<compile_context>
chip_gen: v6e
topology: v6e:2x2x1
jax: 0.10.0
libtpu: 0.0.40
codegen_flags: <defaults>
</compile_context>

<pallas_src>
import functools

import jax
import jax.numpy as jnp
from jax.experimental import pallas as pl
from jax.experimental.pallas import tpu as pltpu


def _round_up(x, m):
    return (x + m - 1) // m * m


def _pos_att_kernel(out_len_ref, cond_len_ref,               # scalar prefetch (SMEM)
                    q_ref, enc_ref,
                    wq_ref, bq_ref, wk_ref, bk_ref, wv_ref, bv_ref,
                    wo_ref, bo_ref, wc_ref, bc_ref,
                    out_ref, score_ref,
                    *, n_layers, n_heads, head_dim):
    """One (batch element, query tile): n_layers x (MHA + GLU conv block + residuals)."""
    E = n_heads * head_dim
    b = pl.program_id(0)
    qi = pl.program_id(1)
    TQ = q_ref.shape[1]
    TK = enc_ref.shape[1]

    out_len = out_len_ref[b]
    cond_len = cond_len_ref[b]

    # --- masks / additive bias built on-chip from the prefetched lengths ---
    q_pos = qi * TQ + jax.lax.broadcasted_iota(jnp.int32, (TQ, 1), 0)
    dec_mask = (q_pos < out_len).astype(jnp.float32)                    # (TQ, 1)
    k_pos = jax.lax.broadcasted_iota(jnp.int32, (1, TK), 1)
    enc_valid = (k_pos < cond_len).astype(jnp.float32)                  # (1, TK)
    m3d = dec_mask * enc_valid                                          # (TQ, TK)
    # -5500 on ~mask3d (attn_mask) + -1e9 on padded keys (key_padding_mask).
    bias = -5500.0 * (1.0 - m3d) + (-1e9) * (1.0 - enc_valid)           # (TQ, TK)
    score_scale = m3d * (1.0 / n_heads)                                 # hoisted

    x = q_ref[0] * dec_mask                     # (TQ, E) f32 residual stream
    enc = enc_ref[0]                            # (TK, E) bf16 (k == v)

    for l in range(n_layers):                   # static unroll (small & fixed)
        xb = x.astype(jnp.bfloat16)
        probs_sum = jnp.zeros((TQ, TK), jnp.float32)
        attn_acc = jnp.zeros((TQ, E), jnp.float32)
        for h in range(n_heads):                # static unroll over heads
            # Per-head projections (weights pre-split per head; 1/sqrt(dh) folded
            # into Wq/bq). bf16 operands, f32 accumulation.
            qh = jnp.dot(xb, wq_ref[l, h],
                         preferred_element_type=jnp.float32) + bq_ref[l, h]
            kh = jnp.dot(enc, wk_ref[l, h],
                         preferred_element_type=jnp.float32) + bk_ref[l, h]
            vh = jnp.dot(enc, wv_ref[l, h],
                         preferred_element_type=jnp.float32) + bv_ref[l, h]
            s = jax.lax.dot_general(
                qh.astype(jnp.bfloat16), kh.astype(jnp.bfloat16),
                dimension_numbers=(((1,), (1,)), ((), ())),
                preferred_element_type=jnp.float32) + bias               # (TQ, TK)
            s = s - jnp.max(s, axis=-1, keepdims=True)
            e = jnp.exp(s)
            inv = pl.reciprocal(jnp.sum(e, axis=-1, keepdims=True), approx=True)
            p = e * inv
            probs_sum = probs_sum + p
            ctx = jnp.dot(p.astype(jnp.bfloat16), vh.astype(jnp.bfloat16),
                          preferred_element_type=jnp.float32)            # (TQ, dh)
            # Accumulate the output projection per head (no concatenate; output
            # stays 128-lane dense).
            attn_acc = attn_acc + jnp.dot(ctx.astype(jnp.bfloat16), wo_ref[l, h],
                                          preferred_element_type=jnp.float32)
        attn_out = attn_acc + bo_ref[l]                                  # (TQ, E)

        # ConvolutionBlock (eval): 1x1 conv E -> 2E, GLU, inner residual.
        a = jnp.dot(attn_out.astype(jnp.bfloat16), wc_ref[l],
                    preferred_element_type=jnp.float32) + bc_ref[l]      # (TQ, 2E)
        glu = a[:, :E] * jax.nn.sigmoid(a[:, E:])
        x = x + (glu + attn_out)                                         # outer residual

        score_ref[0, l, :, :] = probs_sum * score_scale

    out_ref[0] = (x * dec_mask).astype(out_ref.dtype)


def positional_attention_forward(encoder_outputs, melenc_outputs, encoder_lengths,
                                 output_lengths, cond_lens, params, *, n_heads,
                                 q_tile=256):
    """Pallas TPU implementation of PositionalAttention.forward (eval mode).

    Args:
      encoder_outputs: (B, Tk, E) f32  — keys / values.
      melenc_outputs:  (B, Tq, E) f32  — queries.
      encoder_lengths: unused in this config (duration-predictor branch disabled).
      output_lengths:  (B,) int decoder lengths.
      cond_lens:       (B,) int encoder (text) lengths.
      params: list of per-layer dicts with torch-layout tensors:
        in_proj_weight (3E,E), in_proj_bias (3E,), out_proj_weight (E,E),
        out_proj_bias (E,), conv_weight (2E,E,1), conv_bias (2E,).
      q_tile: query-tile size (kept <=256; multiple of 8).
    Returns:
      output (B, Tq, E) f32, attention_scores (B, L, Tq, Tk) f32.
    """
    del encoder_lengths  # only used by the disabled duration-predictor branch
    B, Tk, E = encoder_outputs.shape
    Tq = melenc_outputs.shape[1]
    L = len(params)
    assert E % n_heads == 0
    dh = E // n_heads
    scaling = float(dh) ** -0.5

    # --- pad Tq / Tk so every (.,Tq,Tk) block is (8,128)-aligned (lane-dense) ---
    tq = min(q_tile, _round_up(Tq, 8))
    Tq_pad = _round_up(Tq, tq)
    Tk_pad = _round_up(Tk, 128)
    n_q_tiles = Tq_pad // tq

    melenc_p = jnp.pad(melenc_outputs.astype(jnp.float32),
                       ((0, 0), (0, Tq_pad - Tq), (0, 0)))
    enc_p = jnp.pad(encoder_outputs.astype(jnp.float32),
                    ((0, 0), (0, Tk_pad - Tk), (0, 0))).astype(jnp.bfloat16)

    out_len = jnp.asarray(output_lengths, jnp.int32)
    cond_len = jnp.asarray(cond_lens, jnp.int32)

    # --- one-time weight re-layout: per-head split (no in-kernel lane slicing),
    #     1/sqrt(head_dim) folded into the q projection, bf16 matmul operands. ---
    def stack(fn, dtype):
        return jnp.stack([fn(p) for p in params]).astype(dtype)

    wq = stack(lambda p: (p["in_proj_weight"][:E].T * scaling)
               .reshape(E, n_heads, dh).transpose(1, 0, 2), jnp.bfloat16)   # (L,H,E,dh)
    bq = stack(lambda p: (p["in_proj_bias"][:E] * scaling)
               .reshape(n_heads, 1, dh), jnp.float32)                       # (L,H,1,dh)
    wk = stack(lambda p: p["in_proj_weight"][E:2 * E].T
               .reshape(E, n_heads, dh).transpose(1, 0, 2), jnp.bfloat16)
    bk = stack(lambda p: p["in_proj_bias"][E:2 * E].reshape(n_heads, 1, dh),
               jnp.float32)
    wv = stack(lambda p: p["in_proj_weight"][2 * E:].T
               .reshape(E, n_heads, dh).transpose(1, 0, 2), jnp.bfloat16)
    bv = stack(lambda p: p["in_proj_bias"][2 * E:].reshape(n_heads, 1, dh),
               jnp.float32)
    wo = stack(lambda p: p["out_proj_weight"].T.reshape(n_heads, dh, E),
               jnp.bfloat16)                                                # (L,H,dh,E)
    bo = stack(lambda p: p["out_proj_bias"][None, :], jnp.float32)          # (L,1,E)
    wc = stack(lambda p: p["conv_weight"][:, :, 0].T, jnp.bfloat16)         # (L,E,2E)
    bc = stack(lambda p: p["conv_bias"][None, :], jnp.float32)              # (L,1,2E)

    kernel = functools.partial(_pos_att_kernel, n_layers=L, n_heads=n_heads,
                               head_dim=dh)

    grid_spec = pltpu.PrefetchScalarGridSpec(
        num_scalar_prefetch=2,                       # output_lengths, cond_lens -> SMEM
        grid=(B, n_q_tiles),
        in_specs=[
            pl.BlockSpec((1, tq, E), lambda b, q, *_: (b, q, 0)),        # queries
            pl.BlockSpec((1, Tk_pad, E), lambda b, q, *_: (b, 0, 0)),    # encoder (k=v)
            pl.BlockSpec((L, n_heads, E, dh), lambda b, q, *_: (0, 0, 0, 0)),   # Wq
            pl.BlockSpec((L, n_heads, 1, dh), lambda b, q, *_: (0, 0, 0, 0)),   # bq
            pl.BlockSpec((L, n_heads, E, dh), lambda b, q, *_: (0, 0, 0, 0)),   # Wk
            pl.BlockSpec((L, n_heads, 1, dh), lambda b, q, *_: (0, 0, 0, 0)),   # bk
            pl.BlockSpec((L, n_heads, E, dh), lambda b, q, *_: (0, 0, 0, 0)),   # Wv
            pl.BlockSpec((L, n_heads, 1, dh), lambda b, q, *_: (0, 0, 0, 0)),   # bv
            pl.BlockSpec((L, n_heads, dh, E), lambda b, q, *_: (0, 0, 0, 0)),   # Wo
            pl.BlockSpec((L, 1, E), lambda b, q, *_: (0, 0, 0)),                # bo
            pl.BlockSpec((L, E, 2 * E), lambda b, q, *_: (0, 0, 0)),            # Wc
            pl.BlockSpec((L, 1, 2 * E), lambda b, q, *_: (0, 0, 0)),            # bc
        ],
        out_specs=[
            pl.BlockSpec((1, tq, E), lambda b, q, *_: (b, q, 0)),
            pl.BlockSpec((1, L, tq, Tk_pad), lambda b, q, *_: (b, 0, q, 0)),
        ],
    )

    out_p, scores_p = pl.pallas_call(
        kernel,
        out_shape=[
            jax.ShapeDtypeStruct((B, Tq_pad, E), jnp.float32),
            jax.ShapeDtypeStruct((B, L, Tq_pad, Tk_pad), jnp.float32),
        ],
        grid_spec=grid_spec,
        compiler_params=pltpu.CompilerParams(
            dimension_semantics=("parallel", "parallel"),
            vmem_limit_bytes=48 * 1024 * 1024),
    )(out_len, cond_len, melenc_p, enc_p,
      wq, bq, wk, bk, wv, bv, wo, bo, wc, bc)

    return out_p[:, :Tq, :], scores_p[:, :, :Tq, :Tk]


_HI = jax.lax.Precision.HIGHEST


def _reference_forward(encoder_outputs, melenc_outputs, output_lengths, cond_lens,
                       params, n_heads):
    """Pure-JAX f32 reference mirroring the PyTorch module (eval mode)."""
    B, Tk, E = encoder_outputs.shape
    Tq = melenc_outputs.shape[1]
    dh = E // n_heads
    dec_valid = (jnp.arange(Tq)[None, :] < output_lengths[:, None]).astype(jnp.float32)
    enc_valid = (jnp.arange(Tk)[None, :] < cond_lens[:, None]).astype(jnp.float32)
    dec_mask = dec_valid[:, :, None]
    mask3d = dec_valid[:, :, None] * enc_valid[:, None, :]
    bias = -5500.0 * (1.0 - mask3d) + (-1e9) * (1.0 - enc_valid)[:, None, :]

    x = melenc_outputs * dec_mask
    scores = []
    for p in params:
        wq, bq = p["in_proj_weight"][:E], p["in_proj_bias"][:E]
        wk, bk = p["in_proj_weight"][E:2 * E], p["in_proj_bias"][E:2 * E]
        wv, bv = p["in_proj_weight"][2 * E:], p["in_proj_bias"][2 * E:]
        qp = (jnp.matmul(x, wq.T, precision=_HI) + bq) * (dh ** -0.5)
        kp = jnp.matmul(encoder_outputs, wk.T, precision=_HI) + bk
        vp = jnp.matmul(encoder_outputs, wv.T, precision=_HI) + bv
        qh = qp.reshape(B, Tq, n_heads, dh)
        kh = kp.reshape(B, Tk, n_heads, dh)
        vh = vp.reshape(B, Tk, n_heads, dh)
        s = jnp.einsum("bqhd,bkhd->bhqk", qh, kh, precision=_HI) + bias[:, None]
        pr = jax.nn.softmax(s, axis=-1)
        ctx = jnp.einsum("bhqk,bkhd->bqhd", pr, vh, precision=_HI).reshape(B, Tq, E)
        attn_out = jnp.matmul(ctx, p["out_proj_weight"].T, precision=_HI) + p["out_proj_bias"]
        a = jnp.matmul(attn_out, p["conv_weight"][:, :, 0].T, precision=_HI) + p["conv_bias"]
        glu = a[..., :E] * jax.nn.sigmoid(a[..., E:])
        x = x + (glu + attn_out)
        scores.append(pr.mean(axis=1) * mask3d)
    return x * dec_mask, jnp.stack(scores, axis=1)


if __name__ == "__main__":
    # Small deterministic config: pos_att_dim=128 (lane-dense), 4 heads, 2 MHA layers.
    B, enc_T, dec_T = 2, 16, 8
    E, H, L = 128, 4, 2

    key = jax.random.PRNGKey(0)
    keys = jax.random.split(key, 2 + 6 * L)

    encoder_outputs = 0.5 * jax.random.normal(keys[0], (B, enc_T, E), jnp.float32)
    melenc_outputs = 0.5 * jax.random.normal(keys[1], (B, dec_T, E), jnp.float32)
    output_lengths = jnp.array([dec_T, 5], dtype=jnp.int32)
    cond_lens = jnp.array([enc_T, 11], dtype=jnp.int32)
    encoder_lengths = jnp.ones((B, enc_T), jnp.float32)  # unused in this config

    wscale = 1.0 / (E ** 0.5)
    params = []
    k = 2
    for _ in range(L):
        params.append(dict(
            in_proj_weight=wscale * jax.random.normal(keys[k + 0], (3 * E, E), jnp.float32),
            in_proj_bias=0.02 * jax.random.normal(keys[k + 1], (3 * E,), jnp.float32),
            out_proj_weight=wscale * jax.random.normal(keys[k + 2], (E, E), jnp.float32),
            out_proj_bias=0.02 * jax.random.normal(keys[k + 3], (E,), jnp.float32),
            conv_weight=wscale * jax.random.normal(keys[k + 4], (2 * E, E, 1), jnp.float32),
            conv_bias=0.02 * jax.random.normal(keys[k + 5], (2 * E,), jnp.float32),
        ))
        k += 6

    out, scores = positional_attention_forward(
        encoder_outputs, melenc_outputs, encoder_lengths,
        output_lengths, cond_lens, params, n_heads=H)
    out = jax.block_until_ready(out)
    scores = jax.block_until_ready(scores)

    ref_out, ref_scores = _reference_forward(
        encoder_outputs, melenc_outputs, output_lengths, cond_lens, params, H)

    assert out.shape == (B, dec_T, E)
    assert scores.shape == (B, L, dec_T, enc_T)
    assert bool(jnp.all(jnp.isfinite(out))) and bool(jnp.all(jnp.isfinite(scores)))
    # bf16 matmul operands + approx reciprocal -> loosened (but still tight) tolerances.
    assert jnp.allclose(out, ref_out, atol=2e-2, rtol=2e-2), \
        float(jnp.max(jnp.abs(out - ref_out)))
    assert jnp.allclose(scores, ref_scores, atol=1e-2, rtol=1e-2), \
        float(jnp.max(jnp.abs(scores - ref_scores)))

    print("KERNEL_OK")
</pallas_src>

<mosaic_0001>
module attributes {stable_mosaic.version = 11 : i64} {
  func.func @_pos_att_kernel(%arg0: i32, %arg1: i32, %arg2: memref<2xi32, #tpu.memory_space<smem>>, %arg3: memref<2xi32, #tpu.memory_space<smem>>, %arg4: memref<1x8x128xf32, #tpu.memory_space<vmem>>, %arg5: memref<1x128x128xbf16, #tpu.memory_space<vmem>>, %arg6: memref<2x4x128x32xbf16, #tpu.memory_space<vmem>>, %arg7: memref<2x4x1x32xf32, #tpu.memory_space<vmem>>, %arg8: memref<2x4x128x32xbf16, #tpu.memory_space<vmem>>, %arg9: memref<2x4x1x32xf32, #tpu.memory_space<vmem>>, %arg10: memref<2x4x128x32xbf16, #tpu.memory_space<vmem>>, %arg11: memref<2x4x1x32xf32, #tpu.memory_space<vmem>>, %arg12: memref<2x4x32x128xbf16, #tpu.memory_space<vmem>>, %arg13: memref<2x1x128xf32, #tpu.memory_space<vmem>>, %arg14: memref<2x128x256xbf16, #tpu.memory_space<vmem>>, %arg15: memref<2x1x256xf32, #tpu.memory_space<vmem>>, %arg16: memref<1x8x128xf32, #tpu.memory_space<vmem>>, %arg17: memref<1x2x8x128xf32, #tpu.memory_space<vmem>>) attributes {dimension_semantics = [#tpu.dimension_semantics<parallel>, #tpu.dimension_semantics<parallel>], iteration_bounds = array<i64: 2, 1>, scalar_prefetch = 2 : i64, scratch_operands = 0 : i64, tpu.core_type = #tpu.core_type<tc>, window_params = [{transform_indices = @transform_0, window_bounds = array<i64: 1, 8, 128>}, {transform_indices = @transform_1, window_bounds = array<i64: 1, 128, 128>}, {pipeline_mode = #tpu.pipeline_mode<synchronous>, transform_indices = @transform_2, window_bounds = array<i64: 2, 4, 128, 32>}, {pipeline_mode = #tpu.pipeline_mode<synchronous>, transform_indices = @transform_3, window_bounds = array<i64: 2, 4, 1, 32>}, {pipeline_mode = #tpu.pipeline_mode<synchronous>, transform_indices = @transform_4, window_bounds = array<i64: 2, 4, 128, 32>}, {pipeline_mode = #tpu.pipeline_mode<synchronous>, transform_indices = @transform_5, window_bounds = array<i64: 2, 4, 1, 32>}, {pipeline_mode = #tpu.pipeline_mode<synchronous>, transform_indices = @transform_6, window_bounds = array<i64: 2, 4, 128, 32>}, {pipeline_mode = #tpu.pipeline_mode<synchronous>, transform_indices = @transform_7, window_bounds = array<i64: 2, 4, 1, 32>}, {pipeline_mode = #tpu.pipeline_mode<synchronous>, transform_indices = @transform_8, window_bounds = array<i64: 2, 4, 32, 128>}, {pipeline_mode = #tpu.pipeline_mode<synchronous>, transform_indices = @transform_9, window_bounds = array<i64: 2, 1, 128>}, {pipeline_mode = #tpu.pipeline_mode<synchronous>, transform_indices = @transform_10, window_bounds = array<i64: 2, 128, 256>}, {pipeline_mode = #tpu.pipeline_mode<synchronous>, transform_indices = @transform_11, window_bounds = array<i64: 2, 1, 256>}, {transform_indices = @transform_12, window_bounds = array<i64: 1, 8, 128>}, {transform_indices = @transform_13, window_bounds = array<i64: 1, 2, 8, 128>}]} {
    %0 = arith.index_cast %arg0 : i32 to index
    %1 = memref.load %arg2[%0] : memref<2xi32, #tpu.memory_space<smem>>
    %2 = arith.index_cast %arg0 : i32 to index
    %3 = memref.load %arg3[%2] : memref<2xi32, #tpu.memory_space<smem>>
    %c8_i32 = arith.constant 8 : i32
    %4 = arith.muli %arg1, %c8_i32 : i32
    %5 = tpu.iota {dimensions = array<i32: 0>} : vector<8x1xi32>
    %6 = vector.broadcast %4 : i32 to vector<8x1xi32>
    %7 = arith.addi %6, %5 : vector<8x1xi32>
    %8 = vector.broadcast %1 : i32 to vector<8x1xi32>
    %9 = arith.cmpi slt, %7, %8 : vector<8x1xi32>
    %10 = arith.extui %9 : vector<8x1xi1> to vector<8x1xi32>
    %11 = arith.sitofp %10 : vector<8x1xi32> to vector<8x1xf32>
    %12 = tpu.iota {dimensions = array<i32: 1>} : vector<1x128xi32>
    %13 = vector.broadcast %3 : i32 to vector<1x128xi32>
    %14 = arith.cmpi slt, %12, %13 : vector<1x128xi32>
    %15 = arith.extui %14 : vector<1x128xi1> to vector<1x128xi32>
    %16 = arith.sitofp %15 : vector<1x128xi32> to vector<1x128xf32>
    %17 = vector.broadcast %11 : vector<8x1xf32> to vector<8x128xf32>
    %18 = vector.broadcast %16 : vector<1x128xf32> to vector<8x128xf32>
    %19 = arith.mulf %17, %18 : vector<8x128xf32>
    %cst = arith.constant 1.000000e+00 : f32
    %20 = vector.broadcast %cst : f32 to vector<8x128xf32>
    %21 = arith.subf %20, %19 : vector<8x128xf32>
    %cst_0 = arith.constant -5.500000e+03 : f32
    %22 = vector.broadcast %cst_0 : f32 to vector<8x128xf32>
    %23 = arith.mulf %22, %21 : vector<8x128xf32>
    %cst_1 = arith.constant 1.000000e+00 : f32
    %24 = vector.broadcast %cst_1 : f32 to vector<1x128xf32>
    %25 = arith.subf %24, %16 : vector<1x128xf32>
    %cst_2 = arith.constant -1.000000e+09 : f32
    %26 = vector.broadcast %cst_2 : f32 to vector<1x128xf32>
    %27 = arith.mulf %26, %25 : vector<1x128xf32>
    %28 = vector.broadcast %27 : vector<1x128xf32> to vector<8x128xf32>
    %29 = arith.addf %23, %28 : vector<8x128xf32>
    %cst_3 = arith.constant 2.500000e-01 : f32
    %30 = vector.broadcast %cst_3 : f32 to vector<8x128xf32>
    %31 = arith.mulf %19, %30 : vector<8x128xf32>
    %c0 = arith.constant 0 : index
    %c0_4 = arith.constant 0 : index
    %c0_5 = arith.constant 0 : index
    %32 = vector.load %arg4[%c0, %c0_4, %c0_5] : memref<1x8x128xf32, #tpu.memory_space<vmem>>, vector<1x8x128xf32>
    %33 = vector.shape_cast %32 : vector<1x8x128xf32> to vector<8x128xf32>
    %34 = vector.broadcast %11 : vector<8x1xf32> to vector<8x128xf32>
    %35 = arith.mulf %33, %34 : vector<8x128xf32>
    %c0_6 = arith.constant 0 : index
    %c0_7 = arith.constant 0 : index
    %c0_8 = arith.constant 0 : index
    %36 = vector.load %arg5[%c0_6, %c0_7, %c0_8] : memref<1x128x128xbf16, #tpu.memory_space<vmem>>, vector<1x128x128xbf16>
    %37 = vector.shape_cast %36 : vector<1x128x128xbf16> to vector<128x128xbf16>
    %38 = arith.truncf %35 : vector<8x128xf32> to vector<8x128xbf16>
    %cst_9 = arith.constant 0.000000e+00 : f32
    %39 = vector.broadcast %cst_9 : f32 to vector<8x128xf32>
    %cst_10 = arith.constant 0.000000e+00 : f32
    %40 = vector.broadcast %cst_10 : f32 to vector<8x128xf32>
    %c0_11 = arith.constant 0 : index
    %c0_12 = arith.constant 0 : index
    %c0_13 = arith.constant 0 : index
    %c0_14 = arith.constant 0 : index
    %41 = vector.load %arg6[%c0_11, %c0_12, %c0_13, %c0_14] : memref<2x4x128x32xbf16, #tpu.memory_space<vmem>>, vector<1x1x128x32xbf16>
    %42 = vector.shape_cast %41 : vector<1x1x128x32xbf16> to vector<128x32xbf16>
    %cst_15 = arith.constant dense<0.000000e+00> : vector<8x32xf32>
    %43 = tpu.matmul %38, %42, %cst_15 {dimension_numbers = #tpu.dot_dimension_numbers<[1], [0], [0], [1], [0, 0, 1, 1], [], []>} : vector<8x128xbf16>, vector<128x32xbf16>, vector<8x32xf32> -> vector<8x32xf32>
    %c0_16 = arith.constant 0 : index
    %c0_17 = arith.constant 0 : index
    %c0_18 = arith.constant 0 : index
    %c0_19 = arith.constant 0 : index
    %44 = vector.load %arg7[%c0_16, %c0_17, %c0_18, %c0_19] : memref<2x4x1x32xf32, #tpu.memory_space<vmem>>, vector<1x1x1x32xf32>
    %45 = vector.shape_cast %44 : vector<1x1x1x32xf32> to vector<1x32xf32>
    %46 = vector.broadcast %45 : vector<1x32xf32> to vector<8x32xf32>
    %47 = arith.addf %43, %46 : vector<8x32xf32>
    %c0_20 = arith.constant 0 : index
    %c0_21 = arith.constant 0 : index
    %c0_22 = arith.constant 0 : index
    %c0_23 = arith.constant 0 : index
    %48 = vector.load %arg8[%c0_20, %c0_21, %c0_22, %c0_23] : memref<2x4x128x32xbf16, #tpu.memory_space<vmem>>, vector<1x1x128x32xbf16>
    %49 = vector.shape_cast %48 : vector<1x1x128x32xbf16> to vector<128x32xbf16>
    %cst_24 = arith.constant dense<0.000000e+00> : vector<128x32xf32>
    %50 = tpu.matmul %37, %49, %cst_24 {dimension_numbers = #tpu.dot_dimension_numbers<[1], [0], [0], [1], [0, 0, 1, 1], [], []>} : vector<128x128xbf16>, vector<128x32xbf16>, vector<128x32xf32> -> vector<128x32xf32>
    %c0_25 = arith.constant 0 : index
    %c0_26 = arith.constant 0 : index
    %c0_27 = arith.constant 0 : index
    %c0_28 = arith.constant 0 : index
    %51 = vector.load %arg9[%c0_25, %c0_26, %c0_27, %c0_28] : memref<2x4x1x32xf32, #tpu.memory_space<vmem>>, vector<1x1x1x32xf32>
    %52 = vector.shape_cast %51 : vector<1x1x1x32xf32> to vector<1x32xf32>
    %53 = vector.broadcast %52 : vector<1x32xf32> to vector<128x32xf32>
    %54 = arith.addf %50, %53 : vector<128x32xf32>
    %c0_29 = arith.constant 0 : index
    %c0_30 = arith.constant 0 : index
    %c0_31 = arith.constant 0 : index
    %c0_32 = arith.constant 0 : index
    %55 = vector.load %arg10[%c0_29, %c0_30, %c0_31, %c0_32] : memref<2x4x128x32xbf16, #tpu.memory_space<vmem>>, vector<1x1x128x32xbf16>
    %56 = vector.shape_cast %55 : vector<1x1x128x32xbf16> to vector<128x32xbf16>
    %cst_33 = arith.constant dense<0.000000e+00> : vector<128x32xf32>
    %57 = tpu.matmul %37, %56, %cst_33 {dimension_numbers = #tpu.dot_dimension_numbers<[1], [0], [0], [1], [0, 0, 1, 1], [], []>} : vector<128x128xbf16>, vector<128x32xbf16>, vector<128x32xf32> -> vector<128x32xf32>
    %c0_34 = arith.constant 0 : index
    %c0_35 = arith.constant 0 : index
    %c0_36 = arith.constant 0 : index
    %c0_37 = arith.constant 0 : index
    %58 = vector.load %arg11[%c0_34, %c0_35, %c0_36, %c0_37] : memref<2x4x1x32xf32, #tpu.memory_space<vmem>>, vector<1x1x1x32xf32>
    %59 = vector.shape_cast %58 : vector<1x1x1x32xf32> to vector<1x32xf32>
    %60 = vector.broadcast %59 : vector<1x32xf32> to vector<128x32xf32>
    %61 = arith.addf %57, %60 : vector<128x32xf32>
    %62 = arith.truncf %47 : vector<8x32xf32> to vector<8x32xbf16>
    %63 = arith.truncf %54 : vector<128x32xf32> to vector<128x32xbf16>
    %cst_38 = arith.constant dense<0.000000e+00> : vector<8x128xf32>
    %64 = tpu.matmul %62, %63, %cst_38 {dimension_numbers = #tpu.dot_dimension_numbers<[1], [1], [0], [0], [0, 0, 1, 0], [], []>} : vector<8x32xbf16>, vector<128x32xbf16>, vector<8x128xf32> -> vector<8x128xf32>
    %65 = arith.addf %64, %29 : vector<8x128xf32>
    %cst_39 = arith.constant dense<0xFF800000> : vector<8xf32>
    %66 = vector.multi_reduction <maximumf>, %65, %cst_39 [1] : vector<8x128xf32> to vector<8xf32>
    %67 = vector.shape_cast %66 : vector<8xf32> to vector<8x1xf32>
    %68 = vector.broadcast %67 : vector<8x1xf32> to vector<8x128xf32>
    %69 = arith.subf %65, %68 : vector<8x128xf32>
    %70 = math.exp %69 : vector<8x128xf32>
    %cst_40 = arith.constant dense<0.000000e+00> : vector<8xf32>
    %71 = vector.multi_reduction <add>, %70, %cst_40 [1] : vector<8x128xf32> to vector<8xf32>
    %72 = vector.shape_cast %71 : vector<8xf32> to vector<8x1xf32>
    %73 = tpu.reciprocal %72 {approx = true} : vector<8x1xf32> -> vector<8x1xf32>
    %74 = vector.broadcast %73 : vector<8x1xf32> to vector<8x128xf32>
    %75 = arith.mulf %70, %74 : vector<8x128xf32>
    %76 = arith.addf %39, %75 : vector<8x128xf32>
    %77 = arith.truncf %75 : vector<8x128xf32> to vector<8x128xbf16>
    %78 = arith.truncf %61 : vector<128x32xf32> to vector<128x32xbf16>
    %cst_41 = arith.constant dense<0.000000e+00> : vector<8x32xf32>
    %79 = tpu.matmul %77, %78, %cst_41 {dimension_numbers = #tpu.dot_dimension_numbers<[1], [0], [0], [1], [0, 0, 1, 1], [], []>} : vector<8x128xbf16>, vector<128x32xbf16>, vector<8x32xf32> -> vector<8x32xf32>
    %80 = arith.truncf %79 : vector<8x32xf32> to vector<8x32xbf16>
    %c0_42 = arith.constant 0 : index
    %c0_43 = arith.constant 0 : index
    %c0_44 = arith.constant 0 : index
    %c0_45 = arith.constant 0 : index
    %81 = vector.load %arg12[%c0_42, %c0_43, %c0_44, %c0_45] : memref<2x4x32x128xbf16, #tpu.memory_space<vmem>>, vector<1x1x32x128xbf16>
    %82 = vector.shape_cast %81 : vector<1x1x32x128xbf16> to vector<32x128xbf16>
    %cst_46 = arith.constant dense<0.000000e+00> : vector<8x128xf32>
    %83 = tpu.matmul %80, %82, %cst_46 {dimension_numbers = #tpu.dot_dimension_numbers<[1], [0], [0], [1], [0, 0, 1, 1], [], []>} : vector<8x32xbf16>, vector<32x128xbf16>, vector<8x128xf32> -> vector<8x128xf32>
    %84 = arith.addf %40, %83 : vector<8x128xf32>
    %c0_47 = arith.constant 0 : index
    %c1 = arith.constant 1 : index
    %c0_48 = arith.constant 0 : index
    %c0_49 = arith.constant 0 : index
    %85 = vector.load %arg6[%c0_47, %c1, %c0_48, %c0_49] : memref<2x4x128x32xbf16, #tpu.memory_space<vmem>>, vector<1x1x128x32xbf16>
    %86 = vector.shape_cast %85 : vector<1x1x128x32xbf16> to vector<128x32xbf16>
    %cst_50 = arith.constant dense<0.000000e+00> : vector<8x32xf32>
    %87 = tpu.matmul %38, %86, %cst_50 {dimension_numbers = #tpu.dot_dimension_numbers<[1], [0], [0], [1], [0, 0, 1, 1], [], []>} : vector<8x128xbf16>, vector<128x32xbf16>, vector<8x32xf32> -> vector<8x32xf32>
    %c0_51 = arith.constant 0 : index
    %c1_52 = arith.constant 1 : index
    %c0_53 = arith.constant 0 : index
    %c0_54 = arith.constant 0 : index
    %88 = vector.load %arg7[%c0_51, %c1_52, %c0_53, %c0_54] : memref<2x4x1x32xf32, #tpu.memory_space<vmem>>, vector<1x1x1x32xf32>
    %89 = vector.shape_cast %88 : vector<1x1x1x32xf32> to vector<1x32xf32>
    %90 = vector.broadcast %89 : vector<1x32xf32> to vector<8x32xf32>
    %91 = arith.addf %87, %90 : vector<8x32xf32>
    %c0_55 = arith.constant 0 : index
    %c1_56 = arith.constant 1 : index
    %c0_57 = arith.constant 0 : index
    %c0_58 = arith.constant 0 : index
    %92 = vector.load %arg8[%c0_55, %c1_56, %c0_57, %c0_58] : memref<2x4x128x32xbf16, #tpu.memory_space<vmem>>, vector<1x1x128x32xbf16>
    %93 = vector.shape_cast %92 : vector<1x1x128x32xbf16> to vector<128x32xbf16>
    %cst_59 = arith.constant dense<0.000000e+00> : vector<128x32xf32>
    %94 = tpu.matmul %37, %93, %cst_59 {dimension_numbers = #tpu.dot_dimension_numbers<[1], [0], [0], [1], [0, 0, 1, 1], [], []>} : vector<128x128xbf16>, vector<128x32xbf16>, vector<128x32xf32> -> vector<128x32xf32>
    %c0_60 = arith.constant 0 : index
    %c1_61 = arith.constant 1 : index
    %c0_62 = arith.constant 0 : index
    %c0_63 = arith.constant 0 : index
    %95 = vector.load %arg9[%c0_60, %c1_61, %c0_62, %c0_63] : memref<2x4x1x32xf32, #tpu.memory_space<vmem>>, vector<1x1x1x32xf32>
    %96 = vector.shape_cast %95 : vector<1x1x1x32xf32> to vector<1x32xf32>
    %97 = vector.broadcast %96 : vector<1x32xf32> to vector<128x32xf32>
    %98 = arith.addf %94, %97 : vector<128x32xf32>
    %c0_64 = arith.constant 0 : index
    %c1_65 = arith.constant 1 : index
    %c0_66 = arith.constant 0 : index
    %c0_67 = arith.constant 0 : index
    %99 = vector.load %arg10[%c0_64, %c1_65, %c0_66, %c0_67] : memref<2x4x128x32xbf16, #tpu.memory_space<vmem>>, vector<1x1x128x32xbf16>
    %100 = vector.shape_cast %99 : vector<1x1x128x32xbf16> to vector<128x32xbf16>
    %cst_68 = arith.constant dense<0.000000e+00> : vector<128x32xf32>
    %101 = tpu.matmul %37, %100, %cst_68 {dimension_numbers = #tpu.dot_dimension_numbers<[1], [0], [0], [1], [0, 0, 1, 1], [], []>} : vector<128x128xbf16>, vector<128x32xbf16>, vector<128x32xf32> -> vector<128x32xf32>
    %c0_69 = arith.constant 0 : index
    %c1_70 = arith.constant 1 : index
    %c0_71 = arith.constant 0 : index
    %c0_72 = arith.constant 0 : index
    %102 = vector.load %arg11[%c0_69, %c1_70, %c0_71, %c0_72] : memref<2x4x1x32xf32, #tpu.memory_space<vmem>>, vector<1x1x1x32xf32>
    %103 = vector.shape_cast %102 : vector<1x1x1x32xf32> to vector<1x32xf32>
    %104 = vector.broadcast %103 : vector<1x32xf32> to vector<128x32xf32>
    %105 = arith.addf %101, %104 : vector<128x32xf32>
    %106 = arith.truncf %91 : vector<8x32xf32> to vector<8x32xbf16>
    %107 = arith.truncf %98 : vector<128x32xf32> to vector<128x32xbf16>
    %cst_73 = arith.constant dense<0.000000e+00> : vector<8x128xf32>
    %108 = tpu.matmul %106, %107, %cst_73 {dimension_numbers = #tpu.dot_dimension_numbers<[1], [1], [0], [0], [0, 0, 1, 0], [], []>} : vector<8x32xbf16>, vector<128x32xbf16>, vector<8x128xf32> -> vector<8x128xf32>
    %109 = arith.addf %108, %29 : vector<8x128xf32>
    %cst_74 = arith.constant dense<0xFF800000> : vector<8xf32>
    %110 = vector.multi_reduction <maximumf>, %109, %cst_74 [1] : vector<8x128xf32> to vector<8xf32>
    %111 = vector.shape_cast %110 : vector<8xf32> to vector<8x1xf32>
    %112 = vector.broadcast %111 : vector<8x1xf32> to vector<8x128xf32>
    %113 = arith.subf %109, %112 : vector<8x128xf32>
    %114 = math.exp %113 : vector<8x128xf32>
    %cst_75 = arith.constant dense<0.000000e+00> : vector<8xf32>
    %115 = vector.multi_reduction <add>, %114, %cst_75 [1] : vector<8x128xf32> to vector<8xf32>
    %116 = vector.shape_cast %115 : vector<8xf32> to vector<8x1xf32>
    %117 = tpu.reciprocal %116 {approx = true} : vector<8x1xf32> -> vector<8x1xf32>
    %118 = vector.broadcast %117 : vector<8x1xf32> to vector<8x128xf32>
    %119 = arith.mulf %114, %118 : vector<8x128xf32>
    %120 = arith.addf %76, %119 : vector<8x128xf32>
    %121 = arith.truncf %119 : vector<8x128xf32> to vector<8x128xbf16>
    %122 = arith.truncf %105 : vector<128x32xf32> to vector<128x32xbf16>
    %cst_76 = arith.constant dense<0.000000e+00> : vector<8x32xf32>
    %123 = tpu.matmul %121, %122, %cst_76 {dimension_numbers = #tpu.dot_dimension_numbers<[1], [0], [0], [1], [0, 0, 1, 1], [], []>} : vector<8x128xbf16>, vector<128x32xbf16>, vector<8x32xf32> -> vector<8x32xf32>
    %124 = arith.truncf %123 : vector<8x32xf32> to vector<8x32xbf16>
    %c0_77 = arith.constant 0 : index
    %c1_78 = arith.constant 1 : index
    %c0_79 = arith.constant 0 : index
    %c0_80 = arith.constant 0 : index
    %125 = vector.load %arg12[%c0_77, %c1_78, %c0_79, %c0_80] : memref<2x4x32x128xbf16, #tpu.memory_space<vmem>>, vector<1x1x32x128xbf16>
    %126 = vector.shape_cast %125 : vector<1x1x32x128xbf16> to vector<32x128xbf16>
    %cst_81 = arith.constant dense<0.000000e+00> : vector<8x128xf32>
    %127 = tpu.matmul %124, %126, %cst_81 {dimension_numbers = #tpu.dot_dimension_numbers<[1], [0], [0], [1], [0, 0, 1, 1], [], []>} : vector<8x32xbf16>, vector<32x128xbf16>, vector<8x128xf32> -> vector<8x128xf32>
    %128 = arith.addf %84, %127 : vector<8x128xf32>
    %c0_82 = arith.constant 0 : index
    %c2 = arith.constant 2 : index
    %c0_83 = arith.constant 0 : index
    %c0_84 = arith.constant 0 : index
    %129 = vector.load %arg6[%c0_82, %c2, %c0_83, %c0_84] : memref<2x4x128x32xbf16, #tpu.memory_space<vmem>>, vector<1x1x128x32xbf16>
    %130 = vector.shape_cast %129 : vector<1x1x128x32xbf16> to vector<128x32xbf16>
    %cst_85 = arith.constant dense<0.000000e+00> : vector<8x32xf32>
    %131 = tpu.matmul %38, %130, %cst_85 {dimension_numbers = #tpu.dot_dimension_numbers<[1], [0], [0], [1], [0, 0, 1, 1], [], []>} : vector<8x128xbf16>, vector<128x32xbf16>, vector<8x32xf32> -> vector<8x32xf32>
    %c0_86 = arith.constant 0 : index
    %c2_87 = arith.constant 2 : index
    %c0_88 = arith.constant 0 : index
    %c0_89 = arith.constant 0 : index
    %132 = vector.load %arg7[%c0_86, %c2_87, %c0_88, %c0_89] : memref<2x4x1x32xf32, #tpu.memory_space<vmem>>, vector<1x1x1x32xf32>
    %133 = vector.shape_cast %132 : vector<1x1x1x32xf32> to vector<1x32xf32>
    %134 = vector.broadcast %133 : vector<1x32xf32> to vector<8x32xf32>
    %135 = arith.addf %131, %134 : vector<8x32xf32>
    %c0_90 = arith.constant 0 : index
    %c2_91 = arith.constant 2 : index
    %c0_92 = arith.constant 0 : index
    %c0_93 = arith.constant 0 : index
    %136 = vector.load %arg8[%c0_90, %c2_91, %c0_92, %c0_93] : memref<2x4x128x32xbf16, #tpu.memory_space<vmem>>, vector<1x1x128x32xbf16>
    %137 = vector.shape_cast %136 : vector<1x1x128x32xbf16> to vector<128x32xbf16>
    %cst_94 = arith.constant dense<0.000000e+00> : vector<128x32xf32>
    %138 = tpu.matmul %37, %137, %cst_94 {dimension_numbers = #tpu.dot_dimension_numbers<[1], [0], [0], [1], [0, 0, 1, 1], [], []>} : vector<128x128xbf16>, vector<128x32xbf16>, vector<128x32xf32> -> vector<128x32xf32>
    %c0_95 = arith.constant 0 : index
    %c2_96 = arith.constant 2 : index
    %c0_97 = arith.constant 0 : index
    %c0_98 = arith.constant 0 : index
    %139 = vector.load %arg9[%c0_95, %c2_96, %c0_97, %c0_98] : memref<2x4x1x32xf32, #tpu.memory_space<vmem>>, vector<1x1x1x32xf32>
    %140 = vector.shape_cast %139 : vector<1x1x1x32xf32> to vector<1x32xf32>
    %141 = vector.broadcast %140 : vector<1x32xf32> to vector<128x32xf32>
    %142 = arith.addf %138, %141 : vector<128x32xf32>
    %c0_99 = arith.constant 0 : index
    %c2_100 = arith.constant 2 : index
    %c0_101 = arith.constant 0 : index
    %c0_102 = arith.constant 0 : index
    %143 = vector.load %arg10[%c0_99, %c2_100, %c0_101, %c0_102] : memref<2x4x128x32xbf16, #tpu.memory_space<vmem>>, vector<1x1x128x32xbf16>
    %144 = vector.shape_cast %143 : vector<1x1x128x32xbf16> to vector<128x32xbf16>
    %cst_103 = arith.constant dense<0.000000e+00> : vector<128x32xf32>
    %145 = tpu.matmul %37, %144, %cst_103 {dimension_numbers = #tpu.dot_dimension_numbers<[1], [0], [0], [1], [0, 0, 1, 1], [], []>} : vector<128x128xbf16>, vector<128x32xbf16>, vector<128x32xf32> -> vector<128x32xf32>
    %c0_104 = arith.constant 0 : index
    %c2_105 = arith.constant 2 : index
    %c0_106 = arith.constant 0 : index
    %c0_107 = arith.constant 0 : index
    %146 = vector.load %arg11[%c0_104, %c2_105, %c0_106, %c0_107] : memref<2x4x1x32xf32, #tpu.memory_space<vmem>>, vector<1x1x1x32xf32>
    %147 = vector.shape_cast %146 : vector<1x1x1x32xf32> to vector<1x32xf32>
    %148 = vector.broadcast %147 : vector<1x32xf32> to vector<128x32xf32>
    %149 = arith.addf %145, %148 : vector<128x32xf32>
    %150 = arith.truncf %135 : vector<8x32xf32> to vector<8x32xbf16>
    %151 = arith.truncf %142 : vector<128x32xf32> to vector<128x32xbf16>
    %cst_108 = arith.constant dense<0.000000e+00> : vector<8x128xf32>
    %152 = tpu.matmul %150, %151, %cst_108 {dimension_numbers = #tpu.dot_dimension_numbers<[1], [1], [0], [0], [0, 0, 1, 0], [], []>} : vector<8x32xbf16>, vector<128x32xbf16>, vector<8x128xf32> -> vector<8x128xf32>
    %153 = arith.addf %152, %29 : vector<8x128xf32>
    %cst_109 = arith.constant dense<0xFF800000> : vector<8xf32>
    %154 = vector.multi_reduction <maximumf>, %153, %cst_109 [1] : vector<8x128xf32> to vector<8xf32>
    %155 = vector.shape_cast %154 : vector<8xf32> to vector<8x1xf32>
    %156 = vector.broadcast %155 : vector<8x1xf32> to vector<8x128xf32>
    %157 = arith.subf %153, %156 : vector<8x128xf32>
    %158 = math.exp %157 : vector<8x128xf32>
    %cst_110 = arith.constant dense<0.000000e+00> : vector<8xf32>
    %159 = vector.multi_reduction <add>, %158, %cst_110 [1] : vector<8x128xf32> to vector<8xf32>
    %160 = vector.shape_cast %159 : vector<8xf32> to vector<8x1xf32>
    %161 = tpu.reciprocal %160 {approx = true} : vector<8x1xf32> -> vector<8x1xf32>
    %162 = vector.broadcast %161 : vector<8x1xf32> to vector<8x128xf32>
    %163 = arith.mulf %158, %162 : vector<8x128xf32>
    %164 = arith.addf %120, %163 : vector<8x128xf32>
    %165 = arith.truncf %163 : vector<8x128xf32> to vector<8x128xbf16>
    %166 = arith.truncf %149 : vector<128x32xf32> to vector<128x32xbf16>
    %cst_111 = arith.constant dense<0.000000e+00> : vector<8x32xf32>
    %167 = tpu.matmul %165, %166, %cst_111 {dimension_numbers = #tpu.dot_dimension_numbers<[1], [0], [0], [1], [0, 0, 1, 1], [], []>} : vector<8x128xbf16>, vector<128x32xbf16>, vector<8x32xf32> -> vector<8x32xf32>
    %168 = arith.truncf %167 : vector<8x32xf32> to vector<8x32xbf16>
    %c0_112 = arith.constant 0 : index
    %c2_113 = arith.constant 2 : index
    %c0_114 = arith.constant 0 : index
    %c0_115 = arith.constant 0 : index
    %169 = vector.load %arg12[%c0_112, %c2_113, %c0_114, %c0_115] : memref<2x4x32x128xbf16, #tpu.memory_space<vmem>>, vector<1x1x32x128xbf16>
    %170 = vector.shape_cast %169 : vector<1x1x32x128xbf16> to vector<32x128xbf16>
    %cst_116 = arith.constant dense<0.000000e+00> : vector<8x128xf32>
    %171 = tpu.matmul %168, %170, %cst_116 {dimension_numbers = #tpu.dot_dimension_numbers<[1], [0], [0], [1], [0, 0, 1, 1], [], []>} : vector<8x32xbf16>, vector<32x128xbf16>, vector<8x128xf32> -> vector<8x128xf32>
    %172 = arith.addf %128, %171 : vector<8x128xf32>
    %c0_117 = arith.constant 0 : index
    %c3 = arith.constant 3 : index
    %c0_118 = arith.constant 0 : index
    %c0_119 = arith.constant 0 : index
    %173 = vector.load %arg6[%c0_117, %c3, %c0_118, %c0_119] : memref<2x4x128x32xbf16, #tpu.memory_space<vmem>>, vector<1x1x128x32xbf16>
    %174 = vector.shape_cast %173 : vector<1x1x128x32xbf16> to vector<128x32xbf16>
    %cst_120 = arith.constant dense<0.000000e+00> : vector<8x32xf32>
    %175 = tpu.matmul %38, %174, %cst_120 {dimension_numbers = #tpu.dot_dimension_numbers<[1], [0], [0], [1], [0, 0, 1, 1], [], []>} : vector<8x128xbf16>, vector<128x32xbf16>, vector<8x32xf32> -> vector<8x32xf32>
    %c0_121 = arith.constant 0 : index
    %c3_122 = arith.constant 3 : index
    %c0_123 = arith.constant 0 : index
    %c0_124 = arith.constant 0 : index
    %176 = vector.load %arg7[%c0_121, %c3_122, %c0_123, %c0_124] : memref<2x4x1x32xf32, #tpu.memory_space<vmem>>, vector<1x1x1x32xf32>
    %177 = vector.shape_cast %176 : vector<1x1x1x32xf32> to vector<1x32xf32>
    %178 = vector.broadcast %177 : vector<1x32xf32> to vector<8x32xf32>
    %179 = arith.addf %175, %178 : vector<8x32xf32>
    %c0_125 = arith.constant 0 : index
    %c3_126 = arith.constant 3 : index
    %c0_127 = arith.constant 0 : index
    %c0_128 = arith.constant 0 : index
    %180 = vector.load %arg8[%c0_125, %c3_126, %c0_127, %c0_128] : memref<2x4x128x32xbf16, #tpu.memory_space<vmem>>, vector<1x1x128x32xbf16>
    %181 = vector.shape_cast %180 : vector<1x1x128x32xbf16> to vector<128x32xbf16>
    %cst_129 = arith.constant dense<0.000000e+00> : vector<128x32xf32>
    %182 = tpu.matmul %37, %181, %cst_129 {dimension_numbers = #tpu.dot_dimension_numbers<[1], [0], [0], [1], [0, 0, 1, 1], [], []>} : vector<128x128xbf16>, vector<128x32xbf16>, vector<128x32xf32> -> vector<128x32xf32>
    %c0_130 = arith.constant 0 : index
    %c3_131 = arith.constant 3 : index
    %c0_132 = arith.constant 0 : index
    %c0_133 = arith.constant 0 : index
    %183 = vector.load %arg9[%c0_130, %c3_131, %c0_132, %c0_133] : memref<2x4x1x32xf32, #tpu.memory_space<vmem>>, vector<1x1x1x32xf32>
    %184 = vector.shape_cast %183 : vector<1x1x1x32xf32> to vector<1x32xf32>
    %185 = vector.broadcast %184 : vector<1x32xf32> to vector<128x32xf32>
    %186 = arith.addf %182, %185 : vector<128x32xf32>
    %c0_134 = arith.constant 0 : index
    %c3_135 = arith.constant 3 : index
    %c0_136 = arith.constant 0 : index
    %c0_137 = arith.constant 0 : index
    %187 = vector.load %arg10[%c0_134, %c3_135, %c0_136, %c0_137] : memref<2x4x128x32xbf16, #tpu.memory_space<vmem>>, vector<1x1x128x32xbf16>
    %188 = vector.shape_cast %187 : vector<1x1x128x32xbf16> to vector<128x32xbf16>
    %cst_138 = arith.constant dense<0.000000e+00> : vector<128x32xf32>
    %189 = tpu.matmul %37, %188, %cst_138 {dimension_numbers = #tpu.dot_dimension_numbers<[1], [0], [0], [1], [0, 0, 1, 1], [], []>} : vector<128x128xbf16>, vector<128x32xbf16>, vector<128x32xf32> -> vector<128x32xf32>
    %c0_139 = arith.constant 0 : index
    %c3_140 = arith.constant 3 : index
    %c0_141 = arith.constant 0 : index
    %c0_142 = arith.constant 0 : index
    %190 = vector.load %arg11[%c0_139, %c3_140, %c0_141, %c0_142] : memref<2x4x1x32xf32, #tpu.memory_space<vmem>>, vector<1x1x1x32xf32>
    %191 = vector.shape_cast %190 : vector<1x1x1x32xf32> to vector<1x32xf32>
    %192 = vector.broadcast %191 : vector<1x32xf32> to vector<128x32xf32>
    %193 = arith.addf %189, %192 : vector<128x32xf32>
    %194 = arith.truncf %179 : vector<8x32xf32> to vector<8x32xbf16>
    %195 = arith.truncf %186 : vector<128x32xf32> to vector<128x32xbf16>
    %cst_143 = arith.constant dense<0.000000e+00> : vector<8x128xf32>
    %196 = tpu.matmul %194, %195, %cst_143 {dimension_numbers = #tpu.dot_dimension_numbers<[1], [1], [0], [0], [0, 0, 1, 0], [], []>} : vector<8x32xbf16>, vector<128x32xbf16>, vector<8x128xf32> -> vector<8x128xf32>
    %197 = arith.addf %196, %29 : vector<8x128xf32>
    %cst_144 = arith.constant dense<0xFF800000> : vector<8xf32>
    %198 = vector.multi_reduction <maximumf>, %197, %cst_144 [1] : vector<8x128xf32> to vector<8xf32>
    %199 = vector.shape_cast %198 : vector<8xf32> to vector<8x1xf32>
    %200 = vector.broadcast %199 : vector<8x1xf32> to vector<8x128xf32>
    %201 = arith.subf %197, %200 : vector<8x128xf32>
    %202 = math.exp %201 : vector<8x128xf32>
    %cst_145 = arith.constant dense<0.000000e+00> : vector<8xf32>
    %203 = vector.multi_reduction <add>, %202, %cst_145 [1] : vector<8x128xf32> to vector<8xf32>
    %204 = vector.shape_cast %203 : vector<8xf32> to vector<8x1xf32>
    %205 = tpu.reciprocal %204 {approx = true} : vector<8x1xf32> -> vector<8x1xf32>
    %206 = vector.broadcast %205 : vector<8x1xf32> to vector<8x128xf32>
    %207 = arith.mulf %202, %206 : vector<8x128xf32>
    %208 = arith.addf %164, %207 : vector<8x128xf32>
    %209 = arith.truncf %207 : vector<8x128xf32> to vector<8x128xbf16>
    %210 = arith.truncf %193 : vector<128x32xf32> to vector<128x32xbf16>
    %cst_146 = arith.constant dense<0.000000e+00> : vector<8x32xf32>
    %211 = tpu.matmul %209, %210, %cst_146 {dimension_numbers = #tpu.dot_dimension_numbers<[1], [0], [0], [1], [0, 0, 1, 1], [], []>} : vector<8x128xbf16>, vector<128x32xbf16>, vector<8x32xf32> -> vector<8x32xf32>
    %212 = arith.truncf %211 : vector<8x32xf32> to vector<8x32xbf16>
    %c0_147 = arith.constant 0 : index
    %c3_148 = arith.constant 3 : index
    %c0_149 = arith.constant 0 : index
    %c0_150 = arith.constant 0 : index
    %213 = vector.load %arg12[%c0_147, %c3_148, %c0_149, %c0_150] : memref<2x4x32x128xbf16, #tpu.memory_space<vmem>>, vector<1x1x32x128xbf16>
    %214 = vector.shape_cast %213 : vector<1x1x32x128xbf16> to vector<32x128xbf16>
    %cst_151 = arith.constant dense<0.000000e+00> : vector<8x128xf32>
    %215 = tpu.matmul %212, %214, %cst_151 {dimension_numbers = #tpu.dot_dimension_numbers<[1], [0], [0], [1], [0, 0, 1, 1], [], []>} : vector<8x32xbf16>, vector<32x128xbf16>, vector<8x128xf32> -> vector<8x128xf32>
    %216 = arith.addf %172, %215 : vector<8x128xf32>
    %c0_152 = arith.constant 0 : index
    %c0_153 = arith.constant 0 : index
    %c0_154 = arith.constant 0 : index
    %217 = vector.load %arg13[%c0_152, %c0_153, %c0_154] : memref<2x1x128xf32, #tpu.memory_space<vmem>>, vector<1x1x128xf32>
    %218 = vector.shape_cast %217 : vector<1x1x128xf32> to vector<1x128xf32>
    %219 = vector.broadcast %218 : vector<1x128xf32> to vector<8x128xf32>
    %220 = arith.addf %216, %219 : vector<8x128xf32>
    %221 = arith.truncf %220 : vector<8x128xf32> to vector<8x128xbf16>
    %c0_155 = arith.constant 0 : index
    %c0_156 = arith.constant 0 : index
    %c0_157 = arith.constant 0 : index
    %222 = vector.load %arg14[%c0_155, %c0_156, %c0_157] : memref<2x128x256xbf16, #tpu.memory_space<vmem>>, vector<1x128x256xbf16>
    %223 = vector.shape_cast %222 : vector<1x128x256xbf16> to vector<128x256xbf16>
    %cst_158 = arith.constant dense<0.000000e+00> : vector<8x256xf32>
    %224 = tpu.matmul %221, %223, %cst_158 {dimension_numbers = #tpu.dot_dimension_numbers<[1], [0], [0], [1], [0, 0, 1, 1], [], []>} : vector<8x128xbf16>, vector<128x256xbf16>, vector<8x256xf32> -> vector<8x256xf32>
    %c0_159 = arith.constant 0 : index
    %c0_160 = arith.constant 0 : index
    %c0_161 = arith.constant 0 : index
    %225 = vector.load %arg15[%c0_159, %c0_160, %c0_161] : memref<2x1x256xf32, #tpu.memory_space<vmem>>, vector<1x1x256xf32>
    %226 = vector.shape_cast %225 : vector<1x1x256xf32> to vector<1x256xf32>
    %227 = vector.broadcast %226 : vector<1x256xf32> to vector<8x256xf32>
    %228 = arith.addf %224, %227 : vector<8x256xf32>
    %229 = vector.extract_strided_slice %228 {offsets = [0, 0], sizes = [8, 128], strides = [1, 1]} : vector<8x256xf32> to vector<8x128xf32>
    %230 = vector.extract_strided_slice %228 {offsets = [0, 128], sizes = [8, 128], strides = [1, 1]} : vector<8x256xf32> to vector<8x128xf32>
    %231 = arith.negf %230 : vector<8x128xf32>
    %232 = math.exp %231 : vector<8x128xf32>
    %cst_162 = arith.constant 1.000000e+00 : f32
    %233 = vector.broadcast %cst_162 : f32 to vector<8x128xf32>
    %234 = arith.addf %233, %232 : vector<8x128xf32>
    %235 = arith.divf %233, %234 : vector<8x128xf32>
    %236 = arith.mulf %229, %235 : vector<8x128xf32>
    %237 = arith.addf %236, %220 : vector<8x128xf32>
    %238 = arith.addf %35, %237 : vector<8x128xf32>
    %239 = arith.mulf %208, %31 : vector<8x128xf32>
    %c0_163 = arith.constant 0 : index
    %c0_164 = arith.constant 0 : index
    %c0_165 = arith.constant 0 : index
    %c0_166 = arith.constant 0 : index
    %240 = vector.load %arg17[%c0_163, %c0_164, %c0_165, %c0_166] : memref<1x2x8x128xf32, #tpu.memory_space<vmem>>, vector<1x1x8x128xf32>
    %241 = vector.shape_cast %240 : vector<1x1x8x128xf32> to vector<8x128xf32>
    %242 = vector.shape_cast %239 : vector<8x128xf32> to vector<1x1x8x128xf32>
    tpu.vector_store %arg17[%c0_163, %c0_164, %c0_165, %c0_166], %242 {strides = array<i32>} : memref<1x2x8x128xf32, #tpu.memory_space<vmem>>, vector<1x1x8x128xf32>,
    %243 = arith.truncf %238 : vector<8x128xf32> to vector<8x128xbf16>
    %cst_167 = arith.constant 0.000000e+00 : f32
    %244 = vector.broadcast %cst_167 : f32 to vector<8x128xf32>
    %cst_168 = arith.constant 0.000000e+00 : f32
    %245 = vector.broadcast %cst_168 : f32 to vector<8x128xf32>
    %c1_169 = arith.constant 1 : index
    %c0_170 = arith.constant 0 : index
    %c0_171 = arith.constant 0 : index
    %c0_172 = arith.constant 0 : index
    %246 = vector.load %arg6[%c1_169, %c0_170, %c0_171, %c0_172] : memref<2x4x128x32xbf16, #tpu.memory_space<vmem>>, vector<1x1x128x32xbf16>
    %247 = vector.shape_cast %246 : vector<1x1x128x32xbf16> to vector<128x32xbf16>
    %cst_173 = arith.constant dense<0.000000e+00> : vector<8x32xf32>
    %248 = tpu.matmul %243, %247, %cst_173 {dimension_numbers = #tpu.dot_dimension_numbers<[1], [0], [0], [1], [0, 0, 1, 1], [], []>} : vector<8x128xbf16>, vector<128x32xbf16>, vector<8x32xf32> -> vector<8x32xf32>
    %c1_174 = arith.constant 1 : index
    %c0_175 = arith.constant 0 : index
    %c0_176 = arith.constant 0 : index
    %c0_177 = arith.constant 0 : index
    %249 = vector.load %arg7[%c1_174, %c0_175, %c0_176, %c0_177] : memref<2x4x1x32xf32, #tpu.memory_space<vmem>>, vector<1x1x1x32xf32>
    %250 = vector.shape_cast %249 : vector<1x1x1x32xf32> to vector<1x32xf32>
    %251 = vector.broadcast %250 : vector<1x32xf32> to vector<8x32xf32>
    %252 = arith.addf %248, %251 : vector<8x32xf32>
    %c1_178 = arith.constant 1 : index
    %c0_179 = arith.constant 0 : index
    %c0_180 = arith.constant 0 : index
    %c0_181 = arith.constant 0 : index
    %253 = vector.load %arg8[%c1_178, %c0_179, %c0_180, %c0_181] : memref<2x4x128x32xbf16, #tpu.memory_space<vmem>>, vector<1x1x128x32xbf16>
    %254 = vector.shape_cast %253 : vector<1x1x128x32xbf16> to vector<128x32xbf16>
    %cst_182 = arith.constant dense<0.000000e+00> : vector<128x32xf32>
    %255 = tpu.matmul %37, %254, %cst_182 {dimension_numbers = #tpu.dot_dimension_numbers<[1], [0], [0], [1], [0, 0, 1, 1], [], []>} : vector<128x128xbf16>, vector<128x32xbf16>, vector<128x32xf32> -> vector<128x32xf32>
    %c1_183 = arith.constant 1 : index
    %c0_184 = arith.constant 0 : index
    %c0_185 = arith.constant 0 : index
    %c0_186 = arith.constant 0 : index
    %256 = vector.load %arg9[%c1_183, %c0_184, %c0_185, %c0_186] : memref<2x4x1x32xf32, #tpu.memory_space<vmem>>, vector<1x1x1x32xf32>
    %257 = vector.shape_cast %256 : vector<1x1x1x32xf32> to vector<1x32xf32>
    %258 = vector.broadcast %257 : vector<1x32xf32> to vector<128x32xf32>
    %259 = arith.addf %255, %258 : vector<128x32xf32>
    %c1_187 = arith.constant 1 : index
    %c0_188 = arith.constant 0 : index
    %c0_189 = arith.constant 0 : index
    %c0_190 = arith.constant 0 : index
    %260 = vector.load %arg10[%c1_187, %c0_188, %c0_189, %c0_190] : memref<2x4x128x32xbf16, #tpu.memory_space<vmem>>, vector<1x1x128x32xbf16>
    %261 = vector.shape_cast %260 : vector<1x1x128x32xbf16> to vector<128x32xbf16>
    %cst_191 = arith.constant dense<0.000000e+00> : vector<128x32xf32>
    %262 = tpu.matmul %37, %261, %cst_191 {dimension_numbers = #tpu.dot_dimension_numbers<[1], [0], [0], [1], [0, 0, 1, 1], [], []>} : vector<128x128xbf16>, vector<128x32xbf16>, vector<128x32xf32> -> vector<128x32xf32>
    %c1_192 = arith.constant 1 : index
    %c0_193 = arith.constant 0 : index
    %c0_194 = arith.constant 0 : index
    %c0_195 = arith.constant 0 : index
    %263 = vector.load %arg11[%c1_192, %c0_193, %c0_194, %c0_195] : memref<2x4x1x32xf32, #tpu.memory_space<vmem>>, vector<1x1x1x32xf32>
    %264 = vector.shape_cast %263 : vector<1x1x1x32xf32> to vector<1x32xf32>
    %265 = vector.broadcast %264 : vector<1x32xf32> to vector<128x32xf32>
    %266 = arith.addf %262, %265 : vector<128x32xf32>
    %267 = arith.truncf %252 : vector<8x32xf32> to vector<8x32xbf16>
    %268 = arith.truncf %259 : vector<128x32xf32> to vector<128x32xbf16>
    %cst_196 = arith.constant dense<0.000000e+00> : vector<8x128xf32>
    %269 = tpu.matmul %267, %268, %cst_196 {dimension_numbers = #tpu.dot_dimension_numbers<[1], [1], [0], [0], [0, 0, 1, 0], [], []>} : vector<8x32xbf16>, vector<128x32xbf16>, vector<8x128xf32> -> vector<8x128xf32>
    %270 = arith.addf %269, %29 : vector<8x128xf32>
    %cst_197 = arith.constant dense<0xFF800000> : vector<8xf32>
    %271 = vector.multi_reduction <maximumf>, %270, %cst_197 [1] : vector<8x128xf32> to vector<8xf32>
    %272 = vector.shape_cast %271 : vector<8xf32> to vector<8x1xf32>
    %273 = vector.broadcast %272 : vector<8x1xf32> to vector<8x128xf32>
    %274 = arith.subf %270, %273 : vector<8x128xf32>
    %275 = math.exp %274 : vector<8x128xf32>
    %cst_198 = arith.constant dense<0.000000e+00> : vector<8xf32>
    %276 = vector.multi_reduction <add>, %275, %cst_198 [1] : vector<8x128xf32> to vector<8xf32>
    %277 = vector.shape_cast %276 : vector<8xf32> to vector<8x1xf32>
    %278 = tpu.reciprocal %277 {approx = true} : vector<8x1xf32> -> vector<8x1xf32>
    %279 = vector.broadcast %278 : vector<8x1xf32> to vector<8x128xf32>
    %280 = arith.mulf %275, %279 : vector<8x128xf32>
    %281 = arith.addf %244, %280 : vector<8x128xf32>
    %282 = arith.truncf %280 : vector<8x128xf32> to vector<8x128xbf16>
    %283 = arith.truncf %266 : vector<128x32xf32> to vector<128x32xbf16>
    %cst_199 = arith.constant dense<0.000000e+00> : vector<8x32xf32>
    %284 = tpu.matmul %282, %283, %cst_199 {dimension_numbers = #tpu.dot_dimension_numbers<[1], [0], [0], [1], [0, 0, 1, 1], [], []>} : vector<8x128xbf16>, vector<128x32xbf16>, vector<8x32xf32> -> vector<8x32xf32>
    %285 = arith.truncf %284 : vector<8x32xf32> to vector<8x32xbf16>
    %c1_200 = arith.constant 1 : index
    %c0_201 = arith.constant 0 : index
    %c0_202 = arith.constant 0 : index
    %c0_203 = arith.constant 0 : index
    %286 = vector.load %arg12[%c1_200, %c0_201, %c0_202, %c0_203] : memref<2x4x32x128xbf16, #tpu.memory_space<vmem>>, vector<1x1x32x128xbf16>
    %287 = vector.shape_cast %286 : vector<1x1x32x128xbf16> to vector<32x128xbf16>
    %cst_204 = arith.constant dense<0.000000e+00> : vector<8x128xf32>
    %288 = tpu.matmul %285, %287, %cst_204 {dimension_numbers = #tpu.dot_dimension_numbers<[1], [0], [0], [1], [0, 0, 1, 1], [], []>} : vector<8x32xbf16>, vector<32x128xbf16>, vector<8x128xf32> -> vector<8x128xf32>
    %289 = arith.addf %245, %288 : vector<8x128xf32>
    %c1_205 = arith.constant 1 : index
    %c1_206 = arith.constant 1 : index
    %c0_207 = arith.constant 0 : index
    %c0_208 = arith.constant 0 : index
    %290 = vector.load %arg6[%c1_205, %c1_206, %c0_207, %c0_208] : memref<2x4x128x32xbf16, #tpu.memory_space<vmem>>, vector<1x1x128x32xbf16>
    %291 = vector.shape_cast %290 : vector<1x1x128x32xbf16> to vector<128x32xbf16>
    %cst_209 = arith.constant dense<0.000000e+00> : vector<8x32xf32>
    %292 = tpu.matmul %243, %291, %cst_209 {dimension_numbers = #tpu.dot_dimension_numbers<[1], [0], [0], [1], [0, 0, 1, 1], [], []>} : vector<8x128xbf16>, vector<128x32xbf16>, vector<8x32xf32> -> vector<8x32xf32>
    %c1_210 = arith.constant 1 : index
    %c1_211 = arith.constant 1 : index
    %c0_212 = arith.constant 0 : index
    %c0_213 = arith.constant 0 : index
    %293 = vector.load %arg7[%c1_210, %c1_211, %c0_212, %c0_213] : memref<2x4x1x32xf32, #tpu.memory_space<vmem>>, vector<1x1x1x32xf32>
    %294 = vector.shape_cast %293 : vector<1x1x1x32xf32> to vector<1x32xf32>
    %295 = vector.broadcast %294 : vector<1x32xf32> to vector<8x32xf32>
    %296 = arith.addf %292, %295 : vector<8x32xf32>
    %c1_214 = arith.constant 1 : index
    %c1_215 = arith.constant 1 : index
    %c0_216 = arith.constant 0 : index
    %c0_217 = arith.constant 0 : index
    %297 = vector.load %arg8[%c1_214, %c1_215, %c0_216, %c0_217] : memref<2x4x128x32xbf16, #tpu.memory_space<vmem>>, vector<1x1x128x32xbf16>
    %298 = vector.shape_cast %297 : vector<1x1x128x32xbf16> to vector<128x32xbf16>
    %cst_218 = arith.constant dense<0.000000e+00> : vector<128x32xf32>
    %299 = tpu.matmul %37, %298, %cst_218 {dimension_numbers = #tpu.dot_dimension_numbers<[1], [0], [0], [1], [0, 0, 1, 1], [], []>} : vector<128x128xbf16>, vector<128x32xbf16>, vector<128x32xf32> -> vector<128x32xf32>
    %c1_219 = arith.constant 1 : index
    %c1_220 = arith.constant 1 : index
    %c0_221 = arith.constant 0 : index
    %c0_222 = arith.constant 0 : index
    %300 = vector.load %arg9[%c1_219, %c1_220, %c0_221, %c0_222] : memref<2x4x1x32xf32, #tpu.memory_space<vmem>>, vector<1x1x1x32xf32>
    %301 = vector.shape_cast %300 : vector<1x1x1x32xf32> to vector<1x32xf32>
    %302 = vector.broadcast %301 : vector<1x32xf32> to vector<128x32xf32>
    %303 = arith.addf %299, %302 : vector<128x32xf32>
    %c1_223 = arith.constant 1 : index
    %c1_224 = arith.constant 1 : index
    %c0_225 = arith.constant 0 : index
    %c0_226 = arith.constant 0 : index
    %304 = vector.load %arg10[%c1_223, %c1_224, %c0_225, %c0_226] : memref<2x4x128x32xbf16, #tpu.memory_space<vmem>>, vector<1x1x128x32xbf16>
    %305 = vector.shape_cast %304 : vector<1x1x128x32xbf16> to vector<128x32xbf16>
    %cst_227 = arith.constant dense<0.000000e+00> : vector<128x32xf32>
    %306 = tpu.matmul %37, %305, %cst_227 {dimension_numbers = #tpu.dot_dimension_numbers<[1], [0], [0], [1], [0, 0, 1, 1], [], []>} : vector<128x128xbf16>, vector<128x32xbf16>, vector<128x32xf32> -> vector<128x32xf32>
    %c1_228 = arith.constant 1 : index
    %c1_229 = arith.constant 1 : index
    %c0_230 = arith.constant 0 : index
    %c0_231 = arith.constant 0 : index
    %307 = vector.load %arg11[%c1_228, %c1_229, %c0_230, %c0_231] : memref<2x4x1x32xf32, #tpu.memory_space<vmem>>, vector<1x1x1x32xf32>
    %308 = vector.shape_cast %307 : vector<1x1x1x32xf32> to vector<1x32xf32>
    %309 = vector.broadcast %308 : vector<1x32xf32> to vector<128x32xf32>
    %310 = arith.addf %306, %309 : vector<128x32xf32>
    %311 = arith.truncf %296 : vector<8x32xf32> to vector<8x32xbf16>
    %312 = arith.truncf %303 : vector<128x32xf32> to vector<128x32xbf16>
    %cst_232 = arith.constant dense<0.000000e+00> : vector<8x128xf32>
    %313 = tpu.matmul %311, %312, %cst_232 {dimension_numbers = #tpu.dot_dimension_numbers<[1], [1], [0], [0], [0, 0, 1, 0], [], []>} : vector<8x32xbf16>, vector<128x32xbf16>, vector<8x128xf32> -> vector<8x128xf32>
    %314 = arith.addf %313, %29 : vector<8x128xf32>
    %cst_233 = arith.constant dense<0xFF800000> : vector<8xf32>
    %315 = vector.multi_reduction <maximumf>, %314, %cst_233 [1] : vector<8x128xf32> to vector<8xf32>
    %316 = vector.shape_cast %315 : vector<8xf32> to vector<8x1xf32>
    %317 = vector.broadcast %316 : vector<8x1xf32> to vector<8x128xf32>
    %318 = arith.subf %314, %317 : vector<8x128xf32>
    %319 = math.exp %318 : vector<8x128xf32>
    %cst_234 = arith.constant dense<0.000000e+00> : vector<8xf32>
    %320 = vector.multi_reduction <add>, %319, %cst_234 [1] : vector<8x128xf32> to vector<8xf32>
    %321 = vector.shape_cast %320 : vector<8xf32> to vector<8x1xf32>
    %322 = tpu.reciprocal %321 {approx = true} : vector<8x1xf32> -> vector<8x1xf32>
    %323 = vector.broadcast %322 : vector<8x1xf32> to vector<8x128xf32>
    %324 = arith.mulf %319, %323 : vector<8x128xf32>
    %325 = arith.addf %281, %324 : vector<8x128xf32>
    %326 = arith.truncf %324 : vector<8x128xf32> to vector<8x128xbf16>
    %327 = arith.truncf %310 : vector<128x32xf32> to vector<128x32xbf16>
    %cst_235 = arith.constant dense<0.000000e+00> : vector<8x32xf32>
    %328 = tpu.matmul %326, %327, %cst_235 {dimension_numbers = #tpu.dot_dimension_numbers<[1], [0], [0], [1], [0, 0, 1, 1], [], []>} : vector<8x128xbf16>, vector<128x32xbf16>, vector<8x32xf32> -> vector<8x32xf32>
    %329 = arith.truncf %328 : vector<8x32xf32> to vector<8x32xbf16>
    %c1_236 = arith.constant 1 : index
    %c1_237 = arith.constant 1 : index
    %c0_238 = arith.constant 0 : index
    %c0_239 = arith.constant 0 : index
    %330 = vector.load %arg12[%c1_236, %c1_237, %c0_238, %c0_239] : memref<2x4x32x128xbf16, #tpu.memory_space<vmem>>, vector<1x1x32x128xbf16>
    %331 = vector.shape_cast %330 : vector<1x1x32x128xbf16> to vector<32x128xbf16>
    %cst_240 = arith.constant dense<0.000000e+00> : vector<8x128xf32>
    %332 = tpu.matmul %329, %331, %cst_240 {dimension_numbers = #tpu.dot_dimension_numbers<[1], [0], [0], [1], [0, 0, 1, 1], [], []>} : vector<8x32xbf16>, vector<32x128xbf16>, vector<8x128xf32> -> vector<8x128xf32>
    %333 = arith.addf %289, %332 : vector<8x128xf32>
    %c1_241 = arith.constant 1 : index
    %c2_242 = arith.constant 2 : index
    %c0_243 = arith.constant 0 : index
    %c0_244 = arith.constant 0 : index
    %334 = vector.load %arg6[%c1_241, %c2_242, %c0_243, %c0_244] : memref<2x4x128x32xbf16, #tpu.memory_space<vmem>>, vector<1x1x128x32xbf16>
    %335 = vector.shape_cast %334 : vector<1x1x128x32xbf16> to vector<128x32xbf16>
    %cst_245 = arith.constant dense<0.000000e+00> : vector<8x32xf32>
    %336 = tpu.matmul %243, %335, %cst_245 {dimension_numbers = #tpu.dot_dimension_numbers<[1], [0], [0], [1], [0, 0, 1, 1], [], []>} : vector<8x128xbf16>, vector<128x32xbf16>, vector<8x32xf32> -> vector<8x32xf32>
    %c1_246 = arith.constant 1 : index
    %c2_247 = arith.constant 2 : index
    %c0_248 = arith.constant 0 : index
    %c0_249 = arith.constant 0 : index
    %337 = vector.load %arg7[%c1_246, %c2_247, %c0_248, %c0_249] : memref<2x4x1x32xf32, #tpu.memory_space<vmem>>, vector<1x1x1x32xf32>
    %338 = vector.shape_cast %337 : vector<1x1x1x32xf32> to vector<1x32xf32>
    %339 = vector.broadcast %338 : vector<1x32xf32> to vector<8x32xf32>
    %340 = arith.addf %336, %339 : vector<8x32xf32>
    %c1_250 = arith.constant 1 : index
    %c2_251 = arith.constant 2 : index
    %c0_252 = arith.constant 0 : index
    %c0_253 = arith.constant 0 : index
    %341 = vector.load %arg8[%c1_250, %c2_251, %c0_252, %c0_253] : memref<2x4x128x32xbf16, #tpu.memory_space<vmem>>, vector<1x1x128x32xbf16>
    %342 = vector.shape_cast %341 : vector<1x1x128x32xbf16> to vector<128x32xbf16>
    %cst_254 = arith.constant dense<0.000000e+00> : vector<128x32xf32>
    %343 = tpu.matmul %37, %342, %cst_254 {dimension_numbers = #tpu.dot_dimension_numbers<[1], [0], [0], [1], [0, 0, 1, 1], [], []>} : vector<128x128xbf16>, vector<128x32xbf16>, vector<128x32xf32> -> vector<128x32xf32>
    %c1_255 = arith.constant 1 : index
    %c2_256 = arith.constant 2 : index
    %c0_257 = arith.constant 0 : index
    %c0_258 = arith.constant 0 : index
    %344 = vector.load %arg9[%c1_255, %c2_256, %c0_257, %c0_258] : memref<2x4x1x32xf32, #tpu.memory_space<vmem>>, vector<1x1x1x32xf32>
    %345 = vector.shape_cast %344 : vector<1x1x1x32xf32> to vector<1x32xf32>
    %346 = vector.broadcast %345 : vector<1x32xf32> to vector<128x32xf32>
    %347 = arith.addf %343, %346 : vector<128x32xf32>
    %c1_259 = arith.constant 1 : index
    %c2_260 = arith.constant 2 : index
    %c0_261 = arith.constant 0 : index
    %c0_262 = arith.constant 0 : index
    %348 = vector.load %arg10[%c1_259, %c2_260, %c0_261, %c0_262] : memref<2x4x128x32xbf16, #tpu.memory_space<vmem>>, vector<1x1x128x32xbf16>
    %349 = vector.shape_cast %348 : vector<1x1x128x32xbf16> to vector<128x32xbf16>
    %cst_263 = arith.constant dense<0.000000e+00> : vector<128x32xf32>
    %350 = tpu.matmul %37, %349, %cst_263 {dimension_numbers = #tpu.dot_dimension_numbers<[1], [0], [0], [1], [0, 0, 1, 1], [], []>} : vector<128x128xbf16>, vector<128x32xbf16>, vector<128x32xf32> -> vector<128x32xf32>
    %c1_264 = arith.constant 1 : index
    %c2_265 = arith.constant 2 : index
    %c0_266 = arith.constant 0 : index
    %c0_267 = arith.constant 0 : index
    %351 = vector.load %arg11[%c1_264, %c2_265, %c0_266, %c0_267] : memref<2x4x1x32xf32, #tpu.memory_space<vmem>>, vector<1x1x1x32xf32>
    %352 = vector.shape_cast %351 : vector<1x1x1x32xf32> to vector<1x32xf32>
    %353 = vector.broadcast %352 : vector<1x32xf32> to vector<128x32xf32>
    %354 = arith.addf %350, %353 : vector<128x32xf32>
    %355 = arith.truncf %340 : vector<8x32xf32> to vector<8x32xbf16>
    %356 = arith.truncf %347 : vector<128x32xf32> to vector<128x32xbf16>
    %cst_268 = arith.constant dense<0.000000e+00> : vector<8x128xf32>
    %357 = tpu.matmul %355, %356, %cst_268 {dimension_numbers = #tpu.dot_dimension_numbers<[1], [1], [0], [0], [0, 0, 1, 0], [], []>} : vector<8x32xbf16>, vector<128x32xbf16>, vector<8x128xf32> -> vector<8x128xf32>
    %358 = arith.addf %357, %29 : vector<8x128xf32>
    %cst_269 = arith.constant dense<0xFF800000> : vector<8xf32>
    %359 = vector.multi_reduction <maximumf>, %358, %cst_269 [1] : vector<8x128xf32> to vector<8xf32>
    %360 = vector.shape_cast %359 : vector<8xf32> to vector<8x1xf32>
    %361 = vector.broadcast %360 : vector<8x1xf32> to vector<8x128xf32>
    %362 = arith.subf %358, %361 : vector<8x128xf32>
    %363 = math.exp %362 : vector<8x128xf32>
    %cst_270 = arith.constant dense<0.000000e+00> : vector<8xf32>
    %364 = vector.multi_reduction <add>, %363, %cst_270 [1] : vector<8x128xf32> to vector<8xf32>
    %365 = vector.shape_cast %364 : vector<8xf32> to vector<8x1xf32>
    %366 = tpu.reciprocal %365 {approx = true} : vector<8x1xf32> -> vector<8x1xf32>
    %367 = vector.broadcast %366 : vector<8x1xf32> to vector<8x128xf32>
    %368 = arith.mulf %363, %367 : vector<8x128xf32>
    %369 = arith.addf %325, %368 : vector<8x128xf32>
    %370 = arith.truncf %368 : vector<8x128xf32> to vector<8x128xbf16>
    %371 = arith.truncf %354 : vector<128x32xf32> to vector<128x32xbf16>
    %cst_271 = arith.constant dense<0.000000e+00> : vector<8x32xf32>
    %372 = tpu.matmul %370, %371, %cst_271 {dimension_numbers = #tpu.dot_dimension_numbers<[1], [0], [0], [1], [0, 0, 1, 1], [], []>} : vector<8x128xbf16>, vector<128x32xbf16>, vector<8x32xf32> -> vector<8x32xf32>
    %373 = arith.truncf %372 : vector<8x32xf32> to vector<8x32xbf16>
    %c1_272 = arith.constant 1 : index
    %c2_273 = arith.constant 2 : index
    %c0_274 = arith.constant 0 : index
    %c0_275 = arith.constant 0 : index
    %374 = vector.load %arg12[%c1_272, %c2_273, %c0_274, %c0_275] : memref<2x4x32x128xbf16, #tpu.memory_space<vmem>>, vector<1x1x32x128xbf16>
    %375 = vector.shape_cast %374 : vector<1x1x32x128xbf16> to vector<32x128xbf16>
    %cst_276 = arith.constant dense<0.000000e+00> : vector<8x128xf32>
    %376 = tpu.matmul %373, %375, %cst_276 {dimension_numbers = #tpu.dot_dimension_numbers<[1], [0], [0], [1], [0, 0, 1, 1], [], []>} : vector<8x32xbf16>, vector<32x128xbf16>, vector<8x128xf32> -> vector<8x128xf32>
    %377 = arith.addf %333, %376 : vector<8x128xf32>
    %c1_277 = arith.constant 1 : index
    %c3_278 = arith.constant 3 : index
    %c0_279 = arith.constant 0 : index
    %c0_280 = arith.constant 0 : index
    %378 = vector.load %arg6[%c1_277, %c3_278, %c0_279, %c0_280] : memref<2x4x128x32xbf16, #tpu.memory_space<vmem>>, vector<1x1x128x32xbf16>
    %379 = vector.shape_cast %378 : vector<1x1x128x32xbf16> to vector<128x32xbf16>
    %cst_281 = arith.constant dense<0.000000e+00> : vector<8x32xf32>
    %380 = tpu.matmul %243, %379, %cst_281 {dimension_numbers = #tpu.dot_dimension_numbers<[1], [0], [0], [1], [0, 0, 1, 1], [], []>} : vector<8x128xbf16>, vector<128x32xbf16>, vector<8x32xf32> -> vector<8x32xf32>
    %c1_282 = arith.constant 1 : index
    %c3_283 = arith.constant 3 : index
    %c0_284 = arith.constant 0 : index
    %c0_285 = arith.constant 0 : index
    %381 = vector.load %arg7[%c1_282, %c3_283, %c0_284, %c0_285] : memref<2x4x1x32xf32, #tpu.memory_space<vmem>>, vector<1x1x1x32xf32>
    %382 = vector.shape_cast %381 : vector<1x1x1x32xf32> to vector<1x32xf32>
    %383 = vector.broadcast %382 : vector<1x32xf32> to vector<8x32xf32>
    %384 = arith.addf %380, %383 : vector<8x32xf32>
    %c1_286 = arith.constant 1 : index
    %c3_287 = arith.constant 3 : index
    %c0_288 = arith.constant 0 : index
    %c0_289 = arith.constant 0 : index
    %385 = vector.load %arg8[%c1_286, %c3_287, %c0_288, %c0_289] : memref<2x4x128x32xbf16, #tpu.memory_space<vmem>>, vector<1x1x128x32xbf16>
    %386 = vector.shape_cast %385 : vector<1x1x128x32xbf16> to vector<128x32xbf16>
    %cst_290 = arith.constant dense<0.000000e+00> : vector<128x32xf32>
    %387 = tpu.matmul %37, %386, %cst_290 {dimension_numbers = #tpu.dot_dimension_numbers<[1], [0], [0], [1], [0, 0, 1, 1], [], []>} : vector<128x128xbf16>, vector<128x32xbf16>, vector<128x32xf32> -> vector<128x32xf32>
    %c1_291 = arith.constant 1 : index
    %c3_292 = arith.constant 3 : index
    %c0_293 = arith.constant 0 : index
    %c0_294 = arith.constant 0 : index
    %388 = vector.load %arg9[%c1_291, %c3_292, %c0_293, %c0_294] : memref<2x4x1x32xf32, #tpu.memory_space<vmem>>, vector<1x1x1x32xf32>
    %389 = vector.shape_cast %388 : vector<1x1x1x32xf32> to vector<1x32xf32>
    %390 = vector.broadcast %389 : vector<1x32xf32> to vector<128x32xf32>
    %391 = arith.addf %387, %390 : vector<128x32xf32>
    %c1_295 = arith.constant 1 : index
    %c3_296 = arith.constant 3 : index
    %c0_297 = arith.constant 0 : index
    %c0_298 = arith.constant 0 : index
    %392 = vector.load %arg10[%c1_295, %c3_296, %c0_297, %c0_298] : memref<2x4x128x32xbf16, #tpu.memory_space<vmem>>, vector<1x1x128x32xbf16>
    %393 = vector.shape_cast %392 : vector<1x1x128x32xbf16> to vector<128x32xbf16>
    %cst_299 = arith.constant dense<0.000000e+00> : vector<128x32xf32>
    %394 = tpu.matmul %37, %393, %cst_299 {dimension_numbers = #tpu.dot_dimension_numbers<[1], [0], [0], [1], [0, 0, 1, 1], [], []>} : vector<128x128xbf16>, vector<128x32xbf16>, vector<128x32xf32> -> vector<128x32xf32>
    %c1_300 = arith.constant 1 : index
    %c3_301 = arith.constant 3 : index
    %c0_302 = arith.constant 0 : index
    %c0_303 = arith.constant 0 : index
    %395 = vector.load %arg11[%c1_300, %c3_301, %c0_302, %c0_303] : memref<2x4x1x32xf32, #tpu.memory_space<vmem>>, vector<1x1x1x32xf32>
    %396 = vector.shape_cast %395 : vector<1x1x1x32xf32> to vector<1x32xf32>
    %397 = vector.broadcast %396 : vector<1x32xf32> to vector<128x32xf32>
    %398 = arith.addf %394, %397 : vector<128x32xf32>
    %399 = arith.truncf %384 : vector<8x32xf32> to vector<8x32xbf16>
    %400 = arith.truncf %391 : vector<128x32xf32> to vector<128x32xbf16>
    %cst_304 = arith.constant dense<0.000000e+00> : vector<8x128xf32>
    %401 = tpu.matmul %399, %400, %cst_304 {dimension_numbers = #tpu.dot_dimension_numbers<[1], [1], [0], [0], [0, 0, 1, 0], [], []>} : vector<8x32xbf16>, vector<128x32xbf16>, vector<8x128xf32> -> vector<8x128xf32>
    %402 = arith.addf %401, %29 : vector<8x128xf32>
    %cst_305 = arith.constant dense<0xFF800000> : vector<8xf32>
    %403 = vector.multi_reduction <maximumf>, %402, %cst_305 [1] : vector<8x128xf32> to vector<8xf32>
    %404 = vector.shape_cast %403 : vector<8xf32> to vector<8x1xf32>
    %405 = vector.broadcast %404 : vector<8x1xf32> to vector<8x128xf32>
    %406 = arith.subf %402, %405 : vector<8x128xf32>
    %407 = math.exp %406 : vector<8x128xf32>
    %cst_306 = arith.constant dense<0.000000e+00> : vector<8xf32>
    %408 = vector.multi_reduction <add>, %407, %cst_306 [1] : vector<8x128xf32> to vector<8xf32>
    %409 = vector.shape_cast %408 : vector<8xf32> to vector<8x1xf32>
    %410 = tpu.reciprocal %409 {approx = true} : vector<8x1xf32> -> vector<8x1xf32>
    %411 = vector.broadcast %410 : vector<8x1xf32> to vector<8x128xf32>
    %412 = arith.mulf %407, %411 : vector<8x128xf32>
    %413 = arith.addf %369, %412 : vector<8x128xf32>
    %414 = arith.truncf %412 : vector<8x128xf32> to vector<8x128xbf16>
    %415 = arith.truncf %398 : vector<128x32xf32> to vector<128x32xbf16>
    %cst_307 = arith.constant dense<0.000000e+00> : vector<8x32xf32>
    %416 = tpu.matmul %414, %415, %cst_307 {dimension_numbers = #tpu.dot_dimension_numbers<[1], [0], [0], [1], [0, 0, 1, 1], [], []>} : vector<8x128xbf16>, vector<128x32xbf16>, vector<8x32xf32> -> vector<8x32xf32>
    %417 = arith.truncf %416 : vector<8x32xf32> to vector<8x32xbf16>
    %c1_308 = arith.constant 1 : index
    %c3_309 = arith.constant 3 : index
    %c0_310 = arith.constant 0 : index
    %c0_311 = arith.constant 0 : index
    %418 = vector.load %arg12[%c1_308, %c3_309, %c0_310, %c0_311] : memref<2x4x32x128xbf16, #tpu.memory_space<vmem>>, vector<1x1x32x128xbf16>
    %419 = vector.shape_cast %418 : vector<1x1x32x128xbf16> to vector<32x128xbf16>
    %cst_312 = arith.constant dense<0.000000e+00> : vector<8x128xf32>
    %420 = tpu.matmul %417, %419, %cst_312 {dimension_numbers = #tpu.dot_dimension_numbers<[1], [0], [0], [1], [0, 0, 1, 1], [], []>} : vector<8x32xbf16>, vector<32x128xbf16>, vector<8x128xf32> -> vector<8x128xf32>
    %421 = arith.addf %377, %420 : vector<8x128xf32>
    %c1_313 = arith.constant 1 : index
    %c0_314 = arith.constant 0 : index
    %c0_315 = arith.constant 0 : index
    %422 = vector.load %arg13[%c1_313, %c0_314, %c0_315] : memref<2x1x128xf32, #tpu.memory_space<vmem>>, vector<1x1x128xf32>
    %423 = vector.shape_cast %422 : vector<1x1x128xf32> to vector<1x128xf32>
    %424 = vector.broadcast %423 : vector<1x128xf32> to vector<8x128xf32>
    %425 = arith.addf %421, %424 : vector<8x128xf32>
    %426 = arith.truncf %425 : vector<8x128xf32> to vector<8x128xbf16>
    %c1_316 = arith.constant 1 : index
    %c0_317 = arith.constant 0 : index
    %c0_318 = arith.constant 0 : index
    %427 = vector.load %arg14[%c1_316, %c0_317, %c0_318] : memref<2x128x256xbf16, #tpu.memory_space<vmem>>, vector<1x128x256xbf16>
    %428 = vector.shape_cast %427 : vector<1x128x256xbf16> to vector<128x256xbf16>
    %cst_319 = arith.constant dense<0.000000e+00> : vector<8x256xf32>
    %429 = tpu.matmul %426, %428, %cst_319 {dimension_numbers = #tpu.dot_dimension_numbers<[1], [0], [0], [1], [0, 0, 1, 1], [], []>} : vector<8x128xbf16>, vector<128x256xbf16>, vector<8x256xf32> -> vector<8x256xf32>
    %c1_320 = arith.constant 1 : index
    %c0_321 = arith.constant 0 : index
    %c0_322 = arith.constant 0 : index
    %430 = vector.load %arg15[%c1_320, %c0_321, %c0_322] : memref<2x1x256xf32, #tpu.memory_space<vmem>>, vector<1x1x256xf32>
    %431 = vector.shape_cast %430 : vector<1x1x256xf32> to vector<1x256xf32>
    %432 = vector.broadcast %431 : vector<1x256xf32> to vector<8x256xf32>
    %433 = arith.addf %429, %432 : vector<8x256xf32>
    %434 = vector.extract_strided_slice %433 {offsets = [0, 0], sizes = [8, 128], strides = [1, 1]} : vector<8x256xf32> to vector<8x128xf32>
    %435 = vector.extract_strided_slice %433 {offsets = [0, 128], sizes = [8, 128], strides = [1, 1]} : vector<8x256xf32> to vector<8x128xf32>
    %436 = arith.negf %435 : vector<8x128xf32>
    %437 = math.exp %436 : vector<8x128xf32>
    %cst_323 = arith.constant 1.000000e+00 : f32
    %438 = vector.broadcast %cst_323 : f32 to vector<8x128xf32>
    %439 = arith.addf %438, %437 : vector<8x128xf32>
    %440 = arith.divf %438, %439 : vector<8x128xf32>
    %441 = arith.mulf %434, %440 : vector<8x128xf32>
    %442 = arith.addf %441, %425 : vector<8x128xf32>
    %443 = arith.addf %238, %442 : vector<8x128xf32>
    %444 = arith.mulf %413, %31 : vector<8x128xf32>
    %c0_324 = arith.constant 0 : index
    %c1_325 = arith.constant 1 : index
    %c0_326 = arith.constant 0 : index
    %c0_327 = arith.constant 0 : index
    %445 = vector.load %arg17[%c0_324, %c1_325, %c0_326, %c0_327] : memref<1x2x8x128xf32, #tpu.memory_space<vmem>>, vector<1x1x8x128xf32>
    %446 = vector.shape_cast %445 : vector<1x1x8x128xf32> to vector<8x128xf32>
    %447 = vector.shape_cast %444 : vector<8x128xf32> to vector<1x1x8x128xf32>
    tpu.vector_store %arg17[%c0_324, %c1_325, %c0_326, %c0_327], %447 {strides = array<i32>} : memref<1x2x8x128xf32, #tpu.memory_space<vmem>>, vector<1x1x8x128xf32>,
    %448 = vector.broadcast %11 : vector<8x1xf32> to vector<8x128xf32>
    %449 = arith.mulf %443, %448 : vector<8x128xf32>
    %c0_328 = arith.constant 0 : index
    %c0_329 = arith.constant 0 : index
    %c0_330 = arith.constant 0 : index
    %450 = vector.load %arg16[%c0_328, %c0_329, %c0_330] : memref<1x8x128xf32, #tpu.memory_space<vmem>>, vector<1x8x128xf32>
    %451 = vector.shape_cast %450 : vector<1x8x128xf32> to vector<8x128xf32>
    %452 = vector.shape_cast %449 : vector<8x128xf32> to vector<1x8x128xf32>
    tpu.vector_store %arg16[%c0_328, %c0_329, %c0_330], %452 {strides = array<i32>} : memref<1x8x128xf32, #tpu.memory_space<vmem>>, vector<1x8x128xf32>,
    return
  }
  func.func @transform_0(%arg0: i32, %arg1: i32, %arg2: memref<2xi32, #tpu.memory_space<smem>>, %arg3: memref<2xi32, #tpu.memory_space<smem>>) -> (i32, i32, i32) {
    %c0_i32 = arith.constant 0 : i32
    %c0_i32_0 = arith.constant 0 : i32
    return %arg0, %arg1, %c0_i32 : i32, i32, i32
  }
  func.func @transform_1(%arg0: i32, %arg1: i32, %arg2: memref<2xi32, #tpu.memory_space<smem>>, %arg3: memref<2xi32, #tpu.memory_space<smem>>) -> (i32, i32, i32) {
    %c0_i32 = arith.constant 0 : i32
    %c0_i32_0 = arith.constant 0 : i32
    %c0_i32_1 = arith.constant 0 : i32
    return %arg0, %c0_i32, %c0_i32_0 : i32, i32, i32
  }
  func.func @transform_2(%arg0: i32, %arg1: i32, %arg2: memref<2xi32, #tpu.memory_space<smem>>, %arg3: memref<2xi32, #tpu.memory_space<smem>>) -> (i32, i32, i32, i32) {
    %c0_i32 = arith.constant 0 : i32
    %c0_i32_0 = arith.constant 0 : i32
    %c0_i32_1 = arith.constant 0 : i32
    %c0_i32_2 = arith.constant 0 : i32
    %c0_i32_3 = arith.constant 0 : i32
    return %c0_i32, %c0_i32_0, %c0_i32_1, %c0_i32_2 : i32, i32, i32, i32
  }
  func.func @transform_3(%arg0: i32, %arg1: i32, %arg2: memref<2xi32, #tpu.memory_space<smem>>, %arg3: memref<2xi32, #tpu.memory_space<smem>>) -> (i32, i32, i32, i32) {
    %c0_i32 = arith.constant 0 : i32
    %c0_i32_0 = arith.constant 0 : i32
    %c0_i32_1 = arith.constant 0 : i32
    %c0_i32_2 = arith.constant 0 : i32
    %c0_i32_3 = arith.constant 0 : i32
    return %c0_i32, %c0_i32_0, %c0_i32_1, %c0_i32_2 : i32, i32, i32, i32
  }
  func.func @transform_4(%arg0: i32, %arg1: i32, %arg2: memref<2xi32, #tpu.memory_space<smem>>, %arg3: memref<2xi32, #tpu.memory_space<smem>>) -> (i32, i32, i32, i32) {
    %c0_i32 = arith.constant 0 : i32
    %c0_i32_0 = arith.constant 0 : i32
    %c0_i32_1 = arith.constant 0 : i32
    %c0_i32_2 = arith.constant 0 : i32
    %c0_i32_3 = arith.constant 0 : i32
    return %c0_i32, %c0_i32_0, %c0_i32_1, %c0_i32_2 : i32, i32, i32, i32
  }
  func.func @transform_5(%arg0: i32, %arg1: i32, %arg2: memref<2xi32, #tpu.memory_space<smem>>, %arg3: memref<2xi32, #tpu.memory_space<smem>>) -> (i32, i32, i32, i32) {
    %c0_i32 = arith.constant 0 : i32
    %c0_i32_0 = arith.constant 0 : i32
    %c0_i32_1 = arith.constant 0 : i32
    %c0_i32_2 = arith.constant 0 : i32
    %c0_i32_3 = arith.constant 0 : i32
    return %c0_i32, %c0_i32_0, %c0_i32_1, %c0_i32_2 : i32, i32, i32, i32
  }
  func.func @transform_6(%arg0: i32, %arg1: i32, %arg2: memref<2xi32, #tpu.memory_space<smem>>, %arg3: memref<2xi32, #tpu.memory_space<smem>>) -> (i32, i32, i32, i32) {
    %c0_i32 = arith.constant 0 : i32
    %c0_i32_0 = arith.constant 0 : i32
    %c0_i32_1 = arith.constant 0 : i32
    %c0_i32_2 = arith.constant 0 : i32
    %c0_i32_3 = arith.constant 0 : i32
    return %c0_i32, %c0_i32_0, %c0_i32_1, %c0_i32_2 : i32, i32, i32, i32
  }
  func.func @transform_7(%arg0: i32, %arg1: i32, %arg2: memref<2xi32, #tpu.memory_space<smem>>, %arg3: memref<2xi32, #tpu.memory_space<smem>>) -> (i32, i32, i32, i32) {
    %c0_i32 = arith.constant 0 : i32
    %c0_i32_0 = arith.constant 0 : i32
    %c0_i32_1 = arith.constant 0 : i32
    %c0_i32_2 = arith.constant 0 : i32
    %c0_i32_3 = arith.constant 0 : i32
    return %c0_i32, %c0_i32_0, %c0_i32_1, %c0_i32_2 : i32, i32, i32, i32
  }
  func.func @transform_8(%arg0: i32, %arg1: i32, %arg2: memref<2xi32, #tpu.memory_space<smem>>, %arg3: memref<2xi32, #tpu.memory_space<smem>>) -> (i32, i32, i32, i32) {
    %c0_i32 = arith.constant 0 : i32
    %c0_i32_0 = arith.constant 0 : i32
    %c0_i32_1 = arith.constant 0 : i32
    %c0_i32_2 = arith.constant 0 : i32
    %c0_i32_3 = arith.constant 0 : i32
    return %c0_i32, %c0_i32_0, %c0_i32_1, %c0_i32_2 : i32, i32, i32, i32
  }
  func.func @transform_9(%arg0: i32, %arg1: i32, %arg2: memref<2xi32, #tpu.memory_space<smem>>, %arg3: memref<2xi32, #tpu.memory_space<smem>>) -> (i32, i32, i32) {
    %c0_i32 = arith.constant 0 : i32
    %c0_i32_0 = arith.constant 0 : i32
    %c0_i32_1 = arith.constant 0 : i32
    %c0_i32_2 = arith.constant 0 : i32
    return %c0_i32, %c0_i32_0, %c0_i32_1 : i32, i32, i32
  }
  func.func @transform_10(%arg0: i32, %arg1: i32, %arg2: memref<2xi32, #tpu.memory_space<smem>>, %arg3: memref<2xi32, #tpu.memory_space<smem>>) -> (i32, i32, i32) {
    %c0_i32 = arith.constant 0 : i32
    %c0_i32_0 = arith.constant 0 : i32
    %c0_i32_1 = arith.constant 0 : i32
    %c0_i32_2 = arith.constant 0 : i32
    return %c0_i32, %c0_i32_0, %c0_i32_1 : i32, i32, i32
  }
  func.func @transform_11(%arg0: i32, %arg1: i32, %arg2: memref<2xi32, #tpu.memory_space<smem>>, %arg3: memref<2xi32, #tpu.memory_space<smem>>) -> (i32, i32, i32) {
    %c0_i32 = arith.constant 0 : i32
    %c0_i32_0 = arith.constant 0 : i32
    %c0_i32_1 = arith.constant 0 : i32
    %c0_i32_2 = arith.constant 0 : i32
    return %c0_i32, %c0_i32_0, %c0_i32_1 : i32, i32, i32
  }
  func.func @transform_12(%arg0: i32, %arg1: i32, %arg2: memref<2xi32, #tpu.memory_space<smem>>, %arg3: memref<2xi32, #tpu.memory_space<smem>>) -> (i32, i32, i32) {
    %c0_i32 = arith.constant 0 : i32
    %c0_i32_0 = arith.constant 0 : i32
    return %arg0, %arg1, %c0_i32 : i32, i32, i32
  }
  func.func @transform_13(%arg0: i32, %arg1: i32, %arg2: memref<2xi32, #tpu.memory_space<smem>>, %arg3: memref<2xi32, #tpu.memory_space<smem>>) -> (i32, i32, i32, i32) {
    %c0_i32 = arith.constant 0 : i32
    %c0_i32_0 = arith.constant 0 : i32
    %c0_i32_1 = arith.constant 0 : i32
    return %arg0, %c0_i32, %arg1, %c0_i32_0 : i32, i32, i32, i32
  }
}

</mosaic_0001>

<llo_original>
// kernel: tpu_custom_call.1
$region0: #{tpu_custom_call.1}
  #allocation0 [shape = 'u32[]', space=smem, size = 0x4, offset = 0x4, fixed_abs, tag = 'smem constant byte address 0x4 - core index']
  #allocation1 [shape = 'u32[144,128]{1,0:T(1,128)}', space=vmem, size = 0x12000, scoped, tag = 'internal scratch']
  #allocation2 [shape = 's32[1]{0}', space=sflag, size = 0x4, scoped, tag = 'scoped memory for tpu_custom_call.1']
  #allocation3 [shape = 'u8[512]{0}', space=smem, size = 0x200, scoped, tag = 'prefetched SMEM operand 0']
  #allocation4 [shape = 'u8[512]{0}', space=smem, size = 0x200, scoped, tag = 'prefetched SMEM operand 1']
  %s0 = inlined_call_operand.vmem [shape: s32[2], index: 0, kind: input, shape index: {}]
  %s1 = inlined_call_operand.vmem [shape: s32[2], index: 1, kind: input, shape index: {}]
  %s2 = inlined_call_operand.vmem [shape: f32[2,8,128], index: 2, kind: input, shape index: {}]
  %s3 = inlined_call_operand.vmem [shape: bf16[2,128,128], index: 3, kind: input, shape index: {}]
  %s4 = inlined_call_operand.vmem [shape: bf16[2,4,128,32], index: 4, kind: input, shape index: {}]
  %s5 = inlined_call_operand.vmem [shape: f32[2,4,1,32], index: 5, kind: input, shape index: {}]
  %s6 = inlined_call_operand.vmem [shape: bf16[2,4,128,32], index: 6, kind: input, shape index: {}]
  %s7 = inlined_call_operand.vmem [shape: f32[2,4,1,32], index: 7, kind: input, shape index: {}]
  %s8 = inlined_call_operand.vmem [shape: bf16[2,4,128,32], index: 8, kind: input, shape index: {}]
  %s9 = inlined_call_operand.vmem [shape: f32[2,4,1,32], index: 9, kind: input, shape index: {}]
  %s10 = inlined_call_operand.vmem [shape: bf16[2,4,32,128], index: 10, kind: input, shape index: {}]
  %s11 = inlined_call_operand.vmem [shape: f32[2,1,128], index: 11, kind: input, shape index: {}]
  %s12 = inlined_call_operand.vmem [shape: bf16[2,128,256], index: 12, kind: input, shape index: {}]
  %s13 = inlined_call_operand.vmem [shape: f32[2,1,256], index: 13, kind: input, shape index: {}]
  %s14 = inlined_call_operand.hbm [shape: f32[2,8,128], index: 14, kind: output, shape index: {0}]
  %s15 = inlined_call_operand.hbm [shape: f32[2,2,8,128], index: 15, kind: output, shape index: {1}]
  %16 = xla_tuple %s14, %s15
  %s17 = sld [smem:[#allocation0]]
  $region89: #{tpu_custom_call.1} parent=0
    _
  %s19 = ssub.s32 1, %s17
  %s20 = scalar_select 0, %s19, %s17
  %s21 = sshll.u32 %s0, 4
  %s22 = int_to_ptr.vmem [resolvable:$true] %s21
  %24 = dma.vmem_to_smem %s22, 16, [#allocation3], [#allocation2]
  %s25 = sshll.u32 %s1, 4
  %s26 = int_to_ptr.vmem [resolvable:$true] %s25
  %28 = dma.vmem_to_smem %s26, 16, [#allocation4], [#allocation2]
  %29 = dma.done [#allocation2], 32
  %30 = sfence
  $region1: #{tpu_custom_call.1} parent=0
    #allocation5 [shape = 'u8[8192]{0}', space=vmem, size = 0x2000, scoped, tag = 'output window, operand 0']
    #allocation6 [shape = 's32[2]{0}', space=sflag, size = 0x8, scoped, tag = 'scoped memory for tpu_custom_call.1']
    #allocation7 [shape = 'u8[16384]{0}', space=vmem, size = 0x4000, scoped, tag = 'output window, operand 1']
    #allocation8 [shape = 's32[2]{0}', space=sflag, size = 0x8, scoped, tag = 'scoped memory for tpu_custom_call.1']
    %31 = vsyncpa [#allocation6], 0
    %s32 = scalar_lea.sflag [#allocation6], 1
    %33 = vsyncpa %s32, 0
    %34 = vsyncpa [#allocation8], 0
    %s35 = scalar_lea.sflag [#allocation8], 1
    %36 = vsyncpa %s35, 0
    loop: start=0, step=1, limit=4
    $region2: #{tpu_custom_call.1} parent=1 // loop_pre_header
      _
    $region3: #{tpu_custom_call.1} parent=1 // loop_header
      %s38 = sphi 0, %s42
      %p39 = scmp.ge.s32.totalorder %s38, 4
      %s45 = sphi 0, %s57
      %s46 = sphi 0, %s53
      %s47 = sphi 0, %s45
      %s48 = sphi 0, %s46
      %s49 = sphi 0, %s47
      %s50 = sphi 0, %s48
      %s62 = sphi 0, %s64
      %s65 = sphi 0, %s62
      %s66 = sphi 0, %s65
      %s82 = sphi 0, %s66
      %s88 = sphi 0, %s90
      %s91 = sphi 0, %s88
      %s92 = sphi 0, %s91
      %s108 = sphi 0, %s92
      %s112 = sphi 0, %s112
      %s114 = sphi 0, %s112
      %s115 = sphi 0, %s114
      %s129 = sphi 0, %s115
      %s133 = sphi 0, %s133
      %s135 = sphi 0, %s133
      %s136 = sphi 0, %s135
      %s150 = sphi 0, %s136
      %s154 = sphi 0, %s154
      %s156 = sphi 0, %s154
      %s157 = sphi 0, %s156
      %s171 = sphi 0, %s157
      %s175 = sphi 0, %s175
      %s177 = sphi 0, %s175
      %s178 = sphi 0, %s177
      %s192 = sphi 0, %s178
      %s196 = sphi 0, %s196
      %s198 = sphi 0, %s196
      %s199 = sphi 0, %s198
      %s213 = sphi 0, %s199
      %s217 = sphi 0, %s217
      %s219 = sphi 0, %s217
      %s220 = sphi 0, %s219
      %s234 = sphi 0, %s220
      %s238 = sphi 0, %s238
      %s240 = sphi 0, %s238
      %s241 = sphi 0, %s240
      %s255 = sphi 0, %s241
      %s259 = sphi 0, %s259
      %s261 = sphi 0, %s259
      %s262 = sphi 0, %s261
      %s276 = sphi 0, %s262
      %s280 = sphi 0, %s280
      %s282 = sphi 0, %s280
      %s283 = sphi 0, %s282
      %s297 = sphi 0, %s283
      %s301 = sphi 0, %s301
      %s303 = sphi 0, %s301
      %s304 = sphi 0, %s303
      %s318 = sphi 0, %s304
      %s326 = sphi 0, %s328
      %s329 = sphi 0, %s326
      %s330 = sphi 0, %s329
      %s346 = sphi 0, %s330
      %s354 = sphi 0, %s356
      %s357 = sphi 0, %s354
      %s358 = sphi 0, %s357
      %s374 = sphi 0, %s358
    $region4: #{tpu_custom_call.1} parent=1 // loop_header_branch
      %41 = sbr.rel (%p39) target = $region8
    $region5: #{tpu_custom_call.1} parent=1 // loop_body
      %s43 = ssub.s32 %s38, 1
      %s44 = ssub.s32 %s38, 2
      %s51 = sadd.s32 1, %s46
      %p52 = scmp.ge.s32.totalorder %s51, 1
      %s53 = scalar_select %p52, 0, %s51
      %s54 = sadd.s32 1, %s45
      %s55 = scalar_select %p52, %s54, %s45
      %p56 = scmp.ge.s32.totalorder %s55, 2
      %s57 = scalar_select %p56, 0, %s55
      %s58 = ssub.s32 %s45, %s57
      %s59 = ssub.s32 %s46, %s53
      %s60 = sor.u32 %s58, %s59
      %p61 = scmp.eq.s32.totalorder %s60, 0
      %s63 = sadd.s32 %s62, 1
      %s64 = scalar_select %p61, %s62, %s63
      %p67 = pneg %p61
      %p68 = scmp.eq.s32.totalorder %s38, 1
      %p69 = por %p67, %p68
      %p70 = scmp.ne.s32.totalorder %s62, %s65
      %p71 = scmp.eq.s32.totalorder %s38, 0
      %p72 = por %p70, %p71
      %p73 = scmp.ne.s32.totalorder %s62, %s65
      %p74 = scmp.eq.s32.totalorder %s43, 1
      %p75 = por %p73, %p74
      %p76 = scmp.ne.s32.totalorder %s65, %s66
      %p77 = scmp.eq.s32.totalorder %s43, 0
      %p78 = por %p76, %p77
      %p79 = scmp.ne.s32.totalorder %s65, %s66
      %p80 = scmp.eq.s32.totalorder %s44, 1
      %p81 = por %p79, %p80
      %p83 = scmp.ne.s32.totalorder %s66, %s82
      %p84 = scmp.eq.s32.totalorder %s44, 0
      %p85 = por %p83, %p84
      %s86 = ssub.s32 %s45, %s57
      %p87 = scmp.eq.s32.totalorder %s86, 0
      %s89 = sadd.s32 %s88, 1
      %s90 = scalar_select %p87, %s88, %s89
      %p93 = pneg %p87
      %p94 = scmp.eq.s32.totalorder %s38, 1
      %p95 = por %p93, %p94
      %p96 = scmp.ne.s32.totalorder %s88, %s91
      %p97 = scmp.eq.s32.totalorder %s38, 0
      %p98 = por %p96, %p97
      %p99 = scmp.ne.s32.totalorder %s88, %s91
      %p100 = scmp.eq.s32.totalorder %s43, 1
      %p101 = por %p99, %p100
      %p102 = scmp.ne.s32.totalorder %s91, %s92
      %p103 = scmp.eq.s32.totalorder %s43, 0
      %p104 = por %p102, %p103
      %p105 = scmp.ne.s32.totalorder %s91, %s92
      %p106 = scmp.eq.s32.totalorder %s44, 1
      %p107 = por %p105, %p106
      %p109 = scmp.ne.s32.totalorder %s92, %s108
      %p110 = scmp.eq.s32.totalorder %s44, 0
      %p111 = por %p109, %p110
      %s113 = sadd.s32 %s112, 1
      %p116 = scmp.eq.s32.totalorder %s38, 1
      %p117 = scmp.ne.s32.totalorder %s112, %s114
      %p118 = scmp.eq.s32.totalorder %s38, 0
      %p119 = por %p117, %p118
      %p120 = scmp.ne.s32.totalorder %s112, %s114
      %p121 = scmp.eq.s32.totalorder %s43, 1
      %p122 = por %p120, %p121
      %p123 = scmp.ne.s32.totalorder %s114, %s115
      %p124 = scmp.eq.s32.totalorder %s43, 0
      %p125 = por %p123, %p124
      %p126 = scmp.ne.s32.totalorder %s114, %s115
      %p127 = scmp.eq.s32.totalorder %s44, 1
      %p128 = por %p126, %p127
      %p130 = scmp.ne.s32.totalorder %s115, %s129
      %p131 = scmp.eq.s32.totalorder %s44, 0
      %p132 = por %p130, %p131
      %s134 = sadd.s32 %s133, 1
      %p137 = scmp.eq.s32.totalorder %s38, 1
      %p138 = scmp.ne.s32.totalorder %s133, %s135
      %p139 = scmp.eq.s32.totalorder %s38, 0
      %p140 = por %p138, %p139
      %p141 = scmp.ne.s32.totalorder %s133, %s135
      %p142 = scmp.eq.s32.totalorder %s43, 1
      %p143 = por %p141, %p142
      %p144 = scmp.ne.s32.totalorder %s135, %s136
      %p145 = scmp.eq.s32.totalorder %s43, 0
      %p146 = por %p144, %p145
      %p147 = scmp.ne.s32.totalorder %s135, %s136
      %p148 = scmp.eq.s32.totalorder %s44, 1
      %p149 = por %p147, %p148
      %p151 = scmp.ne.s32.totalorder %s136, %s150
      %p152 = scmp.eq.s32.totalorder %s44, 0
      %p153 = por %p151, %p152
      %s155 = sadd.s32 %s154, 1
      %p158 = scmp.eq.s32.totalorder %s38, 1
      %p159 = scmp.ne.s32.totalorder %s154, %s156
      %p160 = scmp.eq.s32.totalorder %s38, 0
      %p161 = por %p159, %p160
      %p162 = scmp.ne.s32.totalorder %s154, %s156
      %p163 = scmp.eq.s32.totalorder %s43, 1
      %p164 = por %p162, %p163
      %p165 = scmp.ne.s32.totalorder %s156, %s157
      %p166 = scmp.eq.s32.totalorder %s43, 0
      %p167 = por %p165, %p166
      %p168 = scmp.ne.s32.totalorder %s156, %s157
      %p169 = scmp.eq.s32.totalorder %s44, 1
      %p170 = por %p168, %p169
      %p172 = scmp.ne.s32.totalorder %s157, %s171
      %p173 = scmp.eq.s32.totalorder %s44, 0
      %p174 = por %p172, %p173
      %s176 = sadd.s32 %s175, 1
      %p179 = scmp.eq.s32.totalorder %s38, 1
      %p180 = scmp.ne.s32.totalorder %s175, %s177
      %p181 = scmp.eq.s32.totalorder %s38, 0
      %p182 = por %p180, %p181
      %p183 = scmp.ne.s32.totalorder %s175, %s177
      %p184 = scmp.eq.s32.totalorder %s43, 1
      %p185 = por %p183, %p184
      %p186 = scmp.ne.s32.totalorder %s177, %s178
      %p187 = scmp.eq.s32.totalorder %s43, 0
      %p188 = por %p186, %p187
      %p189 = scmp.ne.s32.totalorder %s177, %s178
      %p190 = scmp.eq.s32.totalorder %s44, 1
      %p191 = por %p189, %p190
      %p193 = scmp.ne.s32.totalorder %s178, %s192
      %p194 = scmp.eq.s32.totalorder %s44, 0
      %p195 = por %p193, %p194
      %s197 = sadd.s32 %s196, 1
      %p200 = scmp.eq.s32.totalorder %s38, 1
      %p201 = scmp.ne.s32.totalorder %s196, %s198
      %p202 = scmp.eq.s32.totalorder %s38, 0
      %p203 = por %p201, %p202
      %p204 = scmp.ne.s32.totalorder %s196, %s198
      %p205 = scmp.eq.s32.totalorder %s43, 1
      %p206 = por %p204, %p205
      %p207 = scmp.ne.s32.totalorder %s198, %s199
      %p208 = scmp.eq.s32.totalorder %s43, 0
      %p209 = por %p207, %p208
      %p210 = scmp.ne.s32.totalorder %s198, %s199
      %p211 = scmp.eq.s32.totalorder %s44, 1
      %p212 = por %p210, %p211
      %p214 = scmp.ne.s32.totalorder %s199, %s213
      %p215 = scmp.eq.s32.totalorder %s44, 0
      %p216 = por %p214, %p215
      %s218 = sadd.s32 %s217, 1
      %p221 = scmp.eq.s32.totalorder %s38, 1
      %p222 = scmp.ne.s32.totalorder %s217, %s219
      %p223 = scmp.eq.s32.totalorder %s38, 0
      %p224 = por %p222, %p223
      %p225 = scmp.ne.s32.totalorder %s217, %s219
      %p226 = scmp.eq.s32.totalorder %s43, 1
      %p227 = por %p225, %p226
      %p228 = scmp.ne.s32.totalorder %s219, %s220
      %p229 = scmp.eq.s32.totalorder %s43, 0
      %p230 = por %p228, %p229
      %p231 = scmp.ne.s32.totalorder %s219, %s220
      %p232 = scmp.eq.s32.totalorder %s44, 1
      %p233 = por %p231, %p232
      %p235 = scmp.ne.s32.totalorder %s220, %s234
      %p236 = scmp.eq.s32.totalorder %s44, 0
      %p237 = por %p235, %p236
      %s239 = sadd.s32 %s238, 1
      %p242 = scmp.eq.s32.totalorder %s38, 1
      %p243 = scmp.ne.s32.totalorder %s238, %s240
      %p244 = scmp.eq.s32.totalorder %s38, 0
      %p245 = por %p243, %p244
      %p246 = scmp.ne.s32.totalorder %s238, %s240
      %p247 = scmp.eq.s32.totalorder %s43, 1
      %p248 = por %p246, %p247
      %p249 = scmp.ne.s32.totalorder %s240, %s241
      %p250 = scmp.eq.s32.totalorder %s43, 0
      %p251 = por %p249, %p250
      %p252 = scmp.ne.s32.totalorder %s240, %s241
      %p253 = scmp.eq.s32.totalorder %s44, 1
      %p254 = por %p252, %p253
      %p256 = scmp.ne.s32.totalorder %s241, %s255
      %p257 = scmp.eq.s32.totalorder %s44, 0
      %p258 = por %p256, %p257
      %s260 = sadd.s32 %s259, 1
      %p263 = scmp.eq.s32.totalorder %s38, 1
      %p264 = scmp.ne.s32.totalorder %s259, %s261
      %p265 = scmp.eq.s32.totalorder %s38, 0
      %p266 = por %p264, %p265
      %p267 = scmp.ne.s32.totalorder %s259, %s261
      %p268 = scmp.eq.s32.totalorder %s43, 1
      %p269 = por %p267, %p268
      %p270 = scmp.ne.s32.totalorder %s261, %s262
      %p271 = scmp.eq.s32.totalorder %s43, 0
      %p272 = por %p270, %p271
      %p273 = scmp.ne.s32.totalorder %s261, %s262
      %p274 = scmp.eq.s32.totalorder %s44, 1
      %p275 = por %p273, %p274
      %p277 = scmp.ne.s32.totalorder %s262, %s276
      %p278 = scmp.eq.s32.totalorder %s44, 0
      %p279 = por %p277, %p278
      %s281 = sadd.s32 %s280, 1
      %p284 = scmp.eq.s32.totalorder %s38, 1
      %p285 = scmp.ne.s32.totalorder %s280, %s282
      %p286 = scmp.eq.s32.totalorder %s38, 0
      %p287 = por %p285, %p286
      %p288 = scmp.ne.s32.totalorder %s280, %s282
      %p289 = scmp.eq.s32.totalorder %s43, 1
      %p290 = por %p288, %p289
      %p291 = scmp.ne.s32.totalorder %s282, %s283
      %p292 = scmp.eq.s32.totalorder %s43, 0
      %p293 = por %p291, %p292
      %p294 = scmp.ne.s32.totalorder %s282, %s283
      %p295 = scmp.eq.s32.totalorder %s44, 1
      %p296 = por %p294, %p295
      %p298 = scmp.ne.s32.totalorder %s283, %s297
      %p299 = scmp.eq.s32.totalorder %s44, 0
      %p300 = por %p298, %p299
      %s302 = sadd.s32 %s301, 1
      %p305 = scmp.eq.s32.totalorder %s38, 1
      %p306 = scmp.ne.s32.totalorder %s301, %s303
      %p307 = scmp.eq.s32.totalorder %s38, 0
      %p308 = por %p306, %p307
      %p309 = scmp.ne.s32.totalorder %s301, %s303
      %p310 = scmp.eq.s32.totalorder %s43, 1
      %p311 = por %p309, %p310
      %p312 = scmp.ne.s32.totalorder %s303, %s304
      %p313 = scmp.eq.s32.totalorder %s43, 0
      %p314 = por %p312, %p313
      %p315 = scmp.ne.s32.totalorder %s303, %s304
      %p316 = scmp.eq.s32.totalorder %s44, 1
      %p317 = por %p315, %p316
      %p319 = scmp.ne.s32.totalorder %s304, %s318
      %p320 = scmp.eq.s32.totalorder %s44, 0
      %p321 = por %p319, %p320
      %s322 = ssub.s32 %s45, %s57
      %s323 = ssub.s32 %s46, %s53
      %s324 = sor.u32 %s322, %s323
      %p325 = scmp.eq.s32.totalorder %s324, 0
      %s327 = sadd.s32 %s326, 1
      %s328 = scalar_select %p325, %s326, %s327
      %p331 = pneg %p325
      %p332 = scmp.eq.s32.totalorder %s38, 1
      %p333 = por %p331, %p332
      %p334 = scmp.ne.s32.totalorder %s326, %s329
      %p335 = scmp.eq.s32.totalorder %s38, 0
      %p336 = por %p334, %p335
      %p337 = scmp.ne.s32.totalorder %s326, %s329
      %p338 = scmp.eq.s32.totalorder %s43, 1
      %p339 = por %p337, %p338
      %p340 = scmp.ne.s32.totalorder %s329, %s330
      %p341 = scmp.eq.s32.totalorder %s43, 0
      %p342 = por %p340, %p341
      %p343 = scmp.ne.s32.totalorder %s329, %s330
      %p344 = scmp.eq.s32.totalorder %s44, 1
      %p345 = por %p343, %p344
      %p347 = scmp.ne.s32.totalorder %s330, %s346
      %p348 = scmp.eq.s32.totalorder %s44, 0
      %p349 = por %p347, %p348
      %s350 = ssub.s32 %s45, %s57
      %s351 = ssub.s32 %s46, %s53
      %s352 = sor.u32 %s350, %s351
      %p353 = scmp.eq.s32.totalorder %s352, 0
      %s355 = sadd.s32 %s354, 1
      %s356 = scalar_select %p353, %s354, %s355
      %p359 = pneg %p353
      %p360 = scmp.eq.s32.totalorder %s38, 1
      %p361 = por %p359, %p360
      %p362 = scmp.ne.s32.totalorder %s354, %s357
      %p363 = scmp.eq.s32.totalorder %s38, 0
      %p364 = por %p362, %p363
      %p365 = scmp.ne.s32.totalorder %s354, %s357
      %p366 = scmp.eq.s32.totalorder %s43, 1
      %p367 = por %p365, %p366
      %p368 = scmp.ne.s32.totalorder %s357, %s358
      %p369 = scmp.eq.s32.totalorder %s43, 0
      %p370 = por %p368, %p369
      %p371 = scmp.ne.s32.totalorder %s357, %s358
      %p372 = scmp.eq.s32.totalorder %s44, 1
      %p373 = por %p371, %p372
      %p375 = scmp.ne.s32.totalorder %s358, %s374
      %p376 = scmp.eq.s32.totalorder %s44, 0
      %p377 = por %p375, %p376
      %p378 = scmp.le.s32.totalorder 1, %s38
      %p379 = scmp.lt.s32.totalorder %s38, 3
      %p380 = pnand %p378, %p379
      %p381 = pneg %p380
      // Predicated region
      $region9: #{tpu_custom_call.1} parent=5 // pred_check
        _
      $region10: #{tpu_custom_call.1} parent=5 // pred_check_branch
        %383 = sbr.rel (%p380) target = $region12
      $region11: #{tpu_custom_call.1} parent=5 // pred_region
        %s384 = ssub.s32 %s38, 1
        // Predicated region
        $region13: #{tpu_custom_call.1} parent=11 // pred_check
          %p385 = pneg %p125
        $region14: #{tpu_custom_call.1} parent=11 // pred_check_branch
          %387 = sbr.rel (%p385) target = $region16
        $region15: #{tpu_custom_call.1} parent=11 // pred_region
          _
        $region16: #{tpu_custom_call.1} parent=11 // pred_fallthru
          _
        // Predicated region
        $region17: #{tpu_custom_call.1} parent=11 // pred_check
          %p388 = pneg %p146
        $region18: #{tpu_custom_call.1} parent=11 // pred_check_branch
          %390 = sbr.rel (%p388) target = $region20
        $region19: #{tpu_custom_call.1} parent=11 // pred_region
          _
        $region20: #{tpu_custom_call.1} parent=11 // pred_fallthru
          _
        // Predicated region
        $region21: #{tpu_custom_call.1} parent=11 // pred_check
          %p391 = pneg %p167
        $region22: #{tpu_custom_call.1} parent=11 // pred_check_branch
          %393 = sbr.rel (%p391) target = $region24
        $region23: #{tpu_custom_call.1} parent=11 // pred_region
          _
        $region24: #{tpu_custom_call.1} parent=11 // pred_fallthru
          _
        // Predicated region
        $region25: #{tpu_custom_call.1} parent=11 // pred_check
          %p394 = pneg %p188
        $region26: #{tpu_custom_call.1} parent=11 // pred_check_branch
          %396 = sbr.rel (%p394) target = $region28
        $region27: #{tpu_custom_call.1} parent=11 // pred_region
          _
        $region28: #{tpu_custom_call.1} parent=11 // pred_fallthru
          _
        // Predicated region
        $region29: #{tpu_custom_call.1} parent=11 // pred_check
          %p397 = pneg %p209
        $region30: #{tpu_custom_call.1} parent=11 // pred_check_branch
          %399 = sbr.rel (%p397) target = $region32
        $region31: #{tpu_custom_call.1} parent=11 // pred_region
          _
        $region32: #{tpu_custom_call.1} parent=11 // pred_fallthru
          _
        // Predicated region
        $region33: #{tpu_custom_call.1} parent=11 // pred_check
          %p400 = pneg %p230
        $region34: #{tpu_custom_call.1} parent=11 // pred_check_branch
          %402 = sbr.rel (%p400) target = $region36
        $region35: #{tpu_custom_call.1} parent=11 // pred_region
          _
        $region36: #{tpu_custom_call.1} parent=11 // pred_fallthru
          _
        // Predicated region
        $region37: #{tpu_custom_call.1} parent=11 // pred_check
          %p403 = pneg %p251
        $region38: #{tpu_custom_call.1} parent=11 // pred_check_branch
          %405 = sbr.rel (%p403) target = $region40
        $region39: #{tpu_custom_call.1} parent=11 // pred_region
          _
        $region40: #{tpu_custom_call.1} parent=11 // pred_fallthru
          _
        // Predicated region
        $region41: #{tpu_custom_call.1} parent=11 // pred_check
          %p406 = pneg %p272
        $region42: #{tpu_custom_call.1} parent=11 // pred_check_branch
          %408 = sbr.rel (%p406) target = $region44
        $region43: #{tpu_custom_call.1} parent=11 // pred_region
          _
        $region44: #{tpu_custom_call.1} parent=11 // pred_fallthru
          _
        // Predicated region
        $region45: #{tpu_custom_call.1} parent=11 // pred_check
          %p409 = pneg %p293
        $region46: #{tpu_custom_call.1} parent=11 // pred_check_branch
          %411 = sbr.rel (%p409) target = $region48
        $region47: #{tpu_custom_call.1} parent=11 // pred_region
          _
        $region48: #{tpu_custom_call.1} parent=11 // pred_fallthru
          _
        // Predicated region
        $region49: #{tpu_custom_call.1} parent=11 // pred_check
          %p412 = pneg %p314
        $region50: #{tpu_custom_call.1} parent=11 // pred_check_branch
          %414 = sbr.rel (%p412) target = $region52
        $region51: #{tpu_custom_call.1} parent=11 // pred_region
          _
        $region52: #{tpu_custom_call.1} parent=11 // pred_fallthru
          _
      $region12: #{tpu_custom_call.1} parent=5 // pred_fallthru
        _
      %p415 = scmp.lt.s32.totalorder %s38, 2
      // Predicated region
      $region53: #{tpu_custom_call.1} parent=5 // pred_check
        %p416 = pneg %p415
      $region54: #{tpu_custom_call.1} parent=5 // pred_check_branch
        %418 = sbr.rel (%p416) target = $region56
      $region55: #{tpu_custom_call.1} parent=5 // pred_region
        // Predicated region
        $region57: #{tpu_custom_call.1} parent=55 // pred_check
          %p419 = pneg %p72
        $region58: #{tpu_custom_call.1} parent=55 // pred_check_branch
          %421 = sbr.rel (%p419) target = $region60
        $region59: #{tpu_custom_call.1} parent=55 // pred_region
          %p422 = scmp.lt.s32.totalorder %s45, 1
          %s423 = scalar_select %p422, %s45, 1
          %p424 = scmp.lt.s32.totalorder %s46, 0
          %s425 = scalar_select %p424, %s46, 0
          %s426 = sadd.s32 %s425, %s423
          %s427 = smul.addr %s426, 8
          %s428 = scalar_lea.vmem %s2, %s427
        $region60: #{tpu_custom_call.1} parent=55 // pred_fallthru
          _
        // Predicated region
        $region61: #{tpu_custom_call.1} parent=55 // pred_check
          %p429 = pneg %p98
        $region62: #{tpu_custom_call.1} parent=55 // pred_check_branch
          %431 = sbr.rel (%p429) target = $region64
        $region63: #{tpu_custom_call.1} parent=55 // pred_region
          %p432 = scmp.lt.s32.totalorder %s45, 1
          %s433 = scalar_select %p432, %s45, 1
          %s434 = smul.addr %s433, 16
          %s435 = smul.addr %s434, 4
          %s436 = scalar_lea.vmem %s3, %s435
        $region64: #{tpu_custom_call.1} parent=55 // pred_fallthru
          _
      $region56: #{tpu_custom_call.1} parent=5 // pred_fallthru
        _
      %p437 = scmp.le.s32.totalorder 1, %s38
      %p438 = scmp.lt.s32.totalorder %s38, 3
      %p439 = pnand %p437, %p438
      %p440 = pneg %p439
      // Predicated region
      $region65: #{tpu_custom_call.1} parent=5 // pred_check
        _
      $region66: #{tpu_custom_call.1} parent=5 // pred_check_branch
        %442 = sbr.rel (%p439) target = $region68
      $region67: #{tpu_custom_call.1} parent=5 // pred_region
        %s443 = ssub.s32 %s38, 1
        %p444 = scmp.lt.s32.totalorder %s47, 1
        %s445 = scalar_select %p444, %s47, 1
        %p446 = scmp.lt.s32.totalorder %s48, 0
        %s447 = scalar_select %p446, %s48, 0
        %s448 = sadd.s32 %s447, %s445
        %s449 = smul.addr %s448, 8
        %s450 = scalar_lea.vmem %s2, %s449
        %p451 = pneg %p78
        %p452 = pneg %p75
        %p453 = scmp.lt.s32.totalorder %s47, 1
        %s454 = scalar_select %p453, %s47, 1
        %s455 = smul.addr %s454, 16
        %s456 = smul.addr %s455, 4
        %s457 = scalar_lea.vmem %s3, %s456
        %p458 = pneg %p104
        %p459 = pneg %p101
        %p460 = pneg %p125
        %p461 = pneg %p122
        %p462 = pneg %p146
        %p463 = pneg %p143
        %p464 = pneg %p167
        %p465 = pneg %p164
        %p466 = pneg %p188
        %p467 = pneg %p185
        %p468 = pneg %p209
        %p469 = pneg %p206
        %p470 = pneg %p230
        %p471 = pneg %p227
        %p472 = pneg %p251
        %p473 = pneg %p248
        %p474 = pneg %p272
        %p475 = pneg %p269
        %p476 = pneg %p293
        %p477 = pneg %p290
        %p478 = pneg %p314
        %p479 = pneg %p311
        %p480 = pneg %p342
        %p481 = pneg %p339
        %s482 = sand.u32 %s329, 1
        %s483 = scalar_lea.sflag [#allocation6], %s482
        %s484 = sand.u32 %s329, 1
        %s485 = smul.addr %s484, 8
        %s486 = scalar_lea.vmem [#allocation5], %s485
        %p487 = pneg %p370
        %p488 = pneg %p367
        %s489 = sand.u32 %s357, 1
        %s490 = scalar_lea.sflag [#allocation8], %s489
        %s491 = sand.u32 %s357, 1
        %s492 = smul.addr %s491, 16
        %s493 = scalar_lea.vmem [#allocation7], %s492
        %p494 = scmp.lt.s32.totalorder %s47, 1
        %s495 = scalar_select %p494, %s47, 1
        %p496 = scmp.lt.s32.totalorder %s48, 0
        %s497 = scalar_select %p496, %s48, 0
        %s498 = sadd.s32 %s497, %s495
        %s499 = smul.addr %s498, 8
        %s500 = scalar_lea.vmem %s2, %s499
        %p501 = scmp.lt.s32.totalorder %s47, 1
        %s502 = scalar_select %p501, %s47, 1
        %s503 = smul.addr %s502, 16
        %s504 = smul.addr %s503, 4
        %s505 = scalar_lea.vmem %s3, %s504
        %s507 = sld [smem:[#allocation3 + %s47]]
        %s508 = sld [smem:[#allocation4 + %s47]]
        %s509 = smul.u32 %s48, 8
        %v510 = vlaneseq
        %v511 = vshrl.u32 %v510, 7
        %v512 = vstv %s509
        %v513 = vadd.s32 %v512, %v511
        %v514 = vstv %s507
        %vm515 = vcmp.lt.s32.totalorder %v513, %v514
        %v516 = vsel %vm515, 1, 0
        %v517 = vcvt.s32.f32 %v516
        %v518 = vlaneseq
        %v519 = vand.u32 %v518, 127
        %v520 = vstv %s508
        %vm521 = vcmp.lt.s32.totalorder %v519, %v520
        %v522 = vsel %vm521, 1, 0
        %v523 = vcvt.s32.f32 %v522
        %v524 = vmul.f32 %v517, %v523
        %v525 = vsub.f32 1.0, %v524
        %v526 = vmul.f32 %v525, -5500.0
        %v527 = vsub.f32 1.0, %v523
        %v528 = vmul.f32 %v527, -1e+09
        %v529 = vadd.f32 %v526, %v528
        %v530 = vmul.f32 %v524, 0.25
        %v531 = vld [vmem:[%s500] sm:$0xff]
        %v532 = vmul.f32 %v531, %v517
        %v533 = vld [vmem:[%s505] sm:$0xf]
        %v534 = vld [vmem:[%s505 + $0x4] sm:$0xf]
        %v535 = vld [vmem:[%s505 + $0x8] sm:$0xf]
        %v536 = vld [vmem:[%s505 + $0xc] sm:$0xf]
        %v537 = vld [vmem:[%s505 + $0x10] sm:$0xf]
        %v538 = vld [vmem:[%s505 + $0x14] sm:$0xf]
        %v539 = vld [vmem:[%s505 + $0x18] sm:$0xf]
        %v540 = vld [vmem:[%s505 + $0x1c] sm:$0xf]
        %v541 = vld [vmem:[%s505 + $0x20] sm:$0xf]
        %v542 = vld [vmem:[%s505 + $0x24] sm:$0xf]
        %v543 = vld [vmem:[%s505 + $0x28] sm:$0xf]
        %v544 = vld [vmem:[%s505 + $0x2c] sm:$0xf]
        %v545 = vld [vmem:[%s505 + $0x30] sm:$0xf]
        %v546 = vld [vmem:[%s505 + $0x34] sm:$0xf]
        %v547 = vld [vmem:[%s505 + $0x38] sm:$0xf]
        %v548 = vld [vmem:[%s505 + $0x3c] sm:$0xf]
        %v549 = vpack.c.bf16 %v532, %v532
        %v550 = vld [vmem:[%s4] sm:$0xf]
        %v551 = vld [vmem:[%s4 + $0x4] sm:$0xf]
        %v552 = vld [vmem:[%s4 + $0x8] sm:$0xf]
        %v553 = vld [vmem:[%s4 + $0xc] sm:$0xf]
        %v554 = vld [vmem:[%s4 + $0x10] sm:$0xf]
        %v555 = vld [vmem:[%s4 + $0x14] sm:$0xf]
        %v556 = vld [vmem:[%s4 + $0x18] sm:$0xf]
        %v557 = vld [vmem:[%s4 + $0x1c] sm:$0xf]
        %v558 = vld [vmem:[%s4 + $0x20] sm:$0xf]
        %v559 = vld [vmem:[%s4 + $0x24] sm:$0xf]
        %v560 = vld [vmem:[%s4 + $0x28] sm:$0xf]
        %v561 = vld [vmem:[%s4 + $0x2c] sm:$0xf]
        %v562 = vld [vmem:[%s4 + $0x30] sm:$0xf]
        %v563 = vld [vmem:[%s4 + $0x34] sm:$0xf]
        %v564 = vld [vmem:[%s4 + $0x38] sm:$0xf]
        %v565 = vld [vmem:[%s4 + $0x3c] sm:$0xf]
        %v566 = vld [vmem:[%s5] sm:$0x1]
        %v568 = vlaneseq
        %v569 = vshrl.u32 %v568, 7
        %v570 = vsub.s32 0, %v569
        %v571 = vrot.slane %v566, %v570
        %v589 = vunpack.c.l.b16 %v550
        %v590 = vunpack.c.l.b16 %v551
        %v591 = vunpack.c.l.b16 %v552
        %v592 = vunpack.c.l.b16 %v553
        %v593 = vunpack.c.l.b16 %v554
        %v594 = vunpack.c.l.b16 %v555
        %v595 = vunpack.c.l.b16 %v556
        %v596 = vunpack.c.l.b16 %v557
        %v597 = vunpack.c.l.b16 %v558
        %v598 = vunpack.c.l.b16 %v559
        %v599 = vunpack.c.l.b16 %v560
        %v600 = vunpack.c.l.b16 %v561
        %v601 = vunpack.c.l.b16 %v562
        %v602 = vunpack.c.l.b16 %v563
        %v603 = vunpack.c.l.b16 %v564
        %v604 = vunpack.c.l.b16 %v565
        %v605 = vpack.c.b16 %v590, %v589
        %v606 = vpack.c.b16 %v592, %v591
        %v607 = vpack.c.b16 %v594, %v593
        %v608 = vpack.c.b16 %v596, %v595
        %v609 = vpack.c.b16 %v598, %v597
        %v610 = vpack.c.b16 %v600, %v599
        %v611 = vpack.c.b16 %v602, %v601
        %v612 = vpack.c.b16 %v604, %v603
        %621 = vmatprep.subr.bf16.mxu0 0
        %622 = vmatpush1.bf16.msra.mxu0 %v612
        %623 = vmatprep.subr.bf16.mxu0 0
        %624 = vmatpush1.bf16.msra.mxu0 %v611
        %625 = vmatprep.subr.bf16.mxu0 0
        %626 = vmatpush1.bf16.msra.mxu0 %v610
        %627 = vmatprep.subr.bf16.mxu0 0
        %628 = vmatpush1.bf16.msra.mxu0 %v609
        %629 = vmatprep.subr.bf16.mxu0 0
        %630 = vmatpush1.bf16.msra.mxu0 %v608
        %631 = vmatprep.subr.bf16.mxu0 0
        %632 = vmatpush1.bf16.msra.mxu0 %v607
        %633 = vmatprep.subr.bf16.mxu0 0
        %634 = vmatpush1.bf16.msra.mxu0 %v606
        %635 = vmatprep.subr.bf16.mxu0 0
        %636 = vmatpush1.bf16.msra.mxu0 %v605
        %637 = vmatprep.subr.bf16.mxu0 0
        %638 = vmatpush2.bf16.msra.mxu0 0
        %639 = vmatprep.subr.bf16.mxu0 0
        %640 = vmatpush2.bf16.msra.mxu0 0
        %641 = vmatprep.subr.bf16.mxu0 0
        %642 = vmatpush2.bf16.msra.mxu0 0
        %643 = vmatprep.subr.bf16.mxu0 0
        %644 = vmatpush2.bf16.msra.mxu0 0
        %645 = vmatprep.subr.bf16.mxu0 0
        %646 = vmatpush2.bf16.msra.mxu0 0
        %647 = vmatprep.subr.bf16.mxu0 0
        %648 = vmatpush2.bf16.msra.mxu0 0
        %649 = vmatprep.subr.bf16.mxu0 0
        %650 = vmatpush2.bf16.msra.mxu0 0
        %651 = vmatprep.subr.bf16.mxu0 0
        %652 = vmatpush2.bf16.msra.mxu0 0
        %653 = vmatprep.mubr.bf16.mxu0 0
        %654 = vmatmul.mubr.bf16.gmra.mxu0 %v549
        %v655 = vpop.f32.mrf.mxu0
        %v656 = vadd.f32 %v571, %v655
        %v657 = vpop.f32.mrf.mxu0
        %v658 = vpop.f32.mrf.mxu0
        %v659 = vpop.f32.mrf.mxu0
        %660 = vdwg.mxu0
        %v661 = vld [vmem:[%s6] sm:$0xf]
        %v662 = vld [vmem:[%s6 + $0x4] sm:$0xf]
        %v663 = vld [vmem:[%s6 + $0x8] sm:$0xf]
        %v664 = vld [vmem:[%s6 + $0xc] sm:$0xf]
        %v665 = vld [vmem:[%s6 + $0x10] sm:$0xf]
        %v666 = vld [vmem:[%s6 + $0x14] sm:$0xf]
        %v667 = vld [vmem:[%s6 + $0x18] sm:$0xf]
        %v668 = vld [vmem:[%s6 + $0x1c] sm:$0xf]
        %v669 = vld [vmem:[%s6 + $0x20] sm:$0xf]
        %v670 = vld [vmem:[%s6 + $0x24] sm:$0xf]
        %v671 = vld [vmem:[%s6 + $0x28] sm:$0xf]
        %v672 = vld [vmem:[%s6 + $0x2c] sm:$0xf]
        %v673 = vld [vmem:[%s6 + $0x30] sm:$0xf]
        %v674 = vld [vmem:[%s6 + $0x34] sm:$0xf]
        %v675 = vld [vmem:[%s6 + $0x38] sm:$0xf]
        %v676 = vld [vmem:[%s6 + $0x3c] sm:$0xf]
        %v677 = vld [vmem:[%s7] sm:$0x1]
        %v679 = vlaneseq
        %v680 = vshrl.u32 %v679, 7
        %v681 = vsub.s32 0, %v680
        %v682 = vrot.slane %v677, %v681
        %v700 = vunpack.c.l.b16 %v533
        %v701 = vunpack.c.l.b16 %v534
        %v702 = vunpack.c.l.b16 %v535
        %v703 = vunpack.c.l.b16 %v536
        %v704 = vunpack.c.l.b16 %v537
        %v705 = vunpack.c.l.b16 %v538
        %v706 = vunpack.c.l.b16 %v539
        %v707 = vunpack.c.l.b16 %v540
        %v708 = vunpack.c.l.b16 %v541
        %v709 = vunpack.c.l.b16 %v542
        %v710 = vunpack.c.l.b16 %v543
        %v711 = vunpack.c.l.b16 %v544
        %v712 = vunpack.c.l.b16 %v545
        %v713 = vunpack.c.l.b16 %v546
        %v714 = vunpack.c.l.b16 %v547
        %v715 = vunpack.c.l.b16 %v548
        %v716 = vpack.c.b16 %v701, %v700
        %v717 = vpack.c.b16 %v703, %v702
        %v718 = vpack.c.b16 %v705, %v704
        %v719 = vpack.c.b16 %v707, %v706
        %v720 = vpack.c.b16 %v709, %v708
        %v721 = vpack.c.b16 %v711, %v710
        %v722 = vpack.c.b16 %v713, %v712
        %v723 = vpack.c.b16 %v715, %v714
        %v748 = vunpack.c.l.b16 %v661
        %v749 = vunpack.c.l.b16 %v662
        %v750 = vunpack.c.l.b16 %v663
        %v751 = vunpack.c.l.b16 %v664
        %v752 = vunpack.c.l.b16 %v665
        %v753 = vunpack.c.l.b16 %v666
        %v754 = vunpack.c.l.b16 %v667
        %v755 = vunpack.c.l.b16 %v668
        %v756 = vunpack.c.l.b16 %v669
        %v757 = vunpack.c.l.b16 %v670
        %v758 = vunpack.c.l.b16 %v671
        %v759 = vunpack.c.l.b16 %v672
        %v760 = vunpack.c.l.b16 %v673
        %v761 = vunpack.c.l.b16 %v674
        %v762 = vunpack.c.l.b16 %v675
        %v763 = vunpack.c.l.b16 %v676
        %v764 = vpack.c.b16 %v749, %v748
        %v765 = vpack.c.b16 %v751, %v750
        %v766 = vpack.c.b16 %v753, %v752
        %v767 = vpack.c.b16 %v755, %v754
        %v768 = vpack.c.b16 %v757, %v756
        %v769 = vpack.c.b16 %v759, %v758
        %v770 = vpack.c.b16 %v761, %v760
        %v771 = vpack.c.b16 %v763, %v762
        %780 = vmatprep.subr.bf16.mxu0 0
        %781 = vmatpush1.bf16.msra.mxu0 %v771
        %782 = vmatprep.subr.bf16.mxu0 0
        %783 = vmatpush1.bf16.msra.mxu0 %v770
        %784 = vmatprep.subr.bf16.mxu0 0
        %785 = vmatpush1.bf16.msra.mxu0 %v769
        %786 = vmatprep.subr.bf16.mxu0 0
        %787 = vmatpush1.bf16.msra.mxu0 %v768
        %788 = vmatprep.subr.bf16.mxu0 0
        %789 = vmatpush1.bf16.msra.mxu0 %v767
        %790 = vmatprep.subr.bf16.mxu0 0
        %791 = vmatpush1.bf16.msra.mxu0 %v766
        %792 = vmatprep.subr.bf16.mxu0 0
        %793 = vmatpush1.bf16.msra.mxu0 %v765
        %794 = vmatprep.subr.bf16.mxu0 0
        %795 = vmatpush1.bf16.msra.mxu0 %v764
        %796 = vmatprep.subr.bf16.mxu0 0
        %797 = vmatpush2.bf16.msra.mxu0 0
        %798 = vmatprep.subr.bf16.mxu0 0
        %799 = vmatpush2.bf16.msra.mxu0 0
        %800 = vmatprep.subr.bf16.mxu0 0
        %801 = vmatpush2.bf16.msra.mxu0 0
        %802 = vmatprep.subr.bf16.mxu0 0
        %803 = vmatpush2.bf16.msra.mxu0 0
        %804 = vmatprep.subr.bf16.mxu0 0
        %805 = vmatpush2.bf16.msra.mxu0 0
        %806 = vmatprep.subr.bf16.mxu0 0
        %807 = vmatpush2.bf16.msra.mxu0 0
        %808 = vmatprep.subr.bf16.mxu0 0
        %809 = vmatpush2.bf16.msra.mxu0 0
        %810 = vmatprep.subr.bf16.mxu0 0
        %811 = vmatpush2.bf16.msra.mxu0 0
        %812 = vmatprep.mubr.bf16.mxu0 0
        %813 = vmatmul.mubr.bf16.gmra.mxu0 %v716
        %v814 = vpop.f32.mrf.mxu0
        %v815 = vadd.f32 %v682, %v814
        %v816 = vpop.f32.mrf.mxu0
        %v817 = vpop.f32.mrf.mxu0
        %v818 = vadd.f32 %v682, %v817
        %v819 = vpop.f32.mrf.mxu0
        %820 = vmatprep.mubr.bf16.mxu0 0
        %821 = vmatmul.mubr.bf16.gmra.mxu0 %v717
        %v822 = vpop.f32.mrf.mxu0
        %v823 = vadd.f32 %v682, %v822
        %v824 = vpop.f32.mrf.mxu0
        %v825 = vpop.f32.mrf.mxu0
        %v826 = vadd.f32 %v682, %v825
        %v827 = vpop.f32.mrf.mxu0
        %828 = vmatprep.mubr.bf16.mxu0 0
        %829 = vmatmul.mubr.bf16.gmra.mxu0 %v718
        %v830 = vpop.f32.mrf.mxu0
        %v831 = vadd.f32 %v682, %v830
        %v832 = vpop.f32.mrf.mxu0
        %v833 = vpop.f32.mrf.mxu0
        %v834 = vadd.f32 %v682, %v833
        %v835 = vpop.f32.mrf.mxu0
        %836 = vmatprep.mubr.bf16.mxu0 0
        %837 = vmatmul.mubr.bf16.gmra.mxu0 %v719
        %v838 = vpop.f32.mrf.mxu0
        %v839 = vadd.f32 %v682, %v838
        %v840 = vpop.f32.mrf.mxu0
        %v841 = vpop.f32.mrf.mxu0
        %v842 = vadd.f32 %v682, %v841
        %v843 = vpop.f32.mrf.mxu0
        %844 = vmatprep.mubr.bf16.mxu0 0
        %845 = vmatmul.mubr.bf16.gmra.mxu0 %v720
        %v846 = vpop.f32.mrf.mxu0
        %v847 = vadd.f32 %v682, %v846
        %v848 = vpop.f32.mrf.mxu0
        %v849 = vpop.f32.mrf.mxu0
        %v850 = vadd.f32 %v682, %v849
        %v851 = vpop.f32.mrf.mxu0
        %852 = vmatprep.mubr.bf16.mxu0 0
        %853 = vmatmul.mubr.bf16.gmra.mxu0 %v721
        %v854 = vpop.f32.mrf.mxu0
        %v855 = vadd.f32 %v682, %v854
        %v856 = vpop.f32.mrf.mxu0
        %v857 = vpop.f32.mrf.mxu0
        %v858 = vadd.f32 %v682, %v857
        %v859 = vpop.f32.mrf.mxu0
        %860 = vmatprep.mubr.bf16.mxu0 0
        %861 = vmatmul.mubr.bf16.gmra.mxu0 %v722
        %v862 = vpop.f32.mrf.mxu0
        %v863 = vadd.f32 %v682, %v862
        %v864 = vpop.f32.mrf.mxu0
        %v865 = vpop.f32.mrf.mxu0
        %v866 = vadd.f32 %v682, %v865
        %v867 = vpop.f32.mrf.mxu0
        %868 = vmatprep.mubr.bf16.mxu0 0
        %869 = vmatmul.mubr.bf16.gmra.mxu0 %v723
        %v870 = vpop.f32.mrf.mxu0
        %v871 = vadd.f32 %v682, %v870
        %v872 = vpop.f32.mrf.mxu0
        %v873 = vpop.f32.mrf.mxu0
        %v874 = vadd.f32 %v682, %v873
        %v875 = vpop.f32.mrf.mxu0
        %876 = vdwg.mxu0
        %v877 = vld [vmem:[%s8] sm:$0xf]
        %v878 = vld [vmem:[%s8 + $0x4] sm:$0xf]
        %v879 = vld [vmem:[%s8 + $0x8] sm:$0xf]
        %v880 = vld [vmem:[%s8 + $0xc] sm:$0xf]
        %v881 = vld [vmem:[%s8 + $0x10] sm:$0xf]
        %v882 = vld [vmem:[%s8 + $0x14] sm:$0xf]
        %v883 = vld [vmem:[%s8 + $0x18] sm:$0xf]
        %v884 = vld [vmem:[%s8 + $0x1c] sm:$0xf]
        %v885 = vld [vmem:[%s8 + $0x20] sm:$0xf]
        %v886 = vld [vmem:[%s8 + $0x24] sm:$0xf]
        %v887 = vld [vmem:[%s8 + $0x28] sm:$0xf]
        %v888 = vld [vmem:[%s8 + $0x2c] sm:$0xf]
        %v889 = vld [vmem:[%s8 + $0x30] sm:$0xf]
        %v890 = vld [vmem:[%s8 + $0x34] sm:$0xf]
        %v891 = vld [vmem:[%s8 + $0x38] sm:$0xf]
        %v892 = vld [vmem:[%s8 + $0x3c] sm:$0xf]
        %v893 = vld [vmem:[%s9] sm:$0x1]
        %v895 = vlaneseq
        %v896 = vshrl.u32 %v895, 7
        %v897 = vsub.s32 0, %v896
        %v898 = vrot.slane %v893, %v897
        %v916 = vunpack.c.l.b16 %v877
        %v917 = vunpack.c.l.b16 %v878
        %v918 = vunpack.c.l.b16 %v879
        %v919 = vunpack.c.l.b16 %v880
        %v920 = vunpack.c.l.b16 %v881
        %v921 = vunpack.c.l.b16 %v882
        %v922 = vunpack.c.l.b16 %v883
        %v923 = vunpack.c.l.b16 %v884
        %v924 = vunpack.c.l.b16 %v885
        %v925 = vunpack.c.l.b16 %v886
        %v926 = vunpack.c.l.b16 %v887
        %v927 = vunpack.c.l.b16 %v888
        %v928 = vunpack.c.l.b16 %v889
        %v929 = vunpack.c.l.b16 %v890
        %v930 = vunpack.c.l.b16 %v891
        %v931 = vunpack.c.l.b16 %v892
        %v932 = vpack.c.b16 %v917, %v916
        %v933 = vpack.c.b16 %v919, %v918
        %v934 = vpack.c.b16 %v921, %v920
        %v935 = vpack.c.b16 %v923, %v922
        %v936 = vpack.c.b16 %v925, %v924
        %v937 = vpack.c.b16 %v927, %v926
        %v938 = vpack.c.b16 %v929, %v928
        %v939 = vpack.c.b16 %v931, %v930
        %948 = vmatprep.subr.bf16.mxu0 0
        %949 = vmatpush1.bf16.msra.mxu0 %v939
        %950 = vmatprep.subr.bf16.mxu0 0
        %951 = vmatpush1.bf16.msra.mxu0 %v938
        %952 = vmatprep.subr.bf16.mxu0 0
        %953 = vmatpush1.bf16.msra.mxu0 %v937
        %954 = vmatprep.subr.bf16.mxu0 0
        %955 = vmatpush1.bf16.msra.mxu0 %v936
        %956 = vmatprep.subr.bf16.mxu0 0
        %957 = vmatpush1.bf16.msra.mxu0 %v935
        %958 = vmatprep.subr.bf16.mxu0 0
        %959 = vmatpush1.bf16.msra.mxu0 %v934
        %960 = vmatprep.subr.bf16.mxu0 0
        %961 = vmatpush1.bf16.msra.mxu0 %v933
        %962 = vmatprep.subr.bf16.mxu0 0
        %963 = vmatpush1.bf16.msra.mxu0 %v932
        %964 = vmatprep.subr.bf16.mxu0 0
        %965 = vmatpush2.bf16.msra.mxu0 0
        %966 = vmatprep.subr.bf16.mxu0 0
        %967 = vmatpush2.bf16.msra.mxu0 0
        %968 = vmatprep.subr.bf16.mxu0 0
        %969 = vmatpush2.bf16.msra.mxu0 0
        %970 = vmatprep.subr.bf16.mxu0 0
        %971 = vmatpush2.bf16.msra.mxu0 0
        %972 = vmatprep.subr.bf16.mxu0 0
        %973 = vmatpush2.bf16.msra.mxu0 0
        %974 = vmatprep.subr.bf16.mxu0 0
        %975 = vmatpush2.bf16.msra.mxu0 0
        %976 = vmatprep.subr.bf16.mxu0 0
        %977 = vmatpush2.bf16.msra.mxu0 0
        %978 = vmatprep.subr.bf16.mxu0 0
        %979 = vmatpush2.bf16.msra.mxu0 0
        %980 = vmatprep.mubr.bf16.mxu0 0
        %981 = vmatmul.mubr.bf16.gmra.mxu0 %v716
        %v982 = vpop.f32.mrf.mxu0
        %v983 = vadd.f32 %v898, %v982
        %v984 = vpop.f32.mrf.mxu0
        %v985 = vpop.f32.mrf.mxu0
        %v986 = vadd.f32 %v898, %v985
        %v987 = vpop.f32.mrf.mxu0
        %988 = vmatprep.mubr.bf16.mxu0 0
        %989 = vmatmul.mubr.bf16.gmra.mxu0 %v717
        %v990 = vpop.f32.mrf.mxu0
        %v991 = vadd.f32 %v898, %v990
        %v992 = vpop.f32.mrf.mxu0
        %v993 = vpop.f32.mrf.mxu0
        %v994 = vadd.f32 %v898, %v993
        %v995 = vpop.f32.mrf.mxu0
        %996 = vmatprep.mubr.bf16.mxu0 0
        %997 = vmatmul.mubr.bf16.gmra.mxu0 %v718
        %v998 = vpop.f32.mrf.mxu0
        %v999 = vadd.f32 %v898, %v998
        %v1000 = vpop.f32.mrf.mxu0
        %v1001 = vpop.f32.mrf.mxu0
        %v1002 = vadd.f32 %v898, %v1001
        %v1003 = vpop.f32.mrf.mxu0
        %1004 = vmatprep.mubr.bf16.mxu0 0
        %1005 = vmatmul.mubr.bf16.gmra.mxu0 %v719
        %v1006 = vpop.f32.mrf.mxu0
        %v1007 = vadd.f32 %v898, %v1006
        %v1008 = vpop.f32.mrf.mxu0
        %v1009 = vpop.f32.mrf.mxu0
        %v1010 = vadd.f32 %v898, %v1009
        %v1011 = vpop.f32.mrf.mxu0
        %1012 = vmatprep.mubr.bf16.mxu0 0
        %1013 = vmatmul.mubr.bf16.gmra.mxu0 %v720
        %v1014 = vpop.f32.mrf.mxu0
        %v1015 = vadd.f32 %v898, %v1014
        %v1016 = vpop.f32.mrf.mxu0
        %v1017 = vpop.f32.mrf.mxu0
        %v1018 = vadd.f32 %v898, %v1017
        %v1019 = vpop.f32.mrf.mxu0
        %1020 = vmatprep.mubr.bf16.mxu0 0
        %1021 = vmatmul.mubr.bf16.gmra.mxu0 %v721
        %v1022 = vpop.f32.mrf.mxu0
        %v1023 = vadd.f32 %v898, %v1022
        %v1024 = vpop.f32.mrf.mxu0
        %v1025 = vpop.f32.mrf.mxu0
        %v1026 = vadd.f32 %v898, %v1025
        %v1027 = vpop.f32.mrf.mxu0
        %1028 = vmatprep.mubr.bf16.mxu0 0
        %1029 = vmatmul.mubr.bf16.gmra.mxu0 %v722
        %v1030 = vpop.f32.mrf.mxu0
        %v1031 = vadd.f32 %v898, %v1030
        %v1032 = vpop.f32.mrf.mxu0
        %v1033 = vpop.f32.mrf.mxu0
        %v1034 = vadd.f32 %v898, %v1033
        %v1035 = vpop.f32.mrf.mxu0
        %1036 = vmatprep.mubr.bf16.mxu0 0
        %1037 = vmatmul.mubr.bf16.gmra.mxu0 %v723
        %v1038 = vpop.f32.mrf.mxu0
        %v1039 = vadd.f32 %v898, %v1038
        %v1040 = vpop.f32.mrf.mxu0
        %v1041 = vpop.f32.mrf.mxu0
        %v1042 = vadd.f32 %v898, %v1041
        %v1043 = vpop.f32.mrf.mxu0
        %1044 = vdwg.mxu0
        %v1045 = vpack.c.bf16 %v656, %v656
        %v1046 = vpack.c.bf16 %v818, %v815
        %v1047 = vpack.c.bf16 %v826, %v823
        %v1048 = vpack.c.bf16 %v834, %v831
        %v1049 = vpack.c.bf16 %v842, %v839
        %v1050 = vpack.c.bf16 %v850, %v847
        %v1051 = vpack.c.bf16 %v858, %v855
        %v1052 = vpack.c.bf16 %v866, %v863
        %v1053 = vpack.c.bf16 %v874, %v871
        %vm1054 = vcmask 261120
        %v1056 = vsel %vm1054, %v1045, 0
        %v1059 = vsel %vm1054, %v1046, 0
        %v1062 = vsel %vm1054, %v1047, 0
        %v1065 = vsel %vm1054, %v1048, 0
        %v1068 = vsel %vm1054, %v1049, 0
        %v1071 = vsel %vm1054, %v1050, 0
        %v1074 = vsel %vm1054, %v1051, 0
        %v1077 = vsel %vm1054, %v1052, 0
        %v1080 = vsel %vm1054, %v1053, 0
        %1082 = vmatprep.subr.bf16.mxu0 0
        %1083 = vmatpush1.bf16.xpose.msra.mxu0 %v1080
        %1084 = vmatprep.subr.bf16.mxu0 0
        %1085 = vmatpush1.bf16.xpose.msra.mxu0 %v1077
        %1086 = vmatprep.subr.bf16.mxu0 0
        %1087 = vmatpush1.bf16.xpose.msra.mxu0 %v1074
        %1088 = vmatprep.subr.bf16.mxu0 0
        %1089 = vmatpush1.bf16.xpose.msra.mxu0 %v1071
        %1090 = vmatprep.subr.bf16.mxu0 0
        %1091 = vmatpush1.bf16.xpose.msra.mxu0 %v1068
        %1092 = vmatprep.subr.bf16.mxu0 0
        %1093 = vmatpush1.bf16.xpose.msra.mxu0 %v1065
        %1094 = vmatprep.subr.bf16.mxu0 0
        %1095 = vmatpush1.bf16.xpose.msra.mxu0 %v1062
        %1096 = vmatprep.subr.bf16.mxu0 0
        %1097 = vmatpush1.bf16.xpose.msra.mxu0 %v1059
        %1098 = vmatprep.subr.bf16.mxu0 0
        %1099 = vmatpush2.bf16.xpose.msra.mxu0 0
        %1100 = vmatprep.subr.bf16.mxu0 0
        %1101 = vmatpush2.bf16.xpose.msra.mxu0 0
        %1102 = vmatprep.subr.bf16.mxu0 0
        %1103 = vmatpush2.bf16.xpose.msra.mxu0 0
        %1104 = vmatprep.subr.bf16.mxu0 0
        %1105 = vmatpush2.bf16.xpose.msra.mxu0 0
        %1106 = vmatprep.subr.bf16.mxu0 0
        %1107 = vmatpush2.bf16.xpose.msra.mxu0 0
        %1108 = vmatprep.subr.bf16.mxu0 0
        %1109 = vmatpush2.bf16.xpose.msra.mxu0 0
        %1110 = vmatprep.subr.bf16.mxu0 0
        %1111 = vmatpush2.bf16.xpose.msra.mxu0 0
        %1112 = vmatprep.subr.bf16.mxu0 0
        %1113 = vmatpush2.bf16.xpose.msra.mxu0 0
        %1114 = vmatprep.mubr.bf16.mxu0 0
        %1115 = vmatmul.mubr.bf16.gmra.mxu0 %v1056
        %v1116 = vpop.f32.mrf.mxu0
        %v1117 = vadd.f32 %v529, %v1116
        %v1118 = vpop.f32.mrf.mxu0
        %v1119 = vpop.f32.mrf.mxu0
        %v1120 = vpop.f32.mrf.mxu0
        %1121 = vdwg.mxu0
        %1122 = vmax.xlane.f32.xlu0 %v1117
        %v1123 = vpop.xlane.xlu0 %1122
        %v1124 = vsub.f32 %v1117, %v1123
        %v1125 = vmul.f32 %v1124, 1.442695
        %v1126 = vpow.pop %v1125
        %1127 = vadd.xlane.f32.xlu0 %v1126
        %v1128 = vpop.xlane.xlu0 %1127
        %v1129 = vrcp.pop %v1128
        %v1130 = vmul.f32 %v1126, %v1129
        %v1131 = vadd.f32 %v1130, 0.0
        %v1132 = vpack.c.bf16 %v1130, %v1130
        %v1133 = vpack.c.bf16 %v986, %v983
        %v1134 = vpack.c.bf16 %v994, %v991
        %v1135 = vpack.c.bf16 %v1002, %v999
        %v1136 = vpack.c.bf16 %v1010, %v1007
        %v1137 = vpack.c.bf16 %v1018, %v1015
        %v1138 = vpack.c.bf16 %v1026, %v1023
        %v1139 = vpack.c.bf16 %v1034, %v1031
        %v1140 = vpack.c.bf16 %v1042, %v1039
        %1141 = vmatprep.subr.bf16.mxu0 0
        %1142 = vmatpush1.bf16.msra.mxu0 %v1140
        %1143 = vmatprep.subr.bf16.mxu0 0
        %1144 = vmatpush1.bf16.msra.mxu0 %v1139
        %1145 = vmatprep.subr.bf16.mxu0 0
        %1146 = vmatpush1.bf16.msra.mxu0 %v1138
        %1147 = vmatprep.subr.bf16.mxu0 0
        %1148 = vmatpush1.bf16.msra.mxu0 %v1137
        %1149 = vmatprep.subr.bf16.mxu0 0
        %1150 = vmatpush1.bf16.msra.mxu0 %v1136
        %1151 = vmatprep.subr.bf16.mxu0 0
        %1152 = vmatpush1.bf16.msra.mxu0 %v1135
        %1153 = vmatprep.subr.bf16.mxu0 0
        %1154 = vmatpush1.bf16.msra.mxu0 %v1134
        %1155 = vmatprep.subr.bf16.mxu0 0
        %1156 = vmatpush1.bf16.msra.mxu0 %v1133
        %1157 = vmatprep.subr.bf16.mxu0 0
        %1158 = vmatpush2.bf16.msra.mxu0 0
        %1159 = vmatprep.subr.bf16.mxu0 0
        %1160 = vmatpush2.bf16.msra.mxu0 0
        %1161 = vmatprep.subr.bf16.mxu0 0
        %1162 = vmatpush2.bf16.msra.mxu0 0
        %1163 = vmatprep.subr.bf16.mxu0 0
        %1164 = vmatpush2.bf16.msra.mxu0 0
        %1165 = vmatprep.subr.bf16.mxu0 0
        %1166 = vmatpush2.bf16.msra.mxu0 0
        %1167 = vmatprep.subr.bf16.mxu0 0
        %1168 = vmatpush2.bf16.msra.mxu0 0
        %1169 = vmatprep.subr.bf16.mxu0 0
        %1170 = vmatpush2.bf16.msra.mxu0 0
        %1171 = vmatprep.subr.bf16.mxu0 0
        %1172 = vmatpush2.bf16.msra.mxu0 0
        %1173 = vmatprep.mubr.bf16.mxu0 0
        %1174 = vmatmul.mubr.bf16.gmra.mxu0 %v1132
        %v1175 = vpop.f32.mrf.mxu0
        %v1176 = vadd.f32 0.0, %v1175
        %v1177 = vpop.f32.mrf.mxu0
        %v1178 = vpop.f32.mrf.mxu0
        %v1179 = vpop.f32.mrf.mxu0
        %1180 = vdwg.mxu0
        %v1181 = vpack.c.bf16 %v1176, %v1176
        %v1182 = vld [vmem:[%s10] sm:$0xf]
        %v1183 = vld [vmem:[%s10 + $0x4] sm:$0xf]
        %v1184 = vld [vmem:[%s10 + $0x8] sm:$0xf]
        %v1185 = vld [vmem:[%s10 + $0xc] sm:$0xf]
        %s1186 = scalar_lea.vmem %s4, 64
        %v1187 = vld [vmem:[%s1186] sm:$0xf]
        %v1188 = vld [vmem:[%s1186 + $0x4] sm:$0xf]
        %v1189 = vld [vmem:[%s1186 + $0x8] sm:$0xf]
        %v1190 = vld [vmem:[%s1186 + $0xc] sm:$0xf]
        %v1191 = vld [vmem:[%s1186 + $0x10] sm:$0xf]
        %v1192 = vld [vmem:[%s1186 + $0x14] sm:$0xf]
        %v1193 = vld [vmem:[%s1186 + $0x18] sm:$0xf]
        %v1194 = vld [vmem:[%s1186 + $0x1c] sm:$0xf]
        %v1195 = vld [vmem:[%s1186 + $0x20] sm:$0xf]
        %v1196 = vld [vmem:[%s1186 + $0x24] sm:$0xf]
        %v1197 = vld [vmem:[%s1186 + $0x28] sm:$0xf]
        %v1198 = vld [vmem:[%s1186 + $0x2c] sm:$0xf]
        %v1199 = vld [vmem:[%s1186 + $0x30] sm:$0xf]
        %v1200 = vld [vmem:[%s1186 + $0x34] sm:$0xf]
        %v1201 = vld [vmem:[%s1186 + $0x38] sm:$0xf]
        %v1202 = vld [vmem:[%s1186 + $0x3c] sm:$0xf]
        %s1203 = scalar_lea.vmem %s5, 1
        %v1204 = vld [vmem:[%s1203] sm:$0x1]
        %v1206 = vlaneseq
        %v1207 = vshrl.u32 %v1206, 7
        %v1208 = vsub.s32 0, %v1207
        %v1209 = vrot.slane %v1204, %v1208
        %v1227 = vunpack.c.l.b16 %v1187
        %v1228 = vunpack.c.l.b16 %v1188
        %v1229 = vunpack.c.l.b16 %v1189
        %v1230 = vunpack.c.l.b16 %v1190
        %v1231 = vunpack.c.l.b16 %v1191
        %v1232 = vunpack.c.l.b16 %v1192
        %v1233 = vunpack.c.l.b16 %v1193
        %v1234 = vunpack.c.l.b16 %v1194
        %v1235 = vunpack.c.l.b16 %v1195
        %v1236 = vunpack.c.l.b16 %v1196
        %v1237 = vunpack.c.l.b16 %v1197
        %v1238 = vunpack.c.l.b16 %v1198
        %v1239 = vunpack.c.l.b16 %v1199
        %v1240 = vunpack.c.l.b16 %v1200
        %v1241 = vunpack.c.l.b16 %v1201
        %v1242 = vunpack.c.l.b16 %v1202
        %v1243 = vpack.c.b16 %v1228, %v1227
        %v1244 = vpack.c.b16 %v1230, %v1229
        %v1245 = vpack.c.b16 %v1232, %v1231
        %v1246 = vpack.c.b16 %v1234, %v1233
        %v1247 = vpack.c.b16 %v1236, %v1235
        %v1248 = vpack.c.b16 %v1238, %v1237
        %v1249 = vpack.c.b16 %v1240, %v1239
        %v1250 = vpack.c.b16 %v1242, %v1241
        %1259 = vmatprep.subr.bf16.mxu0 0
        %1260 = vmatpush1.bf16.msra.mxu0 %v1250
        %1261 = vmatprep.subr.bf16.mxu0 0
        %1262 = vmatpush1.bf16.msra.mxu0 %v1249
        %1263 = vmatprep.subr.bf16.mxu0 0
        %1264 = vmatpush1.bf16.msra.mxu0 %v1248
        %1265 = vmatprep.subr.bf16.mxu0 0
        %1266 = vmatpush1.bf16.msra.mxu0 %v1247
        %1267 = vmatprep.subr.bf16.mxu0 0
        %1268 = vmatpush1.bf16.msra.mxu0 %v1246
        %1269 = vmatprep.subr.bf16.mxu0 0
        %1270 = vmatpush1.bf16.msra.mxu0 %v1245
        %1271 = vmatprep.subr.bf16.mxu0 0
        %1272 = vmatpush1.bf16.msra.mxu0 %v1244
        %1273 = vmatprep.subr.bf16.mxu0 0
        %1274 = vmatpush1.bf16.msra.mxu0 %v1243
        %1275 = vmatprep.subr.bf16.mxu0 0
        %1276 = vmatpush2.bf16.msra.mxu0 0
        %1277 = vmatprep.subr.bf16.mxu0 0
        %1278 = vmatpush2.bf16.msra.mxu0 0
        %1279 = vmatprep.subr.bf16.mxu0 0
        %1280 = vmatpush2.bf16.msra.mxu0 0
        %1281 = vmatprep.subr.bf16.mxu0 0
        %1282 = vmatpush2.bf16.msra.mxu0 0
        %1283 = vmatprep.subr.bf16.mxu0 0
        %1284 = vmatpush2.bf16.msra.mxu0 0
        %1285 = vmatprep.subr.bf16.mxu0 0
        %1286 = vmatpush2.bf16.msra.mxu0 0
        %1287 = vmatprep.subr.bf16.mxu0 0
        %1288 = vmatpush2.bf16.msra.mxu0 0
        %1289 = vmatprep.subr.bf16.mxu0 0
        %1290 = vmatpush2.bf16.msra.mxu0 0
        %1291 = vmatprep.mubr.bf16.mxu0 0
        %1292 = vmatmul.mubr.bf16.gmra.mxu0 %v549
        %v1293 = vpop.f32.mrf.mxu0
        %v1294 = vadd.f32 %v1209, %v1293
        %v1295 = vpop.f32.mrf.mxu0
        %v1296 = vpop.f32.mrf.mxu0
        %v1297 = vpop.f32.mrf.mxu0
        %1298 = vdwg.mxu0
        %s1299 = scalar_lea.vmem %s6, 64
        %v1300 = vld [vmem:[%s1299] sm:$0xf]
        %v1301 = vld [vmem:[%s1299 + $0x4] sm:$0xf]
        %v1302 = vld [vmem:[%s1299 + $0x8] sm:$0xf]
        %v1303 = vld [vmem:[%s1299 + $0xc] sm:$0xf]
        %v1304 = vld [vmem:[%s1299 + $0x10] sm:$0xf]
        %v1305 = vld [vmem:[%s1299 + $0x14] sm:$0xf]
        %v1306 = vld [vmem:[%s1299 + $0x18] sm:$0xf]
        %v1307 = vld [vmem:[%s1299 + $0x1c] sm:$0xf]
        %v1308 = vld [vmem:[%s1299 + $0x20] sm:$0xf]
        %v1309 = vld [vmem:[%s1299 + $0x24] sm:$0xf]
        %v1310 = vld [vmem:[%s1299 + $0x28] sm:$0xf]
        %v1311 = vld [vmem:[%s1299 + $0x2c] sm:$0xf]
        %v1312 = vld [vmem:[%s1299 + $0x30] sm:$0xf]
        %v1313 = vld [vmem:[%s1299 + $0x34] sm:$0xf]
        %v1314 = vld [vmem:[%s1299 + $0x38] sm:$0xf]
        %v1315 = vld [vmem:[%s1299 + $0x3c] sm:$0xf]
        %s1316 = scalar_lea.vmem %s7, 1
        %v1317 = vld [vmem:[%s1316] sm:$0x1]
        %v1319 = vlaneseq
        %v1320 = vshrl.u32 %v1319, 7
        %v1321 = vsub.s32 0, %v1320
        %v1322 = vrot.slane %v1317, %v1321
        %v1340 = vunpack.c.l.b16 %v1300
        %v1341 = vunpack.c.l.b16 %v1301
        %v1342 = vunpack.c.l.b16 %v1302
        %v1343 = vunpack.c.l.b16 %v1303
        %v1344 = vunpack.c.l.b16 %v1304
        %v1345 = vunpack.c.l.b16 %v1305
        %v1346 = vunpack.c.l.b16 %v1306
        %v1347 = vunpack.c.l.b16 %v1307
        %v1348 = vunpack.c.l.b16 %v1308
        %v1349 = vunpack.c.l.b16 %v1309
        %v1350 = vunpack.c.l.b16 %v1310
        %v1351 = vunpack.c.l.b16 %v1311
        %v1352 = vunpack.c.l.b16 %v1312
        %v1353 = vunpack.c.l.b16 %v1313
        %v1354 = vunpack.c.l.b16 %v1314
        %v1355 = vunpack.c.l.b16 %v1315
        %v1356 = vpack.c.b16 %v1341, %v1340
        %v1357 = vpack.c.b16 %v1343, %v1342
        %v1358 = vpack.c.b16 %v1345, %v1344
        %v1359 = vpack.c.b16 %v1347, %v1346
        %v1360 = vpack.c.b16 %v1349, %v1348
        %v1361 = vpack.c.b16 %v1351, %v1350
        %v1362 = vpack.c.b16 %v1353, %v1352
        %v1363 = vpack.c.b16 %v1355, %v1354
        %1372 = vmatprep.subr.bf16.mxu0 0
        %1373 = vmatpush1.bf16.msra.mxu0 %v1363
        %1374 = vmatprep.subr.bf16.mxu0 0
        %1375 = vmatpush1.bf16.msra.mxu0 %v1362
        %1376 = vmatprep.subr.bf16.mxu0 0
        %1377 = vmatpush1.bf16.msra.mxu0 %v1361
        %1378 = vmatprep.subr.bf16.mxu0 0
        %1379 = vmatpush1.bf16.msra.mxu0 %v1360
        %1380 = vmatprep.subr.bf16.mxu0 0
        %1381 = vmatpush1.bf16.msra.mxu0 %v1359
        %1382 = vmatprep.subr.bf16.mxu0 0
        %1383 = vmatpush1.bf16.msra.mxu0 %v1358
        %1384 = vmatprep.subr.bf16.mxu0 0
        %1385 = vmatpush1.bf16.msra.mxu0 %v1357
        %1386 = vmatprep.subr.bf16.mxu0 0
        %1387 = vmatpush1.bf16.msra.mxu0 %v1356
        %1388 = vmatprep.subr.bf16.mxu0 0
        %1389 = vmatpush2.bf16.msra.mxu0 0
        %1390 = vmatprep.subr.bf16.mxu0 0
        %1391 = vmatpush2.bf16.msra.mxu0 0
        %1392 = vmatprep.subr.bf16.mxu0 0
        %1393 = vmatpush2.bf16.msra.mxu0 0
        %1394 = vmatprep.subr.bf16.mxu0 0
        %1395 = vmatpush2.bf16.msra.mxu0 0
        %1396 = vmatprep.subr.bf16.mxu0 0
        %1397 = vmatpush2.bf16.msra.mxu0 0
        %1398 = vmatprep.subr.bf16.mxu0 0
        %1399 = vmatpush2.bf16.msra.mxu0 0
        %1400 = vmatprep.subr.bf16.mxu0 0
        %1401 = vmatpush2.bf16.msra.mxu0 0
        %1402 = vmatprep.subr.bf16.mxu0 0
        %1403 = vmatpush2.bf16.msra.mxu0 0
        %1404 = vmatprep.mubr.bf16.mxu0 0
        %1405 = vmatmul.mubr.bf16.gmra.mxu0 %v716
        %v1406 = vpop.f32.mrf.mxu0
        %v1407 = vadd.f32 %v1322, %v1406
        %v1408 = vpop.f32.mrf.mxu0
        %v1409 = vpop.f32.mrf.mxu0
        %v1410 = vadd.f32 %v1322, %v1409
        %v1411 = vpop.f32.mrf.mxu0
        %1412 = vmatprep.mubr.bf16.mxu0 0
        %1413 = vmatmul.mubr.bf16.gmra.mxu0 %v717
        %v1414 = vpop.f32.mrf.mxu0
        %v1415 = vadd.f32 %v1322, %v1414
        %v1416 = vpop.f32.mrf.mxu0
        %v1417 = vpop.f32.mrf.mxu0
        %v1418 = vadd.f32 %v1322, %v1417
        %v1419 = vpop.f32.mrf.mxu0
        %1420 = vmatprep.mubr.bf16.mxu0 0
        %1421 = vmatmul.mubr.bf16.gmra.mxu0 %v718
        %v1422 = vpop.f32.mrf.mxu0
        %v1423 = vadd.f32 %v1322, %v1422
        %v1424 = vpop.f32.mrf.mxu0
        %v1425 = vpop.f32.mrf.mxu0
        %v1426 = vadd.f32 %v1322, %v1425
        %v1427 = vpop.f32.mrf.mxu0
        %1428 = vmatprep.mubr.bf16.mxu0 0
        %1429 = vmatmul.mubr.bf16.gmra.mxu0 %v719
        %v1430 = vpop.f32.mrf.mxu0
        %v1431 = vadd.f32 %v1322, %v1430
        %v1432 = vpop.f32.mrf.mxu0
        %v1433 = vpop.f32.mrf.mxu0
        %v1434 = vadd.f32 %v1322, %v1433
        %v1435 = vpop.f32.mrf.mxu0
        %1436 = vmatprep.mubr.bf16.mxu0 0
        %1437 = vmatmul.mubr.bf16.gmra.mxu0 %v720
        %v1438 = vpop.f32.mrf.mxu0
        %v1439 = vadd.f32 %v1322, %v1438
        %v1440 = vpop.f32.mrf.mxu0
        %v1441 = vpop.f32.mrf.mxu0
        %v1442 = vadd.f32 %v1322, %v1441
        %v1443 = vpop.f32.mrf.mxu0
        %1444 = vmatprep.mubr.bf16.mxu0 0
        %1445 = vmatmul.mubr.bf16.gmra.mxu0 %v721
        %v1446 = vpop.f32.mrf.mxu0
        %v1447 = vadd.f32 %v1322, %v1446
        %v1448 = vpop.f32.mrf.mxu0
        %v1449 = vpop.f32.mrf.mxu0
        %v1450 = vadd.f32 %v1322, %v1449
        %v1451 = vpop.f32.mrf.mxu0
        %1452 = vmatprep.mubr.bf16.mxu0 0
        %1453 = vmatmul.mubr.bf16.gmra.mxu0 %v722
        %v1454 = vpop.f32.mrf.mxu0
        %v1455 = vadd.f32 %v1322, %v1454
        %v1456 = vpop.f32.mrf.mxu0
        %v1457 = vpop.f32.mrf.mxu0
        %v1458 = vadd.f32 %v1322, %v1457
        %v1459 = vpop.f32.mrf.mxu0
        %1460 = vmatprep.mubr.bf16.mxu0 0
        %1461 = vmatmul.mubr.bf16.gmra.mxu0 %v723
        %v1462 = vpop.f32.mrf.mxu0
        %v1463 = vadd.f32 %v1322, %v1462
        %v1464 = vpop.f32.mrf.mxu0
        %v1465 = vpop.f32.mrf.mxu0
        %v1466 = vadd.f32 %v1322, %v1465
        %v1467 = vpop.f32.mrf.mxu0
        %1468 = vdwg.mxu0
        %s1469 = scalar_lea.vmem %s8, 64
        %v1470 = vld [vmem:[%s1469] sm:$0xf]
        %v1471 = vld [vmem:[%s1469 + $0x4] sm:$0xf]
        %v1472 = vld [vmem:[%s1469 + $0x8] sm:$0xf]
        %v1473 = vld [vmem:[%s1469 + $0xc] sm:$0xf]
        %v1474 = vld [vmem:[%s1469 + $0x10] sm:$0xf]
        %v1475 = vld [vmem:[%s1469 + $0x14] sm:$0xf]
        %v1476 = vld [vmem:[%s1469 + $0x18] sm:$0xf]
        %v1477 = vld [vmem:[%s1469 + $0x1c] sm:$0xf]
        %v1478 = vld [vmem:[%s1469 + $0x20] sm:$0xf]
        %v1479 = vld [vmem:[%s1469 + $0x24] sm:$0xf]
        %v1480 = vld [vmem:[%s1469 + $0x28] sm:$0xf]
        %v1481 = vld [vmem:[%s1469 + $0x2c] sm:$0xf]
        %v1482 = vld [vmem:[%s1469 + $0x30] sm:$0xf]
        %v1483 = vld [vmem:[%s1469 + $0x34] sm:$0xf]
        %v1484 = vld [vmem:[%s1469 + $0x38] sm:$0xf]
        %v1485 = vld [vmem:[%s1469 + $0x3c] sm:$0xf]
        %s1486 = scalar_lea.vmem %s9, 1
        %v1487 = vld [vmem:[%s1486] sm:$0x1]
        %v1489 = vlaneseq
        %v1490 = vshrl.u32 %v1489, 7
        %v1491 = vsub.s32 0, %v1490
        %v1492 = vrot.slane %v1487, %v1491
        %v1510 = vunpack.c.l.b16 %v1470
        %v1511 = vunpack.c.l.b16 %v1471
        %v1512 = vunpack.c.l.b16 %v1472
        %v1513 = vunpack.c.l.b16 %v1473
        %v1514 = vunpack.c.l.b16 %v1474
        %v1515 = vunpack.c.l.b16 %v1475
        %v1516 = vunpack.c.l.b16 %v1476
        %v1517 = vunpack.c.l.b16 %v1477
        %v1518 = vunpack.c.l.b16 %v1478
        %v1519 = vunpack.c.l.b16 %v1479
        %v1520 = vunpack.c.l.b16 %v1480
        %v1521 = vunpack.c.l.b16 %v1481
        %v1522 = vunpack.c.l.b16 %v1482
        %v1523 = vunpack.c.l.b16 %v1483
        %v1524 = vunpack.c.l.b16 %v1484
        %v1525 = vunpack.c.l.b16 %v1485
        %v1526 = vpack.c.b16 %v1511, %v1510
        %v1527 = vpack.c.b16 %v1513, %v1512
        %v1528 = vpack.c.b16 %v1515, %v1514
        %v1529 = vpack.c.b16 %v1517, %v1516
        %v1530 = vpack.c.b16 %v1519, %v1518
        %v1531 = vpack.c.b16 %v1521, %v1520
        %v1532 = vpack.c.b16 %v1523, %v1522
        %v1533 = vpack.c.b16 %v1525, %v1524
        %1542 = vmatprep.subr.bf16.mxu0 0
        %1543 = vmatpush1.bf16.msra.mxu0 %v1533
        %1544 = vmatprep.subr.bf16.mxu0 0
        %1545 = vmatpush1.bf16.msra.mxu0 %v1532
        %1546 = vmatprep.subr.bf16.mxu0 0
        %1547 = vmatpush1.bf16.msra.mxu0 %v1531
        %1548 = vmatprep.subr.bf16.mxu0 0
        %1549 = vmatpush1.bf16.msra.mxu0 %v1530
        %1550 = vmatprep.subr.bf16.mxu0 0
        %1551 = vmatpush1.bf16.msra.mxu0 %v1529
        %1552 = vmatprep.subr.bf16.mxu0 0
        %1553 = vmatpush1.bf16.msra.mxu0 %v1528
        %1554 = vmatprep.subr.bf16.mxu0 0
        %1555 = vmatpush1.bf16.msra.mxu0 %v1527
        %1556 = vmatprep.subr.bf16.mxu0 0
        %1557 = vmatpush1.bf16.msra.mxu0 %v1526
        %1558 = vmatprep.subr.bf16.mxu0 0
        %1559 = vmatpush2.bf16.msra.mxu0 0
        %1560 = vmatprep.subr.bf16.mxu0 0
        %1561 = vmatpush2.bf16.msra.mxu0 0
        %1562 = vmatprep.subr.bf16.mxu0 0
        %1563 = vmatpush2.bf16.msra.mxu0 0
        %1564 = vmatprep.subr.bf16.mxu0 0
        %1565 = vmatpush2.bf16.msra.mxu0 0
        %1566 = vmatprep.subr.bf16.mxu0 0
        %1567 = vmatpush2.bf16.msra.mxu0 0
        %1568 = vmatprep.subr.bf16.mxu0 0
        %1569 = vmatpush2.bf16.msra.mxu0 0
        %1570 = vmatprep.subr.bf16.mxu0 0
        %1571 = vmatpush2.bf16.msra.mxu0 0
        %1572 = vmatprep.subr.bf16.mxu0 0
        %1573 = vmatpush2.bf16.msra.mxu0 0
        %1574 = vmatprep.mubr.bf16.mxu0 0
        %1575 = vmatmul.mubr.bf16.gmra.mxu0 %v716
        %v1576 = vpop.f32.mrf.mxu0
        %v1577 = vadd.f32 %v1492, %v1576
        %v1578 = vpop.f32.mrf.mxu0
        %v1579 = vpop.f32.mrf.mxu0
        %v1580 = vadd.f32 %v1492, %v1579
        %v1581 = vpop.f32.mrf.mxu0
        %1582 = vmatprep.mubr.bf16.mxu0 0
        %1583 = vmatmul.mubr.bf16.gmra.mxu0 %v717
        %v1584 = vpop.f32.mrf.mxu0
        %v1585 = vadd.f32 %v1492, %v1584
        %v1586 = vpop.f32.mrf.mxu0
        %v1587 = vpop.f32.mrf.mxu0
        %v1588 = vadd.f32 %v1492, %v1587
        %v1589 = vpop.f32.mrf.mxu0
        %1590 = vmatprep.mubr.bf16.mxu0 0
        %1591 = vmatmul.mubr.bf16.gmra.mxu0 %v718
        %v1592 = vpop.f32.mrf.mxu0
        %v1593 = vadd.f32 %v1492, %v1592
        %v1594 = vpop.f32.mrf.mxu0
        %v1595 = vpop.f32.mrf.mxu0
        %v1596 = vadd.f32 %v1492, %v1595
        %v1597 = vpop.f32.mrf.mxu0
        %1598 = vmatprep.mubr.bf16.mxu0 0
        %1599 = vmatmul.mubr.bf16.gmra.mxu0 %v719
        %v1600 = vpop.f32.mrf.mxu0
        %v1601 = vadd.f32 %v1492, %v1600
        %v1602 = vpop.f32.mrf.mxu0
        %v1603 = vpop.f32.mrf.mxu0
        %v1604 = vadd.f32 %v1492, %v1603
        %v1605 = vpop.f32.mrf.mxu0
        %1606 = vmatprep.mubr.bf16.mxu0 0
        %1607 = vmatmul.mubr.bf16.gmra.mxu0 %v720
        %v1608 = vpop.f32.mrf.mxu0
        %v1609 = vadd.f32 %v1492, %v1608
        %v1610 = vpop.f32.mrf.mxu0
        %v1611 = vpop.f32.mrf.mxu0
        %v1612 = vadd.f32 %v1492, %v1611
        %v1613 = vpop.f32.mrf.mxu0
        %1614 = vmatprep.mubr.bf16.mxu0 0
        %1615 = vmatmul.mubr.bf16.gmra.mxu0 %v721
        %v1616 = vpop.f32.mrf.mxu0
        %v1617 = vadd.f32 %v1492, %v1616
        %v1618 = vpop.f32.mrf.mxu0
        %v1619 = vpop.f32.mrf.mxu0
        %v1620 = vadd.f32 %v1492, %v1619
        %v1621 = vpop.f32.mrf.mxu0
        %1622 = vmatprep.mubr.bf16.mxu0 0
        %1623 = vmatmul.mubr.bf16.gmra.mxu0 %v722
        %v1624 = vpop.f32.mrf.mxu0
        %v1625 = vadd.f32 %v1492, %v1624
        %v1626 = vpop.f32.mrf.mxu0
        %v1627 = vpop.f32.mrf.mxu0
        %v1628 = vadd.f32 %v1492, %v1627
        %v1629 = vpop.f32.mrf.mxu0
        %1630 = vmatprep.mubr.bf16.mxu0 0
        %1631 = vmatmul.mubr.bf16.gmra.mxu0 %v723
        %v1632 = vpop.f32.mrf.mxu0
        %v1633 = vadd.f32 %v1492, %v1632
        %v1634 = vpop.f32.mrf.mxu0
        %v1635 = vpop.f32.mrf.mxu0
        %v1636 = vadd.f32 %v1492, %v1635
        %v1637 = vpop.f32.mrf.mxu0
        %1638 = vdwg.mxu0
        %v1639 = vpack.c.bf16 %v1294, %v1294
        %v1640 = vpack.c.bf16 %v1410, %v1407
        %v1641 = vpack.c.bf16 %v1418, %v1415
        %v1642 = vpack.c.bf16 %v1426, %v1423
        %v1643 = vpack.c.bf16 %v1434, %v1431
        %v1644 = vpack.c.bf16 %v1442, %v1439
        %v1645 = vpack.c.bf16 %v1450, %v1447
        %v1646 = vpack.c.bf16 %v1458, %v1455
        %v1647 = vpack.c.bf16 %v1466, %v1463
        %v1649 = vsel %vm1054, %v1639, 0
        %v1652 = vsel %vm1054, %v1640, 0
        %v1655 = vsel %vm1054, %v1641, 0
        %v1658 = vsel %vm1054, %v1642, 0
        %v1661 = vsel %vm1054, %v1643, 0
        %v1664 = vsel %vm1054, %v1644, 0
        %v1667 = vsel %vm1054, %v1645, 0
        %v1670 = vsel %vm1054, %v1646, 0
        %v1673 = vsel %vm1054, %v1647, 0
        %1675 = vmatprep.subr.bf16.mxu0 0
        %1676 = vmatpush1.bf16.xpose.msra.mxu0 %v1673
        %1677 = vmatprep.subr.bf16.mxu0 0
        %1678 = vmatpush1.bf16.xpose.msra.mxu0 %v1670
        %1679 = vmatprep.subr.bf16.mxu0 0
        %1680 = vmatpush1.bf16.xpose.msra.mxu0 %v1667
        %1681 = vmatprep.subr.bf16.mxu0 0
        %1682 = vmatpush1.bf16.xpose.msra.mxu0 %v1664
        %1683 = vmatprep.subr.bf16.mxu0 0
        %1684 = vmatpush1.bf16.xpose.msra.mxu0 %v1661
        %1685 = vmatprep.subr.bf16.mxu0 0
        %1686 = vmatpush1.bf16.xpose.msra.mxu0 %v1658
        %1687 = vmatprep.subr.bf16.mxu0 0
        %1688 = vmatpush1.bf16.xpose.msra.mxu0 %v1655
        %1689 = vmatprep.subr.bf16.mxu0 0
        %1690 = vmatpush1.bf16.xpose.msra.mxu0 %v1652
        %1691 = vmatprep.subr.bf16.mxu0 0
        %1692 = vmatpush2.bf16.xpose.msra.mxu0 0
        %1693 = vmatprep.subr.bf16.mxu0 0
        %1694 = vmatpush2.bf16.xpose.msra.mxu0 0
        %1695 = vmatprep.subr.bf16.mxu0 0
        %1696 = vmatpush2.bf16.xpose.msra.mxu0 0
        %1697 = vmatprep.subr.bf16.mxu0 0
        %1698 = vmatpush2.bf16.xpose.msra.mxu0 0
        %1699 = vmatprep.subr.bf16.mxu0 0
        %1700 = vmatpush2.bf16.xpose.msra.mxu0 0
        %1701 = vmatprep.subr.bf16.mxu0 0
        %1702 = vmatpush2.bf16.xpose.msra.mxu0 0
        %1703 = vmatprep.subr.bf16.mxu0 0
        %1704 = vmatpush2.bf16.xpose.msra.mxu0 0
        %1705 = vmatprep.subr.bf16.mxu0 0
        %1706 = vmatpush2.bf16.xpose.msra.mxu0 0
        %1707 = vmatprep.mubr.bf16.mxu0 0
        %1708 = vmatmul.mubr.bf16.gmra.mxu0 %v1649
        %v1709 = vpop.f32.mrf.mxu0
        %v1710 = vadd.f32 %v529, %v1709
        %v1711 = vpop.f32.mrf.mxu0
        %v1712 = vpop.f32.mrf.mxu0
        %v1713 = vpop.f32.mrf.mxu0
        %1714 = vdwg.mxu0
        %1715 = vmax.xlane.f32.xlu0 %v1710
        %v1716 = vpop.xlane.xlu0 %1715
        %v1717 = vsub.f32 %v1710, %v1716
        %v1718 = vmul.f32 %v1717, 1.442695
        %v1719 = vpow.pop %v1718
        %1720 = vadd.xlane.f32.xlu0 %v1719
        %v1721 = vpop.xlane.xlu0 %1720
        %v1722 = vrcp.pop %v1721
        %v1723 = vmul.f32 %v1719, %v1722
        %v1724 = vadd.f32 %v1131, %v1723
        %v1725 = vpack.c.bf16 %v1723, %v1723
        %v1726 = vpack.c.bf16 %v1580, %v1577
        %v1727 = vpack.c.bf16 %v1588, %v1585
        %v1728 = vpack.c.bf16 %v1596, %v1593
        %v1729 = vpack.c.bf16 %v1604, %v1601
        %v1730 = vpack.c.bf16 %v1612, %v1609
        %v1731 = vpack.c.bf16 %v1620, %v1617
        %v1732 = vpack.c.bf16 %v1628, %v1625
        %v1733 = vpack.c.bf16 %v1636, %v1633
        %1734 = vmatprep.subr.bf16.mxu0 0
        %1735 = vmatpush1.bf16.msra.mxu0 %v1733
        %1736 = vmatprep.subr.bf16.mxu0 0
        %1737 = vmatpush1.bf16.msra.mxu0 %v1732
        %1738 = vmatprep.subr.bf16.mxu0 0
        %1739 = vmatpush1.bf16.msra.mxu0 %v1731
        %1740 = vmatprep.subr.bf16.mxu0 0
        %1741 = vmatpush1.bf16.msra.mxu0 %v1730
        %1742 = vmatprep.subr.bf16.mxu0 0
        %1743 = vmatpush1.bf16.msra.mxu0 %v1729
        %1744 = vmatprep.subr.bf16.mxu0 0
        %1745 = vmatpush1.bf16.msra.mxu0 %v1728
        %1746 = vmatprep.subr.bf16.mxu0 0
        %1747 = vmatpush1.bf16.msra.mxu0 %v1727
        %1748 = vmatprep.subr.bf16.mxu0 0
        %1749 = vmatpush1.bf16.msra.mxu0 %v1726
        %1750 = vmatprep.subr.bf16.mxu0 0
        %1751 = vmatpush2.bf16.msra.mxu0 0
        %1752 = vmatprep.subr.bf16.mxu0 0
        %1753 = vmatpush2.bf16.msra.mxu0 0
        %1754 = vmatprep.subr.bf16.mxu0 0
        %1755 = vmatpush2.bf16.msra.mxu0 0
        %1756 = vmatprep.subr.bf16.mxu0 0
        %1757 = vmatpush2.bf16.msra.mxu0 0
        %1758 = vmatprep.subr.bf16.mxu0 0
        %1759 = vmatpush2.bf16.msra.mxu0 0
        %1760 = vmatprep.subr.bf16.mxu0 0
        %1761 = vmatpush2.bf16.msra.mxu0 0
        %1762 = vmatprep.subr.bf16.mxu0 0
        %1763 = vmatpush2.bf16.msra.mxu0 0
        %1764 = vmatprep.subr.bf16.mxu0 0
        %1765 = vmatpush2.bf16.msra.mxu0 0
        %1766 = vmatprep.mubr.bf16.mxu0 0
        %1767 = vmatmul.mubr.bf16.gmra.mxu0 %v1725
        %v1768 = vpop.f32.mrf.mxu0
        %v1769 = vadd.f32 0.0, %v1768
        %v1770 = vpop.f32.mrf.mxu0
        %v1771 = vpop.f32.mrf.mxu0
        %v1772 = vpop.f32.mrf.mxu0
        %1773 = vdwg.mxu0
        %v1774 = vpack.c.bf16 %v1769, %v1769
        %s1775 = scalar_lea.vmem %s10, 16
        %v1776 = vld [vmem:[%s1775] sm:$0xf]
        %v1777 = vld [vmem:[%s1775 + $0x4] sm:$0xf]
        %v1778 = vld [vmem:[%s1775 + $0x8] sm:$0xf]
        %v1779 = vld [vmem:[%s1775 + $0xc] sm:$0xf]
        %v1784 = vunpack.c.l.b16 %v1776
        %v1785 = vunpack.c.l.b16 %v1777
        %v1786 = vunpack.c.l.b16 %v1778
        %v1787 = vunpack.c.l.b16 %v1779
        %v1788 = vpack.c.b16 %v1785, %v1784
        %v1789 = vpack.c.b16 %v1787, %v1786
        %v1793 = vsel %vm1054, %v1774, 0
        %1795 = vmatprep.subr.bf16.mxu0 0
        %1796 = vmatpush1.bf16.msra.mxu0 0
        %1797 = vmatprep.subr.bf16.mxu0 0
        %1798 = vmatpush1.bf16.msra.mxu0 0
        %1799 = vmatprep.subr.bf16.mxu0 0
        %1800 = vmatpush1.bf16.msra.mxu0 0
        %1801 = vmatprep.subr.bf16.mxu0 0
        %1802 = vmatpush1.bf16.msra.mxu0 0
        %1803 = vmatprep.subr.bf16.mxu0 0
        %1804 = vmatpush1.bf16.msra.mxu0 0
        %1805 = vmatprep.subr.bf16.mxu0 0
        %1806 = vmatpush1.bf16.msra.mxu0 0
        %1807 = vmatprep.subr.bf16.mxu0 0
        %1808 = vmatpush1.bf16.msra.mxu0 %v1789
        %1809 = vmatprep.subr.bf16.mxu0 0
        %1810 = vmatpush1.bf16.msra.mxu0 %v1788
        %1811 = vmatprep.subr.bf16.mxu0 0
        %1812 = vmatpush2.bf16.msra.mxu0 0
        %1813 = vmatprep.subr.bf16.mxu0 0
        %1814 = vmatpush2.bf16.msra.mxu0 0
        %1815 = vmatprep.subr.bf16.mxu0 0
        %1816 = vmatpush2.bf16.msra.mxu0 0
        %1817 = vmatprep.subr.bf16.mxu0 0
        %1818 = vmatpush2.bf16.msra.mxu0 0
        %1819 = vmatprep.subr.bf16.mxu0 0
        %1820 = vmatpush2.bf16.msra.mxu0 0
        %1821 = vmatprep.subr.bf16.mxu0 0
        %1822 = vmatpush2.bf16.msra.mxu0 0
        %1823 = vmatprep.subr.bf16.mxu0 0
        %1824 = vmatpush2.bf16.msra.mxu0 0
        %1825 = vmatprep.subr.bf16.mxu0 0
        %1826 = vmatpush2.bf16.msra.mxu0 0
        %1827 = vmatprep.mubr.bf16.mxu0 0
        %1828 = vmatmul.mubr.bf16.gmra.mxu0 %v1793
        %v1829 = vpop.f32.mrf.mxu0
        %v1830 = vadd.f32 0.0, %v1829
        %v1831 = vpop.f32.mrf.mxu0
        %v1832 = vpop.f32.mrf.mxu0
        %v1833 = vpop.f32.mrf.mxu0
        %1834 = vdwg.mxu0
        %v1839 = vunpack.c.l.b16 %v1182
        %v1840 = vunpack.c.l.b16 %v1183
        %v1841 = vunpack.c.l.b16 %v1184
        %v1842 = vunpack.c.l.b16 %v1185
        %v1843 = vpack.c.b16 %v1840, %v1839
        %v1844 = vpack.c.b16 %v1842, %v1841
        %v1848 = vsel %vm1054, %v1181, 0
        %1850 = vmatprep.subr.bf16.mxu0 0
        %1851 = vmatpush1.bf16.msra.mxu0 0
        %1852 = vmatprep.subr.bf16.mxu0 0
        %1853 = vmatpush1.bf16.msra.mxu0 0
        %1854 = vmatprep.subr.bf16.mxu0 0
        %1855 = vmatpush1.bf16.msra.mxu0 0
        %1856 = vmatprep.subr.bf16.mxu0 0
        %1857 = vmatpush1.bf16.msra.mxu0 0
        %1858 = vmatprep.subr.bf16.mxu0 0
        %1859 = vmatpush1.bf16.msra.mxu0 0
        %1860 = vmatprep.subr.bf16.mxu0 0
        %1861 = vmatpush1.bf16.msra.mxu0 0
        %1862 = vmatprep.subr.bf16.mxu0 0
        %1863 = vmatpush1.bf16.msra.mxu0 %v1844
        %1864 = vmatprep.subr.bf16.mxu0 0
        %1865 = vmatpush1.bf16.msra.mxu0 %v1843
        %1866 = vmatprep.subr.bf16.mxu0 0
        %1867 = vmatpush2.bf16.msra.mxu0 0
        %1868 = vmatprep.subr.bf16.mxu0 0
        %1869 = vmatpush2.bf16.msra.mxu0 0
        %1870 = vmatprep.subr.bf16.mxu0 0
        %1871 = vmatpush2.bf16.msra.mxu0 0
        %1872 = vmatprep.subr.bf16.mxu0 0
        %1873 = vmatpush2.bf16.msra.mxu0 0
        %1874 = vmatprep.subr.bf16.mxu0 0
        %1875 = vmatpush2.bf16.msra.mxu0 0
        %1876 = vmatprep.subr.bf16.mxu0 0
        %1877 = vmatpush2.bf16.msra.mxu0 0
        %1878 = vmatprep.subr.bf16.mxu0 0
        %1879 = vmatpush2.bf16.msra.mxu0 0
        %1880 = vmatprep.subr.bf16.mxu0 0
        %1881 = vmatpush2.bf16.msra.mxu0 0
        %1882 = vmatprep.mubr.bf16.mxu0 0
        %1883 = vmatmul.mubr.bf16.gmra.mxu0 %v1848
        %v1884 = vpop.f32.mrf.mxu0
        %v1885 = vadd.f32 %v1830, %v1884
        %v1886 = vpop.f32.mrf.mxu0
        %v1887 = vpop.f32.mrf.mxu0
        %v1888 = vpop.f32.mrf.mxu0
        %1889 = vdwg.mxu0
        %s1890 = scalar_lea.vmem %s4, 128
        %v1891 = vld [vmem:[%s1890] sm:$0xf]
        %v1892 = vld [vmem:[%s1890 + $0x4] sm:$0xf]
        %v1893 = vld [vmem:[%s1890 + $0x8] sm:$0xf]
        %v1894 = vld [vmem:[%s1890 + $0xc] sm:$0xf]
        %v1895 = vld [vmem:[%s1890 + $0x10] sm:$0xf]
        %v1896 = vld [vmem:[%s1890 + $0x14] sm:$0xf]
        %v1897 = vld [vmem:[%s1890 + $0x18] sm:$0xf]
        %v1898 = vld [vmem:[%s1890 + $0x1c] sm:$0xf]
        %v1899 = vld [vmem:[%s1890 + $0x20] sm:$0xf]
        %v1900 = vld [vmem:[%s1890 + $0x24] sm:$0xf]
        %v1901 = vld [vmem:[%s1890 + $0x28] sm:$0xf]
        %v1902 = vld [vmem:[%s1890 + $0x2c] sm:$0xf]
        %v1903 = vld [vmem:[%s1890 + $0x30] sm:$0xf]
        %v1904 = vld [vmem:[%s1890 + $0x34] sm:$0xf]
        %v1905 = vld [vmem:[%s1890 + $0x38] sm:$0xf]
        %v1906 = vld [vmem:[%s1890 + $0x3c] sm:$0xf]
        %s1907 = scalar_lea.vmem %s5, 2
        %v1908 = vld [vmem:[%s1907] sm:$0x1]
        %v1910 = vlaneseq
        %v1911 = vshrl.u32 %v1910, 7
        %v1912 = vsub.s32 0, %v1911
        %v1913 = vrot.slane %v1908, %v1912
        %v1931 = vunpack.c.l.b16 %v1891
        %v1932 = vunpack.c.l.b16 %v1892
        %v1933 = vunpack.c.l.b16 %v1893
        %v1934 = vunpack.c.l.b16 %v1894
        %v1935 = vunpack.c.l.b16 %v1895
        %v1936 = vunpack.c.l.b16 %v1896
        %v1937 = vunpack.c.l.b16 %v1897
        %v1938 = vunpack.c.l.b16 %v1898
        %v1939 = vunpack.c.l.b16 %v1899
        %v1940 = vunpack.c.l.b16 %v1900
        %v1941 = vunpack.c.l.b16 %v1901
        %v1942 = vunpack.c.l.b16 %v1902
        %v1943 = vunpack.c.l.b16 %v1903
        %v1944 = vunpack.c.l.b16 %v1904
        %v1945 = vunpack.c.l.b16 %v1905
        %v1946 = vunpack.c.l.b16 %v1906
        %v1947 = vpack.c.b16 %v1932, %v1931
        %v1948 = vpack.c.b16 %v1934, %v1933
        %v1949 = vpack.c.b16 %v1936, %v1935
        %v1950 = vpack.c.b16 %v1938, %v1937
        %v1951 = vpack.c.b16 %v1940, %v1939
        %v1952 = vpack.c.b16 %v1942, %v1941
        %v1953 = vpack.c.b16 %v1944, %v1943
        %v1954 = vpack.c.b16 %v1946, %v1945
        %1963 = vmatprep.subr.bf16.mxu0 0
        %1964 = vmatpush1.bf16.msra.mxu0 %v1954
        %1965 = vmatprep.subr.bf16.mxu0 0
        %1966 = vmatpush1.bf16.msra.mxu0 %v1953
        %1967 = vmatprep.subr.bf16.mxu0 0
        %1968 = vmatpush1.bf16.msra.mxu0 %v1952
        %1969 = vmatprep.subr.bf16.mxu0 0
        %1970 = vmatpush1.bf16.msra.mxu0 %v1951
        %1971 = vmatprep.subr.bf16.mxu0 0
        %1972 = vmatpush1.bf16.msra.mxu0 %v1950
        %1973 = vmatprep.subr.bf16.mxu0 0
        %1974 = vmatpush1.bf16.msra.mxu0 %v1949
        %1975 = vmatprep.subr.bf16.mxu0 0
        %1976 = vmatpush1.bf16.msra.mxu0 %v1948
        %1977 = vmatprep.subr.bf16.mxu0 0
        %1978 = vmatpush1.bf16.msra.mxu0 %v1947
        %1979 = vmatprep.subr.bf16.mxu0 0
        %1980 = vmatpush2.bf16.msra.mxu0 0
        %1981 = vmatprep.subr.bf16.mxu0 0
        %1982 = vmatpush2.bf16.msra.mxu0 0
        %1983 = vmatprep.subr.bf16.mxu0 0
        %1984 = vmatpush2.bf16.msra.mxu0 0
        %1985 = vmatprep.subr.bf16.mxu0 0
        %1986 = vmatpush2.bf16.msra.mxu0 0
        %1987 = vmatprep.subr.bf16.mxu0 0
        %1988 = vmatpush2.bf16.msra.mxu0 0
        %1989 = vmatprep.subr.bf16.mxu0 0
        %1990 = vmatpush2.bf16.msra.mxu0 0
        %1991 = vmatprep.subr.bf16.mxu0 0
        %1992 = vmatpush2.bf16.msra.mxu0 0
        %1993 = vmatprep.subr.bf16.mxu0 0
        %1994 = vmatpush2.bf16.msra.mxu0 0
        %1995 = vmatprep.mubr.bf16.mxu0 0
        %1996 = vmatmul.mubr.bf16.gmra.mxu0 %v549
        %v1997 = vpop.f32.mrf.mxu0
        %v1998 = vadd.f32 %v1913, %v1997
        %v1999 = vpop.f32.mrf.mxu0
        %v2000 = vpop.f32.mrf.mxu0
        %v2001 = vpop.f32.mrf.mxu0
        %2002 = vdwg.mxu0
        %s2003 = scalar_lea.vmem %s6, 128
        %v2004 = vld [vmem:[%s2003] sm:$0xf]
        %v2005 = vld [vmem:[%s2003 + $0x4] sm:$0xf]
        %v2006 = vld [vmem:[%s2003 + $0x8] sm:$0xf]
        %v2007 = vld [vmem:[%s2003 + $0xc] sm:$0xf]
        %v2008 = vld [vmem:[%s2003 + $0x10] sm:$0xf]
        %v2009 = vld [vmem:[%s2003 + $0x14] sm:$0xf]
        %v2010 = vld [vmem:[%s2003 + $0x18] sm:$0xf]
        %v2011 = vld [vmem:[%s2003 + $0x1c] sm:$0xf]
        %v2012 = vld [vmem:[%s2003 + $0x20] sm:$0xf]
        %v2013 = vld [vmem:[%s2003 + $0x24] sm:$0xf]
        %v2014 = vld [vmem:[%s2003 + $0x28] sm:$0xf]
        %v2015 = vld [vmem:[%s2003 + $0x2c] sm:$0xf]
        %v2016 = vld [vmem:[%s2003 + $0x30] sm:$0xf]
        %v2017 = vld [vmem:[%s2003 + $0x34] sm:$0xf]
        %v2018 = vld [vmem:[%s2003 + $0x38] sm:$0xf]
        %v2019 = vld [vmem:[%s2003 + $0x3c] sm:$0xf]
        %s2020 = scalar_lea.vmem %s7, 2
        %v2021 = vld [vmem:[%s2020] sm:$0x1]
        %v2023 = vlaneseq
        %v2024 = vshrl.u32 %v2023, 7
        %v2025 = vsub.s32 0, %v2024
        %v2026 = vrot.slane %v2021, %v2025
        %v2044 = vunpack.c.l.b16 %v2004
        %v2045 = vunpack.c.l.b16 %v2005
        %v2046 = vunpack.c.l.b16 %v2006
        %v2047 = vunpack.c.l.b16 %v2007
        %v2048 = vunpack.c.l.b16 %v2008
        %v2049 = vunpack.c.l.b16 %v2009
        %v2050 = vunpack.c.l.b16 %v2010
        %v2051 = vunpack.c.l.b16 %v2011
        %v2052 = vunpack.c.l.b16 %v2012
        %v2053 = vunpack.c.l.b16 %v2013
        %v2054 = vunpack.c.l.b16 %v2014
        %v2055 = vunpack.c.l.b16 %v2015
        %v2056 = vunpack.c.l.b16 %v2016
        %v2057 = vunpack.c.l.b16 %v2017
        %v2058 = vunpack.c.l.b16 %v2018
        %v2059 = vunpack.c.l.b16 %v2019
        %v2060 = vpack.c.b16 %v2045, %v2044
        %v2061 = vpack.c.b16 %v2047, %v2046
        %v2062 = vpack.c.b16 %v2049, %v2048
        %v2063 = vpack.c.b16 %v2051, %v2050
        %v2064 = vpack.c.b16 %v2053, %v2052
        %v2065 = vpack.c.b16 %v2055, %v2054
        %v2066 = vpack.c.b16 %v2057, %v2056
        %v2067 = vpack.c.b16 %v2059, %v2058
        %2076 = vmatprep.subr.bf16.mxu0 0
        %2077 = vmatpush1.bf16.msra.mxu0 %v2067
        %2078 = vmatprep.subr.bf16.mxu0 0
        %2079 = vmatpush1.bf16.msra.mxu0 %v2066
        %2080 = vmatprep.subr.bf16.mxu0 0
        %2081 = vmatpush1.bf16.msra.mxu0 %v2065
        %2082 = vmatprep.subr.bf16.mxu0 0
        %2083 = vmatpush1.bf16.msra.mxu0 %v2064
        %2084 = vmatprep.subr.bf16.mxu0 0
        %2085 = vmatpush1.bf16.msra.mxu0 %v2063
        %2086 = vmatprep.subr.bf16.mxu0 0
        %2087 = vmatpush1.bf16.msra.mxu0 %v2062
        %2088 = vmatprep.subr.bf16.mxu0 0
        %2089 = vmatpush1.bf16.msra.mxu0 %v2061
        %2090 = vmatprep.subr.bf16.mxu0 0
        %2091 = vmatpush1.bf16.msra.mxu0 %v2060
        %2092 = vmatprep.subr.bf16.mxu0 0
        %2093 = vmatpush2.bf16.msra.mxu0 0
        %2094 = vmatprep.subr.bf16.mxu0 0
        %2095 = vmatpush2.bf16.msra.mxu0 0
        %2096 = vmatprep.subr.bf16.mxu0 0
        %2097 = vmatpush2.bf16.msra.mxu0 0
        %2098 = vmatprep.subr.bf16.mxu0 0
        %2099 = vmatpush2.bf16.msra.mxu0 0
        %2100 = vmatprep.subr.bf16.mxu0 0
        %2101 = vmatpush2.bf16.msra.mxu0 0
        %2102 = vmatprep.subr.bf16.mxu0 0
        %2103 = vmatpush2.bf16.msra.mxu0 0
        %2104 = vmatprep.subr.bf16.mxu0 0
        %2105 = vmatpush2.bf16.msra.mxu0 0
        %2106 = vmatprep.subr.bf16.mxu0 0
        %2107 = vmatpush2.bf16.msra.mxu0 0
        %2108 = vmatprep.mubr.bf16.mxu0 0
        %2109 = vmatmul.mubr.bf16.gmra.mxu0 %v716
        %v2110 = vpop.f32.mrf.mxu0
        %v2111 = vadd.f32 %v2026, %v2110
        %v2112 = vpop.f32.mrf.mxu0
        %v2113 = vpop.f32.mrf.mxu0
        %v2114 = vadd.f32 %v2026, %v2113
        %v2115 = vpop.f32.mrf.mxu0
        %2116 = vmatprep.mubr.bf16.mxu0 0
        %2117 = vmatmul.mubr.bf16.gmra.mxu0 %v717
        %v2118 = vpop.f32.mrf.mxu0
        %v2119 = vadd.f32 %v2026, %v2118
        %v2120 = vpop.f32.mrf.mxu0
        %v2121 = vpop.f32.mrf.mxu0
        %v2122 = vadd.f32 %v2026, %v2121
        %v2123 = vpop.f32.mrf.mxu0
        %2124 = vmatprep.mubr.bf16.mxu0 0
        %2125 = vmatmul.mubr.bf16.gmra.mxu0 %v718
        %v2126 = vpop.f32.mrf.mxu0
        %v2127 = vadd.f32 %v2026, %v2126
        %v2128 = vpop.f32.mrf.mxu0
        %v2129 = vpop.f32.mrf.mxu0
        %v2130 = vadd.f32 %v2026, %v2129
        %v2131 = vpop.f32.mrf.mxu0
        %2132 = vmatprep.mubr.bf16.mxu0 0
        %2133 = vmatmul.mubr.bf16.gmra.mxu0 %v719
        %v2134 = vpop.f32.mrf.mxu0
        %v2135 = vadd.f32 %v2026, %v2134
        %v2136 = vpop.f32.mrf.mxu0
        %v2137 = vpop.f32.mrf.mxu0
        %v2138 = vadd.f32 %v2026, %v2137
        %v2139 = vpop.f32.mrf.mxu0
        %2140 = vmatprep.mubr.bf16.mxu0 0
        %2141 = vmatmul.mubr.bf16.gmra.mxu0 %v720
        %v2142 = vpop.f32.mrf.mxu0
        %v2143 = vadd.f32 %v2026, %v2142
        %v2144 = vpop.f32.mrf.mxu0
        %v2145 = vpop.f32.mrf.mxu0
        %v2146 = vadd.f32 %v2026, %v2145
        %v2147 = vpop.f32.mrf.mxu0
        %2148 = vmatprep.mubr.bf16.mxu0 0
        %2149 = vmatmul.mubr.bf16.gmra.mxu0 %v721
        %v2150 = vpop.f32.mrf.mxu0
        %v2151 = vadd.f32 %v2026, %v2150
        %v2152 = vpop.f32.mrf.mxu0
        %v2153 = vpop.f32.mrf.mxu0
        %v2154 = vadd.f32 %v2026, %v2153
        %v2155 = vpop.f32.mrf.mxu0
        %2156 = vmatprep.mubr.bf16.mxu0 0
        %2157 = vmatmul.mubr.bf16.gmra.mxu0 %v722
        %v2158 = vpop.f32.mrf.mxu0
        %v2159 = vadd.f32 %v2026, %v2158
        %v2160 = vpop.f32.mrf.mxu0
        %v2161 = vpop.f32.mrf.mxu0
        %v2162 = vadd.f32 %v2026, %v2161
        %v2163 = vpop.f32.mrf.mxu0
        %2164 = vmatprep.mubr.bf16.mxu0 0
        %2165 = vmatmul.mubr.bf16.gmra.mxu0 %v723
        %v2166 = vpop.f32.mrf.mxu0
        %v2167 = vadd.f32 %v2026, %v2166
        %v2168 = vpop.f32.mrf.mxu0
        %v2169 = vpop.f32.mrf.mxu0
        %v2170 = vadd.f32 %v2026, %v2169
        %v2171 = vpop.f32.mrf.mxu0
        %2172 = vdwg.mxu0
        %s2173 = scalar_lea.vmem %s8, 128
        %v2174 = vld [vmem:[%s2173] sm:$0xf]
        %v2175 = vld [vmem:[%s2173 + $0x4] sm:$0xf]
        %v2176 = vld [vmem:[%s2173 + $0x8] sm:$0xf]
        %v2177 = vld [vmem:[%s2173 + $0xc] sm:$0xf]
        %v2178 = vld [vmem:[%s2173 + $0x10] sm:$0xf]
        %v2179 = vld [vmem:[%s2173 + $0x14] sm:$0xf]
        %v2180 = vld [vmem:[%s2173 + $0x18] sm:$0xf]
        %v2181 = vld [vmem:[%s2173 + $0x1c] sm:$0xf]
        %v2182 = vld [vmem:[%s2173 + $0x20] sm:$0xf]
        %v2183 = vld [vmem:[%s2173 + $0x24] sm:$0xf]
        %v2184 = vld [vmem:[%s2173 + $0x28] sm:$0xf]
        %v2185 = vld [vmem:[%s2173 + $0x2c] sm:$0xf]
        %v2186 = vld [vmem:[%s2173 + $0x30] sm:$0xf]
        %v2187 = vld [vmem:[%s2173 + $0x34] sm:$0xf]
        %v2188 = vld [vmem:[%s2173 + $0x38] sm:$0xf]
        %v2189 = vld [vmem:[%s2173 + $0x3c] sm:$0xf]
        %s2190 = scalar_lea.vmem %s9, 2
        %v2191 = vld [vmem:[%s2190] sm:$0x1]
        %v2193 = vlaneseq
        %v2194 = vshrl.u32 %v2193, 7
        %v2195 = vsub.s32 0, %v2194
        %v2196 = vrot.slane %v2191, %v2195
        %v2214 = vunpack.c.l.b16 %v2174
        %v2215 = vunpack.c.l.b16 %v2175
        %v2216 = vunpack.c.l.b16 %v2176
        %v2217 = vunpack.c.l.b16 %v2177
        %v2218 = vunpack.c.l.b16 %v2178
        %v2219 = vunpack.c.l.b16 %v2179
        %v2220 = vunpack.c.l.b16 %v2180
        %v2221 = vunpack.c.l.b16 %v2181
        %v2222 = vunpack.c.l.b16 %v2182
        %v2223 = vunpack.c.l.b16 %v2183
        %v2224 = vunpack.c.l.b16 %v2184
        %v2225 = vunpack.c.l.b16 %v2185
        %v2226 = vunpack.c.l.b16 %v2186
        %v2227 = vunpack.c.l.b16 %v2187
        %v2228 = vunpack.c.l.b16 %v2188
        %v2229 = vunpack.c.l.b16 %v2189
        %v2230 = vpack.c.b16 %v2215, %v2214
        %v2231 = vpack.c.b16 %v2217, %v2216
        %v2232 = vpack.c.b16 %v2219, %v2218
        %v2233 = vpack.c.b16 %v2221, %v2220
        %v2234 = vpack.c.b16 %v2223, %v2222
        %v2235 = vpack.c.b16 %v2225, %v2224
        %v2236 = vpack.c.b16 %v2227, %v2226
        %v2237 = vpack.c.b16 %v2229, %v2228
        %2246 = vmatprep.subr.bf16.mxu0 0
        %2247 = vmatpush1.bf16.msra.mxu0 %v2237
        %2248 = vmatprep.subr.bf16.mxu0 0
        %2249 = vmatpush1.bf16.msra.mxu0 %v2236
        %2250 = vmatprep.subr.bf16.mxu0 0
        %2251 = vmatpush1.bf16.msra.mxu0 %v2235
        %2252 = vmatprep.subr.bf16.mxu0 0
        %2253 = vmatpush1.bf16.msra.mxu0 %v2234
        %2254 = vmatprep.subr.bf16.mxu0 0
        %2255 = vmatpush1.bf16.msra.mxu0 %v2233
        %2256 = vmatprep.subr.bf16.mxu0 0
        %2257 = vmatpush1.bf16.msra.mxu0 %v2232
        %2258 = vmatprep.subr.bf16.mxu0 0
        %2259 = vmatpush1.bf16.msra.mxu0 %v2231
        %2260 = vmatprep.subr.bf16.mxu0 0
        %2261 = vmatpush1.bf16.msra.mxu0 %v2230
        %2262 = vmatprep.subr.bf16.mxu0 0
        %2263 = vmatpush2.bf16.msra.mxu0 0
        %2264 = vmatprep.subr.bf16.mxu0 0
        %2265 = vmatpush2.bf16.msra.mxu0 0
        %2266 = vmatprep.subr.bf16.mxu0 0
        %2267 = vmatpush2.bf16.msra.mxu0 0
        %2268 = vmatprep.subr.bf16.mxu0 0
        %2269 = vmatpush2.bf16.msra.mxu0 0
        %2270 = vmatprep.subr.bf16.mxu0 0
        %2271 = vmatpush2.bf16.msra.mxu0 0
        %2272 = vmatprep.subr.bf16.mxu0 0
        %2273 = vmatpush2.bf16.msra.mxu0 0
        %2274 = vmatprep.subr.bf16.mxu0 0
        %2275 = vmatpush2.bf16.msra.mxu0 0
        %2276 = vmatprep.subr.bf16.mxu0 0
        %2277 = vmatpush2.bf16.msra.mxu0 0
        %2278 = vmatprep.mubr.bf16.mxu0 0
        %2279 = vmatmul.mubr.bf16.gmra.mxu0 %v716
        %v2280 = vpop.f32.mrf.mxu0
        %v2281 = vadd.f32 %v2196, %v2280
        %v2282 = vpop.f32.mrf.mxu0
        %v2283 = vpop.f32.mrf.mxu0
        %v2284 = vadd.f32 %v2196, %v2283
        %v2285 = vpop.f32.mrf.mxu0
        %2286 = vmatprep.mubr.bf16.mxu0 0
        %2287 = vmatmul.mubr.bf16.gmra.mxu0 %v717
        %v2288 = vpop.f32.mrf.mxu0
        %v2289 = vadd.f32 %v2196, %v2288
        %v2290 = vpop.f32.mrf.mxu0
        %v2291 = vpop.f32.mrf.mxu0
        %v2292 = vadd.f32 %v2196, %v2291
        %v2293 = vpop.f32.mrf.mxu0
        %2294 = vmatprep.mubr.bf16.mxu0 0
        %2295 = vmatmul.mubr.bf16.gmra.mxu0 %v718
        %v2296 = vpop.f32.mrf.mxu0
        %v2297 = vadd.f32 %v2196, %v2296
        %v2298 = vpop.f32.mrf.mxu0
        %v2299 = vpop.f32.mrf.mxu0
        %v2300 = vadd.f32 %v2196, %v2299
        %v2301 = vpop.f32.mrf.mxu0
        %2302 = vmatprep.mubr.bf16.mxu0 0
        %2303 = vmatmul.mubr.bf16.gmra.mxu0 %v719
        %v2304 = vpop.f32.mrf.mxu0
        %v2305 = vadd.f32 %v2196, %v2304
        %v2306 = vpop.f32.mrf.mxu0
        %v2307 = vpop.f32.mrf.mxu0
        %v2308 = vadd.f32 %v2196, %v2307
        %v2309 = vpop.f32.mrf.mxu0
        %2310 = vmatprep.mubr.bf16.mxu0 0
        %2311 = vmatmul.mubr.bf16.gmra.mxu0 %v720
        %v2312 = vpop.f32.mrf.mxu0
        %v2313 = vadd.f32 %v2196, %v2312
        %v2314 = vpop.f32.mrf.mxu0
        %v2315 = vpop.f32.mrf.mxu0
        %v2316 = vadd.f32 %v2196, %v2315
        %v2317 = vpop.f32.mrf.mxu0
        %2318 = vmatprep.mubr.bf16.mxu0 0
        %2319 = vmatmul.mubr.bf16.gmra.mxu0 %v721
        %v2320 = vpop.f32.mrf.mxu0
        %v2321 = vadd.f32 %v2196, %v2320
        %v2322 = vpop.f32.mrf.mxu0
        %v2323 = vpop.f32.mrf.mxu0
        %v2324 = vadd.f32 %v2196, %v2323
        %v2325 = vpop.f32.mrf.mxu0
        %2326 = vmatprep.mubr.bf16.mxu0 0
        %2327 = vmatmul.mubr.bf16.gmra.mxu0 %v722
        %v2328 = vpop.f32.mrf.mxu0
        %v2329 = vadd.f32 %v2196, %v2328
        %v2330 = vpop.f32.mrf.mxu0
        %v2331 = vpop.f32.mrf.mxu0
        %v2332 = vadd.f32 %v2196, %v2331
        %v2333 = vpop.f32.mrf.mxu0
        %2334 = vmatprep.mubr.bf16.mxu0 0
        %2335 = vmatmul.mubr.bf16.gmra.mxu0 %v723
        %v2336 = vpop.f32.mrf.mxu0
        %v2337 = vadd.f32 %v2196, %v2336
        %v2338 = vpop.f32.mrf.mxu0
        %v2339 = vpop.f32.mrf.mxu0
        %v2340 = vadd.f32 %v2196, %v2339
        %v2341 = vpop.f32.mrf.mxu0
        %2342 = vdwg.mxu0
        %v2343 = vpack.c.bf16 %v1998, %v1998
        %v2344 = vpack.c.bf16 %v2114, %v2111
        %v2345 = vpack.c.bf16 %v2122, %v2119
        %v2346 = vpack.c.bf16 %v2130, %v2127
        %v2347 = vpack.c.bf16 %v2138, %v2135
        %v2348 = vpack.c.bf16 %v2146, %v2143
        %v2349 = vpack.c.bf16 %v2154, %v2151
        %v2350 = vpack.c.bf16 %v2162, %v2159
        %v2351 = vpack.c.bf16 %v2170, %v2167
        %v2353 = vsel %vm1054, %v2343, 0
        %v2356 = vsel %vm1054, %v2344, 0
        %v2359 = vsel %vm1054, %v2345, 0
        %v2362 = vsel %vm1054, %v2346, 0
        %v2365 = vsel %vm1054, %v2347, 0
        %v2368 = vsel %vm1054, %v2348, 0
        %v2371 = vsel %vm1054, %v2349, 0
        %v2374 = vsel %vm1054, %v2350, 0
        %v2377 = vsel %vm1054, %v2351, 0
        %2379 = vmatprep.subr.bf16.mxu0 0
        %2380 = vmatpush1.bf16.xpose.msra.mxu0 %v2377
        %2381 = vmatprep.subr.bf16.mxu0 0
        %2382 = vmatpush1.bf16.xpose.msra.mxu0 %v2374
        %2383 = vmatprep.subr.bf16.mxu0 0
        %2384 = vmatpush1.bf16.xpose.msra.mxu0 %v2371
        %2385 = vmatprep.subr.bf16.mxu0 0
        %2386 = vmatpush1.bf16.xpose.msra.mxu0 %v2368
        %2387 = vmatprep.subr.bf16.mxu0 0
        %2388 = vmatpush1.bf16.xpose.msra.mxu0 %v2365
        %2389 = vmatprep.subr.bf16.mxu0 0
        %2390 = vmatpush1.bf16.xpose.msra.mxu0 %v2362
        %2391 = vmatprep.subr.bf16.mxu0 0
        %2392 = vmatpush1.bf16.xpose.msra.mxu0 %v2359
        %2393 = vmatprep.subr.bf16.mxu0 0
        %2394 = vmatpush1.bf16.xpose.msra.mxu0 %v2356
        %2395 = vmatprep.subr.bf16.mxu0 0
        %2396 = vmatpush2.bf16.xpose.msra.mxu0 0
        %2397 = vmatprep.subr.bf16.mxu0 0
        %2398 = vmatpush2.bf16.xpose.msra.mxu0 0
        %2399 = vmatprep.subr.bf16.mxu0 0
        %2400 = vmatpush2.bf16.xpose.msra.mxu0 0
        %2401 = vmatprep.subr.bf16.mxu0 0
        %2402 = vmatpush2.bf16.xpose.msra.mxu0 0
        %2403 = vmatprep.subr.bf16.mxu0 0
        %2404 = vmatpush2.bf16.xpose.msra.mxu0 0
        %2405 = vmatprep.subr.bf16.mxu0 0
        %2406 = vmatpush2.bf16.xpose.msra.mxu0 0
        %2407 = vmatprep.subr.bf16.mxu0 0
        %2408 = vmatpush2.bf16.xpose.msra.mxu0 0
        %2409 = vmatprep.subr.bf16.mxu0 0
        %2410 = vmatpush2.bf16.xpose.msra.mxu0 0
        %2411 = vmatprep.mubr.bf16.mxu0 0
        %2412 = vmatmul.mubr.bf16.gmra.mxu0 %v2353
        %v2413 = vpop.f32.mrf.mxu0
        %v2414 = vadd.f32 %v529, %v2413
        %v2415 = vpop.f32.mrf.mxu0
        %v2416 = vpop.f32.mrf.mxu0
        %v2417 = vpop.f32.mrf.mxu0
        %2418 = vdwg.mxu0
        %2419 = vmax.xlane.f32.xlu0 %v2414
        %v2420 = vpop.xlane.xlu0 %2419
        %v2421 = vsub.f32 %v2414, %v2420
        %v2422 = vmul.f32 %v2421, 1.442695
        %v2423 = vpow.pop %v2422
        %2424 = vadd.xlane.f32.xlu0 %v2423
        %v2425 = vpop.xlane.xlu0 %2424
        %v2426 = vrcp.pop %v2425
        %v2427 = vmul.f32 %v2423, %v2426
        %v2428 = vadd.f32 %v1724, %v2427
        %v2429 = vpack.c.bf16 %v2427, %v2427
        %v2430 = vpack.c.bf16 %v2284, %v2281
        %v2431 = vpack.c.bf16 %v2292, %v2289
        %v2432 = vpack.c.bf16 %v2300, %v2297
        %v2433 = vpack.c.bf16 %v2308, %v2305
        %v2434 = vpack.c.bf16 %v2316, %v2313
        %v2435 = vpack.c.bf16 %v2324, %v2321
        %v2436 = vpack.c.bf16 %v2332, %v2329
        %v2437 = vpack.c.bf16 %v2340, %v2337
        %2438 = vmatprep.subr.bf16.mxu0 0
        %2439 = vmatpush1.bf16.msra.mxu0 %v2437
        %2440 = vmatprep.subr.bf16.mxu0 0
        %2441 = vmatpush1.bf16.msra.mxu0 %v2436
        %2442 = vmatprep.subr.bf16.mxu0 0
        %2443 = vmatpush1.bf16.msra.mxu0 %v2435
        %2444 = vmatprep.subr.bf16.mxu0 0
        %2445 = vmatpush1.bf16.msra.mxu0 %v2434
        %2446 = vmatprep.subr.bf16.mxu0 0
        %2447 = vmatpush1.bf16.msra.mxu0 %v2433
        %2448 = vmatprep.subr.bf16.mxu0 0
        %2449 = vmatpush1.bf16.msra.mxu0 %v2432
        %2450 = vmatprep.subr.bf16.mxu0 0
        %2451 = vmatpush1.bf16.msra.mxu0 %v2431
        %2452 = vmatprep.subr.bf16.mxu0 0
        %2453 = vmatpush1.bf16.msra.mxu0 %v2430
        %2454 = vmatprep.subr.bf16.mxu0 0
        %2455 = vmatpush2.bf16.msra.mxu0 0
        %2456 = vmatprep.subr.bf16.mxu0 0
        %2457 = vmatpush2.bf16.msra.mxu0 0
        %2458 = vmatprep.subr.bf16.mxu0 0
        %2459 = vmatpush2.bf16.msra.mxu0 0
        %2460 = vmatprep.subr.bf16.mxu0 0
        %2461 = vmatpush2.bf16.msra.mxu0 0
        %2462 = vmatprep.subr.bf16.mxu0 0
        %2463 = vmatpush2.bf16.msra.mxu0 0
        %2464 = vmatprep.subr.bf16.mxu0 0
        %2465 = vmatpush2.bf16.msra.mxu0 0
        %2466 = vmatprep.subr.bf16.mxu0 0
        %2467 = vmatpush2.bf16.msra.mxu0 0
        %2468 = vmatprep.subr.bf16.mxu0 0
        %2469 = vmatpush2.bf16.msra.mxu0 0
        %2470 = vmatprep.mubr.bf16.mxu0 0
        %2471 = vmatmul.mubr.bf16.gmra.mxu0 %v2429
        %v2472 = vpop.f32.mrf.mxu0
        %v2473 = vadd.f32 0.0, %v2472
        %v2474 = vpop.f32.mrf.mxu0
        %v2475 = vpop.f32.mrf.mxu0
        %v2476 = vpop.f32.mrf.mxu0
        %2477 = vdwg.mxu0
        %v2478 = vpack.c.bf16 %v2473, %v2473
        %s2479 = scalar_lea.vmem %s10, 32
        %v2480 = vld [vmem:[%s2479] sm:$0xf]
        %v2481 = vld [vmem:[%s2479 + $0x4] sm:$0xf]
        %v2482 = vld [vmem:[%s2479 + $0x8] sm:$0xf]
        %v2483 = vld [vmem:[%s2479 + $0xc] sm:$0xf]
        %v2488 = vunpack.c.l.b16 %v2480
        %v2489 = vunpack.c.l.b16 %v2481
        %v2490 = vunpack.c.l.b16 %v2482
        %v2491 = vunpack.c.l.b16 %v2483
        %v2492 = vpack.c.b16 %v2489, %v2488
        %v2493 = vpack.c.b16 %v2491, %v2490
        %v2497 = vsel %vm1054, %v2478, 0
        %2499 = vmatprep.subr.bf16.mxu0 0
        %2500 = vmatpush1.bf16.msra.mxu0 0
        %2501 = vmatprep.subr.bf16.mxu0 0
        %2502 = vmatpush1.bf16.msra.mxu0 0
        %2503 = vmatprep.subr.bf16.mxu0 0
        %2504 = vmatpush1.bf16.msra.mxu0 0
        %2505 = vmatprep.subr.bf16.mxu0 0
        %2506 = vmatpush1.bf16.msra.mxu0 0
        %2507 = vmatprep.subr.bf16.mxu0 0
        %2508 = vmatpush1.bf16.msra.mxu0 0
        %2509 = vmatprep.subr.bf16.mxu0 0
        %2510 = vmatpush1.bf16.msra.mxu0 0
        %2511 = vmatprep.subr.bf16.mxu0 0
        %2512 = vmatpush1.bf16.msra.mxu0 %v2493
        %2513 = vmatprep.subr.bf16.mxu0 0
        %2514 = vmatpush1.bf16.msra.mxu0 %v2492
        %2515 = vmatprep.subr.bf16.mxu0 0
        %2516 = vmatpush2.bf16.msra.mxu0 0
        %2517 = vmatprep.subr.bf16.mxu0 0
        %2518 = vmatpush2.bf16.msra.mxu0 0
        %2519 = vmatprep.subr.bf16.mxu0 0
        %2520 = vmatpush2.bf16.msra.mxu0 0
        %2521 = vmatprep.subr.bf16.mxu0 0
        %2522 = vmatpush2.bf16.msra.mxu0 0
        %2523 = vmatprep.subr.bf16.mxu0 0
        %2524 = vmatpush2.bf16.msra.mxu0 0
        %2525 = vmatprep.subr.bf16.mxu0 0
        %2526 = vmatpush2.bf16.msra.mxu0 0
        %2527 = vmatprep.subr.bf16.mxu0 0
        %2528 = vmatpush2.bf16.msra.mxu0 0
        %2529 = vmatprep.subr.bf16.mxu0 0
        %2530 = vmatpush2.bf16.msra.mxu0 0
        %2531 = vmatprep.mubr.bf16.mxu0 0
        %2532 = vmatmul.mubr.bf16.gmra.mxu0 %v2497
        %v2533 = vpop.f32.mrf.mxu0
        %v2534 = vadd.f32 0.0, %v2533
        %v2535 = vpop.f32.mrf.mxu0
        %v2536 = vpop.f32.mrf.mxu0
        %v2537 = vpop.f32.mrf.mxu0
        %2538 = vdwg.mxu0
        %v2539 = vadd.f32 %v1885, %v2534
        %s2540 = scalar_lea.vmem %s4, 192
        %v2541 = vld [vmem:[%s2540] sm:$0xf]
        %v2542 = vld [vmem:[%s2540 + $0x4] sm:$0xf]
        %v2543 = vld [vmem:[%s2540 + $0x8] sm:$0xf]
        %v2544 = vld [vmem:[%s2540 + $0xc] sm:$0xf]
        %v2545 = vld [vmem:[%s2540 + $0x10] sm:$0xf]
        %v2546 = vld [vmem:[%s2540 + $0x14] sm:$0xf]
        %v2547 = vld [vmem:[%s2540 + $0x18] sm:$0xf]
        %v2548 = vld [vmem:[%s2540 + $0x1c] sm:$0xf]
        %v2549 = vld [vmem:[%s2540 + $0x20] sm:$0xf]
        %v2550 = vld [vmem:[%s2540 + $0x24] sm:$0xf]
        %v2551 = vld [vmem:[%s2540 + $0x28] sm:$0xf]
        %v2552 = vld [vmem:[%s2540 + $0x2c] sm:$0xf]
        %v2553 = vld [vmem:[%s2540 + $0x30] sm:$0xf]
        %v2554 = vld [vmem:[%s2540 + $0x34] sm:$0xf]
        %v2555 = vld [vmem:[%s2540 + $0x38] sm:$0xf]
        %v2556 = vld [vmem:[%s2540 + $0x3c] sm:$0xf]
        %s2557 = scalar_lea.vmem %s5, 3
        %v2558 = vld [vmem:[%s2557] sm:$0x1]
        %v2560 = vlaneseq
        %v2561 = vshrl.u32 %v2560, 7
        %v2562 = vsub.s32 0, %v2561
        %v2563 = vrot.slane %v2558, %v2562
        %v2581 = vunpack.c.l.b16 %v2541
        %v2582 = vunpack.c.l.b16 %v2542
        %v2583 = vunpack.c.l.b16 %v2543
        %v2584 = vunpack.c.l.b16 %v2544
        %v2585 = vunpack.c.l.b16 %v2545
        %v2586 = vunpack.c.l.b16 %v2546
        %v2587 = vunpack.c.l.b16 %v2547
        %v2588 = vunpack.c.l.b16 %v2548
        %v2589 = vunpack.c.l.b16 %v2549
        %v2590 = vunpack.c.l.b16 %v2550
        %v2591 = vunpack.c.l.b16 %v2551
        %v2592 = vunpack.c.l.b16 %v2552
        %v2593 = vunpack.c.l.b16 %v2553
        %v2594 = vunpack.c.l.b16 %v2554
        %v2595 = vunpack.c.l.b16 %v2555
        %v2596 = vunpack.c.l.b16 %v2556
        %v2597 = vpack.c.b16 %v2582, %v2581
        %v2598 = vpack.c.b16 %v2584, %v2583
        %v2599 = vpack.c.b16 %v2586, %v2585
        %v2600 = vpack.c.b16 %v2588, %v2587
        %v2601 = vpack.c.b16 %v2590, %v2589
        %v2602 = vpack.c.b16 %v2592, %v2591
        %v2603 = vpack.c.b16 %v2594, %v2593
        %v2604 = vpack.c.b16 %v2596, %v2595
        %2613 = vmatprep.subr.bf16.mxu0 0
        %2614 = vmatpush1.bf16.msra.mxu0 %v2604
        %2615 = vmatprep.subr.bf16.mxu0 0
        %2616 = vmatpush1.bf16.msra.mxu0 %v2603
        %2617 = vmatprep.subr.bf16.mxu0 0
        %2618 = vmatpush1.bf16.msra.mxu0 %v2602
        %2619 = vmatprep.subr.bf16.mxu0 0
        %2620 = vmatpush1.bf16.msra.mxu0 %v2601
        %2621 = vmatprep.subr.bf16.mxu0 0
        %2622 = vmatpush1.bf16.msra.mxu0 %v2600
        %2623 = vmatprep.subr.bf16.mxu0 0
        %2624 = vmatpush1.bf16.msra.mxu0 %v2599
        %2625 = vmatprep.subr.bf16.mxu0 0
        %2626 = vmatpush1.bf16.msra.mxu0 %v2598
        %2627 = vmatprep.subr.bf16.mxu0 0
        %2628 = vmatpush1.bf16.msra.mxu0 %v2597
        %2629 = vmatprep.subr.bf16.mxu0 0
        %2630 = vmatpush2.bf16.msra.mxu0 0
        %2631 = vmatprep.subr.bf16.mxu0 0
        %2632 = vmatpush2.bf16.msra.mxu0 0
        %2633 = vmatprep.subr.bf16.mxu0 0
        %2634 = vmatpush2.bf16.msra.mxu0 0
        %2635 = vmatprep.subr.bf16.mxu0 0
        %2636 = vmatpush2.bf16.msra.mxu0 0
        %2637 = vmatprep.subr.bf16.mxu0 0
        %2638 = vmatpush2.bf16.msra.mxu0 0
        %2639 = vmatprep.subr.bf16.mxu0 0
        %2640 = vmatpush2.bf16.msra.mxu0 0
        %2641 = vmatprep.subr.bf16.mxu0 0
        %2642 = vmatpush2.bf16.msra.mxu0 0
        %2643 = vmatprep.subr.bf16.mxu0 0
        %2644 = vmatpush2.bf16.msra.mxu0 0
        %2645 = vmatprep.mubr.bf16.mxu0 0
        %2646 = vmatmul.mubr.bf16.gmra.mxu0 %v549
        %v2647 = vpop.f32.mrf.mxu0
        %v2648 = vadd.f32 %v2563, %v2647
        %v2649 = vpop.f32.mrf.mxu0
        %v2650 = vpop.f32.mrf.mxu0
        %v2651 = vpop.f32.mrf.mxu0
        %2652 = vdwg.mxu0
        %s2653 = scalar_lea.vmem %s6, 192
        %v2654 = vld [vmem:[%s2653] sm:$0xf]
        %v2655 = vld [vmem:[%s2653 + $0x4] sm:$0xf]
        %v2656 = vld [vmem:[%s2653 + $0x8] sm:$0xf]
        %v2657 = vld [vmem:[%s2653 + $0xc] sm:$0xf]
        %v2658 = vld [vmem:[%s2653 + $0x10] sm:$0xf]
        %v2659 = vld [vmem:[%s2653 + $0x14] sm:$0xf]
        %v2660 = vld [vmem:[%s2653 + $0x18] sm:$0xf]
        %v2661 = vld [vmem:[%s2653 + $0x1c] sm:$0xf]
        %v2662 = vld [vmem:[%s2653 + $0x20] sm:$0xf]
        %v2663 = vld [vmem:[%s2653 + $0x24] sm:$0xf]
        %v2664 = vld [vmem:[%s2653 + $0x28] sm:$0xf]
        %v2665 = vld [vmem:[%s2653 + $0x2c] sm:$0xf]
        %v2666 = vld [vmem:[%s2653 + $0x30] sm:$0xf]
        %v2667 = vld [vmem:[%s2653 + $0x34] sm:$0xf]
        %v2668 = vld [vmem:[%s2653 + $0x38] sm:$0xf]
        %v2669 = vld [vmem:[%s2653 + $0x3c] sm:$0xf]
        %s2670 = scalar_lea.vmem %s7, 3
        %v2671 = vld [vmem:[%s2670] sm:$0x1]
        %v2673 = vlaneseq
        %v2674 = vshrl.u32 %v2673, 7
        %v2675 = vsub.s32 0, %v2674
        %v2676 = vrot.slane %v2671, %v2675
        %v2694 = vunpack.c.l.b16 %v2654
        %v2695 = vunpack.c.l.b16 %v2655
        %v2696 = vunpack.c.l.b16 %v2656
        %v2697 = vunpack.c.l.b16 %v2657
        %v2698 = vunpack.c.l.b16 %v2658
        %v2699 = vunpack.c.l.b16 %v2659
        %v2700 = vunpack.c.l.b16 %v2660
        %v2701 = vunpack.c.l.b16 %v2661
        %v2702 = vunpack.c.l.b16 %v2662
        %v2703 = vunpack.c.l.b16 %v2663
        %v2704 = vunpack.c.l.b16 %v2664
        %v2705 = vunpack.c.l.b16 %v2665
        %v2706 = vunpack.c.l.b16 %v2666
        %v2707 = vunpack.c.l.b16 %v2667
        %v2708 = vunpack.c.l.b16 %v2668
        %v2709 = vunpack.c.l.b16 %v2669
        %v2710 = vpack.c.b16 %v2695, %v2694
        %v2711 = vpack.c.b16 %v2697, %v2696
        %v2712 = vpack.c.b16 %v2699, %v2698
        %v2713 = vpack.c.b16 %v2701, %v2700
        %v2714 = vpack.c.b16 %v2703, %v2702
        %v2715 = vpack.c.b16 %v2705, %v2704
        %v2716 = vpack.c.b16 %v2707, %v2706
        %v2717 = vpack.c.b16 %v2709, %v2708
        %2726 = vmatprep.subr.bf16.mxu0 0
        %2727 = vmatpush1.bf16.msra.mxu0 %v2717
        %2728 = vmatprep.subr.bf16.mxu0 0
        %2729 = vmatpush1.bf16.msra.mxu0 %v2716
        %2730 = vmatprep.subr.bf16.mxu0 0
        %2731 = vmatpush1.bf16.msra.mxu0 %v2715
        %2732 = vmatprep.subr.bf16.mxu0 0
        %2733 = vmatpush1.bf16.msra.mxu0 %v2714
        %2734 = vmatprep.subr.bf16.mxu0 0
        %2735 = vmatpush1.bf16.msra.mxu0 %v2713
        %2736 = vmatprep.subr.bf16.mxu0 0
        %2737 = vmatpush1.bf16.msra.mxu0 %v2712
        %2738 = vmatprep.subr.bf16.mxu0 0
        %2739 = vmatpush1.bf16.msra.mxu0 %v2711
        %2740 = vmatprep.subr.bf16.mxu0 0
        %2741 = vmatpush1.bf16.msra.mxu0 %v2710
        %2742 = vmatprep.subr.bf16.mxu0 0
        %2743 = vmatpush2.bf16.msra.mxu0 0
        %2744 = vmatprep.subr.bf16.mxu0 0
        %2745 = vmatpush2.bf16.msra.mxu0 0
        %2746 = vmatprep.subr.bf16.mxu0 0
        %2747 = vmatpush2.bf16.msra.mxu0 0
        %2748 = vmatprep.subr.bf16.mxu0 0
        %2749 = vmatpush2.bf16.msra.mxu0 0
        %2750 = vmatprep.subr.bf16.mxu0 0
        %2751 = vmatpush2.bf16.msra.mxu0 0
        %2752 = vmatprep.subr.bf16.mxu0 0
        %2753 = vmatpush2.bf16.msra.mxu0 0
        %2754 = vmatprep.subr.bf16.mxu0 0
        %2755 = vmatpush2.bf16.msra.mxu0 0
        %2756 = vmatprep.subr.bf16.mxu0 0
        %2757 = vmatpush2.bf16.msra.mxu0 0
        %2758 = vmatprep.mubr.bf16.mxu0 0
        %2759 = vmatmul.mubr.bf16.gmra.mxu0 %v716
        %v2760 = vpop.f32.mrf.mxu0
        %v2761 = vadd.f32 %v2676, %v2760
        %v2762 = vpop.f32.mrf.mxu0
        %v2763 = vpop.f32.mrf.mxu0
        %v2764 = vadd.f32 %v2676, %v2763
        %v2765 = vpop.f32.mrf.mxu0
        %2766 = vmatprep.mubr.bf16.mxu0 0
        %2767 = vmatmul.mubr.bf16.gmra.mxu0 %v717
        %v2768 = vpop.f32.mrf.mxu0
        %v2769 = vadd.f32 %v2676, %v2768
        %v2770 = vpop.f32.mrf.mxu0
        %v2771 = vpop.f32.mrf.mxu0
        %v2772 = vadd.f32 %v2676, %v2771
        %v2773 = vpop.f32.mrf.mxu0
        %2774 = vmatprep.mubr.bf16.mxu0 0
        %2775 = vmatmul.mubr.bf16.gmra.mxu0 %v718
        %v2776 = vpop.f32.mrf.mxu0
        %v2777 = vadd.f32 %v2676, %v2776
        %v2778 = vpop.f32.mrf.mxu0
        %v2779 = vpop.f32.mrf.mxu0
        %v2780 = vadd.f32 %v2676, %v2779
        %v2781 = vpop.f32.mrf.mxu0
        %2782 = vmatprep.mubr.bf16.mxu0 0
        %2783 = vmatmul.mubr.bf16.gmra.mxu0 %v719
        %v2784 = vpop.f32.mrf.mxu0
        %v2785 = vadd.f32 %v2676, %v2784
        %v2786 = vpop.f32.mrf.mxu0
        %v2787 = vpop.f32.mrf.mxu0
        %v2788 = vadd.f32 %v2676, %v2787
        %v2789 = vpop.f32.mrf.mxu0
        %2790 = vmatprep.mubr.bf16.mxu0 0
        %2791 = vmatmul.mubr.bf16.gmra.mxu0 %v720
        %v2792 = vpop.f32.mrf.mxu0
        %v2793 = vadd.f32 %v2676, %v2792
        %v2794 = vpop.f32.mrf.mxu0
        %v2795 = vpop.f32.mrf.mxu0
        %v2796 = vadd.f32 %v2676, %v2795
        %v2797 = vpop.f32.mrf.mxu0
        %2798 = vmatprep.mubr.bf16.mxu0 0
        %2799 = vmatmul.mubr.bf16.gmra.mxu0 %v721
        %v2800 = vpop.f32.mrf.mxu0
        %v2801 = vadd.f32 %v2676, %v2800
        %v2802 = vpop.f32.mrf.mxu0
        %v2803 = vpop.f32.mrf.mxu0
        %v2804 = vadd.f32 %v2676, %v2803
        %v2805 = vpop.f32.mrf.mxu0
        %2806 = vmatprep.mubr.bf16.mxu0 0
        %2807 = vmatmul.mubr.bf16.gmra.mxu0 %v722
        %v2808 = vpop.f32.mrf.mxu0
        %v2809 = vadd.f32 %v2676, %v2808
        %v2810 = vpop.f32.mrf.mxu0
        %v2811 = vpop.f32.mrf.mxu0
        %v2812 = vadd.f32 %v2676, %v2811
        %v2813 = vpop.f32.mrf.mxu0
        %2814 = vmatprep.mubr.bf16.mxu0 0
        %2815 = vmatmul.mubr.bf16.gmra.mxu0 %v723
        %v2816 = vpop.f32.mrf.mxu0
        %v2817 = vadd.f32 %v2676, %v2816
        %v2818 = vpop.f32.mrf.mxu0
        %v2819 = vpop.f32.mrf.mxu0
        %v2820 = vadd.f32 %v2676, %v2819
        %v2821 = vpop.f32.mrf.mxu0
        %2822 = vdwg.mxu0
        %s2823 = scalar_lea.vmem %s8, 192
        %v2824 = vld [vmem:[%s2823] sm:$0xf]
        %v2825 = vld [vmem:[%s2823 + $0x4] sm:$0xf]
        %v2826 = vld [vmem:[%s2823 + $0x8] sm:$0xf]
        %v2827 = vld [vmem:[%s2823 + $0xc] sm:$0xf]
        %v2828 = vld [vmem:[%s2823 + $0x10] sm:$0xf]
        %v2829 = vld [vmem:[%s2823 + $0x14] sm:$0xf]
        %v2830 = vld [vmem:[%s2823 + $0x18] sm:$0xf]
        %v2831 = vld [vmem:[%s2823 + $0x1c] sm:$0xf]
        %v2832 = vld [vmem:[%s2823 + $0x20] sm:$0xf]
        %v2833 = vld [vmem:[%s2823 + $0x24] sm:$0xf]
        %v2834 = vld [vmem:[%s2823 + $0x28] sm:$0xf]
        %v2835 = vld [vmem:[%s2823 + $0x2c] sm:$0xf]
        %v2836 = vld [vmem:[%s2823 + $0x30] sm:$0xf]
        %v2837 = vld [vmem:[%s2823 + $0x34] sm:$0xf]
        %v2838 = vld [vmem:[%s2823 + $0x38] sm:$0xf]
        %v2839 = vld [vmem:[%s2823 + $0x3c] sm:$0xf]
        %s2840 = scalar_lea.vmem %s9, 3
        %v2841 = vld [vmem:[%s2840] sm:$0x1]
        %v2843 = vlaneseq
        %v2844 = vshrl.u32 %v2843, 7
        %v2845 = vsub.s32 0, %v2844
        %v2846 = vrot.slane %v2841, %v2845
        %v2864 = vunpack.c.l.b16 %v2824
        %v2865 = vunpack.c.l.b16 %v2825
        %v2866 = vunpack.c.l.b16 %v2826
        %v2867 = vunpack.c.l.b16 %v2827
        %v2868 = vunpack.c.l.b16 %v2828
        %v2869 = vunpack.c.l.b16 %v2829
        %v2870 = vunpack.c.l.b16 %v2830
        %v2871 = vunpack.c.l.b16 %v2831
        %v2872 = vunpack.c.l.b16 %v2832
        %v2873 = vunpack.c.l.b16 %v2833
        %v2874 = vunpack.c.l.b16 %v2834
        %v2875 = vunpack.c.l.b16 %v2835
        %v2876 = vunpack.c.l.b16 %v2836
        %v2877 = vunpack.c.l.b16 %v2837
        %v2878 = vunpack.c.l.b16 %v2838
        %v2879 = vunpack.c.l.b16 %v2839
        %v2880 = vpack.c.b16 %v2865, %v2864
        %v2881 = vpack.c.b16 %v2867, %v2866
        %v2882 = vpack.c.b16 %v2869, %v2868
        %v2883 = vpack.c.b16 %v2871, %v2870
        %v2884 = vpack.c.b16 %v2873, %v2872
        %v2885 = vpack.c.b16 %v2875, %v2874
        %v2886 = vpack.c.b16 %v2877, %v2876
        %v2887 = vpack.c.b16 %v2879, %v2878
        %2896 = vmatprep.subr.bf16.mxu0 0
        %2897 = vmatpush1.bf16.msra.mxu0 %v2887
        %2898 = vmatprep.subr.bf16.mxu0 0
        %2899 = vmatpush1.bf16.msra.mxu0 %v2886
        %2900 = vmatprep.subr.bf16.mxu0 0
        %2901 = vmatpush1.bf16.msra.mxu0 %v2885
        %2902 = vmatprep.subr.bf16.mxu0 0
        %2903 = vmatpush1.bf16.msra.mxu0 %v2884
        %2904 = vmatprep.subr.bf16.mxu0 0
        %2905 = vmatpush1.bf16.msra.mxu0 %v2883
        %2906 = vmatprep.subr.bf16.mxu0 0
        %2907 = vmatpush1.bf16.msra.mxu0 %v2882
        %2908 = vmatprep.subr.bf16.mxu0 0
        %2909 = vmatpush1.bf16.msra.mxu0 %v2881
        %2910 = vmatprep.subr.bf16.mxu0 0
        %2911 = vmatpush1.bf16.msra.mxu0 %v2880
        %2912 = vmatprep.subr.bf16.mxu0 0
        %2913 = vmatpush2.bf16.msra.mxu0 0
        %2914 = vmatprep.subr.bf16.mxu0 0
        %2915 = vmatpush2.bf16.msra.mxu0 0
        %2916 = vmatprep.subr.bf16.mxu0 0
        %2917 = vmatpush2.bf16.msra.mxu0 0
        %2918 = vmatprep.subr.bf16.mxu0 0
        %2919 = vmatpush2.bf16.msra.mxu0 0
        %2920 = vmatprep.subr.bf16.mxu0 0
        %2921 = vmatpush2.bf16.msra.mxu0 0
        %2922 = vmatprep.subr.bf16.mxu0 0
        %2923 = vmatpush2.bf16.msra.mxu0 0
        %2924 = vmatprep.subr.bf16.mxu0 0
        %2925 = vmatpush2.bf16.msra.mxu0 0
        %2926 = vmatprep.subr.bf16.mxu0 0
        %2927 = vmatpush2.bf16.msra.mxu0 0
        %2928 = vmatprep.mubr.bf16.mxu0 0
        %2929 = vmatmul.mubr.bf16.gmra.mxu0 %v716
        %v2930 = vpop.f32.mrf.mxu0
        %v2931 = vadd.f32 %v2846, %v2930
        %v2932 = vpop.f32.mrf.mxu0
        %v2933 = vpop.f32.mrf.mxu0
        %v2934 = vadd.f32 %v2846, %v2933
        %v2935 = vpop.f32.mrf.mxu0
        %2936 = vmatprep.mubr.bf16.mxu0 0
        %2937 = vmatmul.mubr.bf16.gmra.mxu0 %v717
        %v2938 = vpop.f32.mrf.mxu0
        %v2939 = vadd.f32 %v2846, %v2938
        %v2940 = vpop.f32.mrf.mxu0
        %v2941 = vpop.f32.mrf.mxu0
        %v2942 = vadd.f32 %v2846, %v2941
        %v2943 = vpop.f32.mrf.mxu0
        %2944 = vmatprep.mubr.bf16.mxu0 0
        %2945 = vmatmul.mubr.bf16.gmra.mxu0 %v718
        %v2946 = vpop.f32.mrf.mxu0
        %v2947 = vadd.f32 %v2846, %v2946
        %v2948 = vpop.f32.mrf.mxu0
        %v2949 = vpop.f32.mrf.mxu0
        %v2950 = vadd.f32 %v2846, %v2949
        %v2951 = vpop.f32.mrf.mxu0
        %2952 = vmatprep.mubr.bf16.mxu0 0
        %2953 = vmatmul.mubr.bf16.gmra.mxu0 %v719
        %v2954 = vpop.f32.mrf.mxu0
        %v2955 = vadd.f32 %v2846, %v2954
        %v2956 = vpop.f32.mrf.mxu0
        %v2957 = vpop.f32.mrf.mxu0
        %v2958 = vadd.f32 %v2846, %v2957
        %v2959 = vpop.f32.mrf.mxu0
        %2960 = vmatprep.mubr.bf16.mxu0 0
        %2961 = vmatmul.mubr.bf16.gmra.mxu0 %v720
        %v2962 = vpop.f32.mrf.mxu0
        %v2963 = vadd.f32 %v2846, %v2962
        %v2964 = vpop.f32.mrf.mxu0
        %v2965 = vpop.f32.mrf.mxu0
        %v2966 = vadd.f32 %v2846, %v2965
        %v2967 = vpop.f32.mrf.mxu0
        %2968 = vmatprep.mubr.bf16.mxu0 0
        %2969 = vmatmul.mubr.bf16.gmra.mxu0 %v721
        %v2970 = vpop.f32.mrf.mxu0
        %v2971 = vadd.f32 %v2846, %v2970
        %v2972 = vpop.f32.mrf.mxu0
        %v2973 = vpop.f32.mrf.mxu0
        %v2974 = vadd.f32 %v2846, %v2973
        %v2975 = vpop.f32.mrf.mxu0
        %2976 = vmatprep.mubr.bf16.mxu0 0
        %2977 = vmatmul.mubr.bf16.gmra.mxu0 %v722
        %v2978 = vpop.f32.mrf.mxu0
        %v2979 = vadd.f32 %v2846, %v2978
        %v2980 = vpop.f32.mrf.mxu0
        %v2981 = vpop.f32.mrf.mxu0
        %v2982 = vadd.f32 %v2846, %v2981
        %v2983 = vpop.f32.mrf.mxu0
        %2984 = vmatprep.mubr.bf16.mxu0 0
        %2985 = vmatmul.mubr.bf16.gmra.mxu0 %v723
        %v2986 = vpop.f32.mrf.mxu0
        %v2987 = vadd.f32 %v2846, %v2986
        %v2988 = vpop.f32.mrf.mxu0
        %v2989 = vpop.f32.mrf.mxu0
        %v2990 = vadd.f32 %v2846, %v2989
        %v2991 = vpop.f32.mrf.mxu0
        %2992 = vdwg.mxu0
        %v2993 = vpack.c.bf16 %v2648, %v2648
        %v2994 = vpack.c.bf16 %v2764, %v2761
        %v2995 = vpack.c.bf16 %v2772, %v2769
        %v2996 = vpack.c.bf16 %v2780, %v2777
        %v2997 = vpack.c.bf16 %v2788, %v2785
        %v2998 = vpack.c.bf16 %v2796, %v2793
        %v2999 = vpack.c.bf16 %v2804, %v2801
        %v3000 = vpack.c.bf16 %v2812, %v2809
        %v3001 = vpack.c.bf16 %v2820, %v2817
        %v3003 = vsel %vm1054, %v2993, 0
        %v3006 = vsel %vm1054, %v2994, 0
        %v3009 = vsel %vm1054, %v2995, 0
        %v3012 = vsel %vm1054, %v2996, 0
        %v3015 = vsel %vm1054, %v2997, 0
        %v3018 = vsel %vm1054, %v2998, 0
        %v3021 = vsel %vm1054, %v2999, 0
        %v3024 = vsel %vm1054, %v3000, 0
        %v3027 = vsel %vm1054, %v3001, 0
        %3029 = vmatprep.subr.bf16.mxu0 0
        %3030 = vmatpush1.bf16.xpose.msra.mxu0 %v3027
        %3031 = vmatprep.subr.bf16.mxu0 0
        %3032 = vmatpush1.bf16.xpose.msra.mxu0 %v3024
        %3033 = vmatprep.subr.bf16.mxu0 0
        %3034 = vmatpush1.bf16.xpose.msra.mxu0 %v3021
        %3035 = vmatprep.subr.bf16.mxu0 0
        %3036 = vmatpush1.bf16.xpose.msra.mxu0 %v3018
        %3037 = vmatprep.subr.bf16.mxu0 0
        %3038 = vmatpush1.bf16.xpose.msra.mxu0 %v3015
        %3039 = vmatprep.subr.bf16.mxu0 0
        %3040 = vmatpush1.bf16.xpose.msra.mxu0 %v3012
        %3041 = vmatprep.subr.bf16.mxu0 0
        %3042 = vmatpush1.bf16.xpose.msra.mxu0 %v3009
        %3043 = vmatprep.subr.bf16.mxu0 0
        %3044 = vmatpush1.bf16.xpose.msra.mxu0 %v3006
        %3045 = vmatprep.subr.bf16.mxu0 0
        %3046 = vmatpush2.bf16.xpose.msra.mxu0 0
        %3047 = vmatprep.subr.bf16.mxu0 0
        %3048 = vmatpush2.bf16.xpose.msra.mxu0 0
        %3049 = vmatprep.subr.bf16.mxu0 0
        %3050 = vmatpush2.bf16.xpose.msra.mxu0 0
        %3051 = vmatprep.subr.bf16.mxu0 0
        %3052 = vmatpush2.bf16.xpose.msra.mxu0 0
        %3053 = vmatprep.subr.bf16.mxu0 0
        %3054 = vmatpush2.bf16.xpose.msra.mxu0 0
        %3055 = vmatprep.subr.bf16.mxu0 0
        %3056 = vmatpush2.bf16.xpose.msra.mxu0 0
        %3057 = vmatprep.subr.bf16.mxu0 0
        %3058 = vmatpush2.bf16.xpose.msra.mxu0 0
        %3059 = vmatprep.subr.bf16.mxu0 0
        %3060 = vmatpush2.bf16.xpose.msra.mxu0 0
        %3061 = vmatprep.mubr.bf16.mxu0 0
        %3062 = vmatmul.mubr.bf16.gmra.mxu0 %v3003
        %v3063 = vpop.f32.mrf.mxu0
        %v3064 = vadd.f32 %v529, %v3063
        %v3065 = vpop.f32.mrf.mxu0
        %v3066 = vpop.f32.mrf.mxu0
        %v3067 = vpop.f32.mrf.mxu0
        %3068 = vdwg.mxu0
        %3069 = vmax.xlane.f32.xlu0 %v3064
        %v3070 = vpop.xlane.xlu0 %3069
        %v3071 = vsub.f32 %v3064, %v3070
        %v3072 = vmul.f32 %v3071, 1.442695
        %v3073 = vpow.pop %v3072
        %3074 = vadd.xlane.f32.xlu0 %v3073
        %v3075 = vpop.xlane.xlu0 %3074
        %v3076 = vrcp.pop %v3075
        %v3077 = vmul.f32 %v3073, %v3076
        %v3078 = vadd.f32 %v2428, %v3077
        %v3079 = vpack.c.bf16 %v3077, %v3077
        %v3080 = vpack.c.bf16 %v2934, %v2931
        %v3081 = vpack.c.bf16 %v2942, %v2939
        %v3082 = vpack.c.bf16 %v2950, %v2947
        %v3083 = vpack.c.bf16 %v2958, %v2955
        %v3084 = vpack.c.bf16 %v2966, %v2963
        %v3085 = vpack.c.bf16 %v2974, %v2971
        %v3086 = vpack.c.bf16 %v2982, %v2979
        %v3087 = vpack.c.bf16 %v2990, %v2987
        %3088 = vmatprep.subr.bf16.mxu0 0
        %3089 = vmatpush1.bf16.msra.mxu0 %v3087
        %3090 = vmatprep.subr.bf16.mxu0 0
        %3091 = vmatpush1.bf16.msra.mxu0 %v3086
        %3092 = vmatprep.subr.bf16.mxu0 0
        %3093 = vmatpush1.bf16.msra.mxu0 %v3085
        %3094 = vmatprep.subr.bf16.mxu0 0
        %3095 = vmatpush1.bf16.msra.mxu0 %v3084
        %3096 = vmatprep.subr.bf16.mxu0 0
        %3097 = vmatpush1.bf16.msra.mxu0 %v3083
        %3098 = vmatprep.subr.bf16.mxu0 0
        %3099 = vmatpush1.bf16.msra.mxu0 %v3082
        %3100 = vmatprep.subr.bf16.mxu0 0
        %3101 = vmatpush1.bf16.msra.mxu0 %v3081
        %3102 = vmatprep.subr.bf16.mxu0 0
        %3103 = vmatpush1.bf16.msra.mxu0 %v3080
        %3104 = vmatprep.subr.bf16.mxu0 0
        %3105 = vmatpush2.bf16.msra.mxu0 0
        %3106 = vmatprep.subr.bf16.mxu0 0
        %3107 = vmatpush2.bf16.msra.mxu0 0
        %3108 = vmatprep.subr.bf16.mxu0 0
        %3109 = vmatpush2.bf16.msra.mxu0 0
        %3110 = vmatprep.subr.bf16.mxu0 0
        %3111 = vmatpush2.bf16.msra.mxu0 0
        %3112 = vmatprep.subr.bf16.mxu0 0
        %3113 = vmatpush2.bf16.msra.mxu0 0
        %3114 = vmatprep.subr.bf16.mxu0 0
        %3115 = vmatpush2.bf16.msra.mxu0 0
        %3116 = vmatprep.subr.bf16.mxu0 0
        %3117 = vmatpush2.bf16.msra.mxu0 0
        %3118 = vmatprep.subr.bf16.mxu0 0
        %3119 = vmatpush2.bf16.msra.mxu0 0
        %3120 = vmatprep.mubr.bf16.mxu0 0
        %3121 = vmatmul.mubr.bf16.gmra.mxu0 %v3079
        %v3122 = vpop.f32.mrf.mxu0
        %v3123 = vadd.f32 0.0, %v3122
        %v3124 = vpop.f32.mrf.mxu0
        %v3125 = vpop.f32.mrf.mxu0
        %v3126 = vpop.f32.mrf.mxu0
        %3127 = vdwg.mxu0
        %v3128 = vpack.c.bf16 %v3123, %v3123
        %s3129 = scalar_lea.vmem %s10, 48
        %v3130 = vld [vmem:[%s3129] sm:$0xf]
        %v3131 = vld [vmem:[%s3129 + $0x4] sm:$0xf]
        %v3132 = vld [vmem:[%s3129 + $0x8] sm:$0xf]
        %v3133 = vld [vmem:[%s3129 + $0xc] sm:$0xf]
        %v3138 = vunpack.c.l.b16 %v3130
        %v3139 = vunpack.c.l.b16 %v3131
        %v3140 = vunpack.c.l.b16 %v3132
        %v3141 = vunpack.c.l.b16 %v3133
        %v3142 = vpack.c.b16 %v3139, %v3138
        %v3143 = vpack.c.b16 %v3141, %v3140
        %v3147 = vsel %vm1054, %v3128, 0
        %3149 = vmatprep.subr.bf16.mxu0 0
        %3150 = vmatpush1.bf16.msra.mxu0 0
        %3151 = vmatprep.subr.bf16.mxu0 0
        %3152 = vmatpush1.bf16.msra.mxu0 0
        %3153 = vmatprep.subr.bf16.mxu0 0
        %3154 = vmatpush1.bf16.msra.mxu0 0
        %3155 = vmatprep.subr.bf16.mxu0 0
        %3156 = vmatpush1.bf16.msra.mxu0 0
        %3157 = vmatprep.subr.bf16.mxu0 0
        %3158 = vmatpush1.bf16.msra.mxu0 0
        %3159 = vmatprep.subr.bf16.mxu0 0
        %3160 = vmatpush1.bf16.msra.mxu0 0
        %3161 = vmatprep.subr.bf16.mxu0 0
        %3162 = vmatpush1.bf16.msra.mxu0 %v3143
        %3163 = vmatprep.subr.bf16.mxu0 0
        %3164 = vmatpush1.bf16.msra.mxu0 %v3142
        %3165 = vmatprep.subr.bf16.mxu0 0
        %3166 = vmatpush2.bf16.msra.mxu0 0
        %3167 = vmatprep.subr.bf16.mxu0 0
        %3168 = vmatpush2.bf16.msra.mxu0 0
        %3169 = vmatprep.subr.bf16.mxu0 0
        %3170 = vmatpush2.bf16.msra.mxu0 0
        %3171 = vmatprep.subr.bf16.mxu0 0
        %3172 = vmatpush2.bf16.msra.mxu0 0
        %3173 = vmatprep.subr.bf16.mxu0 0
        %3174 = vmatpush2.bf16.msra.mxu0 0
        %3175 = vmatprep.subr.bf16.mxu0 0
        %3176 = vmatpush2.bf16.msra.mxu0 0
        %3177 = vmatprep.subr.bf16.mxu0 0
        %3178 = vmatpush2.bf16.msra.mxu0 0
        %3179 = vmatprep.subr.bf16.mxu0 0
        %3180 = vmatpush2.bf16.msra.mxu0 0
        %3181 = vmatprep.mubr.bf16.mxu0 0
        %3182 = vmatmul.mubr.bf16.gmra.mxu0 %v3147
        %v3183 = vpop.f32.mrf.mxu0
        %v3184 = vadd.f32 0.0, %v3183
        %v3185 = vpop.f32.mrf.mxu0
        %v3186 = vpop.f32.mrf.mxu0
        %v3187 = vpop.f32.mrf.mxu0
        %3188 = vdwg.mxu0
        %v3189 = vadd.f32 %v2539, %v3184
        %v3190 = vld [vmem:[%s11] sm:$0x1]
        %v3192 = vlaneseq
        %v3193 = vshrl.u32 %v3192, 7
        %v3194 = vsub.s32 0, %v3193
        %v3195 = vrot.slane %v3190, %v3194
        %v3197 = vadd.f32 %v3189, %v3195
        %v3198 = vpack.c.bf16 %v3197, %v3197
        %v3199 = vld [vmem:[%s12] sm:$0xff]
        %v3200 = vld [vmem:[%s12 + $0x8] sm:$0xff]
        %v3201 = vld [vmem:[%s12 + $0x10] sm:$0xff]
        %v3202 = vld [vmem:[%s12 + $0x18] sm:$0xff]
        %v3203 = vld [vmem:[%s12 + $0x20] sm:$0xff]
        %v3204 = vld [vmem:[%s12 + $0x28] sm:$0xff]
        %v3205 = vld [vmem:[%s12 + $0x30] sm:$0xff]
        %v3206 = vld [vmem:[%s12 + $0x38] sm:$0xff]
        %v3207 = vld [vmem:[%s12 + $0x40] sm:$0xff]
        %v3208 = vld [vmem:[%s12 + $0x48] sm:$0xff]
        %v3209 = vld [vmem:[%s12 + $0x50] sm:$0xff]
        %v3210 = vld [vmem:[%s12 + $0x58] sm:$0xff]
        %v3211 = vld [vmem:[%s12 + $0x60] sm:$0xff]
        %v3212 = vld [vmem:[%s12 + $0x68] sm:$0xff]
        %v3213 = vld [vmem:[%s12 + $0x70] sm:$0xff]
        %v3214 = vld [vmem:[%s12 + $0x78] sm:$0xff]
        %v3215 = vld [vmem:[%s13] sm:$0x3]
        %v3217 = vlaneseq
        %v3218 = vshrl.u32 %v3217, 7
        %v3219 = vsub.s32 0, %v3218
        %v3220 = vrot.slane %v3215, %v3219
        %v3221 = vlaneseq
        %v3222 = vshrl.u32 %v3221, 7
        %v3223 = vsub.s32 1, %v3222
        %v3224 = vrot.slane %v3215, %v3223
        %v3243 = vunpack.c.l.b16 %v3199
        %v3244 = vunpack.c.h.b16 %v3199
        %v3245 = vunpack.c.l.b16 %v3200
        %v3246 = vunpack.c.h.b16 %v3200
        %v3247 = vunpack.c.l.b16 %v3201
        %v3248 = vunpack.c.h.b16 %v3201
        %v3249 = vunpack.c.l.b16 %v3202
        %v3250 = vunpack.c.h.b16 %v3202
        %v3251 = vunpack.c.l.b16 %v3203
        %v3252 = vunpack.c.h.b16 %v3203
        %v3253 = vunpack.c.l.b16 %v3204
        %v3254 = vunpack.c.h.b16 %v3204
        %v3255 = vunpack.c.l.b16 %v3205
        %v3256 = vunpack.c.h.b16 %v3205
        %v3257 = vunpack.c.l.b16 %v3206
        %v3258 = vunpack.c.h.b16 %v3206
        %v3259 = vunpack.c.l.b16 %v3207
        %v3260 = vunpack.c.h.b16 %v3207
        %v3261 = vunpack.c.l.b16 %v3208
        %v3262 = vunpack.c.h.b16 %v3208
        %v3263 = vunpack.c.l.b16 %v3209
        %v3264 = vunpack.c.h.b16 %v3209
        %v3265 = vunpack.c.l.b16 %v3210
        %v3266 = vunpack.c.h.b16 %v3210
        %v3267 = vunpack.c.l.b16 %v3211
        %v3268 = vunpack.c.h.b16 %v3211
        %v3269 = vunpack.c.l.b16 %v3212
        %v3270 = vunpack.c.h.b16 %v3212
        %v3271 = vunpack.c.l.b16 %v3213
        %v3272 = vunpack.c.h.b16 %v3213
        %v3273 = vunpack.c.l.b16 %v3214
        %v3274 = vunpack.c.h.b16 %v3214
        %v3275 = vpack.c.b16 %v3245, %v3243
        %v3276 = vpack.c.b16 %v3246, %v3244
        %v3277 = vpack.c.b16 %v3249, %v3247
        %v3278 = vpack.c.b16 %v3250, %v3248
        %v3279 = vpack.c.b16 %v3253, %v3251
        %v3280 = vpack.c.b16 %v3254, %v3252
        %v3281 = vpack.c.b16 %v3257, %v3255
        %v3282 = vpack.c.b16 %v3258, %v3256
        %v3283 = vpack.c.b16 %v3261, %v3259
        %v3284 = vpack.c.b16 %v3262, %v3260
        %v3285 = vpack.c.b16 %v3265, %v3263
        %v3286 = vpack.c.b16 %v3266, %v3264
        %v3287 = vpack.c.b16 %v3269, %v3267
        %v3288 = vpack.c.b16 %v3270, %v3268
        %v3289 = vpack.c.b16 %v3273, %v3271
        %v3290 = vpack.c.b16 %v3274, %v3272
        %3307 = vmatprep.subr.bf16.mxu0 %v3290
        %3308 = vmatpush1.bf16.msra.mxu0 %v3289
        %3309 = vmatprep.subr.bf16.mxu0 %v3288
        %3310 = vmatpush1.bf16.msra.mxu0 %v3287
        %3311 = vmatprep.subr.bf16.mxu0 %v3286
        %3312 = vmatpush1.bf16.msra.mxu0 %v3285
        %3313 = vmatprep.subr.bf16.mxu0 %v3284
        %3314 = vmatpush1.bf16.msra.mxu0 %v3283
        %3315 = vmatprep.subr.bf16.mxu0 %v3282
        %3316 = vmatpush1.bf16.msra.mxu0 %v3281
        %3317 = vmatprep.subr.bf16.mxu0 %v3280
        %3318 = vmatpush1.bf16.msra.mxu0 %v3279
        %3319 = vmatprep.subr.bf16.mxu0 %v3278
        %3320 = vmatpush1.bf16.msra.mxu0 %v3277
        %3321 = vmatprep.subr.bf16.mxu0 %v3276
        %3322 = vmatpush1.bf16.msra.mxu0 %v3275
        %3323 = vmatprep.subr.bf16.mxu0 0
        %3324 = vmatpush2.bf16.msra.mxu0 0
        %3325 = vmatprep.subr.bf16.mxu0 0
        %3326 = vmatpush2.bf16.msra.mxu0 0
        %3327 = vmatprep.subr.bf16.mxu0 0
        %3328 = vmatpush2.bf16.msra.mxu0 0
        %3329 = vmatprep.subr.bf16.mxu0 0
        %3330 = vmatpush2.bf16.msra.mxu0 0
        %3331 = vmatprep.subr.bf16.mxu0 0
        %3332 = vmatpush2.bf16.msra.mxu0 0
        %3333 = vmatprep.subr.bf16.mxu0 0
        %3334 = vmatpush2.bf16.msra.mxu0 0
        %3335 = vmatprep.subr.bf16.mxu0 0
        %3336 = vmatpush2.bf16.msra.mxu0 0
        %3337 = vmatprep.subr.bf16.mxu0 0
        %3338 = vmatpush2.bf16.msra.mxu0 0
        %3339 = vmatprep.mubr.bf16.mxu0 0
        %3340 = vmatmul.mubr.bf16.gmra.mxu0 %v3198
        %v3341 = vpop.f32.mrf.mxu0
        %v3342 = vadd.f32 %v3220, %v3341
        %v3343 = vpop.f32.mrf.mxu0
        %v3344 = vadd.f32 %v3224, %v3343
        %v3345 = vpop.f32.mrf.mxu0
        %v3346 = vpop.f32.mrf.mxu0
        %3347 = vdwg.mxu0
        %v3348 = vxor.u32 %v3344, 2147483648
        %v3349 = vmul.f32 %v3348, 1.442695
        %v3350 = vpow.pop %v3349
        %v3351 = vadd.f32 %v3350, 1.0
        %v3352 = vrcp.pop %v3351
        %v3353 = vmul.f32 1.0, %v3352
        %v3354 = vmul.f32 %v3342, %v3353
        %v3355 = vadd.f32 %v3354, %v3197
        %v3356 = vadd.f32 %v532, %v3355
        %v3357 = vmul.f32 %v3078, %v530
        %3358 = vst [vmem:[%s493] sm:$0xff] %v3357
        %v3359 = vpack.c.bf16 %v3356, %v3356
        %s3360 = scalar_lea.vmem %s4, 256
        %v3361 = vld [vmem:[%s3360] sm:$0xf]
        %v3362 = vld [vmem:[%s3360 + $0x4] sm:$0xf]
        %v3363 = vld [vmem:[%s3360 + $0x8] sm:$0xf]
        %v3364 = vld [vmem:[%s3360 + $0xc] sm:$0xf]
        %v3365 = vld [vmem:[%s3360 + $0x10] sm:$0xf]
        %v3366 = vld [vmem:[%s3360 + $0x14] sm:$0xf]
        %v3367 = vld [vmem:[%s3360 + $0x18] sm:$0xf]
        %v3368 = vld [vmem:[%s3360 + $0x1c] sm:$0xf]
        %v3369 = vld [vmem:[%s3360 + $0x20] sm:$0xf]
        %v3370 = vld [vmem:[%s3360 + $0x24] sm:$0xf]
        %v3371 = vld [vmem:[%s3360 + $0x28] sm:$0xf]
        %v3372 = vld [vmem:[%s3360 + $0x2c] sm:$0xf]
        %v3373 = vld [vmem:[%s3360 + $0x30] sm:$0xf]
        %v3374 = vld [vmem:[%s3360 + $0x34] sm:$0xf]
        %v3375 = vld [vmem:[%s3360 + $0x38] sm:$0xf]
        %v3376 = vld [vmem:[%s3360 + $0x3c] sm:$0xf]
        %s3377 = scalar_lea.vmem %s5, 4
        %v3378 = vld [vmem:[%s3377] sm:$0x1]
        %v3380 = vlaneseq
        %v3381 = vshrl.u32 %v3380, 7
        %v3382 = vsub.s32 0, %v3381
        %v3383 = vrot.slane %v3378, %v3382
        %v3401 = vunpack.c.l.b16 %v3361
        %v3402 = vunpack.c.l.b16 %v3362
        %v3403 = vunpack.c.l.b16 %v3363
        %v3404 = vunpack.c.l.b16 %v3364
        %v3405 = vunpack.c.l.b16 %v3365
        %v3406 = vunpack.c.l.b16 %v3366
        %v3407 = vunpack.c.l.b16 %v3367
        %v3408 = vunpack.c.l.b16 %v3368
        %v3409 = vunpack.c.l.b16 %v3369
        %v3410 = vunpack.c.l.b16 %v3370
        %v3411 = vunpack.c.l.b16 %v3371
        %v3412 = vunpack.c.l.b16 %v3372
        %v3413 = vunpack.c.l.b16 %v3373
        %v3414 = vunpack.c.l.b16 %v3374
        %v3415 = vunpack.c.l.b16 %v3375
        %v3416 = vunpack.c.l.b16 %v3376
        %v3417 = vpack.c.b16 %v3402, %v3401
        %v3418 = vpack.c.b16 %v3404, %v3403
        %v3419 = vpack.c.b16 %v3406, %v3405
        %v3420 = vpack.c.b16 %v3408, %v3407
        %v3421 = vpack.c.b16 %v3410, %v3409
        %v3422 = vpack.c.b16 %v3412, %v3411
        %v3423 = vpack.c.b16 %v3414, %v3413
        %v3424 = vpack.c.b16 %v3416, %v3415
        %3433 = vmatprep.subr.bf16.mxu0 0
        %3434 = vmatpush1.bf16.msra.mxu0 %v3424
        %3435 = vmatprep.subr.bf16.mxu0 0
        %3436 = vmatpush1.bf16.msra.mxu0 %v3423
        %3437 = vmatprep.subr.bf16.mxu0 0
        %3438 = vmatpush1.bf16.msra.mxu0 %v3422
        %3439 = vmatprep.subr.bf16.mxu0 0
        %3440 = vmatpush1.bf16.msra.mxu0 %v3421
        %3441 = vmatprep.subr.bf16.mxu0 0
        %3442 = vmatpush1.bf16.msra.mxu0 %v3420
        %3443 = vmatprep.subr.bf16.mxu0 0
        %3444 = vmatpush1.bf16.msra.mxu0 %v3419
        %3445 = vmatprep.subr.bf16.mxu0 0
        %3446 = vmatpush1.bf16.msra.mxu0 %v3418
        %3447 = vmatprep.subr.bf16.mxu0 0
        %3448 = vmatpush1.bf16.msra.mxu0 %v3417
        %3449 = vmatprep.subr.bf16.mxu0 0
        %3450 = vmatpush2.bf16.msra.mxu0 0
        %3451 = vmatprep.subr.bf16.mxu0 0
        %3452 = vmatpush2.bf16.msra.mxu0 0
        %3453 = vmatprep.subr.bf16.mxu0 0
        %3454 = vmatpush2.bf16.msra.mxu0 0
        %3455 = vmatprep.subr.bf16.mxu0 0
        %3456 = vmatpush2.bf16.msra.mxu0 0
        %3457 = vmatprep.subr.bf16.mxu0 0
        %3458 = vmatpush2.bf16.msra.mxu0 0
        %3459 = vmatprep.subr.bf16.mxu0 0
        %3460 = vmatpush2.bf16.msra.mxu0 0
        %3461 = vmatprep.subr.bf16.mxu0 0
        %3462 = vmatpush2.bf16.msra.mxu0 0
        %3463 = vmatprep.subr.bf16.mxu0 0
        %3464 = vmatpush2.bf16.msra.mxu0 0
        %3465 = vmatprep.mubr.bf16.mxu0 0
        %3466 = vmatmul.mubr.bf16.gmra.mxu0 %v3359
        %v3467 = vpop.f32.mrf.mxu0
        %v3468 = vadd.f32 %v3383, %v3467
        %v3469 = vpop.f32.mrf.mxu0
        %v3470 = vpop.f32.mrf.mxu0
        %v3471 = vpop.f32.mrf.mxu0
        %3472 = vdwg.mxu0
        %s3473 = scalar_lea.vmem %s6, 256
        %v3474 = vld [vmem:[%s3473] sm:$0xf]
        %v3475 = vld [vmem:[%s3473 + $0x4] sm:$0xf]
        %v3476 = vld [vmem:[%s3473 + $0x8] sm:$0xf]
        %v3477 = vld [vmem:[%s3473 + $0xc] sm:$0xf]
        %v3478 = vld [vmem:[%s3473 + $0x10] sm:$0xf]
        %v3479 = vld [vmem:[%s3473 + $0x14] sm:$0xf]
        %v3480 = vld [vmem:[%s3473 + $0x18] sm:$0xf]
        %v3481 = vld [vmem:[%s3473 + $0x1c] sm:$0xf]
        %v3482 = vld [vmem:[%s3473 + $0x20] sm:$0xf]
        %v3483 = vld [vmem:[%s3473 + $0x24] sm:$0xf]
        %v3484 = vld [vmem:[%s3473 + $0x28] sm:$0xf]
        %v3485 = vld [vmem:[%s3473 + $0x2c] sm:$0xf]
        %v3486 = vld [vmem:[%s3473 + $0x30] sm:$0xf]
        %v3487 = vld [vmem:[%s3473 + $0x34] sm:$0xf]
        %v3488 = vld [vmem:[%s3473 + $0x38] sm:$0xf]
        %v3489 = vld [vmem:[%s3473 + $0x3c] sm:$0xf]
        %s3490 = scalar_lea.vmem %s7, 4
        %v3491 = vld [vmem:[%s3490] sm:$0x1]
        %v3493 = vlaneseq
        %v3494 = vshrl.u32 %v3493, 7
        %v3495 = vsub.s32 0, %v3494
        %v3496 = vrot.slane %v3491, %v3495
        %v3514 = vunpack.c.l.b16 %v3474
        %v3515 = vunpack.c.l.b16 %v3475
        %v3516 = vunpack.c.l.b16 %v3476
        %v3517 = vunpack.c.l.b16 %v3477
        %v3518 = vunpack.c.l.b16 %v3478
        %v3519 = vunpack.c.l.b16 %v3479
        %v3520 = vunpack.c.l.b16 %v3480
        %v3521 = vunpack.c.l.b16 %v3481
        %v3522 = vunpack.c.l.b16 %v3482
        %v3523 = vunpack.c.l.b16 %v3483
        %v3524 = vunpack.c.l.b16 %v3484
        %v3525 = vunpack.c.l.b16 %v3485
        %v3526 = vunpack.c.l.b16 %v3486
        %v3527 = vunpack.c.l.b16 %v3487
        %v3528 = vunpack.c.l.b16 %v3488
        %v3529 = vunpack.c.l.b16 %v3489
        %v3530 = vpack.c.b16 %v3515, %v3514
        %v3531 = vpack.c.b16 %v3517, %v3516
        %v3532 = vpack.c.b16 %v3519, %v3518
        %v3533 = vpack.c.b16 %v3521, %v3520
        %v3534 = vpack.c.b16 %v3523, %v3522
        %v3535 = vpack.c.b16 %v3525, %v3524
        %v3536 = vpack.c.b16 %v3527, %v3526
        %v3537 = vpack.c.b16 %v3529, %v3528
        %3546 = vmatprep.subr.bf16.mxu0 0
        %3547 = vmatpush1.bf16.msra.mxu0 %v3537
        %3548 = vmatprep.subr.bf16.mxu0 0
        %3549 = vmatpush1.bf16.msra.mxu0 %v3536
        %3550 = vmatprep.subr.bf16.mxu0 0
        %3551 = vmatpush1.bf16.msra.mxu0 %v3535
        %3552 = vmatprep.subr.bf16.mxu0 0
        %3553 = vmatpush1.bf16.msra.mxu0 %v3534
        %3554 = vmatprep.subr.bf16.mxu0 0
        %3555 = vmatpush1.bf16.msra.mxu0 %v3533
        %3556 = vmatprep.subr.bf16.mxu0 0
        %3557 = vmatpush1.bf16.msra.mxu0 %v3532
        %3558 = vmatprep.subr.bf16.mxu0 0
        %3559 = vmatpush1.bf16.msra.mxu0 %v3531
        %3560 = vmatprep.subr.bf16.mxu0 0
        %3561 = vmatpush1.bf16.msra.mxu0 %v3530
        %3562 = vmatprep.subr.bf16.mxu0 0
        %3563 = vmatpush2.bf16.msra.mxu0 0
        %3564 = vmatprep.subr.bf16.mxu0 0
        %3565 = vmatpush2.bf16.msra.mxu0 0
        %3566 = vmatprep.subr.bf16.mxu0 0
        %3567 = vmatpush2.bf16.msra.mxu0 0
        %3568 = vmatprep.subr.bf16.mxu0 0
        %3569 = vmatpush2.bf16.msra.mxu0 0
        %3570 = vmatprep.subr.bf16.mxu0 0
        %3571 = vmatpush2.bf16.msra.mxu0 0
        %3572 = vmatprep.subr.bf16.mxu0 0
        %3573 = vmatpush2.bf16.msra.mxu0 0
        %3574 = vmatprep.subr.bf16.mxu0 0
        %3575 = vmatpush2.bf16.msra.mxu0 0
        %3576 = vmatprep.subr.bf16.mxu0 0
        %3577 = vmatpush2.bf16.msra.mxu0 0
        %3578 = vmatprep.mubr.bf16.mxu0 0
        %3579 = vmatmul.mubr.bf16.gmra.mxu0 %v716
        %v3580 = vpop.f32.mrf.mxu0
        %v3581 = vadd.f32 %v3496, %v3580
        %v3582 = vpop.f32.mrf.mxu0
        %v3583 = vpop.f32.mrf.mxu0
        %v3584 = vadd.f32 %v3496, %v3583
        %v3585 = vpop.f32.mrf.mxu0
        %3586 = vmatprep.mubr.bf16.mxu0 0
        %3587 = vmatmul.mubr.bf16.gmra.mxu0 %v717
        %v3588 = vpop.f32.mrf.mxu0
        %v3589 = vadd.f32 %v3496, %v3588
        %v3590 = vpop.f32.mrf.mxu0
        %v3591 = vpop.f32.mrf.mxu0
        %v3592 = vadd.f32 %v3496, %v3591
        %v3593 = vpop.f32.mrf.mxu0
        %3594 = vmatprep.mubr.bf16.mxu0 0
        %3595 = vmatmul.mubr.bf16.gmra.mxu0 %v718
        %v3596 = vpop.f32.mrf.mxu0
        %v3597 = vadd.f32 %v3496, %v3596
        %v3598 = vpop.f32.mrf.mxu0
        %v3599 = vpop.f32.mrf.mxu0
        %v3600 = vadd.f32 %v3496, %v3599
        %v3601 = vpop.f32.mrf.mxu0
        %3602 = vmatprep.mubr.bf16.mxu0 0
        %3603 = vmatmul.mubr.bf16.gmra.mxu0 %v719
        %v3604 = vpop.f32.mrf.mxu0
        %v3605 = vadd.f32 %v3496, %v3604
        %v3606 = vpop.f32.mrf.mxu0
        %v3607 = vpop.f32.mrf.mxu0
        %v3608 = vadd.f32 %v3496, %v3607
        %v3609 = vpop.f32.mrf.mxu0
        %3610 = vmatprep.mubr.bf16.mxu0 0
        %3611 = vmatmul.mubr.bf16.gmra.mxu0 %v720
        %v3612 = vpop.f32.mrf.mxu0
        %v3613 = vadd.f32 %v3496, %v3612
        %v3614 = vpop.f32.mrf.mxu0
        %v3615 = vpop.f32.mrf.mxu0
        %v3616 = vadd.f32 %v3496, %v3615
        %v3617 = vpop.f32.mrf.mxu0
        %3618 = vmatprep.mubr.bf16.mxu0 0
        %3619 = vmatmul.mubr.bf16.gmra.mxu0 %v721
        %v3620 = vpop.f32.mrf.mxu0
        %v3621 = vadd.f32 %v3496, %v3620
        %v3622 = vpop.f32.mrf.mxu0
        %v3623 = vpop.f32.mrf.mxu0
        %v3624 = vadd.f32 %v3496, %v3623
        %v3625 = vpop.f32.mrf.mxu0
        %3626 = vmatprep.mubr.bf16.mxu0 0
        %3627 = vmatmul.mubr.bf16.gmra.mxu0 %v722
        %v3628 = vpop.f32.mrf.mxu0
        %v3629 = vadd.f32 %v3496, %v3628
        %v3630 = vpop.f32.mrf.mxu0
        %v3631 = vpop.f32.mrf.mxu0
        %v3632 = vadd.f32 %v3496, %v3631
        %v3633 = vpop.f32.mrf.mxu0
        %3634 = vmatprep.mubr.bf16.mxu0 0
        %3635 = vmatmul.mubr.bf16.gmra.mxu0 %v723
        %v3636 = vpop.f32.mrf.mxu0
        %v3637 = vadd.f32 %v3496, %v3636
        %v3638 = vpop.f32.mrf.mxu0
        %v3639 = vpop.f32.mrf.mxu0
        %v3640 = vadd.f32 %v3496, %v3639
        %v3641 = vpop.f32.mrf.mxu0
        %3642 = vdwg.mxu0
        %s3643 = scalar_lea.vmem %s8, 256
        %v3644 = vld [vmem:[%s3643] sm:$0xf]
        %v3645 = vld [vmem:[%s3643 + $0x4] sm:$0xf]
        %v3646 = vld [vmem:[%s3643 + $0x8] sm:$0xf]
        %v3647 = vld [vmem:[%s3643 + $0xc] sm:$0xf]
        %v3648 = vld [vmem:[%s3643 + $0x10] sm:$0xf]
        %v3649 = vld [vmem:[%s3643 + $0x14] sm:$0xf]
        %v3650 = vld [vmem:[%s3643 + $0x18] sm:$0xf]
        %v3651 = vld [vmem:[%s3643 + $0x1c] sm:$0xf]
        %v3652 = vld [vmem:[%s3643 + $0x20] sm:$0xf]
        %v3653 = vld [vmem:[%s3643 + $0x24] sm:$0xf]
        %v3654 = vld [vmem:[%s3643 + $0x28] sm:$0xf]
        %v3655 = vld [vmem:[%s3643 + $0x2c] sm:$0xf]
        %v3656 = vld [vmem:[%s3643 + $0x30] sm:$0xf]
        %v3657 = vld [vmem:[%s3643 + $0x34] sm:$0xf]
        %v3658 = vld [vmem:[%s3643 + $0x38] sm:$0xf]
        %v3659 = vld [vmem:[%s3643 + $0x3c] sm:$0xf]
        %s3660 = scalar_lea.vmem %s9, 4
        %v3661 = vld [vmem:[%s3660] sm:$0x1]
        %v3663 = vlaneseq
        %v3664 = vshrl.u32 %v3663, 7
        %v3665 = vsub.s32 0, %v3664
        %v3666 = vrot.slane %v3661, %v3665
        %v3684 = vunpack.c.l.b16 %v3644
        %v3685 = vunpack.c.l.b16 %v3645
        %v3686 = vunpack.c.l.b16 %v3646
        %v3687 = vunpack.c.l.b16 %v3647
        %v3688 = vunpack.c.l.b16 %v3648
        %v3689 = vunpack.c.l.b16 %v3649
        %v3690 = vunpack.c.l.b16 %v3650
        %v3691 = vunpack.c.l.b16 %v3651
        %v3692 = vunpack.c.l.b16 %v3652
        %v3693 = vunpack.c.l.b16 %v3653
        %v3694 = vunpack.c.l.b16 %v3654
        %v3695 = vunpack.c.l.b16 %v3655
        %v3696 = vunpack.c.l.b16 %v3656
        %v3697 = vunpack.c.l.b16 %v3657
        %v3698 = vunpack.c.l.b16 %v3658
        %v3699 = vunpack.c.l.b16 %v3659
        %v3700 = vpack.c.b16 %v3685, %v3684
        %v3701 = vpack.c.b16 %v3687, %v3686
        %v3702 = vpack.c.b16 %v3689, %v3688
        %v3703 = vpack.c.b16 %v3691, %v3690
        %v3704 = vpack.c.b16 %v3693, %v3692
        %v3705 = vpack.c.b16 %v3695, %v3694
        %v3706 = vpack.c.b16 %v3697, %v3696
        %v3707 = vpack.c.b16 %v3699, %v3698
        %3716 = vmatprep.subr.bf16.mxu0 0
        %3717 = vmatpush1.bf16.msra.mxu0 %v3707
        %3718 = vmatprep.subr.bf16.mxu0 0
        %3719 = vmatpush1.bf16.msra.mxu0 %v3706
        %3720 = vmatprep.subr.bf16.mxu0 0
        %3721 = vmatpush1.bf16.msra.mxu0 %v3705
        %3722 = vmatprep.subr.bf16.mxu0 0
        %3723 = vmatpush1.bf16.msra.mxu0 %v3704
        %3724 = vmatprep.subr.bf16.mxu0 0
        %3725 = vmatpush1.bf16.msra.mxu0 %v3703
        %3726 = vmatprep.subr.bf16.mxu0 0
        %3727 = vmatpush1.bf16.msra.mxu0 %v3702
        %3728 = vmatprep.subr.bf16.mxu0 0
        %3729 = vmatpush1.bf16.msra.mxu0 %v3701
        %3730 = vmatprep.subr.bf16.mxu0 0
        %3731 = vmatpush1.bf16.msra.mxu0 %v3700
        %3732 = vmatprep.subr.bf16.mxu0 0
        %3733 = vmatpush2.bf16.msra.mxu0 0
        %3734 = vmatprep.subr.bf16.mxu0 0
        %3735 = vmatpush2.bf16.msra.mxu0 0
        %3736 = vmatprep.subr.bf16.mxu0 0
        %3737 = vmatpush2.bf16.msra.mxu0 0
        %3738 = vmatprep.subr.bf16.mxu0 0
        %3739 = vmatpush2.bf16.msra.mxu0 0
        %3740 = vmatprep.subr.bf16.mxu0 0
        %3741 = vmatpush2.bf16.msra.mxu0 0
        %3742 = vmatprep.subr.bf16.mxu0 0
        %3743 = vmatpush2.bf16.msra.mxu0 0
        %3744 = vmatprep.subr.bf16.mxu0 0
        %3745 = vmatpush2.bf16.msra.mxu0 0
        %3746 = vmatprep.subr.bf16.mxu0 0
        %3747 = vmatpush2.bf16.msra.mxu0 0
        %3748 = vmatprep.mubr.bf16.mxu0 0
        %3749 = vmatmul.mubr.bf16.gmra.mxu0 %v716
        %v3750 = vpop.f32.mrf.mxu0
        %v3751 = vadd.f32 %v3666, %v3750
        %v3752 = vpop.f32.mrf.mxu0
        %v3753 = vpop.f32.mrf.mxu0
        %v3754 = vadd.f32 %v3666, %v3753
        %v3755 = vpop.f32.mrf.mxu0
        %3756 = vmatprep.mubr.bf16.mxu0 0
        %3757 = vmatmul.mubr.bf16.gmra.mxu0 %v717
        %v3758 = vpop.f32.mrf.mxu0
        %v3759 = vadd.f32 %v3666, %v3758
        %v3760 = vpop.f32.mrf.mxu0
        %v3761 = vpop.f32.mrf.mxu0
        %v3762 = vadd.f32 %v3666, %v3761
        %v3763 = vpop.f32.mrf.mxu0
        %3764 = vmatprep.mubr.bf16.mxu0 0
        %3765 = vmatmul.mubr.bf16.gmra.mxu0 %v718
        %v3766 = vpop.f32.mrf.mxu0
        %v3767 = vadd.f32 %v3666, %v3766
        %v3768 = vpop.f32.mrf.mxu0
        %v3769 = vpop.f32.mrf.mxu0
        %v3770 = vadd.f32 %v3666, %v3769
        %v3771 = vpop.f32.mrf.mxu0
        %3772 = vmatprep.mubr.bf16.mxu0 0
        %3773 = vmatmul.mubr.bf16.gmra.mxu0 %v719
        %v3774 = vpop.f32.mrf.mxu0
        %v3775 = vadd.f32 %v3666, %v3774
        %v3776 = vpop.f32.mrf.mxu0
        %v3777 = vpop.f32.mrf.mxu0
        %v3778 = vadd.f32 %v3666, %v3777
        %v3779 = vpop.f32.mrf.mxu0
        %3780 = vmatprep.mubr.bf16.mxu0 0
        %3781 = vmatmul.mubr.bf16.gmra.mxu0 %v720
        %v3782 = vpop.f32.mrf.mxu0
        %v3783 = vadd.f32 %v3666, %v3782
        %v3784 = vpop.f32.mrf.mxu0
        %v3785 = vpop.f32.mrf.mxu0
        %v3786 = vadd.f32 %v3666, %v3785
        %v3787 = vpop.f32.mrf.mxu0
        %3788 = vmatprep.mubr.bf16.mxu0 0
        %3789 = vmatmul.mubr.bf16.gmra.mxu0 %v721
        %v3790 = vpop.f32.mrf.mxu0
        %v3791 = vadd.f32 %v3666, %v3790
        %v3792 = vpop.f32.mrf.mxu0
        %v3793 = vpop.f32.mrf.mxu0
        %v3794 = vadd.f32 %v3666, %v3793
        %v3795 = vpop.f32.mrf.mxu0
        %3796 = vmatprep.mubr.bf16.mxu0 0
        %3797 = vmatmul.mubr.bf16.gmra.mxu0 %v722
        %v3798 = vpop.f32.mrf.mxu0
        %v3799 = vadd.f32 %v3666, %v3798
        %v3800 = vpop.f32.mrf.mxu0
        %v3801 = vpop.f32.mrf.mxu0
        %v3802 = vadd.f32 %v3666, %v3801
        %v3803 = vpop.f32.mrf.mxu0
        %3804 = vmatprep.mubr.bf16.mxu0 0
        %3805 = vmatmul.mubr.bf16.gmra.mxu0 %v723
        %v3806 = vpop.f32.mrf.mxu0
        %v3807 = vadd.f32 %v3666, %v3806
        %v3808 = vpop.f32.mrf.mxu0
        %v3809 = vpop.f32.mrf.mxu0
        %v3810 = vadd.f32 %v3666, %v3809
        %v3811 = vpop.f32.mrf.mxu0
        %3812 = vdwg.mxu0
        %v3813 = vpack.c.bf16 %v3468, %v3468
        %v3814 = vpack.c.bf16 %v3584, %v3581
        %v3815 = vpack.c.bf16 %v3592, %v3589
        %v3816 = vpack.c.bf16 %v3600, %v3597
        %v3817 = vpack.c.bf16 %v3608, %v3605
        %v3818 = vpack.c.bf16 %v3616, %v3613
        %v3819 = vpack.c.bf16 %v3624, %v3621
        %v3820 = vpack.c.bf16 %v3632, %v3629
        %v3821 = vpack.c.bf16 %v3640, %v3637
        %v3823 = vsel %vm1054, %v3813, 0
        %v3826 = vsel %vm1054, %v3814, 0
        %v3829 = vsel %vm1054, %v3815, 0
        %v3832 = vsel %vm1054, %v3816, 0
        %v3835 = vsel %vm1054, %v3817, 0
        %v3838 = vsel %vm1054, %v3818, 0
        %v3841 = vsel %vm1054, %v3819, 0
        %v3844 = vsel %vm1054, %v3820, 0
        %v3847 = vsel %vm1054, %v3821, 0
        %3849 = vmatprep.subr.bf16.mxu0 0
        %3850 = vmatpush1.bf16.xpose.msra.mxu0 %v3847
        %3851 = vmatprep.subr.bf16.mxu0 0
        %3852 = vmatpush1.bf16.xpose.msra.mxu0 %v3844
        %3853 = vmatprep.subr.bf16.mxu0 0
        %3854 = vmatpush1.bf16.xpose.msra.mxu0 %v3841
        %3855 = vmatprep.subr.bf16.mxu0 0
        %3856 = vmatpush1.bf16.xpose.msra.mxu0 %v3838
        %3857 = vmatprep.subr.bf16.mxu0 0
        %3858 = vmatpush1.bf16.xpose.msra.mxu0 %v3835
        %3859 = vmatprep.subr.bf16.mxu0 0
        %3860 = vmatpush1.bf16.xpose.msra.mxu0 %v3832
        %3861 = vmatprep.subr.bf16.mxu0 0
        %3862 = vmatpush1.bf16.xpose.msra.mxu0 %v3829
        %3863 = vmatprep.subr.bf16.mxu0 0
        %3864 = vmatpush1.bf16.xpose.msra.mxu0 %v3826
        %3865 = vmatprep.subr.bf16.mxu0 0
        %3866 = vmatpush2.bf16.xpose.msra.mxu0 0
        %3867 = vmatprep.subr.bf16.mxu0 0
        %3868 = vmatpush2.bf16.xpose.msra.mxu0 0
        %3869 = vmatprep.subr.bf16.mxu0 0
        %3870 = vmatpush2.bf16.xpose.msra.mxu0 0
        %3871 = vmatprep.subr.bf16.mxu0 0
        %3872 = vmatpush2.bf16.xpose.msra.mxu0 0
        %3873 = vmatprep.subr.bf16.mxu0 0
        %3874 = vmatpush2.bf16.xpose.msra.mxu0 0
        %3875 = vmatprep.subr.bf16.mxu0 0
        %3876 = vmatpush2.bf16.xpose.msra.mxu0 0
        %3877 = vmatprep.subr.bf16.mxu0 0
        %3878 = vmatpush2.bf16.xpose.msra.mxu0 0
        %3879 = vmatprep.subr.bf16.mxu0 0
        %3880 = vmatpush2.bf16.xpose.msra.mxu0 0
        %3881 = vmatprep.mubr.bf16.mxu0 0
        %3882 = vmatmul.mubr.bf16.gmra.mxu0 %v3823
        %v3883 = vpop.f32.mrf.mxu0
        %v3884 = vadd.f32 %v529, %v3883
        %v3885 = vpop.f32.mrf.mxu0
        %v3886 = vpop.f32.mrf.mxu0
        %v3887 = vpop.f32.mrf.mxu0
        %3888 = vdwg.mxu0
        %3889 = vmax.xlane.f32.xlu0 %v3884
        %v3890 = vpop.xlane.xlu0 %3889
        %v3891 = vsub.f32 %v3884, %v3890
        %v3892 = vmul.f32 %v3891, 1.442695
        %v3893 = vpow.pop %v3892
        %3894 = vadd.xlane.f32.xlu0 %v3893
        %v3895 = vpop.xlane.xlu0 %3894
        %v3896 = vrcp.pop %v3895
        %v3897 = vmul.f32 %v3893, %v3896
        %v3898 = vadd.f32 %v3897, 0.0
        %v3899 = vpack.c.bf16 %v3897, %v3897
        %v3900 = vpack.c.bf16 %v3754, %v3751
        %v3901 = vpack.c.bf16 %v3762, %v3759
        %v3902 = vpack.c.bf16 %v3770, %v3767
        %v3903 = vpack.c.bf16 %v3778, %v3775
        %v3904 = vpack.c.bf16 %v3786, %v3783
        %v3905 = vpack.c.bf16 %v3794, %v3791
        %v3906 = vpack.c.bf16 %v3802, %v3799
        %v3907 = vpack.c.bf16 %v3810, %v3807
        %3908 = vmatprep.subr.bf16.mxu0 0
        %3909 = vmatpush1.bf16.msra.mxu0 %v3907
        %3910 = vmatprep.subr.bf16.mxu0 0
        %3911 = vmatpush1.bf16.msra.mxu0 %v3906
        %3912 = vmatprep.subr.bf16.mxu0 0
        %3913 = vmatpush1.bf16.msra.mxu0 %v3905
        %3914 = vmatprep.subr.bf16.mxu0 0
        %3915 = vmatpush1.bf16.msra.mxu0 %v3904
        %3916 = vmatprep.subr.bf16.mxu0 0
        %3917 = vmatpush1.bf16.msra.mxu0 %v3903
        %3918 = vmatprep.subr.bf16.mxu0 0
        %3919 = vmatpush1.bf16.msra.mxu0 %v3902
        %3920 = vmatprep.subr.bf16.mxu0 0
        %3921 = vmatpush1.bf16.msra.mxu0 %v3901
        %3922 = vmatprep.subr.bf16.mxu0 0
        %3923 = vmatpush1.bf16.msra.mxu0 %v3900
        %3924 = vmatprep.subr.bf16.mxu0 0
        %3925 = vmatpush2.bf16.msra.mxu0 0
        %3926 = vmatprep.subr.bf16.mxu0 0
        %3927 = vmatpush2.bf16.msra.mxu0 0
        %3928 = vmatprep.subr.bf16.mxu0 0
        %3929 = vmatpush2.bf16.msra.mxu0 0
        %3930 = vmatprep.subr.bf16.mxu0 0
        %3931 = vmatpush2.bf16.msra.mxu0 0
        %3932 = vmatprep.subr.bf16.mxu0 0
        %3933 = vmatpush2.bf16.msra.mxu0 0
        %3934 = vmatprep.subr.bf16.mxu0 0
        %3935 = vmatpush2.bf16.msra.mxu0 0
        %3936 = vmatprep.subr.bf16.mxu0 0
        %3937 = vmatpush2.bf16.msra.mxu0 0
        %3938 = vmatprep.subr.bf16.mxu0 0
        %3939 = vmatpush2.bf16.msra.mxu0 0
        %3940 = vmatprep.mubr.bf16.mxu0 0
        %3941 = vmatmul.mubr.bf16.gmra.mxu0 %v3899
        %v3942 = vpop.f32.mrf.mxu0
        %v3943 = vadd.f32 0.0, %v3942
        %v3944 = vpop.f32.mrf.mxu0
        %v3945 = vpop.f32.mrf.mxu0
        %v3946 = vpop.f32.mrf.mxu0
        %3947 = vdwg.mxu0
        %v3948 = vpack.c.bf16 %v3943, %v3943
        %s3949 = scalar_lea.vmem %s10, 64
        %v3950 = vld [vmem:[%s3949] sm:$0xf]
        %v3951 = vld [vmem:[%s3949 + $0x4] sm:$0xf]
        %v3952 = vld [vmem:[%s3949 + $0x8] sm:$0xf]
        %v3953 = vld [vmem:[%s3949 + $0xc] sm:$0xf]
        %s3954 = scalar_lea.vmem %s4, 320
        %v3955 = vld [vmem:[%s3954] sm:$0xf]
        %v3956 = vld [vmem:[%s3954 + $0x4] sm:$0xf]
        %v3957 = vld [vmem:[%s3954 + $0x8] sm:$0xf]
        %v3958 = vld [vmem:[%s3954 + $0xc] sm:$0xf]
        %v3959 = vld [vmem:[%s3954 + $0x10] sm:$0xf]
        %v3960 = vld [vmem:[%s3954 + $0x14] sm:$0xf]
        %v3961 = vld [vmem:[%s3954 + $0x18] sm:$0xf]
        %v3962 = vld [vmem:[%s3954 + $0x1c] sm:$0xf]
        %v3963 = vld [vmem:[%s3954 + $0x20] sm:$0xf]
        %v3964 = vld [vmem:[%s3954 + $0x24] sm:$0xf]
        %v3965 = vld [vmem:[%s3954 + $0x28] sm:$0xf]
        %v3966 = vld [vmem:[%s3954 + $0x2c] sm:$0xf]
        %v3967 = vld [vmem:[%s3954 + $0x30] sm:$0xf]
        %v3968 = vld [vmem:[%s3954 + $0x34] sm:$0xf]
        %v3969 = vld [vmem:[%s3954 + $0x38] sm:$0xf]
        %v3970 = vld [vmem:[%s3954 + $0x3c] sm:$0xf]
        %s3971 = scalar_lea.vmem %s5, 5
        %v3972 = vld [vmem:[%s3971] sm:$0x1]
        %v3974 = vlaneseq
        %v3975 = vshrl.u32 %v3974, 7
        %v3976 = vsub.s32 0, %v3975
        %v3977 = vrot.slane %v3972, %v3976
        %v3995 = vunpack.c.l.b16 %v3955
        %v3996 = vunpack.c.l.b16 %v3956
        %v3997 = vunpack.c.l.b16 %v3957
        %v3998 = vunpack.c.l.b16 %v3958
        %v3999 = vunpack.c.l.b16 %v3959
        %v4000 = vunpack.c.l.b16 %v3960
        %v4001 = vunpack.c.l.b16 %v3961
        %v4002 = vunpack.c.l.b16 %v3962
        %v4003 = vunpack.c.l.b16 %v3963
        %v4004 = vunpack.c.l.b16 %v3964
        %v4005 = vunpack.c.l.b16 %v3965
        %v4006 = vunpack.c.l.b16 %v3966
        %v4007 = vunpack.c.l.b16 %v3967
        %v4008 = vunpack.c.l.b16 %v3968
        %v4009 = vunpack.c.l.b16 %v3969
        %v4010 = vunpack.c.l.b16 %v3970
        %v4011 = vpack.c.b16 %v3996, %v3995
        %v4012 = vpack.c.b16 %v3998, %v3997
        %v4013 = vpack.c.b16 %v4000, %v3999
        %v4014 = vpack.c.b16 %v4002, %v4001
        %v4015 = vpack.c.b16 %v4004, %v4003
        %v4016 = vpack.c.b16 %v4006, %v4005
        %v4017 = vpack.c.b16 %v4008, %v4007
        %v4018 = vpack.c.b16 %v4010, %v4009
        %4027 = vmatprep.subr.bf16.mxu0 0
        %4028 = vmatpush1.bf16.msra.mxu0 %v4018
        %4029 = vmatprep.subr.bf16.mxu0 0
        %4030 = vmatpush1.bf16.msra.mxu0 %v4017
        %4031 = vmatprep.subr.bf16.mxu0 0
        %4032 = vmatpush1.bf16.msra.mxu0 %v4016
        %4033 = vmatprep.subr.bf16.mxu0 0
        %4034 = vmatpush1.bf16.msra.mxu0 %v4015
        %4035 = vmatprep.subr.bf16.mxu0 0
        %4036 = vmatpush1.bf16.msra.mxu0 %v4014
        %4037 = vmatprep.subr.bf16.mxu0 0
        %4038 = vmatpush1.bf16.msra.mxu0 %v4013
        %4039 = vmatprep.subr.bf16.mxu0 0
        %4040 = vmatpush1.bf16.msra.mxu0 %v4012
        %4041 = vmatprep.subr.bf16.mxu0 0
        %4042 = vmatpush1.bf16.msra.mxu0 %v4011
        %4043 = vmatprep.subr.bf16.mxu0 0
        %4044 = vmatpush2.bf16.msra.mxu0 0
        %4045 = vmatprep.subr.bf16.mxu0 0
        %4046 = vmatpush2.bf16.msra.mxu0 0
        %4047 = vmatprep.subr.bf16.mxu0 0
        %4048 = vmatpush2.bf16.msra.mxu0 0
        %4049 = vmatprep.subr.bf16.mxu0 0
        %4050 = vmatpush2.bf16.msra.mxu0 0
        %4051 = vmatprep.subr.bf16.mxu0 0
        %4052 = vmatpush2.bf16.msra.mxu0 0
        %4053 = vmatprep.subr.bf16.mxu0 0
        %4054 = vmatpush2.bf16.msra.mxu0 0
        %4055 = vmatprep.subr.bf16.mxu0 0
        %4056 = vmatpush2.bf16.msra.mxu0 0
        %4057 = vmatprep.subr.bf16.mxu0 0
        %4058 = vmatpush2.bf16.msra.mxu0 0
        %4059 = vmatprep.mubr.bf16.mxu0 0
        %4060 = vmatmul.mubr.bf16.gmra.mxu0 %v3359
        %v4061 = vpop.f32.mrf.mxu0
        %v4062 = vadd.f32 %v3977, %v4061
        %v4063 = vpop.f32.mrf.mxu0
        %v4064 = vpop.f32.mrf.mxu0
        %v4065 = vpop.f32.mrf.mxu0
        %4066 = vdwg.mxu0
        %s4067 = scalar_lea.vmem %s6, 320
        %v4068 = vld [vmem:[%s4067] sm:$0xf]
        %v4069 = vld [vmem:[%s4067 + $0x4] sm:$0xf]
        %v4070 = vld [vmem:[%s4067 + $0x8] sm:$0xf]
        %v4071 = vld [vmem:[%s4067 + $0xc] sm:$0xf]
        %v4072 = vld [vmem:[%s4067 + $0x10] sm:$0xf]
        %v4073 = vld [vmem:[%s4067 + $0x14] sm:$0xf]
        %v4074 = vld [vmem:[%s4067 + $0x18] sm:$0xf]
        %v4075 = vld [vmem:[%s4067 + $0x1c] sm:$0xf]
        %v4076 = vld [vmem:[%s4067 + $0x20] sm:$0xf]
        %v4077 = vld [vmem:[%s4067 + $0x24] sm:$0xf]
        %v4078 = vld [vmem:[%s4067 + $0x28] sm:$0xf]
        %v4079 = vld [vmem:[%s4067 + $0x2c] sm:$0xf]
        %v4080 = vld [vmem:[%s4067 + $0x30] sm:$0xf]
        %v4081 = vld [vmem:[%s4067 + $0x34] sm:$0xf]
        %v4082 = vld [vmem:[%s4067 + $0x38] sm:$0xf]
        %v4083 = vld [vmem:[%s4067 + $0x3c] sm:$0xf]
        %s4084 = scalar_lea.vmem %s7, 5
        %v4085 = vld [vmem:[%s4084] sm:$0x1]
        %v4087 = vlaneseq
        %v4088 = vshrl.u32 %v4087, 7
        %v4089 = vsub.s32 0, %v4088
        %v4090 = vrot.slane %v4085, %v4089
        %v4108 = vunpack.c.l.b16 %v4068
        %v4109 = vunpack.c.l.b16 %v4069
        %v4110 = vunpack.c.l.b16 %v4070
        %v4111 = vunpack.c.l.b16 %v4071
        %v4112 = vunpack.c.l.b16 %v4072
        %v4113 = vunpack.c.l.b16 %v4073
        %v4114 = vunpack.c.l.b16 %v4074
        %v4115 = vunpack.c.l.b16 %v4075
        %v4116 = vunpack.c.l.b16 %v4076
        %v4117 = vunpack.c.l.b16 %v4077
        %v4118 = vunpack.c.l.b16 %v4078
        %v4119 = vunpack.c.l.b16 %v4079
        %v4120 = vunpack.c.l.b16 %v4080
        %v4121 = vunpack.c.l.b16 %v4081
        %v4122 = vunpack.c.l.b16 %v4082
        %v4123 = vunpack.c.l.b16 %v4083
        %v4124 = vpack.c.b16 %v4109, %v4108
        %v4125 = vpack.c.b16 %v4111, %v4110
        %v4126 = vpack.c.b16 %v4113, %v4112
        %v4127 = vpack.c.b16 %v4115, %v4114
        %v4128 = vpack.c.b16 %v4117, %v4116
        %v4129 = vpack.c.b16 %v4119, %v4118
        %v4130 = vpack.c.b16 %v4121, %v4120
        %v4131 = vpack.c.b16 %v4123, %v4122
        %4140 = vmatprep.subr.bf16.mxu0 0
        %4141 = vmatpush1.bf16.msra.mxu0 %v4131
        %4142 = vmatprep.subr.bf16.mxu0 0
        %4143 = vmatpush1.bf16.msra.mxu0 %v4130
        %4144 = vmatprep.subr.bf16.mxu0 0
        %4145 = vmatpush1.bf16.msra.mxu0 %v4129
        %4146 = vmatprep.subr.bf16.mxu0 0
        %4147 = vmatpush1.bf16.msra.mxu0 %v4128
        %4148 = vmatprep.subr.bf16.mxu0 0
        %4149 = vmatpush1.bf16.msra.mxu0 %v4127
        %4150 = vmatprep.subr.bf16.mxu0 0
        %4151 = vmatpush1.bf16.msra.mxu0 %v4126
        %4152 = vmatprep.subr.bf16.mxu0 0
        %4153 = vmatpush1.bf16.msra.mxu0 %v4125
        %4154 = vmatprep.subr.bf16.mxu0 0
        %4155 = vmatpush1.bf16.msra.mxu0 %v4124
        %4156 = vmatprep.subr.bf16.mxu0 0
        %4157 = vmatpush2.bf16.msra.mxu0 0
        %4158 = vmatprep.subr.bf16.mxu0 0
        %4159 = vmatpush2.bf16.msra.mxu0 0
        %4160 = vmatprep.subr.bf16.mxu0 0
        %4161 = vmatpush2.bf16.msra.mxu0 0
        %4162 = vmatprep.subr.bf16.mxu0 0
        %4163 = vmatpush2.bf16.msra.mxu0 0
        %4164 = vmatprep.subr.bf16.mxu0 0
        %4165 = vmatpush2.bf16.msra.mxu0 0
        %4166 = vmatprep.subr.bf16.mxu0 0
        %4167 = vmatpush2.bf16.msra.mxu0 0
        %4168 = vmatprep.subr.bf16.mxu0 0
        %4169 = vmatpush2.bf16.msra.mxu0 0
        %4170 = vmatprep.subr.bf16.mxu0 0
        %4171 = vmatpush2.bf16.msra.mxu0 0
        %4172 = vmatprep.mubr.bf16.mxu0 0
        %4173 = vmatmul.mubr.bf16.gmra.mxu0 %v716
        %v4174 = vpop.f32.mrf.mxu0
        %v4175 = vadd.f32 %v4090, %v4174
        %v4176 = vpop.f32.mrf.mxu0
        %v4177 = vpop.f32.mrf.mxu0
        %v4178 = vadd.f32 %v4090, %v4177
        %v4179 = vpop.f32.mrf.mxu0
        %4180 = vmatprep.mubr.bf16.mxu0 0
        %4181 = vmatmul.mubr.bf16.gmra.mxu0 %v717
        %v4182 = vpop.f32.mrf.mxu0
        %v4183 = vadd.f32 %v4090, %v4182
        %v4184 = vpop.f32.mrf.mxu0
        %v4185 = vpop.f32.mrf.mxu0
        %v4186 = vadd.f32 %v4090, %v4185
        %v4187 = vpop.f32.mrf.mxu0
        %4188 = vmatprep.mubr.bf16.mxu0 0
        %4189 = vmatmul.mubr.bf16.gmra.mxu0 %v718
        %v4190 = vpop.f32.mrf.mxu0
        %v4191 = vadd.f32 %v4090, %v4190
        %v4192 = vpop.f32.mrf.mxu0
        %v4193 = vpop.f32.mrf.mxu0
        %v4194 = vadd.f32 %v4090, %v4193
        %v4195 = vpop.f32.mrf.mxu0
        %4196 = vmatprep.mubr.bf16.mxu0 0
        %4197 = vmatmul.mubr.bf16.gmra.mxu0 %v719
        %v4198 = vpop.f32.mrf.mxu0
        %v4199 = vadd.f32 %v4090, %v4198
        %v4200 = vpop.f32.mrf.mxu0
        %v4201 = vpop.f32.mrf.mxu0
        %v4202 = vadd.f32 %v4090, %v4201
        %v4203 = vpop.f32.mrf.mxu0
        %4204 = vmatprep.mubr.bf16.mxu0 0
        %4205 = vmatmul.mubr.bf16.gmra.mxu0 %v720
        %v4206 = vpop.f32.mrf.mxu0
        %v4207 = vadd.f32 %v4090, %v4206
        %v4208 = vpop.f32.mrf.mxu0
        %v4209 = vpop.f32.mrf.mxu0
        %v4210 = vadd.f32 %v4090, %v4209
        %v4211 = vpop.f32.mrf.mxu0
        %4212 = vmatprep.mubr.bf16.mxu0 0
        %4213 = vmatmul.mubr.bf16.gmra.mxu0 %v721
        %v4214 = vpop.f32.mrf.mxu0
        %v4215 = vadd.f32 %v4090, %v4214
        %v4216 = vpop.f32.mrf.mxu0
        %v4217 = vpop.f32.mrf.mxu0
        %v4218 = vadd.f32 %v4090, %v4217
        %v4219 = vpop.f32.mrf.mxu0
        %4220 = vmatprep.mubr.bf16.mxu0 0
        %4221 = vmatmul.mubr.bf16.gmra.mxu0 %v722
        %v4222 = vpop.f32.mrf.mxu0
        %v4223 = vadd.f32 %v4090, %v4222
        %v4224 = vpop.f32.mrf.mxu0
        %v4225 = vpop.f32.mrf.mxu0
        %v4226 = vadd.f32 %v4090, %v4225
        %v4227 = vpop.f32.mrf.mxu0
        %4228 = vmatprep.mubr.bf16.mxu0 0
        %4229 = vmatmul.mubr.bf16.gmra.mxu0 %v723
        %v4230 = vpop.f32.mrf.mxu0
        %v4231 = vadd.f32 %v4090, %v4230
        %v4232 = vpop.f32.mrf.mxu0
        %v4233 = vpop.f32.mrf.mxu0
        %v4234 = vadd.f32 %v4090, %v4233
        %v4235 = vpop.f32.mrf.mxu0
        %4236 = vdwg.mxu0
        %s4237 = scalar_lea.vmem %s8, 320
        %v4238 = vld [vmem:[%s4237] sm:$0xf]
        %v4239 = vld [vmem:[%s4237 + $0x4] sm:$0xf]
        %v4240 = vld [vmem:[%s4237 + $0x8] sm:$0xf]
        %v4241 = vld [vmem:[%s4237 + $0xc] sm:$0xf]
        %v4242 = vld [vmem:[%s4237 + $0x10] sm:$0xf]
        %v4243 = vld [vmem:[%s4237 + $0x14] sm:$0xf]
        %v4244 = vld [vmem:[%s4237 + $0x18] sm:$0xf]
        %v4245 = vld [vmem:[%s4237 + $0x1c] sm:$0xf]
        %v4246 = vld [vmem:[%s4237 + $0x20] sm:$0xf]
        %v4247 = vld [vmem:[%s4237 + $0x24] sm:$0xf]
        %v4248 = vld [vmem:[%s4237 + $0x28] sm:$0xf]
        %v4249 = vld [vmem:[%s4237 + $0x2c] sm:$0xf]
        %v4250 = vld [vmem:[%s4237 + $0x30] sm:$0xf]
        %v4251 = vld [vmem:[%s4237 + $0x34] sm:$0xf]
        %v4252 = vld [vmem:[%s4237 + $0x38] sm:$0xf]
        %v4253 = vld [vmem:[%s4237 + $0x3c] sm:$0xf]
        %s4254 = scalar_lea.vmem %s9, 5
        %v4255 = vld [vmem:[%s4254] sm:$0x1]
        %v4257 = vlaneseq
        %v4258 = vshrl.u32 %v4257, 7
        %v4259 = vsub.s32 0, %v4258
        %v4260 = vrot.slane %v4255, %v4259
        %v4278 = vunpack.c.l.b16 %v4238
        %v4279 = vunpack.c.l.b16 %v4239
        %v4280 = vunpack.c.l.b16 %v4240
        %v4281 = vunpack.c.l.b16 %v4241
        %v4282 = vunpack.c.l.b16 %v4242
        %v4283 = vunpack.c.l.b16 %v4243
        %v4284 = vunpack.c.l.b16 %v4244
        %v4285 = vunpack.c.l.b16 %v4245
        %v4286 = vunpack.c.l.b16 %v4246
        %v4287 = vunpack.c.l.b16 %v4247
        %v4288 = vunpack.c.l.b16 %v4248
        %v4289 = vunpack.c.l.b16 %v4249
        %v4290 = vunpack.c.l.b16 %v4250
        %v4291 = vunpack.c.l.b16 %v4251
        %v4292 = vunpack.c.l.b16 %v4252
        %v4293 = vunpack.c.l.b16 %v4253
        %v4294 = vpack.c.b16 %v4279, %v4278
        %v4295 = vpack.c.b16 %v4281, %v4280
        %v4296 = vpack.c.b16 %v4283, %v4282
        %v4297 = vpack.c.b16 %v4285, %v4284
        %v4298 = vpack.c.b16 %v4287, %v4286
        %v4299 = vpack.c.b16 %v4289, %v4288
        %v4300 = vpack.c.b16 %v4291, %v4290
        %v4301 = vpack.c.b16 %v4293, %v4292
        %4310 = vmatprep.subr.bf16.mxu0 0
        %4311 = vmatpush1.bf16.msra.mxu0 %v4301
        %4312 = vmatprep.subr.bf16.mxu0 0
        %4313 = vmatpush1.bf16.msra.mxu0 %v4300
        %4314 = vmatprep.subr.bf16.mxu0 0
        %4315 = vmatpush1.bf16.msra.mxu0 %v4299
        %4316 = vmatprep.subr.bf16.mxu0 0
        %4317 = vmatpush1.bf16.msra.mxu0 %v4298
        %4318 = vmatprep.subr.bf16.mxu0 0
        %4319 = vmatpush1.bf16.msra.mxu0 %v4297
        %4320 = vmatprep.subr.bf16.mxu0 0
        %4321 = vmatpush1.bf16.msra.mxu0 %v4296
        %4322 = vmatprep.subr.bf16.mxu0 0
        %4323 = vmatpush1.bf16.msra.mxu0 %v4295
        %4324 = vmatprep.subr.bf16.mxu0 0
        %4325 = vmatpush1.bf16.msra.mxu0 %v4294
        %4326 = vmatprep.subr.bf16.mxu0 0
        %4327 = vmatpush2.bf16.msra.mxu0 0
        %4328 = vmatprep.subr.bf16.mxu0 0
        %4329 = vmatpush2.bf16.msra.mxu0 0
        %4330 = vmatprep.subr.bf16.mxu0 0
        %4331 = vmatpush2.bf16.msra.mxu0 0
        %4332 = vmatprep.subr.bf16.mxu0 0
        %4333 = vmatpush2.bf16.msra.mxu0 0
        %4334 = vmatprep.subr.bf16.mxu0 0
        %4335 = vmatpush2.bf16.msra.mxu0 0
        %4336 = vmatprep.subr.bf16.mxu0 0
        %4337 = vmatpush2.bf16.msra.mxu0 0
        %4338 = vmatprep.subr.bf16.mxu0 0
        %4339 = vmatpush2.bf16.msra.mxu0 0
        %4340 = vmatprep.subr.bf16.mxu0 0
        %4341 = vmatpush2.bf16.msra.mxu0 0
        %4342 = vmatprep.mubr.bf16.mxu0 0
        %4343 = vmatmul.mubr.bf16.gmra.mxu0 %v716
        %v4344 = vpop.f32.mrf.mxu0
        %v4345 = vadd.f32 %v4260, %v4344
        %v4346 = vpop.f32.mrf.mxu0
        %v4347 = vpop.f32.mrf.mxu0
        %v4348 = vadd.f32 %v4260, %v4347
        %v4349 = vpop.f32.mrf.mxu0
        %4350 = vmatprep.mubr.bf16.mxu0 0
        %4351 = vmatmul.mubr.bf16.gmra.mxu0 %v717
        %v4352 = vpop.f32.mrf.mxu0
        %v4353 = vadd.f32 %v4260, %v4352
        %v4354 = vpop.f32.mrf.mxu0
        %v4355 = vpop.f32.mrf.mxu0
        %v4356 = vadd.f32 %v4260, %v4355
        %v4357 = vpop.f32.mrf.mxu0
        %4358 = vmatprep.mubr.bf16.mxu0 0
        %4359 = vmatmul.mubr.bf16.gmra.mxu0 %v718
        %v4360 = vpop.f32.mrf.mxu0
        %v4361 = vadd.f32 %v4260, %v4360
        %v4362 = vpop.f32.mrf.mxu0
        %v4363 = vpop.f32.mrf.mxu0
        %v4364 = vadd.f32 %v4260, %v4363
        %v4365 = vpop.f32.mrf.mxu0
        %4366 = vmatprep.mubr.bf16.mxu0 0
        %4367 = vmatmul.mubr.bf16.gmra.mxu0 %v719
        %v4368 = vpop.f32.mrf.mxu0
        %v4369 = vadd.f32 %v4260, %v4368
        %v4370 = vpop.f32.mrf.mxu0
        %v4371 = vpop.f32.mrf.mxu0
        %v4372 = vadd.f32 %v4260, %v4371
        %v4373 = vpop.f32.mrf.mxu0
        %4374 = vmatprep.mubr.bf16.mxu0 0
        %4375 = vmatmul.mubr.bf16.gmra.mxu0 %v720
        %v4376 = vpop.f32.mrf.mxu0
        %v4377 = vadd.f32 %v4260, %v4376
        %v4378 = vpop.f32.mrf.mxu0
        %v4379 = vpop.f32.mrf.mxu0
        %v4380 = vadd.f32 %v4260, %v4379
        %v4381 = vpop.f32.mrf.mxu0
        %4382 = vmatprep.mubr.bf16.mxu0 0
        %4383 = vmatmul.mubr.bf16.gmra.mxu0 %v721
        %v4384 = vpop.f32.mrf.mxu0
        %v4385 = vadd.f32 %v4260, %v4384
        %v4386 = vpop.f32.mrf.mxu0
        %v4387 = vpop.f32.mrf.mxu0
        %v4388 = vadd.f32 %v4260, %v4387
        %v4389 = vpop.f32.mrf.mxu0
        %4390 = vmatprep.mubr.bf16.mxu0 0
        %4391 = vmatmul.mubr.bf16.gmra.mxu0 %v722
        %v4392 = vpop.f32.mrf.mxu0
        %v4393 = vadd.f32 %v4260, %v4392
        %v4394 = vpop.f32.mrf.mxu0
        %v4395 = vpop.f32.mrf.mxu0
        %v4396 = vadd.f32 %v4260, %v4395
        %v4397 = vpop.f32.mrf.mxu0
        %4398 = vmatprep.mubr.bf16.mxu0 0
        %4399 = vmatmul.mubr.bf16.gmra.mxu0 %v723
        %v4400 = vpop.f32.mrf.mxu0
        %v4401 = vadd.f32 %v4260, %v4400
        %v4402 = vpop.f32.mrf.mxu0
        %v4403 = vpop.f32.mrf.mxu0
        %v4404 = vadd.f32 %v4260, %v4403
        %v4405 = vpop.f32.mrf.mxu0
        %4406 = vdwg.mxu0
        %v4407 = vpack.c.bf16 %v4062, %v4062
        %v4408 = vpack.c.bf16 %v4178, %v4175
        %v4409 = vpack.c.bf16 %v4186, %v4183
        %v4410 = vpack.c.bf16 %v4194, %v4191
        %v4411 = vpack.c.bf16 %v4202, %v4199
        %v4412 = vpack.c.bf16 %v4210, %v4207
        %v4413 = vpack.c.bf16 %v4218, %v4215
        %v4414 = vpack.c.bf16 %v4226, %v4223
        %v4415 = vpack.c.bf16 %v4234, %v4231
        %v4417 = vsel %vm1054, %v4407, 0
        %v4420 = vsel %vm1054, %v4408, 0
        %v4423 = vsel %vm1054, %v4409, 0
        %v4426 = vsel %vm1054, %v4410, 0
        %v4429 = vsel %vm1054, %v4411, 0
        %v4432 = vsel %vm1054, %v4412, 0
        %v4435 = vsel %vm1054, %v4413, 0
        %v4438 = vsel %vm1054, %v4414, 0
        %v4441 = vsel %vm1054, %v4415, 0
        %4443 = vmatprep.subr.bf16.mxu0 0
        %4444 = vmatpush1.bf16.xpose.msra.mxu0 %v4441
        %4445 = vmatprep.subr.bf16.mxu0 0
        %4446 = vmatpush1.bf16.xpose.msra.mxu0 %v4438
        %4447 = vmatprep.subr.bf16.mxu0 0
        %4448 = vmatpush1.bf16.xpose.msra.mxu0 %v4435
        %4449 = vmatprep.subr.bf16.mxu0 0
        %4450 = vmatpush1.bf16.xpose.msra.mxu0 %v4432
        %4451 = vmatprep.subr.bf16.mxu0 0
        %4452 = vmatpush1.bf16.xpose.msra.mxu0 %v4429
        %4453 = vmatprep.subr.bf16.mxu0 0
        %4454 = vmatpush1.bf16.xpose.msra.mxu0 %v4426
        %4455 = vmatprep.subr.bf16.mxu0 0
        %4456 = vmatpush1.bf16.xpose.msra.mxu0 %v4423
        %4457 = vmatprep.subr.bf16.mxu0 0
        %4458 = vmatpush1.bf16.xpose.msra.mxu0 %v4420
        %4459 = vmatprep.subr.bf16.mxu0 0
        %4460 = vmatpush2.bf16.xpose.msra.mxu0 0
        %4461 = vmatprep.subr.bf16.mxu0 0
        %4462 = vmatpush2.bf16.xpose.msra.mxu0 0
        %4463 = vmatprep.subr.bf16.mxu0 0
        %4464 = vmatpush2.bf16.xpose.msra.mxu0 0
        %4465 = vmatprep.subr.bf16.mxu0 0
        %4466 = vmatpush2.bf16.xpose.msra.mxu0 0
        %4467 = vmatprep.subr.bf16.mxu0 0
        %4468 = vmatpush2.bf16.xpose.msra.mxu0 0
        %4469 = vmatprep.subr.bf16.mxu0 0
        %4470 = vmatpush2.bf16.xpose.msra.mxu0 0
        %4471 = vmatprep.subr.bf16.mxu0 0
        %4472 = vmatpush2.bf16.xpose.msra.mxu0 0
        %4473 = vmatprep.subr.bf16.mxu0 0
        %4474 = vmatpush2.bf16.xpose.msra.mxu0 0
        %4475 = vmatprep.mubr.bf16.mxu0 0
        %4476 = vmatmul.mubr.bf16.gmra.mxu0 %v4417
        %v4477 = vpop.f32.mrf.mxu0
        %v4478 = vadd.f32 %v529, %v4477
        %v4479 = vpop.f32.mrf.mxu0
        %v4480 = vpop.f32.mrf.mxu0
        %v4481 = vpop.f32.mrf.mxu0
        %4482 = vdwg.mxu0
        %4483 = vmax.xlane.f32.xlu0 %v4478
        %v4484 = vpop.xlane.xlu0 %4483
        %v4485 = vsub.f32 %v4478, %v4484
        %v4486 = vmul.f32 %v4485, 1.442695
        %v4487 = vpow.pop %v4486
        %4488 = vadd.xlane.f32.xlu0 %v4487
        %v4489 = vpop.xlane.xlu0 %4488
        %v4490 = vrcp.pop %v4489
        %v4491 = vmul.f32 %v4487, %v4490
        %v4492 = vadd.f32 %v3898, %v4491
        %v4493 = vpack.c.bf16 %v4491, %v4491
        %v4494 = vpack.c.bf16 %v4348, %v4345
        %v4495 = vpack.c.bf16 %v4356, %v4353
        %v4496 = vpack.c.bf16 %v4364, %v4361
        %v4497 = vpack.c.bf16 %v4372, %v4369
        %v4498 = vpack.c.bf16 %v4380, %v4377
        %v4499 = vpack.c.bf16 %v4388, %v4385
        %v4500 = vpack.c.bf16 %v4396, %v4393
        %v4501 = vpack.c.bf16 %v4404, %v4401
        %4502 = vmatprep.subr.bf16.mxu0 0
        %4503 = vmatpush1.bf16.msra.mxu0 %v4501
        %4504 = vmatprep.subr.bf16.mxu0 0
        %4505 = vmatpush1.bf16.msra.mxu0 %v4500
        %4506 = vmatprep.subr.bf16.mxu0 0
        %4507 = vmatpush1.bf16.msra.mxu0 %v4499
        %4508 = vmatprep.subr.bf16.mxu0 0
        %4509 = vmatpush1.bf16.msra.mxu0 %v4498
        %4510 = vmatprep.subr.bf16.mxu0 0
        %4511 = vmatpush1.bf16.msra.mxu0 %v4497
        %4512 = vmatprep.subr.bf16.mxu0 0
        %4513 = vmatpush1.bf16.msra.mxu0 %v4496
        %4514 = vmatprep.subr.bf16.mxu0 0
        %4515 = vmatpush1.bf16.msra.mxu0 %v4495
        %4516 = vmatprep.subr.bf16.mxu0 0
        %4517 = vmatpush1.bf16.msra.mxu0 %v4494
        %4518 = vmatprep.subr.bf16.mxu0 0
        %4519 = vmatpush2.bf16.msra.mxu0 0
        %4520 = vmatprep.subr.bf16.mxu0 0
        %4521 = vmatpush2.bf16.msra.mxu0 0
        %4522 = vmatprep.subr.bf16.mxu0 0
        %4523 = vmatpush2.bf16.msra.mxu0 0
        %4524 = vmatprep.subr.bf16.mxu0 0
        %4525 = vmatpush2.bf16.msra.mxu0 0
        %4526 = vmatprep.subr.bf16.mxu0 0
        %4527 = vmatpush2.bf16.msra.mxu0 0
        %4528 = vmatprep.subr.bf16.mxu0 0
        %4529 = vmatpush2.bf16.msra.mxu0 0
        %4530 = vmatprep.subr.bf16.mxu0 0
        %4531 = vmatpush2.bf16.msra.mxu0 0
        %4532 = vmatprep.subr.bf16.mxu0 0
        %4533 = vmatpush2.bf16.msra.mxu0 0
        %4534 = vmatprep.mubr.bf16.mxu0 0
        %4535 = vmatmul.mubr.bf16.gmra.mxu0 %v4493
        %v4536 = vpop.f32.mrf.mxu0
        %v4537 = vadd.f32 0.0, %v4536
        %v4538 = vpop.f32.mrf.mxu0
        %v4539 = vpop.f32.mrf.mxu0
        %v4540 = vpop.f32.mrf.mxu0
        %4541 = vdwg.mxu0
        %v4542 = vpack.c.bf16 %v4537, %v4537
        %s4543 = scalar_lea.vmem %s10, 80
        %v4544 = vld [vmem:[%s4543] sm:$0xf]
        %v4545 = vld [vmem:[%s4543 + $0x4] sm:$0xf]
        %v4546 = vld [vmem:[%s4543 + $0x8] sm:$0xf]
        %v4547 = vld [vmem:[%s4543 + $0xc] sm:$0xf]
        %v4552 = vunpack.c.l.b16 %v4544
        %v4553 = vunpack.c.l.b16 %v4545
        %v4554 = vunpack.c.l.b16 %v4546
        %v4555 = vunpack.c.l.b16 %v4547
        %v4556 = vpack.c.b16 %v4553, %v4552
        %v4557 = vpack.c.b16 %v4555, %v4554
        %v4561 = vsel %vm1054, %v4542, 0
        %4563 = vmatprep.subr.bf16.mxu0 0
        %4564 = vmatpush1.bf16.msra.mxu0 0
        %4565 = vmatprep.subr.bf16.mxu0 0
        %4566 = vmatpush1.bf16.msra.mxu0 0
        %4567 = vmatprep.subr.bf16.mxu0 0
        %4568 = vmatpush1.bf16.msra.mxu0 0
        %4569 = vmatprep.subr.bf16.mxu0 0
        %4570 = vmatpush1.bf16.msra.mxu0 0
        %4571 = vmatprep.subr.bf16.mxu0 0
        %4572 = vmatpush1.bf16.msra.mxu0 0
        %4573 = vmatprep.subr.bf16.mxu0 0
        %4574 = vmatpush1.bf16.msra.mxu0 0
        %4575 = vmatprep.subr.bf16.mxu0 0
        %4576 = vmatpush1.bf16.msra.mxu0 %v4557
        %4577 = vmatprep.subr.bf16.mxu0 0
        %4578 = vmatpush1.bf16.msra.mxu0 %v4556
        %4579 = vmatprep.subr.bf16.mxu0 0
        %4580 = vmatpush2.bf16.msra.mxu0 0
        %4581 = vmatprep.subr.bf16.mxu0 0
        %4582 = vmatpush2.bf16.msra.mxu0 0
        %4583 = vmatprep.subr.bf16.mxu0 0
        %4584 = vmatpush2.bf16.msra.mxu0 0
        %4585 = vmatprep.subr.bf16.mxu0 0
        %4586 = vmatpush2.bf16.msra.mxu0 0
        %4587 = vmatprep.subr.bf16.mxu0 0
        %4588 = vmatpush2.bf16.msra.mxu0 0
        %4589 = vmatprep.subr.bf16.mxu0 0
        %4590 = vmatpush2.bf16.msra.mxu0 0
        %4591 = vmatprep.subr.bf16.mxu0 0
        %4592 = vmatpush2.bf16.msra.mxu0 0
        %4593 = vmatprep.subr.bf16.mxu0 0
        %4594 = vmatpush2.bf16.msra.mxu0 0
        %4595 = vmatprep.mubr.bf16.mxu0 0
        %4596 = vmatmul.mubr.bf16.gmra.mxu0 %v4561
        %v4597 = vpop.f32.mrf.mxu0
        %v4598 = vadd.f32 0.0, %v4597
        %v4599 = vpop.f32.mrf.mxu0
        %v4600 = vpop.f32.mrf.mxu0
        %v4601 = vpop.f32.mrf.mxu0
        %4602 = vdwg.mxu0
        %v4607 = vunpack.c.l.b16 %v3950
        %v4608 = vunpack.c.l.b16 %v3951
        %v4609 = vunpack.c.l.b16 %v3952
        %v4610 = vunpack.c.l.b16 %v3953
        %v4611 = vpack.c.b16 %v4608, %v4607
        %v4612 = vpack.c.b16 %v4610, %v4609
        %v4616 = vsel %vm1054, %v3948, 0
        %4618 = vmatprep.subr.bf16.mxu0 0
        %4619 = vmatpush1.bf16.msra.mxu0 0
        %4620 = vmatprep.subr.bf16.mxu0 0
        %4621 = vmatpush1.bf16.msra.mxu0 0
        %4622 = vmatprep.subr.bf16.mxu0 0
        %4623 = vmatpush1.bf16.msra.mxu0 0
        %4624 = vmatprep.subr.bf16.mxu0 0
        %4625 = vmatpush1.bf16.msra.mxu0 0
        %4626 = vmatprep.subr.bf16.mxu0 0
        %4627 = vmatpush1.bf16.msra.mxu0 0
        %4628 = vmatprep.subr.bf16.mxu0 0
        %4629 = vmatpush1.bf16.msra.mxu0 0
        %4630 = vmatprep.subr.bf16.mxu0 0
        %4631 = vmatpush1.bf16.msra.mxu0 %v4612
        %4632 = vmatprep.subr.bf16.mxu0 0
        %4633 = vmatpush1.bf16.msra.mxu0 %v4611
        %4634 = vmatprep.subr.bf16.mxu0 0
        %4635 = vmatpush2.bf16.msra.mxu0 0
        %4636 = vmatprep.subr.bf16.mxu0 0
        %4637 = vmatpush2.bf16.msra.mxu0 0
        %4638 = vmatprep.subr.bf16.mxu0 0
        %4639 = vmatpush2.bf16.msra.mxu0 0
        %4640 = vmatprep.subr.bf16.mxu0 0
        %4641 = vmatpush2.bf16.msra.mxu0 0
        %4642 = vmatprep.subr.bf16.mxu0 0
        %4643 = vmatpush2.bf16.msra.mxu0 0
        %4644 = vmatprep.subr.bf16.mxu0 0
        %4645 = vmatpush2.bf16.msra.mxu0 0
        %4646 = vmatprep.subr.bf16.mxu0 0
        %4647 = vmatpush2.bf16.msra.mxu0 0
        %4648 = vmatprep.subr.bf16.mxu0 0
        %4649 = vmatpush2.bf16.msra.mxu0 0
        %4650 = vmatprep.mubr.bf16.mxu0 0
        %4651 = vmatmul.mubr.bf16.gmra.mxu0 %v4616
        %v4652 = vpop.f32.mrf.mxu0
        %v4653 = vadd.f32 %v4598, %v4652
        %v4654 = vpop.f32.mrf.mxu0
        %v4655 = vpop.f32.mrf.mxu0
        %v4656 = vpop.f32.mrf.mxu0
        %4657 = vdwg.mxu0
        %s4658 = scalar_lea.vmem %s4, 384
        %v4659 = vld [vmem:[%s4658] sm:$0xf]
        %v4660 = vld [vmem:[%s4658 + $0x4] sm:$0xf]
        %v4661 = vld [vmem:[%s4658 + $0x8] sm:$0xf]
        %v4662 = vld [vmem:[%s4658 + $0xc] sm:$0xf]
        %v4663 = vld [vmem:[%s4658 + $0x10] sm:$0xf]
        %v4664 = vld [vmem:[%s4658 + $0x14] sm:$0xf]
        %v4665 = vld [vmem:[%s4658 + $0x18] sm:$0xf]
        %v4666 = vld [vmem:[%s4658 + $0x1c] sm:$0xf]
        %v4667 = vld [vmem:[%s4658 + $0x20] sm:$0xf]
        %v4668 = vld [vmem:[%s4658 + $0x24] sm:$0xf]
        %v4669 = vld [vmem:[%s4658 + $0x28] sm:$0xf]
        %v4670 = vld [vmem:[%s4658 + $0x2c] sm:$0xf]
        %v4671 = vld [vmem:[%s4658 + $0x30] sm:$0xf]
        %v4672 = vld [vmem:[%s4658 + $0x34] sm:$0xf]
        %v4673 = vld [vmem:[%s4658 + $0x38] sm:$0xf]
        %v4674 = vld [vmem:[%s4658 + $0x3c] sm:$0xf]
        %s4675 = scalar_lea.vmem %s5, 6
        %v4676 = vld [vmem:[%s4675] sm:$0x1]
        %v4678 = vlaneseq
        %v4679 = vshrl.u32 %v4678, 7
        %v4680 = vsub.s32 0, %v4679
        %v4681 = vrot.slane %v4676, %v4680
        %v4699 = vunpack.c.l.b16 %v4659
        %v4700 = vunpack.c.l.b16 %v4660
        %v4701 = vunpack.c.l.b16 %v4661
        %v4702 = vunpack.c.l.b16 %v4662
        %v4703 = vunpack.c.l.b16 %v4663
        %v4704 = vunpack.c.l.b16 %v4664
        %v4705 = vunpack.c.l.b16 %v4665
        %v4706 = vunpack.c.l.b16 %v4666
        %v4707 = vunpack.c.l.b16 %v4667
        %v4708 = vunpack.c.l.b16 %v4668
        %v4709 = vunpack.c.l.b16 %v4669
        %v4710 = vunpack.c.l.b16 %v4670
        %v4711 = vunpack.c.l.b16 %v4671
        %v4712 = vunpack.c.l.b16 %v4672
        %v4713 = vunpack.c.l.b16 %v4673
        %v4714 = vunpack.c.l.b16 %v4674
        %v4715 = vpack.c.b16 %v4700, %v4699
        %v4716 = vpack.c.b16 %v4702, %v4701
        %v4717 = vpack.c.b16 %v4704, %v4703
        %v4718 = vpack.c.b16 %v4706, %v4705
        %v4719 = vpack.c.b16 %v4708, %v4707
        %v4720 = vpack.c.b16 %v4710, %v4709
        %v4721 = vpack.c.b16 %v4712, %v4711
        %v4722 = vpack.c.b16 %v4714, %v4713
        %4731 = vmatprep.subr.bf16.mxu0 0
        %4732 = vmatpush1.bf16.msra.mxu0 %v4722
        %4733 = vmatprep.subr.bf16.mxu0 0
        %4734 = vmatpush1.bf16.msra.mxu0 %v4721
        %4735 = vmatprep.subr.bf16.mxu0 0
        %4736 = vmatpush1.bf16.msra.mxu0 %v4720
        %4737 = vmatprep.subr.bf16.mxu0 0
        %4738 = vmatpush1.bf16.msra.mxu0 %v4719
        %4739 = vmatprep.subr.bf16.mxu0 0
        %4740 = vmatpush1.bf16.msra.mxu0 %v4718
        %4741 = vmatprep.subr.bf16.mxu0 0
        %4742 = vmatpush1.bf16.msra.mxu0 %v4717
        %4743 = vmatprep.subr.bf16.mxu0 0
        %4744 = vmatpush1.bf16.msra.mxu0 %v4716
        %4745 = vmatprep.subr.bf16.mxu0 0
        %4746 = vmatpush1.bf16.msra.mxu0 %v4715
        %4747 = vmatprep.subr.bf16.mxu0 0
        %4748 = vmatpush2.bf16.msra.mxu0 0
        %4749 = vmatprep.subr.bf16.mxu0 0
        %4750 = vmatpush2.bf16.msra.mxu0 0
        %4751 = vmatprep.subr.bf16.mxu0 0
        %4752 = vmatpush2.bf16.msra.mxu0 0
        %4753 = vmatprep.subr.bf16.mxu0 0
        %4754 = vmatpush2.bf16.msra.mxu0 0
        %4755 = vmatprep.subr.bf16.mxu0 0
        %4756 = vmatpush2.bf16.msra.mxu0 0
        %4757 = vmatprep.subr.bf16.mxu0 0
        %4758 = vmatpush2.bf16.msra.mxu0 0
        %4759 = vmatprep.subr.bf16.mxu0 0
        %4760 = vmatpush2.bf16.msra.mxu0 0
        %4761 = vmatprep.subr.bf16.mxu0 0
        %4762 = vmatpush2.bf16.msra.mxu0 0
        %4763 = vmatprep.mubr.bf16.mxu0 0
        %4764 = vmatmul.mubr.bf16.gmra.mxu0 %v3359
        %v4765 = vpop.f32.mrf.mxu0
        %v4766 = vadd.f32 %v4681, %v4765
        %v4767 = vpop.f32.mrf.mxu0
        %v4768 = vpop.f32.mrf.mxu0
        %v4769 = vpop.f32.mrf.mxu0
        %4770 = vdwg.mxu0
        %s4771 = scalar_lea.vmem %s6, 384
        %v4772 = vld [vmem:[%s4771] sm:$0xf]
        %v4773 = vld [vmem:[%s4771 + $0x4] sm:$0xf]
        %v4774 = vld [vmem:[%s4771 + $0x8] sm:$0xf]
        %v4775 = vld [vmem:[%s4771 + $0xc] sm:$0xf]
        %v4776 = vld [vmem:[%s4771 + $0x10] sm:$0xf]
        %v4777 = vld [vmem:[%s4771 + $0x14] sm:$0xf]
        %v4778 = vld [vmem:[%s4771 + $0x18] sm:$0xf]
        %v4779 = vld [vmem:[%s4771 + $0x1c] sm:$0xf]
        %v4780 = vld [vmem:[%s4771 + $0x20] sm:$0xf]
        %v4781 = vld [vmem:[%s4771 + $0x24] sm:$0xf]
        %v4782 = vld [vmem:[%s4771 + $0x28] sm:$0xf]
        %v4783 = vld [vmem:[%s4771 + $0x2c] sm:$0xf]
        %v4784 = vld [vmem:[%s4771 + $0x30] sm:$0xf]
        %v4785 = vld [vmem:[%s4771 + $0x34] sm:$0xf]
        %v4786 = vld [vmem:[%s4771 + $0x38] sm:$0xf]
        %v4787 = vld [vmem:[%s4771 + $0x3c] sm:$0xf]
        %s4788 = scalar_lea.vmem %s7, 6
        %v4789 = vld [vmem:[%s4788] sm:$0x1]
        %v4791 = vlaneseq
        %v4792 = vshrl.u32 %v4791, 7
        %v4793 = vsub.s32 0, %v4792
        %v4794 = vrot.slane %v4789, %v4793
        %v4812 = vunpack.c.l.b16 %v4772
        %v4813 = vunpack.c.l.b16 %v4773
        %v4814 = vunpack.c.l.b16 %v4774
        %v4815 = vunpack.c.l.b16 %v4775
        %v4816 = vunpack.c.l.b16 %v4776
        %v4817 = vunpack.c.l.b16 %v4777
        %v4818 = vunpack.c.l.b16 %v4778
        %v4819 = vunpack.c.l.b16 %v4779
        %v4820 = vunpack.c.l.b16 %v4780
        %v4821 = vunpack.c.l.b16 %v4781
        %v4822 = vunpack.c.l.b16 %v4782
        %v4823 = vunpack.c.l.b16 %v4783
        %v4824 = vunpack.c.l.b16 %v4784
        %v4825 = vunpack.c.l.b16 %v4785
        %v4826 = vunpack.c.l.b16 %v4786
        %v4827 = vunpack.c.l.b16 %v4787
        %v4828 = vpack.c.b16 %v4813, %v4812
        %v4829 = vpack.c.b16 %v4815, %v4814
        %v4830 = vpack.c.b16 %v4817, %v4816
        %v4831 = vpack.c.b16 %v4819, %v4818
        %v4832 = vpack.c.b16 %v4821, %v4820
        %v4833 = vpack.c.b16 %v4823, %v4822
        %v4834 = vpack.c.b16 %v4825, %v4824
        %v4835 = vpack.c.b16 %v4827, %v4826
        %4844 = vmatprep.subr.bf16.mxu0 0
        %4845 = vmatpush1.bf16.msra.mxu0 %v4835
        %4846 = vmatprep.subr.bf16.mxu0 0
        %4847 = vmatpush1.bf16.msra.mxu0 %v4834
        %4848 = vmatprep.subr.bf16.mxu0 0
        %4849 = vmatpush1.bf16.msra.mxu0 %v4833
        %4850 = vmatprep.subr.bf16.mxu0 0
        %4851 = vmatpush1.bf16.msra.mxu0 %v4832
        %4852 = vmatprep.subr.bf16.mxu0 0
        %4853 = vmatpush1.bf16.msra.mxu0 %v4831
        %4854 = vmatprep.subr.bf16.mxu0 0
        %4855 = vmatpush1.bf16.msra.mxu0 %v4830
        %4856 = vmatprep.subr.bf16.mxu0 0
        %4857 = vmatpush1.bf16.msra.mxu0 %v4829
        %4858 = vmatprep.subr.bf16.mxu0 0
        %4859 = vmatpush1.bf16.msra.mxu0 %v4828
        %4860 = vmatprep.subr.bf16.mxu0 0
        %4861 = vmatpush2.bf16.msra.mxu0 0
        %4862 = vmatprep.subr.bf16.mxu0 0
        %4863 = vmatpush2.bf16.msra.mxu0 0
        %4864 = vmatprep.subr.bf16.mxu0 0
        %4865 = vmatpush2.bf16.msra.mxu0 0
        %4866 = vmatprep.subr.bf16.mxu0 0
        %4867 = vmatpush2.bf16.msra.mxu0 0
        %4868 = vmatprep.subr.bf16.mxu0 0
        %4869 = vmatpush2.bf16.msra.mxu0 0
        %4870 = vmatprep.subr.bf16.mxu0 0
        %4871 = vmatpush2.bf16.msra.mxu0 0
        %4872 = vmatprep.subr.bf16.mxu0 0
        %4873 = vmatpush2.bf16.msra.mxu0 0
        %4874 = vmatprep.subr.bf16.mxu0 0
        %4875 = vmatpush2.bf16.msra.mxu0 0
        %4876 = vmatprep.mubr.bf16.mxu0 0
        %4877 = vmatmul.mubr.bf16.gmra.mxu0 %v716
        %v4878 = vpop.f32.mrf.mxu0
        %v4879 = vadd.f32 %v4794, %v4878
        %v4880 = vpop.f32.mrf.mxu0
        %v4881 = vpop.f32.mrf.mxu0
        %v4882 = vadd.f32 %v4794, %v4881
        %v4883 = vpop.f32.mrf.mxu0
        %4884 = vmatprep.mubr.bf16.mxu0 0
        %4885 = vmatmul.mubr.bf16.gmra.mxu0 %v717
        %v4886 = vpop.f32.mrf.mxu0
        %v4887 = vadd.f32 %v4794, %v4886
        %v4888 = vpop.f32.mrf.mxu0
        %v4889 = vpop.f32.mrf.mxu0
        %v4890 = vadd.f32 %v4794, %v4889
        %v4891 = vpop.f32.mrf.mxu0
        %4892 = vmatprep.mubr.bf16.mxu0 0
        %4893 = vmatmul.mubr.bf16.gmra.mxu0 %v718
        %v4894 = vpop.f32.mrf.mxu0
        %v4895 = vadd.f32 %v4794, %v4894
        %v4896 = vpop.f32.mrf.mxu0
        %v4897 = vpop.f32.mrf.mxu0
        %v4898 = vadd.f32 %v4794, %v4897
        %v4899 = vpop.f32.mrf.mxu0
        %4900 = vmatprep.mubr.bf16.mxu0 0
        %4901 = vmatmul.mubr.bf16.gmra.mxu0 %v719
        %v4902 = vpop.f32.mrf.mxu0
        %v4903 = vadd.f32 %v4794, %v4902
        %v4904 = vpop.f32.mrf.mxu0
        %v4905 = vpop.f32.mrf.mxu0
        %v4906 = vadd.f32 %v4794, %v4905
        %v4907 = vpop.f32.mrf.mxu0
        %4908 = vmatprep.mubr.bf16.mxu0 0
        %4909 = vmatmul.mubr.bf16.gmra.mxu0 %v720
        %v4910 = vpop.f32.mrf.mxu0
        %v4911 = vadd.f32 %v4794, %v4910
        %v4912 = vpop.f32.mrf.mxu0
        %v4913 = vpop.f32.mrf.mxu0
        %v4914 = vadd.f32 %v4794, %v4913
        %v4915 = vpop.f32.mrf.mxu0
        %4916 = vmatprep.mubr.bf16.mxu0 0
        %4917 = vmatmul.mubr.bf16.gmra.mxu0 %v721
        %v4918 = vpop.f32.mrf.mxu0
        %v4919 = vadd.f32 %v4794, %v4918
        %v4920 = vpop.f32.mrf.mxu0
        %v4921 = vpop.f32.mrf.mxu0
        %v4922 = vadd.f32 %v4794, %v4921
        %v4923 = vpop.f32.mrf.mxu0
        %4924 = vmatprep.mubr.bf16.mxu0 0
        %4925 = vmatmul.mubr.bf16.gmra.mxu0 %v722
        %v4926 = vpop.f32.mrf.mxu0
        %v4927 = vadd.f32 %v4794, %v4926
        %v4928 = vpop.f32.mrf.mxu0
        %v4929 = vpop.f32.mrf.mxu0
        %v4930 = vadd.f32 %v4794, %v4929
        %v4931 = vpop.f32.mrf.mxu0
        %4932 = vmatprep.mubr.bf16.mxu0 0
        %4933 = vmatmul.mubr.bf16.gmra.mxu0 %v723
        %v4934 = vpop.f32.mrf.mxu0
        %v4935 = vadd.f32 %v4794, %v4934
        %v4936 = vpop.f32.mrf.mxu0
        %v4937 = vpop.f32.mrf.mxu0
        %v4938 = vadd.f32 %v4794, %v4937
        %v4939 = vpop.f32.mrf.mxu0
        %4940 = vdwg.mxu0
        %s4941 = scalar_lea.vmem %s8, 384
        %v4942 = vld [vmem:[%s4941] sm:$0xf]
        %v4943 = vld [vmem:[%s4941 + $0x4] sm:$0xf]
        %v4944 = vld [vmem:[%s4941 + $0x8] sm:$0xf]
        %v4945 = vld [vmem:[%s4941 + $0xc] sm:$0xf]
        %v4946 = vld [vmem:[%s4941 + $0x10] sm:$0xf]
        %v4947 = vld [vmem:[%s4941 + $0x14] sm:$0xf]
        %v4948 = vld [vmem:[%s4941 + $0x18] sm:$0xf]
        %v4949 = vld [vmem:[%s4941 + $0x1c] sm:$0xf]
        %v4950 = vld [vmem:[%s4941 + $0x20] sm:$0xf]
        %v4951 = vld [vmem:[%s4941 + $0x24] sm:$0xf]
        %v4952 = vld [vmem:[%s4941 + $0x28] sm:$0xf]
        %v4953 = vld [vmem:[%s4941 + $0x2c] sm:$0xf]
        %v4954 = vld [vmem:[%s4941 + $0x30] sm:$0xf]
        %v4955 = vld [vmem:[%s4941 + $0x34] sm:$0xf]
        %v4956 = vld [vmem:[%s4941 + $0x38] sm:$0xf]
        %v4957 = vld [vmem:[%s4941 + $0x3c] sm:$0xf]
        %s4958 = scalar_lea.vmem %s9, 6
        %v4959 = vld [vmem:[%s4958] sm:$0x1]
        %v4961 = vlaneseq
        %v4962 = vshrl.u32 %v4961, 7
        %v4963 = vsub.s32 0, %v4962
        %v4964 = vrot.slane %v4959, %v4963
        %v4982 = vunpack.c.l.b16 %v4942
        %v4983 = vunpack.c.l.b16 %v4943
        %v4984 = vunpack.c.l.b16 %v4944
        %v4985 = vunpack.c.l.b16 %v4945
        %v4986 = vunpack.c.l.b16 %v4946
        %v4987 = vunpack.c.l.b16 %v4947
        %v4988 = vunpack.c.l.b16 %v4948
        %v4989 = vunpack.c.l.b16 %v4949
        %v4990 = vunpack.c.l.b16 %v4950
        %v4991 = vunpack.c.l.b16 %v4951
        %v4992 = vunpack.c.l.b16 %v4952
        %v4993 = vunpack.c.l.b16 %v4953
        %v4994 = vunpack.c.l.b16 %v4954
        %v4995 = vunpack.c.l.b16 %v4955
        %v4996 = vunpack.c.l.b16 %v4956
        %v4997 = vunpack.c.l.b16 %v4957
        %v4998 = vpack.c.b16 %v4983, %v4982
        %v4999 = vpack.c.b16 %v4985, %v4984
        %v5000 = vpack.c.b16 %v4987, %v4986
        %v5001 = vpack.c.b16 %v4989, %v4988
        %v5002 = vpack.c.b16 %v4991, %v4990
        %v5003 = vpack.c.b16 %v4993, %v4992
        %v5004 = vpack.c.b16 %v4995, %v4994
        %v5005 = vpack.c.b16 %v4997, %v4996
        %5014 = vmatprep.subr.bf16.mxu0 0
        %5015 = vmatpush1.bf16.msra.mxu0 %v5005
        %5016 = vmatprep.subr.bf16.mxu0 0
        %5017 = vmatpush1.bf16.msra.mxu0 %v5004
        %5018 = vmatprep.subr.bf16.mxu0 0
        %5019 = vmatpush1.bf16.msra.mxu0 %v5003
        %5020 = vmatprep.subr.bf16.mxu0 0
        %5021 = vmatpush1.bf16.msra.mxu0 %v5002
        %5022 = vmatprep.subr.bf16.mxu0 0
        %5023 = vmatpush1.bf16.msra.mxu0 %v5001
        %5024 = vmatprep.subr.bf16.mxu0 0
        %5025 = vmatpush1.bf16.msra.mxu0 %v5000
        %5026 = vmatprep.subr.bf16.mxu0 0
        %5027 = vmatpush1.bf16.msra.mxu0 %v4999
        %5028 = vmatprep.subr.bf16.mxu0 0
        %5029 = vmatpush1.bf16.msra.mxu0 %v4998
        %5030 = vmatprep.subr.bf16.mxu0 0
        %5031 = vmatpush2.bf16.msra.mxu0 0
        %5032 = vmatprep.subr.bf16.mxu0 0
        %5033 = vmatpush2.bf16.msra.mxu0 0
        %5034 = vmatprep.subr.bf16.mxu0 0
        %5035 = vmatpush2.bf16.msra.mxu0 0
        %5036 = vmatprep.subr.bf16.mxu0 0
        %5037 = vmatpush2.bf16.msra.mxu0 0
        %5038 = vmatprep.subr.bf16.mxu0 0
        %5039 = vmatpush2.bf16.msra.mxu0 0
        %5040 = vmatprep.subr.bf16.mxu0 0
        %5041 = vmatpush2.bf16.msra.mxu0 0
        %5042 = vmatprep.subr.bf16.mxu0 0
        %5043 = vmatpush2.bf16.msra.mxu0 0
        %5044 = vmatprep.subr.bf16.mxu0 0
        %5045 = vmatpush2.bf16.msra.mxu0 0
        %5046 = vmatprep.mubr.bf16.mxu0 0
        %5047 = vmatmul.mubr.bf16.gmra.mxu0 %v716
        %v5048 = vpop.f32.mrf.mxu0
        %v5049 = vadd.f32 %v4964, %v5048
        %v5050 = vpop.f32.mrf.mxu0
        %v5051 = vpop.f32.mrf.mxu0
        %v5052 = vadd.f32 %v4964, %v5051
        %v5053 = vpop.f32.mrf.mxu0
        %5054 = vmatprep.mubr.bf16.mxu0 0
        %5055 = vmatmul.mubr.bf16.gmra.mxu0 %v717
        %v5056 = vpop.f32.mrf.mxu0
        %v5057 = vadd.f32 %v4964, %v5056
        %v5058 = vpop.f32.mrf.mxu0
        %v5059 = vpop.f32.mrf.mxu0
        %v5060 = vadd.f32 %v4964, %v5059
        %v5061 = vpop.f32.mrf.mxu0
        %5062 = vmatprep.mubr.bf16.mxu0 0
        %5063 = vmatmul.mubr.bf16.gmra.mxu0 %v718
        %v5064 = vpop.f32.mrf.mxu0
        %v5065 = vadd.f32 %v4964, %v5064
        %v5066 = vpop.f32.mrf.mxu0
        %v5067 = vpop.f32.mrf.mxu0
        %v5068 = vadd.f32 %v4964, %v5067
        %v5069 = vpop.f32.mrf.mxu0
        %5070 = vmatprep.mubr.bf16.mxu0 0
        %5071 = vmatmul.mubr.bf16.gmra.mxu0 %v719
        %v5072 = vpop.f32.mrf.mxu0
        %v5073 = vadd.f32 %v4964, %v5072
        %v5074 = vpop.f32.mrf.mxu0
        %v5075 = vpop.f32.mrf.mxu0
        %v5076 = vadd.f32 %v4964, %v5075
        %v5077 = vpop.f32.mrf.mxu0
        %5078 = vmatprep.mubr.bf16.mxu0 0
        %5079 = vmatmul.mubr.bf16.gmra.mxu0 %v720
        %v5080 = vpop.f32.mrf.mxu0
        %v5081 = vadd.f32 %v4964, %v5080
        %v5082 = vpop.f32.mrf.mxu0
        %v5083 = vpop.f32.mrf.mxu0
        %v5084 = vadd.f32 %v4964, %v5083
        %v5085 = vpop.f32.mrf.mxu0
        %5086 = vmatprep.mubr.bf16.mxu0 0
        %5087 = vmatmul.mubr.bf16.gmra.mxu0 %v721
        %v5088 = vpop.f32.mrf.mxu0
        %v5089 = vadd.f32 %v4964, %v5088
        %v5090 = vpop.f32.mrf.mxu0
        %v5091 = vpop.f32.mrf.mxu0
        %v5092 = vadd.f32 %v4964, %v5091
        %v5093 = vpop.f32.mrf.mxu0
        %5094 = vmatprep.mubr.bf16.mxu0 0
        %5095 = vmatmul.mubr.bf16.gmra.mxu0 %v722
        %v5096 = vpop.f32.mrf.mxu0
        %v5097 = vadd.f32 %v4964, %v5096
        %v5098 = vpop.f32.mrf.mxu0
        %v5099 = vpop.f32.mrf.mxu0
        %v5100 = vadd.f32 %v4964, %v5099
        %v5101 = vpop.f32.mrf.mxu0
        %5102 = vmatprep.mubr.bf16.mxu0 0
        %5103 = vmatmul.mubr.bf16.gmra.mxu0 %v723
        %v5104 = vpop.f32.mrf.mxu0
        %v5105 = vadd.f32 %v4964, %v5104
        %v5106 = vpop.f32.mrf.mxu0
        %v5107 = vpop.f32.mrf.mxu0
        %v5108 = vadd.f32 %v4964, %v5107
        %v5109 = vpop.f32.mrf.mxu0
        %5110 = vdwg.mxu0
        %v5111 = vpack.c.bf16 %v4766, %v4766
        %v5112 = vpack.c.bf16 %v4882, %v4879
        %v5113 = vpack.c.bf16 %v4890, %v4887
        %v5114 = vpack.c.bf16 %v4898, %v4895
        %v5115 = vpack.c.bf16 %v4906, %v4903
        %v5116 = vpack.c.bf16 %v4914, %v4911
        %v5117 = vpack.c.bf16 %v4922, %v4919
        %v5118 = vpack.c.bf16 %v4930, %v4927
        %v5119 = vpack.c.bf16 %v4938, %v4935
        %v5121 = vsel %vm1054, %v5111, 0
        %v5124 = vsel %vm1054, %v5112, 0
        %v5127 = vsel %vm1054, %v5113, 0
        %v5130 = vsel %vm1054, %v5114, 0
        %v5133 = vsel %vm1054, %v5115, 0
        %v5136 = vsel %vm1054, %v5116, 0
        %v5139 = vsel %vm1054, %v5117, 0
        %v5142 = vsel %vm1054, %v5118, 0
        %v5145 = vsel %vm1054, %v5119, 0
        %5147 = vmatprep.subr.bf16.mxu0 0
        %5148 = vmatpush1.bf16.xpose.msra.mxu0 %v5145
        %5149 = vmatprep.subr.bf16.mxu0 0
        %5150 = vmatpush1.bf16.xpose.msra.mxu0 %v5142
        %5151 = vmatprep.subr.bf16.mxu0 0
        %5152 = vmatpush1.bf16.xpose.msra.mxu0 %v5139
        %5153 = vmatprep.subr.bf16.mxu0 0
        %5154 = vmatpush1.bf16.xpose.msra.mxu0 %v5136
        %5155 = vmatprep.subr.bf16.mxu0 0
        %5156 = vmatpush1.bf16.xpose.msra.mxu0 %v5133
        %5157 = vmatprep.subr.bf16.mxu0 0
        %5158 = vmatpush1.bf16.xpose.msra.mxu0 %v5130
        %5159 = vmatprep.subr.bf16.mxu0 0
        %5160 = vmatpush1.bf16.xpose.msra.mxu0 %v5127
        %5161 = vmatprep.subr.bf16.mxu0 0
        %5162 = vmatpush1.bf16.xpose.msra.mxu0 %v5124
        %5163 = vmatprep.subr.bf16.mxu0 0
        %5164 = vmatpush2.bf16.xpose.msra.mxu0 0
        %5165 = vmatprep.subr.bf16.mxu0 0
        %5166 = vmatpush2.bf16.xpose.msra.mxu0 0
        %5167 = vmatprep.subr.bf16.mxu0 0
        %5168 = vmatpush2.bf16.xpose.msra.mxu0 0
        %5169 = vmatprep.subr.bf16.mxu0 0
        %5170 = vmatpush2.bf16.xpose.msra.mxu0 0
        %5171 = vmatprep.subr.bf16.mxu0 0
        %5172 = vmatpush2.bf16.xpose.msra.mxu0 0
        %5173 = vmatprep.subr.bf16.mxu0 0
        %5174 = vmatpush2.bf16.xpose.msra.mxu0 0
        %5175 = vmatprep.subr.bf16.mxu0 0
        %5176 = vmatpush2.bf16.xpose.msra.mxu0 0
        %5177 = vmatprep.subr.bf16.mxu0 0
        %5178 = vmatpush2.bf16.xpose.msra.mxu0 0
        %5179 = vmatprep.mubr.bf16.mxu0 0
        %5180 = vmatmul.mubr.bf16.gmra.mxu0 %v5121
        %v5181 = vpop.f32.mrf.mxu0
        %v5182 = vadd.f32 %v529, %v5181
        %v5183 = vpop.f32.mrf.mxu0
        %v5184 = vpop.f32.mrf.mxu0
        %v5185 = vpop.f32.mrf.mxu0
        %5186 = vdwg.mxu0
        %5187 = vmax.xlane.f32.xlu0 %v5182
        %v5188 = vpop.xlane.xlu0 %5187
        %v5189 = vsub.f32 %v5182, %v5188
        %v5190 = vmul.f32 %v5189, 1.442695
        %v5191 = vpow.pop %v5190
        %5192 = vadd.xlane.f32.xlu0 %v5191
        %v5193 = vpop.xlane.xlu0 %5192
        %v5194 = vrcp.pop %v5193
        %v5195 = vmul.f32 %v5191, %v5194
        %v5196 = vadd.f32 %v4492, %v5195
        %v5197 = vpack.c.bf16 %v5195, %v5195
        %v5198 = vpack.c.bf16 %v5052, %v5049
        %v5199 = vpack.c.bf16 %v5060, %v5057
        %v5200 = vpack.c.bf16 %v5068, %v5065
        %v5201 = vpack.c.bf16 %v5076, %v5073
        %v5202 = vpack.c.bf16 %v5084, %v5081
        %v5203 = vpack.c.bf16 %v5092, %v5089
        %v5204 = vpack.c.bf16 %v5100, %v5097
        %v5205 = vpack.c.bf16 %v5108, %v5105
        %5206 = vmatprep.subr.bf16.mxu0 0
        %5207 = vmatpush1.bf16.msra.mxu0 %v5205
        %5208 = vmatprep.subr.bf16.mxu0 0
        %5209 = vmatpush1.bf16.msra.mxu0 %v5204
        %5210 = vmatprep.subr.bf16.mxu0 0
        %5211 = vmatpush1.bf16.msra.mxu0 %v5203
        %5212 = vmatprep.subr.bf16.mxu0 0
        %5213 = vmatpush1.bf16.msra.mxu0 %v5202
        %5214 = vmatprep.subr.bf16.mxu0 0
        %5215 = vmatpush1.bf16.msra.mxu0 %v5201
        %5216 = vmatprep.subr.bf16.mxu0 0
        %5217 = vmatpush1.bf16.msra.mxu0 %v5200
        %5218 = vmatprep.subr.bf16.mxu0 0
        %5219 = vmatpush1.bf16.msra.mxu0 %v5199
        %5220 = vmatprep.subr.bf16.mxu0 0
        %5221 = vmatpush1.bf16.msra.mxu0 %v5198
        %5222 = vmatprep.subr.bf16.mxu0 0
        %5223 = vmatpush2.bf16.msra.mxu0 0
        %5224 = vmatprep.subr.bf16.mxu0 0
        %5225 = vmatpush2.bf16.msra.mxu0 0
        %5226 = vmatprep.subr.bf16.mxu0 0
        %5227 = vmatpush2.bf16.msra.mxu0 0
        %5228 = vmatprep.subr.bf16.mxu0 0
        %5229 = vmatpush2.bf16.msra.mxu0 0
        %5230 = vmatprep.subr.bf16.mxu0 0
        %5231 = vmatpush2.bf16.msra.mxu0 0
        %5232 = vmatprep.subr.bf16.mxu0 0
        %5233 = vmatpush2.bf16.msra.mxu0 0
        %5234 = vmatprep.subr.bf16.mxu0 0
        %5235 = vmatpush2.bf16.msra.mxu0 0
        %5236 = vmatprep.subr.bf16.mxu0 0
        %5237 = vmatpush2.bf16.msra.mxu0 0
        %5238 = vmatprep.mubr.bf16.mxu0 0
        %5239 = vmatmul.mubr.bf16.gmra.mxu0 %v5197
        %v5240 = vpop.f32.mrf.mxu0
        %v5241 = vadd.f32 0.0, %v5240
        %v5242 = vpop.f32.mrf.mxu0
        %v5243 = vpop.f32.mrf.mxu0
        %v5244 = vpop.f32.mrf.mxu0
        %5245 = vdwg.mxu0
        %v5246 = vpack.c.bf16 %v5241, %v5241
        %s5247 = scalar_lea.vmem %s10, 96
        %v5248 = vld [vmem:[%s5247] sm:$0xf]
        %v5249 = vld [vmem:[%s5247 + $0x4] sm:$0xf]
        %v5250 = vld [vmem:[%s5247 + $0x8] sm:$0xf]
        %v5251 = vld [vmem:[%s5247 + $0xc] sm:$0xf]
        %v5256 = vunpack.c.l.b16 %v5248
        %v5257 = vunpack.c.l.b16 %v5249
        %v5258 = vunpack.c.l.b16 %v5250
        %v5259 = vunpack.c.l.b16 %v5251
        %v5260 = vpack.c.b16 %v5257, %v5256
        %v5261 = vpack.c.b16 %v5259, %v5258
        %v5265 = vsel %vm1054, %v5246, 0
        %5267 = vmatprep.subr.bf16.mxu0 0
        %5268 = vmatpush1.bf16.msra.mxu0 0
        %5269 = vmatprep.subr.bf16.mxu0 0
        %5270 = vmatpush1.bf16.msra.mxu0 0
        %5271 = vmatprep.subr.bf16.mxu0 0
        %5272 = vmatpush1.bf16.msra.mxu0 0
        %5273 = vmatprep.subr.bf16.mxu0 0
        %5274 = vmatpush1.bf16.msra.mxu0 0
        %5275 = vmatprep.subr.bf16.mxu0 0
        %5276 = vmatpush1.bf16.msra.mxu0 0
        %5277 = vmatprep.subr.bf16.mxu0 0
        %5278 = vmatpush1.bf16.msra.mxu0 0
        %5279 = vmatprep.subr.bf16.mxu0 0
        %5280 = vmatpush1.bf16.msra.mxu0 %v5261
        %5281 = vmatprep.subr.bf16.mxu0 0
        %5282 = vmatpush1.bf16.msra.mxu0 %v5260
        %5283 = vmatprep.subr.bf16.mxu0 0
        %5284 = vmatpush2.bf16.msra.mxu0 0
        %5285 = vmatprep.subr.bf16.mxu0 0
        %5286 = vmatpush2.bf16.msra.mxu0 0
        %5287 = vmatprep.subr.bf16.mxu0 0
        %5288 = vmatpush2.bf16.msra.mxu0 0
        %5289 = vmatprep.subr.bf16.mxu0 0
        %5290 = vmatpush2.bf16.msra.mxu0 0
        %5291 = vmatprep.subr.bf16.mxu0 0
        %5292 = vmatpush2.bf16.msra.mxu0 0
        %5293 = vmatprep.subr.bf16.mxu0 0
        %5294 = vmatpush2.bf16.msra.mxu0 0
        %5295 = vmatprep.subr.bf16.mxu0 0
        %5296 = vmatpush2.bf16.msra.mxu0 0
        %5297 = vmatprep.subr.bf16.mxu0 0
        %5298 = vmatpush2.bf16.msra.mxu0 0
        %5299 = vmatprep.mubr.bf16.mxu0 0
        %5300 = vmatmul.mubr.bf16.gmra.mxu0 %v5265
        %v5301 = vpop.f32.mrf.mxu0
        %v5302 = vadd.f32 0.0, %v5301
        %v5303 = vpop.f32.mrf.mxu0
        %v5304 = vpop.f32.mrf.mxu0
        %v5305 = vpop.f32.mrf.mxu0
        %5306 = vdwg.mxu0
        %v5307 = vadd.f32 %v4653, %v5302
        %s5308 = scalar_lea.vmem %s4, 448
        %v5309 = vld [vmem:[%s5308] sm:$0xf]
        %v5310 = vld [vmem:[%s5308 + $0x4] sm:$0xf]
        %v5311 = vld [vmem:[%s5308 + $0x8] sm:$0xf]
        %v5312 = vld [vmem:[%s5308 + $0xc] sm:$0xf]
        %v5313 = vld [vmem:[%s5308 + $0x10] sm:$0xf]
        %v5314 = vld [vmem:[%s5308 + $0x14] sm:$0xf]
        %v5315 = vld [vmem:[%s5308 + $0x18] sm:$0xf]
        %v5316 = vld [vmem:[%s5308 + $0x1c] sm:$0xf]
        %v5317 = vld [vmem:[%s5308 + $0x20] sm:$0xf]
        %v5318 = vld [vmem:[%s5308 + $0x24] sm:$0xf]
        %v5319 = vld [vmem:[%s5308 + $0x28] sm:$0xf]
        %v5320 = vld [vmem:[%s5308 + $0x2c] sm:$0xf]
        %v5321 = vld [vmem:[%s5308 + $0x30] sm:$0xf]
        %v5322 = vld [vmem:[%s5308 + $0x34] sm:$0xf]
        %v5323 = vld [vmem:[%s5308 + $0x38] sm:$0xf]
        %v5324 = vld [vmem:[%s5308 + $0x3c] sm:$0xf]
        %s5325 = scalar_lea.vmem %s5, 7
        %v5326 = vld [vmem:[%s5325] sm:$0x1]
        %v5328 = vlaneseq
        %v5329 = vshrl.u32 %v5328, 7
        %v5330 = vsub.s32 0, %v5329
        %v5331 = vrot.slane %v5326, %v5330
        %v5349 = vunpack.c.l.b16 %v5309
        %v5350 = vunpack.c.l.b16 %v5310
        %v5351 = vunpack.c.l.b16 %v5311
        %v5352 = vunpack.c.l.b16 %v5312
        %v5353 = vunpack.c.l.b16 %v5313
        %v5354 = vunpack.c.l.b16 %v5314
        %v5355 = vunpack.c.l.b16 %v5315
        %v5356 = vunpack.c.l.b16 %v5316
        %v5357 = vunpack.c.l.b16 %v5317
        %v5358 = vunpack.c.l.b16 %v5318
        %v5359 = vunpack.c.l.b16 %v5319
        %v5360 = vunpack.c.l.b16 %v5320
        %v5361 = vunpack.c.l.b16 %v5321
        %v5362 = vunpack.c.l.b16 %v5322
        %v5363 = vunpack.c.l.b16 %v5323
        %v5364 = vunpack.c.l.b16 %v5324
        %v5365 = vpack.c.b16 %v5350, %v5349
        %v5366 = vpack.c.b16 %v5352, %v5351
        %v5367 = vpack.c.b16 %v5354, %v5353
        %v5368 = vpack.c.b16 %v5356, %v5355
        %v5369 = vpack.c.b16 %v5358, %v5357
        %v5370 = vpack.c.b16 %v5360, %v5359
        %v5371 = vpack.c.b16 %v5362, %v5361
        %v5372 = vpack.c.b16 %v5364, %v5363
        %5381 = vmatprep.subr.bf16.mxu0 0
        %5382 = vmatpush1.bf16.msra.mxu0 %v5372
        %5383 = vmatprep.subr.bf16.mxu0 0
        %5384 = vmatpush1.bf16.msra.mxu0 %v5371
        %5385 = vmatprep.subr.bf16.mxu0 0
        %5386 = vmatpush1.bf16.msra.mxu0 %v5370
        %5387 = vmatprep.subr.bf16.mxu0 0
        %5388 = vmatpush1.bf16.msra.mxu0 %v5369
        %5389 = vmatprep.subr.bf16.mxu0 0
        %5390 = vmatpush1.bf16.msra.mxu0 %v5368
        %5391 = vmatprep.subr.bf16.mxu0 0
        %5392 = vmatpush1.bf16.msra.mxu0 %v5367
        %5393 = vmatprep.subr.bf16.mxu0 0
        %5394 = vmatpush1.bf16.msra.mxu0 %v5366
        %5395 = vmatprep.subr.bf16.mxu0 0
        %5396 = vmatpush1.bf16.msra.mxu0 %v5365
        %5397 = vmatprep.subr.bf16.mxu0 0
        %5398 = vmatpush2.bf16.msra.mxu0 0
        %5399 = vmatprep.subr.bf16.mxu0 0
        %5400 = vmatpush2.bf16.msra.mxu0 0
        %5401 = vmatprep.subr.bf16.mxu0 0
        %5402 = vmatpush2.bf16.msra.mxu0 0
        %5403 = vmatprep.subr.bf16.mxu0 0
        %5404 = vmatpush2.bf16.msra.mxu0 0
        %5405 = vmatprep.subr.bf16.mxu0 0
        %5406 = vmatpush2.bf16.msra.mxu0 0
        %5407 = vmatprep.subr.bf16.mxu0 0
        %5408 = vmatpush2.bf16.msra.mxu0 0
        %5409 = vmatprep.subr.bf16.mxu0 0
        %5410 = vmatpush2.bf16.msra.mxu0 0
        %5411 = vmatprep.subr.bf16.mxu0 0
        %5412 = vmatpush2.bf16.msra.mxu0 0
        %5413 = vmatprep.mubr.bf16.mxu0 0
        %5414 = vmatmul.mubr.bf16.gmra.mxu0 %v3359
        %v5415 = vpop.f32.mrf.mxu0
        %v5416 = vadd.f32 %v5331, %v5415
        %v5417 = vpop.f32.mrf.mxu0
        %v5418 = vpop.f32.mrf.mxu0
        %v5419 = vpop.f32.mrf.mxu0
        %5420 = vdwg.mxu0
        %s5421 = scalar_lea.vmem %s6, 448
        %v5422 = vld [vmem:[%s5421] sm:$0xf]
        %v5423 = vld [vmem:[%s5421 + $0x4] sm:$0xf]
        %v5424 = vld [vmem:[%s5421 + $0x8] sm:$0xf]
        %v5425 = vld [vmem:[%s5421 + $0xc] sm:$0xf]
        %v5426 = vld [vmem:[%s5421 + $0x10] sm:$0xf]
        %v5427 = vld [vmem:[%s5421 + $0x14] sm:$0xf]
        %v5428 = vld [vmem:[%s5421 + $0x18] sm:$0xf]
        %v5429 = vld [vmem:[%s5421 + $0x1c] sm:$0xf]
        %v5430 = vld [vmem:[%s5421 + $0x20] sm:$0xf]
        %v5431 = vld [vmem:[%s5421 + $0x24] sm:$0xf]
        %v5432 = vld [vmem:[%s5421 + $0x28] sm:$0xf]
        %v5433 = vld [vmem:[%s5421 + $0x2c] sm:$0xf]
        %v5434 = vld [vmem:[%s5421 + $0x30] sm:$0xf]
        %v5435 = vld [vmem:[%s5421 + $0x34] sm:$0xf]
        %v5436 = vld [vmem:[%s5421 + $0x38] sm:$0xf]
        %v5437 = vld [vmem:[%s5421 + $0x3c] sm:$0xf]
        %s5438 = scalar_lea.vmem %s7, 7
        %v5439 = vld [vmem:[%s5438] sm:$0x1]
        %v5441 = vlaneseq
        %v5442 = vshrl.u32 %v5441, 7
        %v5443 = vsub.s32 0, %v5442
        %v5444 = vrot.slane %v5439, %v5443
        %v5462 = vunpack.c.l.b16 %v5422
        %v5463 = vunpack.c.l.b16 %v5423
        %v5464 = vunpack.c.l.b16 %v5424
        %v5465 = vunpack.c.l.b16 %v5425
        %v5466 = vunpack.c.l.b16 %v5426
        %v5467 = vunpack.c.l.b16 %v5427
        %v5468 = vunpack.c.l.b16 %v5428
        %v5469 = vunpack.c.l.b16 %v5429
        %v5470 = vunpack.c.l.b16 %v5430
        %v5471 = vunpack.c.l.b16 %v5431
        %v5472 = vunpack.c.l.b16 %v5432
        %v5473 = vunpack.c.l.b16 %v5433
        %v5474 = vunpack.c.l.b16 %v5434
        %v5475 = vunpack.c.l.b16 %v5435
        %v5476 = vunpack.c.l.b16 %v5436
        %v5477 = vunpack.c.l.b16 %v5437
        %v5478 = vpack.c.b16 %v5463, %v5462
        %v5479 = vpack.c.b16 %v5465, %v5464
        %v5480 = vpack.c.b16 %v5467, %v5466
        %v5481 = vpack.c.b16 %v5469, %v5468
        %v5482 = vpack.c.b16 %v5471, %v5470
        %v5483 = vpack.c.b16 %v5473, %v5472
        %v5484 = vpack.c.b16 %v5475, %v5474
        %v5485 = vpack.c.b16 %v5477, %v5476
        %5494 = vmatprep.subr.bf16.mxu0 0
        %5495 = vmatpush1.bf16.msra.mxu0 %v5485
        %5496 = vmatprep.subr.bf16.mxu0 0
        %5497 = vmatpush1.bf16.msra.mxu0 %v5484
        %5498 = vmatprep.subr.bf16.mxu0 0
        %5499 = vmatpush1.bf16.msra.mxu0 %v5483
        %5500 = vmatprep.subr.bf16.mxu0 0
        %5501 = vmatpush1.bf16.msra.mxu0 %v5482
        %5502 = vmatprep.subr.bf16.mxu0 0
        %5503 = vmatpush1.bf16.msra.mxu0 %v5481
        %5504 = vmatprep.subr.bf16.mxu0 0
        %5505 = vmatpush1.bf16.msra.mxu0 %v5480
        %5506 = vmatprep.subr.bf16.mxu0 0
        %5507 = vmatpush1.bf16.msra.mxu0 %v5479
        %5508 = vmatprep.subr.bf16.mxu0 0
        %5509 = vmatpush1.bf16.msra.mxu0 %v5478
        %5510 = vmatprep.subr.bf16.mxu0 0
        %5511 = vmatpush2.bf16.msra.mxu0 0
        %5512 = vmatprep.subr.bf16.mxu0 0
        %5513 = vmatpush2.bf16.msra.mxu0 0
        %5514 = vmatprep.subr.bf16.mxu0 0
        %5515 = vmatpush2.bf16.msra.mxu0 0
        %5516 = vmatprep.subr.bf16.mxu0 0
        %5517 = vmatpush2.bf16.msra.mxu0 0
        %5518 = vmatprep.subr.bf16.mxu0 0
        %5519 = vmatpush2.bf16.msra.mxu0 0
        %5520 = vmatprep.subr.bf16.mxu0 0
        %5521 = vmatpush2.bf16.msra.mxu0 0
        %5522 = vmatprep.subr.bf16.mxu0 0
        %5523 = vmatpush2.bf16.msra.mxu0 0
        %5524 = vmatprep.subr.bf16.mxu0 0
        %5525 = vmatpush2.bf16.msra.mxu0 0
        %5526 = vmatprep.mubr.bf16.mxu0 0
        %5527 = vmatmul.mubr.bf16.gmra.mxu0 %v716
        %v5528 = vpop.f32.mrf.mxu0
        %v5529 = vadd.f32 %v5444, %v5528
        %v5530 = vpop.f32.mrf.mxu0
        %v5531 = vpop.f32.mrf.mxu0
        %v5532 = vadd.f32 %v5444, %v5531
        %v5533 = vpop.f32.mrf.mxu0
        %5534 = vmatprep.mubr.bf16.mxu0 0
        %5535 = vmatmul.mubr.bf16.gmra.mxu0 %v717
        %v5536 = vpop.f32.mrf.mxu0
        %v5537 = vadd.f32 %v5444, %v5536
        %v5538 = vpop.f32.mrf.mxu0
        %v5539 = vpop.f32.mrf.mxu0
        %v5540 = vadd.f32 %v5444, %v5539
        %v5541 = vpop.f32.mrf.mxu0
        %5542 = vmatprep.mubr.bf16.mxu0 0
        %5543 = vmatmul.mubr.bf16.gmra.mxu0 %v718
        %v5544 = vpop.f32.mrf.mxu0
        %v5545 = vadd.f32 %v5444, %v5544
        %v5546 = vpop.f32.mrf.mxu0
        %v5547 = vpop.f32.mrf.mxu0
        %v5548 = vadd.f32 %v5444, %v5547
        %v5549 = vpop.f32.mrf.mxu0
        %5550 = vmatprep.mubr.bf16.mxu0 0
        %5551 = vmatmul.mubr.bf16.gmra.mxu0 %v719
        %v5552 = vpop.f32.mrf.mxu0
        %v5553 = vadd.f32 %v5444, %v5552
        %v5554 = vpop.f32.mrf.mxu0
        %v5555 = vpop.f32.mrf.mxu0
        %v5556 = vadd.f32 %v5444, %v5555
        %v5557 = vpop.f32.mrf.mxu0
        %5558 = vmatprep.mubr.bf16.mxu0 0
        %5559 = vmatmul.mubr.bf16.gmra.mxu0 %v720
        %v5560 = vpop.f32.mrf.mxu0
        %v5561 = vadd.f32 %v5444, %v5560
        %v5562 = vpop.f32.mrf.mxu0
        %v5563 = vpop.f32.mrf.mxu0
        %v5564 = vadd.f32 %v5444, %v5563
        %v5565 = vpop.f32.mrf.mxu0
        %5566 = vmatprep.mubr.bf16.mxu0 0
        %5567 = vmatmul.mubr.bf16.gmra.mxu0 %v721
        %v5568 = vpop.f32.mrf.mxu0
        %v5569 = vadd.f32 %v5444, %v5568
        %v5570 = vpop.f32.mrf.mxu0
        %v5571 = vpop.f32.mrf.mxu0
        %v5572 = vadd.f32 %v5444, %v5571
        %v5573 = vpop.f32.mrf.mxu0
        %5574 = vmatprep.mubr.bf16.mxu0 0
        %5575 = vmatmul.mubr.bf16.gmra.mxu0 %v722
        %v5576 = vpop.f32.mrf.mxu0
        %v5577 = vadd.f32 %v5444, %v5576
        %v5578 = vpop.f32.mrf.mxu0
        %v5579 = vpop.f32.mrf.mxu0
        %v5580 = vadd.f32 %v5444, %v5579
        %v5581 = vpop.f32.mrf.mxu0
        %5582 = vmatprep.mubr.bf16.mxu0 0
        %5583 = vmatmul.mubr.bf16.gmra.mxu0 %v723
        %v5584 = vpop.f32.mrf.mxu0
        %v5585 = vadd.f32 %v5444, %v5584
        %v5586 = vpop.f32.mrf.mxu0
        %v5587 = vpop.f32.mrf.mxu0
        %v5588 = vadd.f32 %v5444, %v5587
        %v5589 = vpop.f32.mrf.mxu0
        %5590 = vdwg.mxu0
        %s5591 = scalar_lea.vmem %s8, 448
        %v5592 = vld [vmem:[%s5591] sm:$0xf]
        %v5593 = vld [vmem:[%s5591 + $0x4] sm:$0xf]
        %v5594 = vld [vmem:[%s5591 + $0x8] sm:$0xf]
        %v5595 = vld [vmem:[%s5591 + $0xc] sm:$0xf]
        %v5596 = vld [vmem:[%s5591 + $0x10] sm:$0xf]
        %v5597 = vld [vmem:[%s5591 + $0x14] sm:$0xf]
        %v5598 = vld [vmem:[%s5591 + $0x18] sm:$0xf]
        %v5599 = vld [vmem:[%s5591 + $0x1c] sm:$0xf]
        %v5600 = vld [vmem:[%s5591 + $0x20] sm:$0xf]
        %v5601 = vld [vmem:[%s5591 + $0x24] sm:$0xf]
        %v5602 = vld [vmem:[%s5591 + $0x28] sm:$0xf]
        %v5603 = vld [vmem:[%s5591 + $0x2c] sm:$0xf]
        %v5604 = vld [vmem:[%s5591 + $0x30] sm:$0xf]
        %v5605 = vld [vmem:[%s5591 + $0x34] sm:$0xf]
        %v5606 = vld [vmem:[%s5591 + $0x38] sm:$0xf]
        %v5607 = vld [vmem:[%s5591 + $0x3c] sm:$0xf]
        %s5608 = scalar_lea.vmem %s9, 7
        %v5609 = vld [vmem:[%s5608] sm:$0x1]
        %v5611 = vlaneseq
        %v5612 = vshrl.u32 %v5611, 7
        %v5613 = vsub.s32 0, %v5612
        %v5614 = vrot.slane %v5609, %v5613
        %v5632 = vunpack.c.l.b16 %v5592
        %v5633 = vunpack.c.l.b16 %v5593
        %v5634 = vunpack.c.l.b16 %v5594
        %v5635 = vunpack.c.l.b16 %v5595
        %v5636 = vunpack.c.l.b16 %v5596
        %v5637 = vunpack.c.l.b16 %v5597
        %v5638 = vunpack.c.l.b16 %v5598
        %v5639 = vunpack.c.l.b16 %v5599
        %v5640 = vunpack.c.l.b16 %v5600
        %v5641 = vunpack.c.l.b16 %v5601
        %v5642 = vunpack.c.l.b16 %v5602
        %v5643 = vunpack.c.l.b16 %v5603
        %v5644 = vunpack.c.l.b16 %v5604
        %v5645 = vunpack.c.l.b16 %v5605
        %v5646 = vunpack.c.l.b16 %v5606
        %v5647 = vunpack.c.l.b16 %v5607
        %v5648 = vpack.c.b16 %v5633, %v5632
        %v5649 = vpack.c.b16 %v5635, %v5634
        %v5650 = vpack.c.b16 %v5637, %v5636
        %v5651 = vpack.c.b16 %v5639, %v5638
        %v5652 = vpack.c.b16 %v5641, %v5640
        %v5653 = vpack.c.b16 %v5643, %v5642
        %v5654 = vpack.c.b16 %v5645, %v5644
        %v5655 = vpack.c.b16 %v5647, %v5646
        %5664 = vmatprep.subr.bf16.mxu0 0
        %5665 = vmatpush1.bf16.msra.mxu0 %v5655
        %5666 = vmatprep.subr.bf16.mxu0 0
        %5667 = vmatpush1.bf16.msra.mxu0 %v5654
        %5668 = vmatprep.subr.bf16.mxu0 0
        %5669 = vmatpush1.bf16.msra.mxu0 %v5653
        %5670 = vmatprep.subr.bf16.mxu0 0
        %5671 = vmatpush1.bf16.msra.mxu0 %v5652
        %5672 = vmatprep.subr.bf16.mxu0 0
        %5673 = vmatpush1.bf16.msra.mxu0 %v5651
        %5674 = vmatprep.subr.bf16.mxu0 0
        %5675 = vmatpush1.bf16.msra.mxu0 %v5650
        %5676 = vmatprep.subr.bf16.mxu0 0
        %5677 = vmatpush1.bf16.msra.mxu0 %v5649
        %5678 = vmatprep.subr.bf16.mxu0 0
        %5679 = vmatpush1.bf16.msra.mxu0 %v5648
        %5680 = vmatprep.subr.bf16.mxu0 0
        %5681 = vmatpush2.bf16.msra.mxu0 0
        %5682 = vmatprep.subr.bf16.mxu0 0
        %5683 = vmatpush2.bf16.msra.mxu0 0
        %5684 = vmatprep.subr.bf16.mxu0 0
        %5685 = vmatpush2.bf16.msra.mxu0 0
        %5686 = vmatprep.subr.bf16.mxu0 0
        %5687 = vmatpush2.bf16.msra.mxu0 0
        %5688 = vmatprep.subr.bf16.mxu0 0
        %5689 = vmatpush2.bf16.msra.mxu0 0
        %5690 = vmatprep.subr.bf16.mxu0 0
        %5691 = vmatpush2.bf16.msra.mxu0 0
        %5692 = vmatprep.subr.bf16.mxu0 0
        %5693 = vmatpush2.bf16.msra.mxu0 0
        %5694 = vmatprep.subr.bf16.mxu0 0
        %5695 = vmatpush2.bf16.msra.mxu0 0
        %5696 = vmatprep.mubr.bf16.mxu0 0
        %5697 = vmatmul.mubr.bf16.gmra.mxu0 %v716
        %v5698 = vpop.f32.mrf.mxu0
        %v5699 = vadd.f32 %v5614, %v5698
        %v5700 = vpop.f32.mrf.mxu0
        %v5701 = vpop.f32.mrf.mxu0
        %v5702 = vadd.f32 %v5614, %v5701
        %v5703 = vpop.f32.mrf.mxu0
        %5704 = vmatprep.mubr.bf16.mxu0 0
        %5705 = vmatmul.mubr.bf16.gmra.mxu0 %v717
        %v5706 = vpop.f32.mrf.mxu0
        %v5707 = vadd.f32 %v5614, %v5706
        %v5708 = vpop.f32.mrf.mxu0
        %v5709 = vpop.f32.mrf.mxu0
        %v5710 = vadd.f32 %v5614, %v5709
        %v5711 = vpop.f32.mrf.mxu0
        %5712 = vmatprep.mubr.bf16.mxu0 0
        %5713 = vmatmul.mubr.bf16.gmra.mxu0 %v718
        %v5714 = vpop.f32.mrf.mxu0
        %v5715 = vadd.f32 %v5614, %v5714
        %v5716 = vpop.f32.mrf.mxu0
        %v5717 = vpop.f32.mrf.mxu0
        %v5718 = vadd.f32 %v5614, %v5717
        %v5719 = vpop.f32.mrf.mxu0
        %5720 = vmatprep.mubr.bf16.mxu0 0
        %5721 = vmatmul.mubr.bf16.gmra.mxu0 %v719
        %v5722 = vpop.f32.mrf.mxu0
        %v5723 = vadd.f32 %v5614, %v5722
        %v5724 = vpop.f32.mrf.mxu0
        %v5725 = vpop.f32.mrf.mxu0
        %v5726 = vadd.f32 %v5614, %v5725
        %v5727 = vpop.f32.mrf.mxu0
        %5728 = vmatprep.mubr.bf16.mxu0 0
        %5729 = vmatmul.mubr.bf16.gmra.mxu0 %v720
        %v5730 = vpop.f32.mrf.mxu0
        %v5731 = vadd.f32 %v5614, %v5730
        %v5732 = vpop.f32.mrf.mxu0
        %v5733 = vpop.f32.mrf.mxu0
        %v5734 = vadd.f32 %v5614, %v5733
        %v5735 = vpop.f32.mrf.mxu0
        %5736 = vmatprep.mubr.bf16.mxu0 0
        %5737 = vmatmul.mubr.bf16.gmra.mxu0 %v721
        %v5738 = vpop.f32.mrf.mxu0
        %v5739 = vadd.f32 %v5614, %v5738
        %v5740 = vpop.f32.mrf.mxu0
        %v5741 = vpop.f32.mrf.mxu0
        %v5742 = vadd.f32 %v5614, %v5741
        %v5743 = vpop.f32.mrf.mxu0
        %5744 = vmatprep.mubr.bf16.mxu0 0
        %5745 = vmatmul.mubr.bf16.gmra.mxu0 %v722
        %v5746 = vpop.f32.mrf.mxu0
        %v5747 = vadd.f32 %v5614, %v5746
        %v5748 = vpop.f32.mrf.mxu0
        %v5749 = vpop.f32.mrf.mxu0
        %v5750 = vadd.f32 %v5614, %v5749
        %v5751 = vpop.f32.mrf.mxu0
        %5752 = vmatprep.mubr.bf16.mxu0 0
        %5753 = vmatmul.mubr.bf16.gmra.mxu0 %v723
        %v5754 = vpop.f32.mrf.mxu0
        %v5755 = vadd.f32 %v5614, %v5754
        %v5756 = vpop.f32.mrf.mxu0
        %v5757 = vpop.f32.mrf.mxu0
        %v5758 = vadd.f32 %v5614, %v5757
        %v5759 = vpop.f32.mrf.mxu0
        %5760 = vdwg.mxu0
        %v5761 = vpack.c.bf16 %v5416, %v5416
        %v5762 = vpack.c.bf16 %v5532, %v5529
        %v5763 = vpack.c.bf16 %v5540, %v5537
        %v5764 = vpack.c.bf16 %v5548, %v5545
        %v5765 = vpack.c.bf16 %v5556, %v5553
        %v5766 = vpack.c.bf16 %v5564, %v5561
        %v5767 = vpack.c.bf16 %v5572, %v5569
        %v5768 = vpack.c.bf16 %v5580, %v5577
        %v5769 = vpack.c.bf16 %v5588, %v5585
        %v5771 = vsel %vm1054, %v5761, 0
        %v5774 = vsel %vm1054, %v5762, 0
        %v5777 = vsel %vm1054, %v5763, 0
        %v5780 = vsel %vm1054, %v5764, 0
        %v5783 = vsel %vm1054, %v5765, 0
        %v5786 = vsel %vm1054, %v5766, 0
        %v5789 = vsel %vm1054, %v5767, 0
        %v5792 = vsel %vm1054, %v5768, 0
        %v5795 = vsel %vm1054, %v5769, 0
        %5797 = vmatprep.subr.bf16.mxu0 0
        %5798 = vmatpush1.bf16.xpose.msra.mxu0 %v5795
        %5799 = vmatprep.subr.bf16.mxu0 0
        %5800 = vmatpush1.bf16.xpose.msra.mxu0 %v5792
        %5801 = vmatprep.subr.bf16.mxu0 0
        %5802 = vmatpush1.bf16.xpose.msra.mxu0 %v5789
        %5803 = vmatprep.subr.bf16.mxu0 0
        %5804 = vmatpush1.bf16.xpose.msra.mxu0 %v5786
        %5805 = vmatprep.subr.bf16.mxu0 0
        %5806 = vmatpush1.bf16.xpose.msra.mxu0 %v5783
        %5807 = vmatprep.subr.bf16.mxu0 0
        %5808 = vmatpush1.bf16.xpose.msra.mxu0 %v5780
        %5809 = vmatprep.subr.bf16.mxu0 0
        %5810 = vmatpush1.bf16.xpose.msra.mxu0 %v5777
        %5811 = vmatprep.subr.bf16.mxu0 0
        %5812 = vmatpush1.bf16.xpose.msra.mxu0 %v5774
        %5813 = vmatprep.subr.bf16.mxu0 0
        %5814 = vmatpush2.bf16.xpose.msra.mxu0 0
        %5815 = vmatprep.subr.bf16.mxu0 0
        %5816 = vmatpush2.bf16.xpose.msra.mxu0 0
        %5817 = vmatprep.subr.bf16.mxu0 0
        %5818 = vmatpush2.bf16.xpose.msra.mxu0 0
        %5819 = vmatprep.subr.bf16.mxu0 0
        %5820 = vmatpush2.bf16.xpose.msra.mxu0 0
        %5821 = vmatprep.subr.bf16.mxu0 0
        %5822 = vmatpush2.bf16.xpose.msra.mxu0 0
        %5823 = vmatprep.subr.bf16.mxu0 0
        %5824 = vmatpush2.bf16.xpose.msra.mxu0 0
        %5825 = vmatprep.subr.bf16.mxu0 0
        %5826 = vmatpush2.bf16.xpose.msra.mxu0 0
        %5827 = vmatprep.subr.bf16.mxu0 0
        %5828 = vmatpush2.bf16.xpose.msra.mxu0 0
        %5829 = vmatprep.mubr.bf16.mxu0 0
        %5830 = vmatmul.mubr.bf16.gmra.mxu0 %v5771
        %v5831 = vpop.f32.mrf.mxu0
        %v5832 = vadd.f32 %v529, %v5831
        %v5833 = vpop.f32.mrf.mxu0
        %v5834 = vpop.f32.mrf.mxu0
        %v5835 = vpop.f32.mrf.mxu0
        %5836 = vdwg.mxu0
        %5837 = vmax.xlane.f32.xlu0 %v5832
        %v5838 = vpop.xlane.xlu0 %5837
        %v5839 = vsub.f32 %v5832, %v5838
        %v5840 = vmul.f32 %v5839, 1.442695
        %v5841 = vpow.pop %v5840
        %5842 = vadd.xlane.f32.xlu0 %v5841
        %v5843 = vpop.xlane.xlu0 %5842
        %v5844 = vrcp.pop %v5843
        %v5845 = vmul.f32 %v5841, %v5844
        %v5846 = vadd.f32 %v5196, %v5845
        %v5847 = vpack.c.bf16 %v5845, %v5845
        %v5848 = vpack.c.bf16 %v5702, %v5699
        %v5849 = vpack.c.bf16 %v5710, %v5707
        %v5850 = vpack.c.bf16 %v5718, %v5715
        %v5851 = vpack.c.bf16 %v5726, %v5723
        %v5852 = vpack.c.bf16 %v5734, %v5731
        %v5853 = vpack.c.bf16 %v5742, %v5739
        %v5854 = vpack.c.bf16 %v5750, %v5747
        %v5855 = vpack.c.bf16 %v5758, %v5755
        %5856 = vmatprep.subr.bf16.mxu0 0
        %5857 = vmatpush1.bf16.msra.mxu0 %v5855
        %5858 = vmatprep.subr.bf16.mxu0 0
        %5859 = vmatpush1.bf16.msra.mxu0 %v5854
        %5860 = vmatprep.subr.bf16.mxu0 0
        %5861 = vmatpush1.bf16.msra.mxu0 %v5853
        %5862 = vmatprep.subr.bf16.mxu0 0
        %5863 = vmatpush1.bf16.msra.mxu0 %v5852
        %5864 = vmatprep.subr.bf16.mxu0 0
        %5865 = vmatpush1.bf16.msra.mxu0 %v5851
        %5866 = vmatprep.subr.bf16.mxu0 0
        %5867 = vmatpush1.bf16.msra.mxu0 %v5850
        %5868 = vmatprep.subr.bf16.mxu0 0
        %5869 = vmatpush1.bf16.msra.mxu0 %v5849
        %5870 = vmatprep.subr.bf16.mxu0 0
        %5871 = vmatpush1.bf16.msra.mxu0 %v5848
        %5872 = vmatprep.subr.bf16.mxu0 0
        %5873 = vmatpush2.bf16.msra.mxu0 0
        %5874 = vmatprep.subr.bf16.mxu0 0
        %5875 = vmatpush2.bf16.msra.mxu0 0
        %5876 = vmatprep.subr.bf16.mxu0 0
        %5877 = vmatpush2.bf16.msra.mxu0 0
        %5878 = vmatprep.subr.bf16.mxu0 0
        %5879 = vmatpush2.bf16.msra.mxu0 0
        %5880 = vmatprep.subr.bf16.mxu0 0
        %5881 = vmatpush2.bf16.msra.mxu0 0
        %5882 = vmatprep.subr.bf16.mxu0 0
        %5883 = vmatpush2.bf16.msra.mxu0 0
        %5884 = vmatprep.subr.bf16.mxu0 0
        %5885 = vmatpush2.bf16.msra.mxu0 0
        %5886 = vmatprep.subr.bf16.mxu0 0
        %5887 = vmatpush2.bf16.msra.mxu0 0
        %5888 = vmatprep.mubr.bf16.mxu0 0
        %5889 = vmatmul.mubr.bf16.gmra.mxu0 %v5847
        %v5890 = vpop.f32.mrf.mxu0
        %v5891 = vadd.f32 0.0, %v5890
        %v5892 = vpop.f32.mrf.mxu0
        %v5893 = vpop.f32.mrf.mxu0
        %v5894 = vpop.f32.mrf.mxu0
        %5895 = vdwg.mxu0
        %v5896 = vpack.c.bf16 %v5891, %v5891
        %s5897 = scalar_lea.vmem %s10, 112
        %v5898 = vld [vmem:[%s5897] sm:$0xf]
        %v5899 = vld [vmem:[%s5897 + $0x4] sm:$0xf]
        %v5900 = vld [vmem:[%s5897 + $0x8] sm:$0xf]
        %v5901 = vld [vmem:[%s5897 + $0xc] sm:$0xf]
        %v5906 = vunpack.c.l.b16 %v5898
        %v5907 = vunpack.c.l.b16 %v5899
        %v5908 = vunpack.c.l.b16 %v5900
        %v5909 = vunpack.c.l.b16 %v5901
        %v5910 = vpack.c.b16 %v5907, %v5906
        %v5911 = vpack.c.b16 %v5909, %v5908
        %v5915 = vsel %vm1054, %v5896, 0
        %5917 = vmatprep.subr.bf16.mxu0 0
        %5918 = vmatpush1.bf16.msra.mxu0 0
        %5919 = vmatprep.subr.bf16.mxu0 0
        %5920 = vmatpush1.bf16.msra.mxu0 0
        %5921 = vmatprep.subr.bf16.mxu0 0
        %5922 = vmatpush1.bf16.msra.mxu0 0
        %5923 = vmatprep.subr.bf16.mxu0 0
        %5924 = vmatpush1.bf16.msra.mxu0 0
        %5925 = vmatprep.subr.bf16.mxu0 0
        %5926 = vmatpush1.bf16.msra.mxu0 0
        %5927 = vmatprep.subr.bf16.mxu0 0
        %5928 = vmatpush1.bf16.msra.mxu0 0
        %5929 = vmatprep.subr.bf16.mxu0 0
        %5930 = vmatpush1.bf16.msra.mxu0 %v5911
        %5931 = vmatprep.subr.bf16.mxu0 0
        %5932 = vmatpush1.bf16.msra.mxu0 %v5910
        %5933 = vmatprep.subr.bf16.mxu0 0
        %5934 = vmatpush2.bf16.msra.mxu0 0
        %5935 = vmatprep.subr.bf16.mxu0 0
        %5936 = vmatpush2.bf16.msra.mxu0 0
        %5937 = vmatprep.subr.bf16.mxu0 0
        %5938 = vmatpush2.bf16.msra.mxu0 0
        %5939 = vmatprep.subr.bf16.mxu0 0
        %5940 = vmatpush2.bf16.msra.mxu0 0
        %5941 = vmatprep.subr.bf16.mxu0 0
        %5942 = vmatpush2.bf16.msra.mxu0 0
        %5943 = vmatprep.subr.bf16.mxu0 0
        %5944 = vmatpush2.bf16.msra.mxu0 0
        %5945 = vmatprep.subr.bf16.mxu0 0
        %5946 = vmatpush2.bf16.msra.mxu0 0
        %5947 = vmatprep.subr.bf16.mxu0 0
        %5948 = vmatpush2.bf16.msra.mxu0 0
        %5949 = vmatprep.mubr.bf16.mxu0 0
        %5950 = vmatmul.mubr.bf16.gmra.mxu0 %v5915
        %v5951 = vpop.f32.mrf.mxu0
        %v5952 = vadd.f32 0.0, %v5951
        %v5953 = vpop.f32.mrf.mxu0
        %v5954 = vpop.f32.mrf.mxu0
        %v5955 = vpop.f32.mrf.mxu0
        %5956 = vdwg.mxu0
        %v5957 = vadd.f32 %v5307, %v5952
        %s5958 = scalar_lea.vmem %s11, 1
        %v5959 = vld [vmem:[%s5958] sm:$0x1]
        %v5961 = vlaneseq
        %v5962 = vshrl.u32 %v5961, 7
        %v5963 = vsub.s32 0, %v5962
        %v5964 = vrot.slane %v5959, %v5963
        %v5966 = vadd.f32 %v5957, %v5964
        %v5967 = vpack.c.bf16 %v5966, %v5966
        %s5968 = scalar_lea.vmem %s12, 128
        %v5969 = vld [vmem:[%s5968] sm:$0xff]
        %v5970 = vld [vmem:[%s5968 + $0x8] sm:$0xff]
        %v5971 = vld [vmem:[%s5968 + $0x10] sm:$0xff]
        %v5972 = vld [vmem:[%s5968 + $0x18] sm:$0xff]
        %v5973 = vld [vmem:[%s5968 + $0x20] sm:$0xff]
        %v5974 = vld [vmem:[%s5968 + $0x28] sm:$0xff]
        %v5975 = vld [vmem:[%s5968 + $0x30] sm:$0xff]
        %v5976 = vld [vmem:[%s5968 + $0x38] sm:$0xff]
        %v5977 = vld [vmem:[%s5968 + $0x40] sm:$0xff]
        %v5978 = vld [vmem:[%s5968 + $0x48] sm:$0xff]
        %v5979 = vld [vmem:[%s5968 + $0x50] sm:$0xff]
        %v5980 = vld [vmem:[%s5968 + $0x58] sm:$0xff]
        %v5981 = vld [vmem:[%s5968 + $0x60] sm:$0xff]
        %v5982 = vld [vmem:[%s5968 + $0x68] sm:$0xff]
        %v5983 = vld [vmem:[%s5968 + $0x70] sm:$0xff]
        %v5984 = vld [vmem:[%s5968 + $0x78] sm:$0xff]
        %s5985 = scalar_lea.vmem %s13, 2
        %v5986 = vld [vmem:[%s5985] sm:$0x3]
        %v5988 = vlaneseq
        %v5989 = vshrl.u32 %v5988, 7
        %v5990 = vsub.s32 0, %v5989
        %v5991 = vrot.slane %v5986, %v5990
        %v5992 = vlaneseq
        %v5993 = vshrl.u32 %v5992, 7
        %v5994 = vsub.s32 1, %v5993
        %v5995 = vrot.slane %v5986, %v5994
        %v6014 = vunpack.c.l.b16 %v5969
        %v6015 = vunpack.c.h.b16 %v5969
        %v6016 = vunpack.c.l.b16 %v5970
        %v6017 = vunpack.c.h.b16 %v5970
        %v6018 = vunpack.c.l.b16 %v5971
        %v6019 = vunpack.c.h.b16 %v5971
        %v6020 = vunpack.c.l.b16 %v5972
        %v6021 = vunpack.c.h.b16 %v5972
        %v6022 = vunpack.c.l.b16 %v5973
        %v6023 = vunpack.c.h.b16 %v5973
        %v6024 = vunpack.c.l.b16 %v5974
        %v6025 = vunpack.c.h.b16 %v5974
        %v6026 = vunpack.c.l.b16 %v5975
        %v6027 = vunpack.c.h.b16 %v5975
        %v6028 = vunpack.c.l.b16 %v5976
        %v6029 = vunpack.c.h.b16 %v5976
        %v6030 = vunpack.c.l.b16 %v5977
        %v6031 = vunpack.c.h.b16 %v5977
        %v6032 = vunpack.c.l.b16 %v5978
        %v6033 = vunpack.c.h.b16 %v5978
        %v6034 = vunpack.c.l.b16 %v5979
        %v6035 = vunpack.c.h.b16 %v5979
        %v6036 = vunpack.c.l.b16 %v5980
        %v6037 = vunpack.c.h.b16 %v5980
        %v6038 = vunpack.c.l.b16 %v5981
        %v6039 = vunpack.c.h.b16 %v5981
        %v6040 = vunpack.c.l.b16 %v5982
        %v6041 = vunpack.c.h.b16 %v5982
        %v6042 = vunpack.c.l.b16 %v5983
        %v6043 = vunpack.c.h.b16 %v5983
        %v6044 = vunpack.c.l.b16 %v5984
        %v6045 = vunpack.c.h.b16 %v5984
        %v6046 = vpack.c.b16 %v6016, %v6014
        %v6047 = vpack.c.b16 %v6017, %v6015
        %v6048 = vpack.c.b16 %v6020, %v6018
        %v6049 = vpack.c.b16 %v6021, %v6019
        %v6050 = vpack.c.b16 %v6024, %v6022
        %v6051 = vpack.c.b16 %v6025, %v6023
        %v6052 = vpack.c.b16 %v6028, %v6026
        %v6053 = vpack.c.b16 %v6029, %v6027
        %v6054 = vpack.c.b16 %v6032, %v6030
        %v6055 = vpack.c.b16 %v6033, %v6031
        %v6056 = vpack.c.b16 %v6036, %v6034
        %v6057 = vpack.c.b16 %v6037, %v6035
        %v6058 = vpack.c.b16 %v6040, %v6038
        %v6059 = vpack.c.b16 %v6041, %v6039
        %v6060 = vpack.c.b16 %v6044, %v6042
        %v6061 = vpack.c.b16 %v6045, %v6043
        %6078 = vmatprep.subr.bf16.mxu0 %v6061
        %6079 = vmatpush1.bf16.msra.mxu0 %v6060
        %6080 = vmatprep.subr.bf16.mxu0 %v6059
        %6081 = vmatpush1.bf16.msra.mxu0 %v6058
        %6082 = vmatprep.subr.bf16.mxu0 %v6057
        %6083 = vmatpush1.bf16.msra.mxu0 %v6056
        %6084 = vmatprep.subr.bf16.mxu0 %v6055
        %6085 = vmatpush1.bf16.msra.mxu0 %v6054
        %6086 = vmatprep.subr.bf16.mxu0 %v6053
        %6087 = vmatpush1.bf16.msra.mxu0 %v6052
        %6088 = vmatprep.subr.bf16.mxu0 %v6051
        %6089 = vmatpush1.bf16.msra.mxu0 %v6050
        %6090 = vmatprep.subr.bf16.mxu0 %v6049
        %6091 = vmatpush1.bf16.msra.mxu0 %v6048
        %6092 = vmatprep.subr.bf16.mxu0 %v6047
        %6093 = vmatpush1.bf16.msra.mxu0 %v6046
        %6094 = vmatprep.subr.bf16.mxu0 0
        %6095 = vmatpush2.bf16.msra.mxu0 0
        %6096 = vmatprep.subr.bf16.mxu0 0
        %6097 = vmatpush2.bf16.msra.mxu0 0
        %6098 = vmatprep.subr.bf16.mxu0 0
        %6099 = vmatpush2.bf16.msra.mxu0 0
        %6100 = vmatprep.subr.bf16.mxu0 0
        %6101 = vmatpush2.bf16.msra.mxu0 0
        %6102 = vmatprep.subr.bf16.mxu0 0
        %6103 = vmatpush2.bf16.msra.mxu0 0
        %6104 = vmatprep.subr.bf16.mxu0 0
        %6105 = vmatpush2.bf16.msra.mxu0 0
        %6106 = vmatprep.subr.bf16.mxu0 0
        %6107 = vmatpush2.bf16.msra.mxu0 0
        %6108 = vmatprep.subr.bf16.mxu0 0
        %6109 = vmatpush2.bf16.msra.mxu0 0
        %6110 = vmatprep.mubr.bf16.mxu0 0
        %6111 = vmatmul.mubr.bf16.gmra.mxu0 %v5967
        %v6112 = vpop.f32.mrf.mxu0
        %v6113 = vadd.f32 %v5991, %v6112
        %v6114 = vpop.f32.mrf.mxu0
        %v6115 = vadd.f32 %v5995, %v6114
        %v6116 = vpop.f32.mrf.mxu0
        %v6117 = vpop.f32.mrf.mxu0
        %6118 = vdwg.mxu0
        %v6119 = vxor.u32 %v6115, 2147483648
        %v6120 = vmul.f32 %v6119, 1.442695
        %v6121 = vpow.pop %v6120
        %v6122 = vadd.f32 %v6121, 1.0
        %v6123 = vrcp.pop %v6122
        %v6124 = vmul.f32 1.0, %v6123
        %v6125 = vmul.f32 %v6113, %v6124
        %v6126 = vadd.f32 %v6125, %v5966
        %v6127 = vadd.f32 %v3356, %v6126
        %v6128 = vmul.f32 %v5846, %v530
        %s6129 = scalar_lea.vmem %s493, 8 [#allocation7]
        %6130 = vst [vmem:[%s6129] sm:$0xff] %v6128
        %v6131 = vmul.f32 %v6127, %v517
        %6132 = vst [vmem:[%s486] sm:$0xff] %v6131
        %s6133 = sand.u32 %s329, 1
        %s6134 = scalar_lea.sflag [#allocation6], %s6133
        %s6135 = sand.u32 %s329, 1
        %s6136 = smul.addr %s6135, 8
        %s6137 = scalar_lea.vmem [#allocation5], %s6136
        %s6138 = sand.u32 %s357, 1
        %s6139 = scalar_lea.sflag [#allocation8], %s6138
        %s6140 = sand.u32 %s357, 1
        %s6141 = smul.addr %s6140, 16
        %s6142 = scalar_lea.vmem [#allocation7], %s6141
        // Predicated region
        $region69: #{tpu_custom_call.1} parent=67 // pred_check
          %p6143 = pneg %p339
        $region70: #{tpu_custom_call.1} parent=67 // pred_check_branch
          %6145 = sbr.rel (%p6143) target = $region72
        $region71: #{tpu_custom_call.1} parent=67 // pred_region
          %s6147 = ssub.s32 128, 128
          %6148 = vsyncadd %s6134, %s6147
          %s6149 = sadd.s32 %s48, %s47
          %s6150 = smul.addr %s6149, 128
          %s6151 = scalar_lea.hbm %s14, %s6150
          %s6153 = sshll.u32 %s6137, 4
          %s6154 = int_to_ptr.vmem [resolvable:$true] %s6153
          %6156 = dma.vmem_to_hbm [thread:$0]  %s6154, 128, %s6151, %s6134
        $region72: #{tpu_custom_call.1} parent=67 // pred_fallthru
          _
        // Predicated region
        $region73: #{tpu_custom_call.1} parent=67 // pred_check
          %p6157 = pneg %p367
        $region74: #{tpu_custom_call.1} parent=67 // pred_check_branch
          %6159 = sbr.rel (%p6157) target = $region76
        $region75: #{tpu_custom_call.1} parent=67 // pred_region
          %s6161 = ssub.s32 256, 256
          %6162 = vsyncadd %s6139, %s6161
          %s6163 = smul.addr %s47, 2
          %s6164 = sadd.s32 %s48, %s6163
          %s6165 = smul.addr %s6164, 128
          %s6166 = scalar_lea.hbm %s15, %s6165
          %s6167 = sshll.u32 %s6142, 4
          %s6168 = int_to_ptr.vmem [resolvable:$true] %s6167
          %6173 = dma.vmem_to_hbm [thread:$0]  %s6168, 256, %s6166, %s6139, 128, 128, 8
        $region76: #{tpu_custom_call.1} parent=67 // pred_fallthru
          _
      $region68: #{tpu_custom_call.1} parent=5 // pred_fallthru
        _
      %p6174 = scmp.le.s32.totalorder 2, %s38
      // Predicated region
      $region77: #{tpu_custom_call.1} parent=5 // pred_check
        %p6175 = pneg %p6174
      $region78: #{tpu_custom_call.1} parent=5 // pred_check_branch
        %6177 = sbr.rel (%p6175) target = $region80
      $region79: #{tpu_custom_call.1} parent=5 // pred_region
        %s6178 = ssub.s32 %s38, 2
        // Predicated region
        $region81: #{tpu_custom_call.1} parent=79 // pred_check
          %p6179 = pneg %p345
        $region82: #{tpu_custom_call.1} parent=79 // pred_check_branch
          %6181 = sbr.rel (%p6179) target = $region84
        $region83: #{tpu_custom_call.1} parent=79 // pred_region
          %s6182 = sand.u32 %s330, 1
          %s6183 = scalar_lea.sflag [#allocation6], %s6182
          %s6184 = sand.u32 %s330, 1
          %s6185 = smul.addr %s6184, 8
          %s6186 = scalar_lea.vmem [#allocation5], %s6185
          %6187 = dma.done %s6183, 128
        $region84: #{tpu_custom_call.1} parent=79 // pred_fallthru
          _
        // Predicated region
        $region85: #{tpu_custom_call.1} parent=79 // pred_check
          %p6188 = pneg %p373
        $region86: #{tpu_custom_call.1} parent=79 // pred_check_branch
          %6190 = sbr.rel (%p6188) target = $region88
        $region87: #{tpu_custom_call.1} parent=79 // pred_region
          %s6191 = sand.u32 %s358, 1
          %s6192 = scalar_lea.sflag [#allocation8], %s6191
          %s6193 = sand.u32 %s358, 1
          %s6194 = smul.addr %s6193, 16
          %s6195 = scalar_lea.vmem [#allocation7], %s6194
          %6196 = dma.done %s6192, 256
        $region88: #{tpu_custom_call.1} parent=79 // pred_fallthru
          _
      $region80: #{tpu_custom_call.1} parent=5 // pred_fallthru
        _
    $region6: #{tpu_custom_call.1} parent=1 // loop_footer
      %s42 = sadd.s32 1, %s38
    $region7: #{tpu_custom_call.1} parent=1 // loop_footer_branch
      %37 = sbr.rel target = $region3
    $region8: #{tpu_custom_call.1} parent=1 // loop_exit
      _
    %6197 = vsyncpa [#allocation6], 1
    %s6198 = scalar_lea.sflag [#allocation6], 1
    %6199 = vsyncpa %s6198, 1
    %6200 = vsyncpa [#allocation8], 1
    %s6201 = scalar_lea.sflag [#allocation8], 1
    %6202 = vsyncpa %s6201, 1

</llo_original>
